<compile_context>
chip_gen: v6e
topology: v6e:2x2x1
jax: 0.10.0
libtpu: 0.0.40
codegen_flags: <defaults>
</compile_context>

<pallas_src>
import functools
import math

import jax
import jax.numpy as jnp
from jax.experimental import pallas as pl
from jax.experimental.pallas import tpu as pltpu


def _round_up(x, m):
    return ((x + m - 1) // m) * m


# ----------------------------------------------------------------------------
# Pallas kernel: (M, N, K)-tiled matmul, bf16 operands, f32 VMEM accumulator,
# fused bias + optional LeakyReLU written once at the last K step.
#
# CORRECTNESS NOTE: this relies on K being the LAST grid axis, marked
# "arbitrary", with the output / accumulator index_map ignoring k (the block
# stays VMEM-resident across K steps).  Do not reorder K or mark it parallel.
# ----------------------------------------------------------------------------
def _mm_bias_act_kernel(a_ref, b_ref, bias_ref, o_ref, acc_ref, *,
                        negative_slope):
    k = pl.program_id(2)

    @pl.when(k == 0)
    def _():
        acc_ref[...] = jnp.zeros_like(acc_ref)

    acc_ref[...] += jnp.dot(a_ref[...], b_ref[...],
                            preferred_element_type=jnp.float32)

    @pl.when(k == pl.num_programs(2) - 1)
    def _():
        out = acc_ref[...] + bias_ref[...]
        if negative_slope is not None:
            out = jnp.where(out >= 0, out, negative_slope * out)
        o_ref[...] = out.astype(o_ref.dtype)


def matmul_bias_act(a, w_pad, bias_pad, *, negative_slope, out_dtype,
                    tm, tn, tk):
    """act(a @ w + bias) with a tiled Pallas TPU kernel.

    a:        (M, K)   activation (bf16; only the activation is padded here)
    w_pad:    (Kp, Np) weight, already K-padded + bf16 (prepared once in HBM)
    bias_pad: (1, Np)  bias, f32 (prepared once)
    Returns (M, Np) in out_dtype.
    """
    M, K = a.shape
    Kp, Np = w_pad.shape
    assert Kp >= K and Kp % tk == 0 and Np % tn == 0, (K, Kp, tk, Np, tn)

    Mp = _round_up(M, tm)
    a_p = a.astype(jnp.bfloat16)
    if (Mp, Kp) != (M, K):
        # Zero-fill pad: padded M rows pass harmlessly through bias/LeakyReLU
        # and are sliced off below; padded K columns multiply zero weights.
        a_p = jnp.pad(a_p, ((0, Mp - M), (0, Kp - K)))

    grid = (Mp // tm, Np // tn, Kp // tk)
    kernel = functools.partial(_mm_bias_act_kernel,
                               negative_slope=negative_slope)

    # TODO(synk): on v5e, deepen the fc weight-stream pipeline with
    # pipeline_mode=pl.Buffered(3) on the B BlockSpec once verified on HW.
    out_p = pl.pallas_call(
        kernel,
        out_shape=jax.ShapeDtypeStruct((Mp, Np), out_dtype),
        grid_spec=pltpu.PrefetchScalarGridSpec(
            num_scalar_prefetch=0,
            grid=grid,
            in_specs=[
                pl.BlockSpec((tm, tk), lambda i, j, k: (i, k)),
                pl.BlockSpec((tk, tn), lambda i, j, k: (k, j)),
                pl.BlockSpec((1, tn), lambda i, j, k: (0, j)),
            ],
            out_specs=pl.BlockSpec((tm, tn), lambda i, j, k: (i, j)),
            scratch_shapes=[pltpu.VMEM((tm, tn), jnp.float32)],
        ),
        compiler_params=pltpu.CompilerParams(
            dimension_semantics=("parallel", "parallel", "arbitrary"),
            vmem_limit_bytes=32 * 1024 * 1024,
        ),
    )(a_p, w_pad, bias_pad)

    if Mp != M:
        out_p = out_p[:M]          # N is never padded, so no column slice.
    return out_p


# ----------------------------------------------------------------------------
# NHWC im2col glue (plain JAX, runs in bf16, fused under jit).  Patch rows are
# ordered tap-major (kh, kw) then channel, matching the prepared weights.
# ----------------------------------------------------------------------------
# TODO(synk): fold im2col into the Pallas kernel by iterating the (kh, kw)
# taps as extra "arbitrary" K-grid steps over shifted input windows instead of
# materializing the 9x-duplicated patch matrix in HBM.
def _im2col_nhwc(x, kh, kw, stride, pad):
    # x: (N, H, W, C) bf16 -> (N*OH*OW, kh*kw*C) bf16
    N, H, W, C = x.shape
    OH = (H + 2 * pad - kh) // stride + 1
    OW = (W + 2 * pad - kw) // stride + 1
    xp = jnp.pad(x, ((0, 0), (pad, pad), (pad, pad), (0, 0)))
    taps = []
    for i in range(kh):
        for j in range(kw):
            taps.append(
                xp[:, i:i + stride * (OH - 1) + 1:stride,
                      j:j + stride * (OW - 1) + 1:stride, :]
            )  # (N, OH, OW, C)
    col = jnp.concatenate(taps, axis=-1)  # (N, OH, OW, kh*kw*C)
    return col.reshape(N * OH * OW, kh * kw * C), OH, OW


def conv2d_leaky_nhwc(x, w_pad, bias, kh, kw, stride, pad, *, tm, tn, tk,
                      negative_slope=0.01):
    # x: (N, H, W, C) NHWC bf16; w_pad: (Kpad, OC) bf16; bias: (1, OC) f32
    N = x.shape[0]
    oc = w_pad.shape[1]
    col, OH, OW = _im2col_nhwc(x, kh, kw, stride, pad)
    tm = min(tm, _round_up(col.shape[0], 8))
    out = matmul_bias_act(col, w_pad, bias,
                          negative_slope=negative_slope,
                          out_dtype=jnp.bfloat16,    # bf16 inter-layer writeback
                          tm=tm, tn=tn, tk=tk)       # (N*OH*OW, OC)
    return out.reshape(N, OH, OW, oc)                # stay NHWC


# ----------------------------------------------------------------------------
# Parameter init (PyTorch-style uniform fan-in init, raw NCHW layout) and a
# one-time preparation pass (reshape / permute / K-pad / bf16-cast weights).
# ----------------------------------------------------------------------------
def _init_conv(key, oc, ic, kh, kw):
    k1, k2 = jax.random.split(key)
    bound = 1.0 / math.sqrt(ic * kh * kw)
    w = jax.random.uniform(k1, (oc, ic, kh, kw), jnp.float32, -bound, bound)
    b = jax.random.uniform(k2, (oc,), jnp.float32, -bound, bound)
    return w, b


def _init_linear(key, in_f, out_f):
    k1, k2 = jax.random.split(key)
    bound = 1.0 / math.sqrt(in_f)
    w = jax.random.uniform(k1, (out_f, in_f), jnp.float32, -bound, bound)
    b = jax.random.uniform(k2, (out_f,), jnp.float32, -bound, bound)
    return w, b


def init_params(key, z_size):
    k1, k2, k3, k4 = jax.random.split(key, 4)
    return {
        "conv1": _init_conv(k1, 64, 3, 5, 5),
        "conv2": _init_conv(k2, 128, 64, 3, 3),
        "conv3": _init_conv(k3, 256, 128, 3, 3),
        "fc": _init_linear(k4, 8 * 8 * 256, z_size),
    }


def prepare_params(raw):
    """Hoist ALL weight reshapes, K-padding and bf16 casts out of the forward,
    so the padded bf16 matrices live in HBM once (no per-call pad/cast ops)."""
    p = {}
    for name in ("conv1", "conv2", "conv3"):
        w, b = raw[name]
        oc, c, kh, kw = w.shape
        k = kh * kw * c
        kp = _round_up(k, 128)
        # Rows ordered (kh, kw, C) to match _im2col_nhwc tap-major patches.
        w_mat = w.transpose(2, 3, 1, 0).reshape(k, oc)
        w_mat = jnp.pad(w_mat, ((0, kp - k), (0, 0))).astype(jnp.bfloat16)
        p[name + "_w"] = w_mat                              # (Kpad, OC) bf16
        p[name + "_b"] = b.astype(jnp.float32).reshape(1, oc)
    wf, bf = raw["fc"]
    z = wf.shape[0]
    # PyTorch flattens NCHW (C-major); we flatten NHWC, so permute fc columns
    # once: row index h*(8*256) + w*256 + c picks wf[:, c*64 + h*8 + w].
    p["fc_w"] = (wf.reshape(z, 256, 8, 8).transpose(2, 3, 1, 0)
                   .reshape(8 * 8 * 256, z).astype(jnp.bfloat16))  # no N pad
    p["fc_b"] = bf.astype(jnp.float32).reshape(1, z)
    return p


def descriptor_cifar_forward(params, x):
    # x: (N, 3, 32, 32) NCHW (PyTorch convention). Compute in NHWC / bf16.
    x = jnp.transpose(x, (0, 2, 3, 1)).astype(jnp.bfloat16)         # NHWC bf16
    # conv1: K=75->128, N=64 (full), M-grid=2 at batch 2 (megacore on M).
    out = conv2d_leaky_nhwc(x, params["conv1_w"], params["conv1_b"],
                            5, 5, 2, 1, tm=256, tn=64, tk=128)       # (N,15,15, 64)
    # conv2: K=576->640 taken in ONE step; split M (tm=64 -> 2 parallel steps).
    out = conv2d_leaky_nhwc(out, params["conv2_w"], params["conv2_b"],
                            3, 3, 2, 1, tm=64, tn=128, tk=640)       # (N, 8, 8,128)
    # conv3: K=1152 exact, ONE step; split N (tn=128 -> 2 parallel steps).
    out = conv2d_leaky_nhwc(out, params["conv3_w"], params["conv3_b"],
                            3, 3, 1, 1, tm=128, tn=128, tk=1152)     # (N, 8, 8,256)
    n = out.shape[0]
    flat = out.reshape(n, -1)         # NHWC flatten; fc_w permuted to match
    z = params["fc_w"].shape[1]
    # fc: pure weight streaming.  N stays 32 (no pad), K=16384 in 4 tiles.
    return matmul_bias_act(flat, params["fc_w"], params["fc_b"],
                           negative_slope=None, out_dtype=jnp.float32,
                           tm=min(256, _round_up(n, 8)), tn=z, tk=4096)


# ----------------------------------------------------------------------------
# Pure-JAX reference (PyTorch semantics: NCHW conv + C-major flatten, f32).
# ----------------------------------------------------------------------------
def _reference_forward(raw, x):
    def leaky(v):
        return jnp.where(v >= 0, v, 0.01 * v)

    def conv(x, w, b, stride, pad):
        y = jax.lax.conv_general_dilated(
            x, w, window_strides=(stride, stride),
            padding=((pad, pad), (pad, pad)),
            dimension_numbers=("NCHW", "OIHW", "NCHW"))
        return y + b[None, :, None, None]

    w1, b1 = raw["conv1"]
    w2, b2 = raw["conv2"]
    w3, b3 = raw["conv3"]
    wf, bf = raw["fc"]
    out = leaky(conv(x, w1, b1, 2, 1))
    out = leaky(conv(out, w2, b2, 2, 1))
    out = leaky(conv(out, w3, b3, 1, 1))
    flat = out.reshape(out.shape[0], -1)
    return flat @ wf.T + bf


if __name__ == "__main__":
    z_size = 32
    key = jax.random.PRNGKey(0)
    kp, kx = jax.random.split(key)

    raw_params = init_params(kp, z_size)
    params = prepare_params(raw_params)
    x = jax.random.normal(kx, (2, 3, 32, 32), jnp.float32)

    fwd = jax.jit(descriptor_cifar_forward)
    y = jax.block_until_ready(fwd(params, x))

    assert y.shape == (2, z_size), y.shape
    assert y.dtype == jnp.float32, y.dtype
    assert bool(jnp.all(jnp.isfinite(y)))

    # Correctness vs. f32 reference (bf16 MXU operands / bf16 inter-layer
    # activations -> loose tolerance).
    y_ref = _reference_forward(raw_params, x)
    err = float(jnp.max(jnp.abs(y - y_ref)))
    scale = float(jnp.maximum(1.0, jnp.max(jnp.abs(y_ref))))
    assert err <= 1e-1 * scale, (err, scale)

    print("KERNEL_OK")
</pallas_src>

<mosaic_0001>
module attributes {stable_mosaic.version = 11 : i64} {
  func.func @_mm_bias_act_kernel(%arg0: i32, %arg1: i32, %arg2: i32, %arg3: memref<256x128xbf16, #tpu.memory_space<vmem>>, %arg4: memref<128x64xbf16, #tpu.memory_space<vmem>>, %arg5: memref<1x64xf32, #tpu.memory_space<vmem>>, %arg6: memref<256x64xbf16, #tpu.memory_space<vmem>>, %arg7: memref<256x64xf32, #tpu.memory_space<vmem>>) attributes {dimension_semantics = [#tpu.dimension_semantics<parallel>, #tpu.dimension_semantics<parallel>, #tpu.dimension_semantics<arbitrary>], iteration_bounds = array<i64: 2, 1, 1>, scalar_prefetch = 0 : i64, scratch_operands = 1 : i64, tpu.core_type = #tpu.core_type<tc>, window_params = [{transform_indices = @transform_0, window_bounds = array<i64: 256, 128>}, {transform_indices = @transform_1, window_bounds = array<i64: 128, 64>}, {transform_indices = @transform_2, window_bounds = array<i64: 1, 64>}, {transform_indices = @transform_3, window_bounds = array<i64: 256, 64>}]} {
    %c0_i32 = arith.constant 0 : i32
    %0 = arith.cmpi eq, %arg2, %c0_i32 : i32
    %1 = arith.extui %0 : i1 to i32
    %c0_i32_0 = arith.constant 0 : i32
    %2 = arith.cmpi ne, %1, %c0_i32_0 : i32
    scf.if %2 {
      %cst_10 = arith.constant 0.000000e+00 : f32
      %12 = vector.broadcast %cst_10 : f32 to vector<256x64xf32>
      %c0_11 = arith.constant 0 : index
      %c0_12 = arith.constant 0 : index
      %13 = vector.load %arg7[%c0_11, %c0_12] : memref<256x64xf32, #tpu.memory_space<vmem>>, vector<256x64xf32>
      tpu.vector_store %arg7[%c0_11, %c0_12], %12 {strides = array<i32>} : memref<256x64xf32, #tpu.memory_space<vmem>>, vector<256x64xf32>,
    } else {
    }
    %c0 = arith.constant 0 : index
    %c0_1 = arith.constant 0 : index
    %3 = vector.load %arg7[%c0, %c0_1] : memref<256x64xf32, #tpu.memory_space<vmem>>, vector<256x64xf32>
    %c0_2 = arith.constant 0 : index
    %c0_3 = arith.constant 0 : index
    %4 = vector.load %arg3[%c0_2, %c0_3] : memref<256x128xbf16, #tpu.memory_space<vmem>>, vector<256x128xbf16>
    %c0_4 = arith.constant 0 : index
    %c0_5 = arith.constant 0 : index
    %5 = vector.load %arg4[%c0_4, %c0_5] : memref<128x64xbf16, #tpu.memory_space<vmem>>, vector<128x64xbf16>
    %cst = arith.constant dense<0.000000e+00> : vector<256x64xf32>
    %6 = tpu.matmul %4, %5, %cst {dimension_numbers = #tpu.dot_dimension_numbers<[1], [0], [0], [1], [0, 0, 1, 1], [], []>} : vector<256x128xbf16>, vector<128x64xbf16>, vector<256x64xf32> -> vector<256x64xf32>
    %7 = arith.addf %3, %6 : vector<256x64xf32>
    %c0_6 = arith.constant 0 : index
    %c0_7 = arith.constant 0 : index
    %8 = vector.load %arg7[%c0_6, %c0_7] : memref<256x64xf32, #tpu.memory_space<vmem>>, vector<256x64xf32>
    tpu.vector_store %arg7[%c0_6, %c0_7], %7 {strides = array<i32>} : memref<256x64xf32, #tpu.memory_space<vmem>>, vector<256x64xf32>,
    %c0_i32_8 = arith.constant 0 : i32
    %9 = arith.cmpi eq, %arg2, %c0_i32_8 : i32
    %10 = arith.extui %9 : i1 to i32
    %c0_i32_9 = arith.constant 0 : i32
    %11 = arith.cmpi ne, %10, %c0_i32_9 : i32
    scf.if %11 {
      %c0_10 = arith.constant 0 : index
      %c0_11 = arith.constant 0 : index
      %12 = vector.load %arg7[%c0_10, %c0_11] : memref<256x64xf32, #tpu.memory_space<vmem>>, vector<256x64xf32>
      %c0_12 = arith.constant 0 : index
      %c0_13 = arith.constant 0 : index
      %13 = vector.load %arg5[%c0_12, %c0_13] : memref<1x64xf32, #tpu.memory_space<vmem>>, vector<1x64xf32>
      %14 = vector.broadcast %13 : vector<1x64xf32> to vector<256x64xf32>
      %15 = arith.addf %12, %14 : vector<256x64xf32>
      %cst_14 = arith.constant 0.000000e+00 : f32
      %16 = vector.broadcast %cst_14 : f32 to vector<256x64xf32>
      %17 = arith.cmpf oge, %15, %16 : vector<256x64xf32>
      %cst_15 = arith.constant 0.00999999977 : f32
      %18 = vector.broadcast %cst_15 : f32 to vector<256x64xf32>
      %19 = arith.mulf %18, %15 : vector<256x64xf32>
      %20 = arith.select %17, %15, %19 : vector<256x64xi1>, vector<256x64xf32>
      %21 = arith.truncf %20 : vector<256x64xf32> to vector<256x64xbf16>
      %c0_16 = arith.constant 0 : index
      %c0_17 = arith.constant 0 : index
      %22 = vector.load %arg6[%c0_16, %c0_17] : memref<256x64xbf16, #tpu.memory_space<vmem>>, vector<256x64xbf16>
      tpu.vector_store %arg6[%c0_16, %c0_17], %21 {strides = array<i32>} : memref<256x64xbf16, #tpu.memory_space<vmem>>, vector<256x64xbf16>,
    } else {
    }
    return
  }
  func.func @transform_0(%arg0: i32, %arg1: i32, %arg2: i32) -> (i32, i32) {
    %c0_i32 = arith.constant 0 : i32
    return %arg0, %arg2 : i32, i32
  }
  func.func @transform_1(%arg0: i32, %arg1: i32, %arg2: i32) -> (i32, i32) {
    %c0_i32 = arith.constant 0 : i32
    return %arg2, %arg1 : i32, i32
  }
  func.func @transform_2(%arg0: i32, %arg1: i32, %arg2: i32) -> (i32, i32) {
    %c0_i32 = arith.constant 0 : i32
    %c0_i32_0 = arith.constant 0 : i32
    return %c0_i32, %arg1 : i32, i32
  }
  func.func @transform_3(%arg0: i32, %arg1: i32, %arg2: i32) -> (i32, i32) {
    %c0_i32 = arith.constant 0 : i32
    return %arg0, %arg1 : i32, i32
  }
}

module attributes {stable_mosaic.version = 11 : i64} {
  func.func @_mm_bias_act_kernel(%arg0: i32, %arg1: i32, %arg2: i32, %arg3: memref<64x640xbf16, #tpu.memory_space<vmem>>, %arg4: memref<640x128xbf16, #tpu.memory_space<vmem>>, %arg5: memref<1x128xf32, #tpu.memory_space<vmem>>, %arg6: memref<64x128xbf16, #tpu.memory_space<vmem>>, %arg7: memref<64x128xf32, #tpu.memory_space<vmem>>) attributes {dimension_semantics = [#tpu.dimension_semantics<parallel>, #tpu.dimension_semantics<parallel>, #tpu.dimension_semantics<arbitrary>], iteration_bounds = array<i64: 2, 1, 1>, scalar_prefetch = 0 : i64, scratch_operands = 1 : i64, tpu.core_type = #tpu.core_type<tc>, window_params = [{transform_indices = @transform_0, window_bounds = array<i64: 64, 640>}, {transform_indices = @transform_1, window_bounds = array<i64: 640, 128>}, {transform_indices = @transform_2, window_bounds = array<i64: 1, 128>}, {transform_indices = @transform_3, window_bounds = array<i64: 64, 128>}]} {
    %c0_i32 = arith.constant 0 : i32
    %0 = arith.cmpi eq, %arg2, %c0_i32 : i32
    %1 = arith.extui %0 : i1 to i32
    %c0_i32_0 = arith.constant 0 : i32
    %2 = arith.cmpi ne, %1, %c0_i32_0 : i32
    scf.if %2 {
      %cst_10 = arith.constant 0.000000e+00 : f32
      %12 = vector.broadcast %cst_10 : f32 to vector<64x128xf32>
      %c0_11 = arith.constant 0 : index
      %c0_12 = arith.constant 0 : index
      %13 = vector.load %arg7[%c0_11, %c0_12] : memref<64x128xf32, #tpu.memory_space<vmem>>, vector<64x128xf32>
      tpu.vector_store %arg7[%c0_11, %c0_12], %12 {strides = array<i32>} : memref<64x128xf32, #tpu.memory_space<vmem>>, vector<64x128xf32>,
    } else {
    }
    %c0 = arith.constant 0 : index
    %c0_1 = arith.constant 0 : index
    %3 = vector.load %arg7[%c0, %c0_1] : memref<64x128xf32, #tpu.memory_space<vmem>>, vector<64x128xf32>
    %c0_2 = arith.constant 0 : index
    %c0_3 = arith.constant 0 : index
    %4 = vector.load %arg3[%c0_2, %c0_3] : memref<64x640xbf16, #tpu.memory_space<vmem>>, vector<64x640xbf16>
    %c0_4 = arith.constant 0 : index
    %c0_5 = arith.constant 0 : index
    %5 = vector.load %arg4[%c0_4, %c0_5] : memref<640x128xbf16, #tpu.memory_space<vmem>>, vector<640x128xbf16>
    %cst = arith.constant dense<0.000000e+00> : vector<64x128xf32>
    %6 = tpu.matmul %4, %5, %cst {dimension_numbers = #tpu.dot_dimension_numbers<[1], [0], [0], [1], [0, 0, 1, 1], [], []>} : vector<64x640xbf16>, vector<640x128xbf16>, vector<64x128xf32> -> vector<64x128xf32>
    %7 = arith.addf %3, %6 : vector<64x128xf32>
    %c0_6 = arith.constant 0 : index
    %c0_7 = arith.constant 0 : index
    %8 = vector.load %arg7[%c0_6, %c0_7] : memref<64x128xf32, #tpu.memory_space<vmem>>, vector<64x128xf32>
    tpu.vector_store %arg7[%c0_6, %c0_7], %7 {strides = array<i32>} : memref<64x128xf32, #tpu.memory_space<vmem>>, vector<64x128xf32>,
    %c0_i32_8 = arith.constant 0 : i32
    %9 = arith.cmpi eq, %arg2, %c0_i32_8 : i32
    %10 = arith.extui %9 : i1 to i32
    %c0_i32_9 = arith.constant 0 : i32
    %11 = arith.cmpi ne, %10, %c0_i32_9 : i32
    scf.if %11 {
      %c0_10 = arith.constant 0 : index
      %c0_11 = arith.constant 0 : index
      %12 = vector.load %arg7[%c0_10, %c0_11] : memref<64x128xf32, #tpu.memory_space<vmem>>, vector<64x128xf32>
      %c0_12 = arith.constant 0 : index
      %c0_13 = arith.constant 0 : index
      %13 = vector.load %arg5[%c0_12, %c0_13] : memref<1x128xf32, #tpu.memory_space<vmem>>, vector<1x128xf32>
      %14 = vector.broadcast %13 : vector<1x128xf32> to vector<64x128xf32>
      %15 = arith.addf %12, %14 : vector<64x128xf32>
      %cst_14 = arith.constant 0.000000e+00 : f32
      %16 = vector.broadcast %cst_14 : f32 to vector<64x128xf32>
      %17 = arith.cmpf oge, %15, %16 : vector<64x128xf32>
      %cst_15 = arith.constant 0.00999999977 : f32
      %18 = vector.broadcast %cst_15 : f32 to vector<64x128xf32>
      %19 = arith.mulf %18, %15 : vector<64x128xf32>
      %20 = arith.select %17, %15, %19 : vector<64x128xi1>, vector<64x128xf32>
      %21 = arith.truncf %20 : vector<64x128xf32> to vector<64x128xbf16>
      %c0_16 = arith.constant 0 : index
      %c0_17 = arith.constant 0 : index
      %22 = vector.load %arg6[%c0_16, %c0_17] : memref<64x128xbf16, #tpu.memory_space<vmem>>, vector<64x128xbf16>
      tpu.vector_store %arg6[%c0_16, %c0_17], %21 {strides = array<i32>} : memref<64x128xbf16, #tpu.memory_space<vmem>>, vector<64x128xbf16>,
    } else {
    }
    return
  }
  func.func @transform_0(%arg0: i32, %arg1: i32, %arg2: i32) -> (i32, i32) {
    %c0_i32 = arith.constant 0 : i32
    return %arg0, %arg2 : i32, i32
  }
  func.func @transform_1(%arg0: i32, %arg1: i32, %arg2: i32) -> (i32, i32) {
    %c0_i32 = arith.constant 0 : i32
    return %arg2, %arg1 : i32, i32
  }
  func.func @transform_2(%arg0: i32, %arg1: i32, %arg2: i32) -> (i32, i32) {
    %c0_i32 = arith.constant 0 : i32
    %c0_i32_0 = arith.constant 0 : i32
    return %c0_i32, %arg1 : i32, i32
  }
  func.func @transform_3(%arg0: i32, %arg1: i32, %arg2: i32) -> (i32, i32) {
    %c0_i32 = arith.constant 0 : i32
    return %arg0, %arg1 : i32, i32
  }
}

module attributes {stable_mosaic.version = 11 : i64} {
  func.func @_mm_bias_act_kernel(%arg0: i32, %arg1: i32, %arg2: i32, %arg3: memref<128x1152xbf16, #tpu.memory_space<vmem>>, %arg4: memref<1152x128xbf16, #tpu.memory_space<vmem>>, %arg5: memref<1x128xf32, #tpu.memory_space<vmem>>, %arg6: memref<128x128xbf16, #tpu.memory_space<vmem>>, %arg7: memref<128x128xf32, #tpu.memory_space<vmem>>) attributes {dimension_semantics = [#tpu.dimension_semantics<parallel>, #tpu.dimension_semantics<parallel>, #tpu.dimension_semantics<arbitrary>], iteration_bounds = array<i64: 1, 2, 1>, scalar_prefetch = 0 : i64, scratch_operands = 1 : i64, tpu.core_type = #tpu.core_type<tc>, window_params = [{transform_indices = @transform_0, window_bounds = array<i64: 128, 1152>}, {transform_indices = @transform_1, window_bounds = array<i64: 1152, 128>}, {transform_indices = @transform_2, window_bounds = array<i64: 1, 128>}, {transform_indices = @transform_3, window_bounds = array<i64: 128, 128>}]} {
    %c0_i32 = arith.constant 0 : i32
    %0 = arith.cmpi eq, %arg2, %c0_i32 : i32
    %1 = arith.extui %0 : i1 to i32
    %c0_i32_0 = arith.constant 0 : i32
    %2 = arith.cmpi ne, %1, %c0_i32_0 : i32
    scf.if %2 {
      %cst_10 = arith.constant 0.000000e+00 : f32
      %12 = vector.broadcast %cst_10 : f32 to vector<128x128xf32>
      %c0_11 = arith.constant 0 : index
      %c0_12 = arith.constant 0 : index
      %13 = vector.load %arg7[%c0_11, %c0_12] : memref<128x128xf32, #tpu.memory_space<vmem>>, vector<128x128xf32>
      tpu.vector_store %arg7[%c0_11, %c0_12], %12 {strides = array<i32>} : memref<128x128xf32, #tpu.memory_space<vmem>>, vector<128x128xf32>,
    } else {
    }
    %c0 = arith.constant 0 : index
    %c0_1 = arith.constant 0 : index
    %3 = vector.load %arg7[%c0, %c0_1] : memref<128x128xf32, #tpu.memory_space<vmem>>, vector<128x128xf32>
    %c0_2 = arith.constant 0 : index
    %c0_3 = arith.constant 0 : index
    %4 = vector.load %arg3[%c0_2, %c0_3] : memref<128x1152xbf16, #tpu.memory_space<vmem>>, vector<128x1152xbf16>
    %c0_4 = arith.constant 0 : index
    %c0_5 = arith.constant 0 : index
    %5 = vector.load %arg4[%c0_4, %c0_5] : memref<1152x128xbf16, #tpu.memory_space<vmem>>, vector<1152x128xbf16>
    %cst = arith.constant dense<0.000000e+00> : vector<128x128xf32>
    %6 = tpu.matmul %4, %5, %cst {dimension_numbers = #tpu.dot_dimension_numbers<[1], [0], [0], [1], [0, 0, 1, 1], [], []>} : vector<128x1152xbf16>, vector<1152x128xbf16>, vector<128x128xf32> -> vector<128x128xf32>
    %7 = arith.addf %3, %6 : vector<128x128xf32>
    %c0_6 = arith.constant 0 : index
    %c0_7 = arith.constant 0 : index
    %8 = vector.load %arg7[%c0_6, %c0_7] : memref<128x128xf32, #tpu.memory_space<vmem>>, vector<128x128xf32>
    tpu.vector_store %arg7[%c0_6, %c0_7], %7 {strides = array<i32>} : memref<128x128xf32, #tpu.memory_space<vmem>>, vector<128x128xf32>,
    %c0_i32_8 = arith.constant 0 : i32
    %9 = arith.cmpi eq, %arg2, %c0_i32_8 : i32
    %10 = arith.extui %9 : i1 to i32
    %c0_i32_9 = arith.constant 0 : i32
    %11 = arith.cmpi ne, %10, %c0_i32_9 : i32
    scf.if %11 {
      %c0_10 = arith.constant 0 : index
      %c0_11 = arith.constant 0 : index
      %12 = vector.load %arg7[%c0_10, %c0_11] : memref<128x128xf32, #tpu.memory_space<vmem>>, vector<128x128xf32>
      %c0_12 = arith.constant 0 : index
      %c0_13 = arith.constant 0 : index
      %13 = vector.load %arg5[%c0_12, %c0_13] : memref<1x128xf32, #tpu.memory_space<vmem>>, vector<1x128xf32>
      %14 = vector.broadcast %13 : vector<1x128xf32> to vector<128x128xf32>
      %15 = arith.addf %12, %14 : vector<128x128xf32>
      %cst_14 = arith.constant 0.000000e+00 : f32
      %16 = vector.broadcast %cst_14 : f32 to vector<128x128xf32>
      %17 = arith.cmpf oge, %15, %16 : vector<128x128xf32>
      %cst_15 = arith.constant 0.00999999977 : f32
      %18 = vector.broadcast %cst_15 : f32 to vector<128x128xf32>
      %19 = arith.mulf %18, %15 : vector<128x128xf32>
      %20 = arith.select %17, %15, %19 : vector<128x128xi1>, vector<128x128xf32>
      %21 = arith.truncf %20 : vector<128x128xf32> to vector<128x128xbf16>
      %c0_16 = arith.constant 0 : index
      %c0_17 = arith.constant 0 : index
      %22 = vector.load %arg6[%c0_16, %c0_17] : memref<128x128xbf16, #tpu.memory_space<vmem>>, vector<128x128xbf16>
      tpu.vector_store %arg6[%c0_16, %c0_17], %21 {strides = array<i32>} : memref<128x128xbf16, #tpu.memory_space<vmem>>, vector<128x128xbf16>,
    } else {
    }
    return
  }
  func.func @transform_0(%arg0: i32, %arg1: i32, %arg2: i32) -> (i32, i32) {
    %c0_i32 = arith.constant 0 : i32
    return %arg0, %arg2 : i32, i32
  }
  func.func @transform_1(%arg0: i32, %arg1: i32, %arg2: i32) -> (i32, i32) {
    %c0_i32 = arith.constant 0 : i32
    return %arg2, %arg1 : i32, i32
  }
  func.func @transform_2(%arg0: i32, %arg1: i32, %arg2: i32) -> (i32, i32) {
    %c0_i32 = arith.constant 0 : i32
    %c0_i32_0 = arith.constant 0 : i32
    return %c0_i32, %arg1 : i32, i32
  }
  func.func @transform_3(%arg0: i32, %arg1: i32, %arg2: i32) -> (i32, i32) {
    %c0_i32 = arith.constant 0 : i32
    return %arg0, %arg1 : i32, i32
  }
}

module attributes {stable_mosaic.version = 11 : i64} {
  func.func @_mm_bias_act_kernel(%arg0: i32, %arg1: i32, %arg2: i32, %arg3: memref<8x4096xbf16, #tpu.memory_space<vmem>>, %arg4: memref<4096x32xbf16, #tpu.memory_space<vmem>>, %arg5: memref<1x32xf32, #tpu.memory_space<vmem>>, %arg6: memref<8x32xf32, #tpu.memory_space<vmem>>, %arg7: memref<8x32xf32, #tpu.memory_space<vmem>>) attributes {dimension_semantics = [#tpu.dimension_semantics<parallel>, #tpu.dimension_semantics<parallel>, #tpu.dimension_semantics<arbitrary>], iteration_bounds = array<i64: 1, 1, 4>, scalar_prefetch = 0 : i64, scratch_operands = 1 : i64, tpu.core_type = #tpu.core_type<tc>, window_params = [{transform_indices = @transform_0, window_bounds = array<i64: 8, 4096>}, {transform_indices = @transform_1, window_bounds = array<i64: 4096, 32>}, {transform_indices = @transform_2, window_bounds = array<i64: 1, 32>}, {transform_indices = @transform_3, window_bounds = array<i64: 8, 32>}]} {
    %c0_i32 = arith.constant 0 : i32
    %0 = arith.cmpi eq, %arg2, %c0_i32 : i32
    %1 = arith.extui %0 : i1 to i32
    %c0_i32_0 = arith.constant 0 : i32
    %2 = arith.cmpi ne, %1, %c0_i32_0 : i32
    scf.if %2 {
      %cst_9 = arith.constant 0.000000e+00 : f32
      %12 = vector.broadcast %cst_9 : f32 to vector<8x32xf32>
      %c0_10 = arith.constant 0 : index
      %c0_11 = arith.constant 0 : index
      %13 = vector.load %arg7[%c0_10, %c0_11] : memref<8x32xf32, #tpu.memory_space<vmem>>, vector<8x32xf32>
      tpu.vector_store %arg7[%c0_10, %c0_11], %12 {strides = array<i32>} : memref<8x32xf32, #tpu.memory_space<vmem>>, vector<8x32xf32>,
    } else {
    }
    %c0 = arith.constant 0 : index
    %c0_1 = arith.constant 0 : index
    %3 = vector.load %arg7[%c0, %c0_1] : memref<8x32xf32, #tpu.memory_space<vmem>>, vector<8x32xf32>
    %c0_2 = arith.constant 0 : index
    %c0_3 = arith.constant 0 : index
    %4 = vector.load %arg3[%c0_2, %c0_3] : memref<8x4096xbf16, #tpu.memory_space<vmem>>, vector<8x4096xbf16>
    %c0_4 = arith.constant 0 : index
    %c0_5 = arith.constant 0 : index
    %5 = vector.load %arg4[%c0_4, %c0_5] : memref<4096x32xbf16, #tpu.memory_space<vmem>>, vector<4096x32xbf16>
    %cst = arith.constant dense<0.000000e+00> : vector<8x32xf32>
    %6 = tpu.matmul %4, %5, %cst {dimension_numbers = #tpu.dot_dimension_numbers<[1], [0], [0], [1], [0, 0, 1, 1], [], []>} : vector<8x4096xbf16>, vector<4096x32xbf16>, vector<8x32xf32> -> vector<8x32xf32>
    %7 = arith.addf %3, %6 : vector<8x32xf32>
    %c0_6 = arith.constant 0 : index
    %c0_7 = arith.constant 0 : index
    %8 = vector.load %arg7[%c0_6, %c0_7] : memref<8x32xf32, #tpu.memory_space<vmem>>, vector<8x32xf32>
    tpu.vector_store %arg7[%c0_6, %c0_7], %7 {strides = array<i32>} : memref<8x32xf32, #tpu.memory_space<vmem>>, vector<8x32xf32>,
    %c3_i32 = arith.constant 3 : i32
    %9 = arith.cmpi eq, %arg2, %c3_i32 : i32
    %10 = arith.extui %9 : i1 to i32
    %c0_i32_8 = arith.constant 0 : i32
    %11 = arith.cmpi ne, %10, %c0_i32_8 : i32
    scf.if %11 {
      %c0_9 = arith.constant 0 : index
      %c0_10 = arith.constant 0 : index
      %12 = vector.load %arg7[%c0_9, %c0_10] : memref<8x32xf32, #tpu.memory_space<vmem>>, vector<8x32xf32>
      %c0_11 = arith.constant 0 : index
      %c0_12 = arith.constant 0 : index
      %13 = vector.load %arg5[%c0_11, %c0_12] : memref<1x32xf32, #tpu.memory_space<vmem>>, vector<1x32xf32>
      %14 = vector.broadcast %13 : vector<1x32xf32> to vector<8x32xf32>
      %15 = arith.addf %12, %14 : vector<8x32xf32>
      %c0_13 = arith.constant 0 : index
      %c0_14 = arith.constant 0 : index
      %16 = vector.load %arg6[%c0_13, %c0_14] : memref<8x32xf32, #tpu.memory_space<vmem>>, vector<8x32xf32>
      tpu.vector_store %arg6[%c0_13, %c0_14], %15 {strides = array<i32>} : memref<8x32xf32, #tpu.memory_space<vmem>>, vector<8x32xf32>,
    } else {
    }
    return
  }
  func.func @transform_0(%arg0: i32, %arg1: i32, %arg2: i32) -> (i32, i32) {
    %c0_i32 = arith.constant 0 : i32
    return %arg0, %arg2 : i32, i32
  }
  func.func @transform_1(%arg0: i32, %arg1: i32, %arg2: i32) -> (i32, i32) {
    %c0_i32 = arith.constant 0 : i32
    return %arg2, %arg1 : i32, i32
  }
  func.func @transform_2(%arg0: i32, %arg1: i32, %arg2: i32) -> (i32, i32) {
    %c0_i32 = arith.constant 0 : i32
    %c0_i32_0 = arith.constant 0 : i32
    return %c0_i32, %arg1 : i32, i32
  }
  func.func @transform_3(%arg0: i32, %arg1: i32, %arg2: i32) -> (i32, i32) {
    %c0_i32 = arith.constant 0 : i32
    return %arg0, %arg1 : i32, i32
  }
}

</mosaic_0001>

<llo_original>
// kernel: descriptor_cifar_forward.4
$region0: #{descriptor_cifar_forward.4}
  #allocation0 [shape = 'u32[]', space=smem, size = 0x4, offset = 0x4, fixed_abs, tag = 'smem constant byte address 0x4 - core index']
  #allocation1 [shape = 'u32[144,128]{1,0:T(1,128)}', space=vmem, size = 0x12000, scoped, tag = 'internal scratch']
  #allocation2 [shape = 'f32[256,64]{1,0:T(8,128)}', space=vmem, size = 0x20000, scoped, tag = 'scratch operand']
  %s0 = inlined_call_operand.vmem [shape: bf16[512,128], index: 0, kind: input, shape index: {}]
  %s1 = inlined_call_operand.vmem [shape: bf16[128,64], index: 1, kind: input, shape index: {}]
  %s2 = inlined_call_operand.vmem [shape: f32[1,64], index: 2, kind: input, shape index: {}]
  %s3 = inlined_call_operand.vmem [shape: bf16[512,64], index: 3, kind: output, shape index: {}]
  %s4 = sld [smem:[#allocation0]]
  $region53: #{descriptor_cifar_forward.4} parent=0
    _
  %s6 = ssub.s32 1, %s4
  %s7 = scalar_select 0, %s6, %s4
  loop: start=0, step=1, limit=4
  $region2: #{descriptor_cifar_forward.4} parent=0 // loop_pre_header
    _
  $region3: #{descriptor_cifar_forward.4} parent=0 // loop_header
    %s9 = sphi 0, %s13
    %p10 = scmp.ge.s32.totalorder %s9, 4
    %s16 = sphi 0, %s35
    %s17 = sphi 0, %s31
    %s18 = sphi 0, %s27
    %s19 = sphi 0, %s16
    %s20 = sphi 0, %s17
    %s21 = sphi 0, %s18
    %s22 = sphi 0, %s19
    %s23 = sphi 0, %s20
    %s24 = sphi 0, %s21
    %s40 = sphi 0, %s42
    %s43 = sphi 0, %s40
    %s44 = sphi 0, %s43
    %s60 = sphi 0, %s44
    %s68 = sphi 0, %s70
    %s71 = sphi 0, %s68
    %s72 = sphi 0, %s71
    %s88 = sphi 0, %s72
    %s94 = sphi 0, %s96
    %s97 = sphi 0, %s94
    %s98 = sphi 0, %s97
    %s114 = sphi 0, %s98
    %s122 = sphi 0, %s124
    %s125 = sphi 0, %s122
    %s126 = sphi 0, %s125
    %s142 = sphi 0, %s126
  $region4: #{descriptor_cifar_forward.4} parent=0 // loop_header_branch
    %12 = sbr.rel (%p10) target = $region8
  $region5: #{descriptor_cifar_forward.4} parent=0 // loop_body
    %s14 = ssub.s32 %s9, 1
    %s15 = ssub.s32 %s9, 2
    %s25 = sadd.s32 1, %s18
    %p26 = scmp.ge.s32.totalorder %s25, 1
    %s27 = scalar_select %p26, 0, %s25
    %s28 = sadd.s32 1, %s17
    %s29 = scalar_select %p26, %s28, %s17
    %p30 = scmp.ge.s32.totalorder %s29, 1
    %s31 = scalar_select %p30, 0, %s29
    %s32 = sadd.s32 1, %s16
    %s33 = scalar_select %p30, %s32, %s16
    %p34 = scmp.ge.s32.totalorder %s33, 2
    %s35 = scalar_select %p34, 0, %s33
    %s36 = ssub.s32 %s16, %s35
    %s37 = ssub.s32 %s18, %s27
    %s38 = sor.u32 %s36, %s37
    %p39 = scmp.eq.s32.totalorder %s38, 0
    %s41 = sadd.s32 %s40, 1
    %s42 = scalar_select %p39, %s40, %s41
    %p45 = pneg %p39
    %p46 = scmp.eq.s32.totalorder %s9, 1
    %p47 = por %p45, %p46
    %p48 = scmp.ne.s32.totalorder %s40, %s43
    %p49 = scmp.eq.s32.totalorder %s9, 0
    %p50 = por %p48, %p49
    %p51 = scmp.ne.s32.totalorder %s40, %s43
    %p52 = scmp.eq.s32.totalorder %s14, 1
    %p53 = por %p51, %p52
    %p54 = scmp.ne.s32.totalorder %s43, %s44
    %p55 = scmp.eq.s32.totalorder %s14, 0
    %p56 = por %p54, %p55
    %p57 = scmp.ne.s32.totalorder %s43, %s44
    %p58 = scmp.eq.s32.totalorder %s15, 1
    %p59 = por %p57, %p58
    %p61 = scmp.ne.s32.totalorder %s44, %s60
    %p62 = scmp.eq.s32.totalorder %s15, 0
    %p63 = por %p61, %p62
    %s64 = ssub.s32 %s18, %s27
    %s65 = ssub.s32 %s17, %s31
    %s66 = sor.u32 %s64, %s65
    %p67 = scmp.eq.s32.totalorder %s66, 0
    %s69 = sadd.s32 %s68, 1
    %s70 = scalar_select %p67, %s68, %s69
    %p73 = pneg %p67
    %p74 = scmp.eq.s32.totalorder %s9, 1
    %p75 = por %p73, %p74
    %p76 = scmp.ne.s32.totalorder %s68, %s71
    %p77 = scmp.eq.s32.totalorder %s9, 0
    %p78 = por %p76, %p77
    %p79 = scmp.ne.s32.totalorder %s68, %s71
    %p80 = scmp.eq.s32.totalorder %s14, 1
    %p81 = por %p79, %p80
    %p82 = scmp.ne.s32.totalorder %s71, %s72
    %p83 = scmp.eq.s32.totalorder %s14, 0
    %p84 = por %p82, %p83
    %p85 = scmp.ne.s32.totalorder %s71, %s72
    %p86 = scmp.eq.s32.totalorder %s15, 1
    %p87 = por %p85, %p86
    %p89 = scmp.ne.s32.totalorder %s72, %s88
    %p90 = scmp.eq.s32.totalorder %s15, 0
    %p91 = por %p89, %p90
    %s92 = ssub.s32 %s17, %s31
    %p93 = scmp.eq.s32.totalorder %s92, 0
    %s95 = sadd.s32 %s94, 1
    %s96 = scalar_select %p93, %s94, %s95
    %p99 = pneg %p93
    %p100 = scmp.eq.s32.totalorder %s9, 1
    %p101 = por %p99, %p100
    %p102 = scmp.ne.s32.totalorder %s94, %s97
    %p103 = scmp.eq.s32.totalorder %s9, 0
    %p104 = por %p102, %p103
    %p105 = scmp.ne.s32.totalorder %s94, %s97
    %p106 = scmp.eq.s32.totalorder %s14, 1
    %p107 = por %p105, %p106
    %p108 = scmp.ne.s32.totalorder %s97, %s98
    %p109 = scmp.eq.s32.totalorder %s14, 0
    %p110 = por %p108, %p109
    %p111 = scmp.ne.s32.totalorder %s97, %s98
    %p112 = scmp.eq.s32.totalorder %s15, 1
    %p113 = por %p111, %p112
    %p115 = scmp.ne.s32.totalorder %s98, %s114
    %p116 = scmp.eq.s32.totalorder %s15, 0
    %p117 = por %p115, %p116
    %s118 = ssub.s32 %s16, %s35
    %s119 = ssub.s32 %s17, %s31
    %s120 = sor.u32 %s118, %s119
    %p121 = scmp.eq.s32.totalorder %s120, 0
    %s123 = sadd.s32 %s122, 1
    %s124 = scalar_select %p121, %s122, %s123
    %p127 = pneg %p121
    %p128 = scmp.eq.s32.totalorder %s9, 1
    %p129 = por %p127, %p128
    %p130 = scmp.ne.s32.totalorder %s122, %s125
    %p131 = scmp.eq.s32.totalorder %s9, 0
    %p132 = por %p130, %p131
    %p133 = scmp.ne.s32.totalorder %s122, %s125
    %p134 = scmp.eq.s32.totalorder %s14, 1
    %p135 = por %p133, %p134
    %p136 = scmp.ne.s32.totalorder %s125, %s126
    %p137 = scmp.eq.s32.totalorder %s14, 0
    %p138 = por %p136, %p137
    %p139 = scmp.ne.s32.totalorder %s125, %s126
    %p140 = scmp.eq.s32.totalorder %s15, 1
    %p141 = por %p139, %p140
    %p143 = scmp.ne.s32.totalorder %s126, %s142
    %p144 = scmp.eq.s32.totalorder %s15, 0
    %p145 = por %p143, %p144
    %p146 = scmp.le.s32.totalorder 1, %s9
    %p147 = scmp.lt.s32.totalorder %s9, 3
    %p148 = pnand %p146, %p147
    %p149 = pneg %p148
    // Predicated region
    $region9: #{descriptor_cifar_forward.4} parent=5 // pred_check
      _
    $region10: #{descriptor_cifar_forward.4} parent=5 // pred_check_branch
      %151 = sbr.rel (%p148) target = $region12
    $region11: #{descriptor_cifar_forward.4} parent=5 // pred_region
      %s152 = ssub.s32 %s9, 1
      // Predicated region
      $region13: #{descriptor_cifar_forward.4} parent=11 // pred_check
        %p153 = pneg %p84
      $region14: #{descriptor_cifar_forward.4} parent=11 // pred_check_branch
        %155 = sbr.rel (%p153) target = $region16
      $region15: #{descriptor_cifar_forward.4} parent=11 // pred_region
        %s156 = smul.u32 16, %s21
        %p157 = scmp.lt.s32.totalorder %s156, 15
        %s158 = scalar_select %p157, %s156, 15
        %p159 = scmp.lt.s32.totalorder %s20, 0
        %s160 = scalar_select %p159, %s20, 0
        %s161 = sadd.s32 %s160, %s158
        %s162 = smul.addr %s161, 4
        %s163 = scalar_lea.vmem %s1, %s162
        %s164 = smul.u32 16, %s21
      $region16: #{descriptor_cifar_forward.4} parent=11 // pred_fallthru
        _
      // Predicated region
      $region17: #{descriptor_cifar_forward.4} parent=11 // pred_check
        %p165 = pneg %p110
      $region18: #{descriptor_cifar_forward.4} parent=11 // pred_check_branch
        %167 = sbr.rel (%p165) target = $region20
      $region19: #{descriptor_cifar_forward.4} parent=11 // pred_region
        %p168 = scmp.lt.s32.totalorder %s20, 0
        %s169 = scalar_select %p168, %s20, 0
        %s170 = scalar_lea.vmem %s2, %s169
      $region20: #{descriptor_cifar_forward.4} parent=11 // pred_fallthru
        _
    $region12: #{descriptor_cifar_forward.4} parent=5 // pred_fallthru
      _
    %p171 = scmp.lt.s32.totalorder %s9, 2
    // Predicated region
    $region21: #{descriptor_cifar_forward.4} parent=5 // pred_check
      %p172 = pneg %p171
    $region22: #{descriptor_cifar_forward.4} parent=5 // pred_check_branch
      %174 = sbr.rel (%p172) target = $region24
    $region23: #{descriptor_cifar_forward.4} parent=5 // pred_region
      // Predicated region
      $region25: #{descriptor_cifar_forward.4} parent=23 // pred_check
        %p175 = pneg %p50
      $region26: #{descriptor_cifar_forward.4} parent=23 // pred_check_branch
        %177 = sbr.rel (%p175) target = $region28
      $region27: #{descriptor_cifar_forward.4} parent=23 // pred_region
        %s178 = smul.u32 32, %s16
        %p179 = scmp.lt.s32.totalorder %s178, 63
        %s180 = scalar_select %p179, %s178, 63
        %p181 = scmp.lt.s32.totalorder %s18, 0
        %s182 = scalar_select %p181, %s18, 0
        %s183 = sadd.s32 %s182, %s180
        %s184 = smul.addr %s183, 4
        %s185 = scalar_lea.vmem %s0, %s184
        %s186 = smul.u32 32, %s16
      $region28: #{descriptor_cifar_forward.4} parent=23 // pred_fallthru
        _
    $region24: #{descriptor_cifar_forward.4} parent=5 // pred_fallthru
      _
    %p187 = scmp.le.s32.totalorder 1, %s9
    %p188 = scmp.lt.s32.totalorder %s9, 3
    %p189 = pnand %p187, %p188
    %p190 = pneg %p189
    // Predicated region
    $region29: #{descriptor_cifar_forward.4} parent=5 // pred_check
      _
    $region30: #{descriptor_cifar_forward.4} parent=5 // pred_check_branch
      %192 = sbr.rel (%p189) target = $region32
    $region31: #{descriptor_cifar_forward.4} parent=5 // pred_region
      %s193 = ssub.s32 %s9, 1
      %s194 = smul.u32 32, %s19
      %p195 = scmp.lt.s32.totalorder %s194, 63
      %s196 = scalar_select %p195, %s194, 63
      %p197 = scmp.lt.s32.totalorder %s21, 0
      %s198 = scalar_select %p197, %s21, 0
      %s199 = sadd.s32 %s198, %s196
      %s200 = smul.addr %s199, 4
      %s201 = scalar_lea.vmem %s0, %s200
      %p202 = pneg %p56
      %p203 = pneg %p53
      %s204 = smul.u32 16, %s21
      %p205 = scmp.lt.s32.totalorder %s204, 15
      %s206 = scalar_select %p205, %s204, 15
      %p207 = scmp.lt.s32.totalorder %s20, 0
      %s208 = scalar_select %p207, %s20, 0
      %s209 = sadd.s32 %s208, %s206
      %s210 = smul.addr %s209, 4
      %s211 = scalar_lea.vmem %s1, %s210
      %p212 = pneg %p84
      %p213 = pneg %p81
      %p214 = scmp.lt.s32.totalorder %s20, 0
      %s215 = scalar_select %p214, %s20, 0
      %s216 = scalar_lea.vmem %s2, %s215
      %p217 = pneg %p110
      %p218 = pneg %p107
      %p219 = pneg %p138
      %p220 = pneg %p135
      %s221 = smul.u32 32, %s19
      %p222 = scmp.lt.s32.totalorder %s221, 63
      %s223 = scalar_select %p222, %s221, 63
      %p224 = scmp.lt.s32.totalorder %s20, 0
      %s225 = scalar_select %p224, %s20, 0
      %s226 = sadd.s32 %s225, %s223
      %s227 = smul.addr %s226, 4
      %s228 = scalar_lea.vmem %s3, %s227
      %s229 = smul.u32 32, %s19
      %p230 = scmp.lt.s32.totalorder %s229, 63
      %s231 = scalar_select %p230, %s229, 63
      %p232 = scmp.lt.s32.totalorder %s21, 0
      %s233 = scalar_select %p232, %s21, 0
      %s234 = sadd.s32 %s233, %s231
      %s235 = smul.addr %s234, 4
      %s236 = scalar_lea.vmem %s0, %s235
      %s237 = smul.u32 32, %s19
      %s238 = smul.u32 16, %s21
      %p239 = scmp.lt.s32.totalorder %s238, 15
      %s240 = scalar_select %p239, %s238, 15
      %p241 = scmp.lt.s32.totalorder %s20, 0
      %s242 = scalar_select %p241, %s20, 0
      %s243 = sadd.s32 %s242, %s240
      %s244 = smul.addr %s243, 4
      %s245 = scalar_lea.vmem %s1, %s244
      %s246 = smul.u32 16, %s21
      %p247 = scmp.lt.s32.totalorder %s20, 0
      %s248 = scalar_select %p247, %s20, 0
      %s249 = scalar_lea.vmem %s2, %s248
      %s250 = smul.u32 32, %s19
      %p251 = scmp.lt.s32.totalorder %s250, 63
      %s252 = scalar_select %p251, %s250, 63
      %p253 = scmp.lt.s32.totalorder %s20, 0
      %s254 = scalar_select %p253, %s20, 0
      %s255 = sadd.s32 %s254, %s252
      %s256 = smul.addr %s255, 4
      %s257 = scalar_lea.vmem %s3, %s256
      %s258 = smul.u32 32, %s19
      %p260 = scmp.eq.s32.totalorder %s21, 0
      // Predicated region
      $region33: #{descriptor_cifar_forward.4} parent=31 // pred_check
        %p261 = pneg %p260
      $region34: #{descriptor_cifar_forward.4} parent=31 // pred_check_branch
        %263 = sbr.rel (%p261) target = $region36
      $region35: #{descriptor_cifar_forward.4} parent=31 // pred_region
        %vm264 = vcmask 523264
        %265 = vst.msk [vmem:[#allocation2] sm:$0xff] %vm264, 0.0
        %266 = vst.msk [vmem:[#allocation2 + $0x8] sm:$0xff] %vm264, 0.0
        %267 = vst.msk [vmem:[#allocation2 + $0x10] sm:$0xff] %vm264, 0.0
        %268 = vst.msk [vmem:[#allocation2 + $0x18] sm:$0xff] %vm264, 0.0
        %269 = vst.msk [vmem:[#allocation2 + $0x20] sm:$0xff] %vm264, 0.0
        %270 = vst.msk [vmem:[#allocation2 + $0x28] sm:$0xff] %vm264, 0.0
        %271 = vst.msk [vmem:[#allocation2 + $0x30] sm:$0xff] %vm264, 0.0
        %272 = vst.msk [vmem:[#allocation2 + $0x38] sm:$0xff] %vm264, 0.0
        %273 = vst.msk [vmem:[#allocation2 + $0x40] sm:$0xff] %vm264, 0.0
        %274 = vst.msk [vmem:[#allocation2 + $0x48] sm:$0xff] %vm264, 0.0
        %275 = vst.msk [vmem:[#allocation2 + $0x50] sm:$0xff] %vm264, 0.0
        %276 = vst.msk [vmem:[#allocation2 + $0x58] sm:$0xff] %vm264, 0.0
        %277 = vst.msk [vmem:[#allocation2 + $0x60] sm:$0xff] %vm264, 0.0
        %278 = vst.msk [vmem:[#allocation2 + $0x68] sm:$0xff] %vm264, 0.0
        %279 = vst.msk [vmem:[#allocation2 + $0x70] sm:$0xff] %vm264, 0.0
        %280 = vst.msk [vmem:[#allocation2 + $0x78] sm:$0xff] %vm264, 0.0
        %281 = vst.msk [vmem:[#allocation2 + $0x80] sm:$0xff] %vm264, 0.0
        %282 = vst.msk [vmem:[#allocation2 + $0x88] sm:$0xff] %vm264, 0.0
        %283 = vst.msk [vmem:[#allocation2 + $0x90] sm:$0xff] %vm264, 0.0
        %284 = vst.msk [vmem:[#allocation2 + $0x98] sm:$0xff] %vm264, 0.0
        %285 = vst.msk [vmem:[#allocation2 + $0xa0] sm:$0xff] %vm264, 0.0
        %286 = vst.msk [vmem:[#allocation2 + $0xa8] sm:$0xff] %vm264, 0.0
        %287 = vst.msk [vmem:[#allocation2 + $0xb0] sm:$0xff] %vm264, 0.0
        %288 = vst.msk [vmem:[#allocation2 + $0xb8] sm:$0xff] %vm264, 0.0
        %289 = vst.msk [vmem:[#allocation2 + $0xc0] sm:$0xff] %vm264, 0.0
        %290 = vst.msk [vmem:[#allocation2 + $0xc8] sm:$0xff] %vm264, 0.0
        %291 = vst.msk [vmem:[#allocation2 + $0xd0] sm:$0xff] %vm264, 0.0
        %292 = vst.msk [vmem:[#allocation2 + $0xd8] sm:$0xff] %vm264, 0.0
        %293 = vst.msk [vmem:[#allocation2 + $0xe0] sm:$0xff] %vm264, 0.0
        %294 = vst.msk [vmem:[#allocation2 + $0xe8] sm:$0xff] %vm264, 0.0
        %295 = vst.msk [vmem:[#allocation2 + $0xf0] sm:$0xff] %vm264, 0.0
        %296 = vst.msk [vmem:[#allocation2 + $0xf8] sm:$0xff] %vm264, 0.0
      $region36: #{descriptor_cifar_forward.4} parent=31 // pred_fallthru
        _
      %v297 = vld [vmem:[#allocation2] sm:$0xff]
      %v298 = vld [vmem:[#allocation2 + $0x8] sm:$0xff]
      %v299 = vld [vmem:[#allocation2 + $0x10] sm:$0xff]
      %v300 = vld [vmem:[#allocation2 + $0x18] sm:$0xff]
      %v301 = vld [vmem:[#allocation2 + $0x20] sm:$0xff]
      %v302 = vld [vmem:[#allocation2 + $0x28] sm:$0xff]
      %v303 = vld [vmem:[#allocation2 + $0x30] sm:$0xff]
      %v304 = vld [vmem:[#allocation2 + $0x38] sm:$0xff]
      %v305 = vld [vmem:[#allocation2 + $0x40] sm:$0xff]
      %v306 = vld [vmem:[#allocation2 + $0x48] sm:$0xff]
      %v307 = vld [vmem:[#allocation2 + $0x50] sm:$0xff]
      %v308 = vld [vmem:[#allocation2 + $0x58] sm:$0xff]
      %v309 = vld [vmem:[#allocation2 + $0x60] sm:$0xff]
      %v310 = vld [vmem:[#allocation2 + $0x68] sm:$0xff]
      %v311 = vld [vmem:[#allocation2 + $0x70] sm:$0xff]
      %v312 = vld [vmem:[#allocation2 + $0x78] sm:$0xff]
      %v313 = vld [vmem:[#allocation2 + $0x80] sm:$0xff]
      %v314 = vld [vmem:[#allocation2 + $0x88] sm:$0xff]
      %v315 = vld [vmem:[#allocation2 + $0x90] sm:$0xff]
      %v316 = vld [vmem:[#allocation2 + $0x98] sm:$0xff]
      %v317 = vld [vmem:[#allocation2 + $0xa0] sm:$0xff]
      %v318 = vld [vmem:[#allocation2 + $0xa8] sm:$0xff]
      %v319 = vld [vmem:[#allocation2 + $0xb0] sm:$0xff]
      %v320 = vld [vmem:[#allocation2 + $0xb8] sm:$0xff]
      %v321 = vld [vmem:[#allocation2 + $0xc0] sm:$0xff]
      %v322 = vld [vmem:[#allocation2 + $0xc8] sm:$0xff]
      %v323 = vld [vmem:[#allocation2 + $0xd0] sm:$0xff]
      %v324 = vld [vmem:[#allocation2 + $0xd8] sm:$0xff]
      %v325 = vld [vmem:[#allocation2 + $0xe0] sm:$0xff]
      %v326 = vld [vmem:[#allocation2 + $0xe8] sm:$0xff]
      %v327 = vld [vmem:[#allocation2 + $0xf0] sm:$0xff]
      %v328 = vld [vmem:[#allocation2 + $0xf8] sm:$0xff]
      %v329 = vld [vmem:[%s236] sm:$0xf]
      %v330 = vld [vmem:[%s236 + $0x4] sm:$0xf]
      %v331 = vld [vmem:[%s236 + $0x8] sm:$0xf]
      %v332 = vld [vmem:[%s236 + $0xc] sm:$0xf]
      %v333 = vld [vmem:[%s236 + $0x10] sm:$0xf]
      %v334 = vld [vmem:[%s236 + $0x14] sm:$0xf]
      %v335 = vld [vmem:[%s236 + $0x18] sm:$0xf]
      %v336 = vld [vmem:[%s236 + $0x1c] sm:$0xf]
      %v337 = vld [vmem:[%s236 + $0x20] sm:$0xf]
      %v338 = vld [vmem:[%s236 + $0x24] sm:$0xf]
      %v339 = vld [vmem:[%s236 + $0x28] sm:$0xf]
      %v340 = vld [vmem:[%s236 + $0x2c] sm:$0xf]
      %v341 = vld [vmem:[%s236 + $0x30] sm:$0xf]
      %v342 = vld [vmem:[%s236 + $0x34] sm:$0xf]
      %v343 = vld [vmem:[%s236 + $0x38] sm:$0xf]
      %v344 = vld [vmem:[%s236 + $0x3c] sm:$0xf]
      %v345 = vld [vmem:[%s236 + $0x40] sm:$0xf]
      %v346 = vld [vmem:[%s236 + $0x44] sm:$0xf]
      %v347 = vld [vmem:[%s236 + $0x48] sm:$0xf]
      %v348 = vld [vmem:[%s236 + $0x4c] sm:$0xf]
      %v349 = vld [vmem:[%s236 + $0x50] sm:$0xf]
      %v350 = vld [vmem:[%s236 + $0x54] sm:$0xf]
      %v351 = vld [vmem:[%s236 + $0x58] sm:$0xf]
      %v352 = vld [vmem:[%s236 + $0x5c] sm:$0xf]
      %v353 = vld [vmem:[%s236 + $0x60] sm:$0xf]
      %v354 = vld [vmem:[%s236 + $0x64] sm:$0xf]
      %v355 = vld [vmem:[%s236 + $0x68] sm:$0xf]
      %v356 = vld [vmem:[%s236 + $0x6c] sm:$0xf]
      %v357 = vld [vmem:[%s236 + $0x70] sm:$0xf]
      %v358 = vld [vmem:[%s236 + $0x74] sm:$0xf]
      %v359 = vld [vmem:[%s236 + $0x78] sm:$0xf]
      %v360 = vld [vmem:[%s236 + $0x7c] sm:$0xf]
      %v361 = vld [vmem:[%s245] sm:$0xf]
      %v362 = vld [vmem:[%s245 + $0x4] sm:$0xf]
      %v363 = vld [vmem:[%s245 + $0x8] sm:$0xf]
      %v364 = vld [vmem:[%s245 + $0xc] sm:$0xf]
      %v365 = vld [vmem:[%s245 + $0x10] sm:$0xf]
      %v366 = vld [vmem:[%s245 + $0x14] sm:$0xf]
      %v367 = vld [vmem:[%s245 + $0x18] sm:$0xf]
      %v368 = vld [vmem:[%s245 + $0x1c] sm:$0xf]
      %v369 = vld [vmem:[%s245 + $0x20] sm:$0xf]
      %v370 = vld [vmem:[%s245 + $0x24] sm:$0xf]
      %v371 = vld [vmem:[%s245 + $0x28] sm:$0xf]
      %v372 = vld [vmem:[%s245 + $0x2c] sm:$0xf]
      %v373 = vld [vmem:[%s245 + $0x30] sm:$0xf]
      %v374 = vld [vmem:[%s245 + $0x34] sm:$0xf]
      %v375 = vld [vmem:[%s245 + $0x38] sm:$0xf]
      %v376 = vld [vmem:[%s245 + $0x3c] sm:$0xf]
      %v409 = vunpack.c.l.b16 %v329
      %v410 = vunpack.c.l.b16 %v330
      %v411 = vunpack.c.l.b16 %v331
      %v412 = vunpack.c.l.b16 %v332
      %v413 = vunpack.c.l.b16 %v333
      %v414 = vunpack.c.l.b16 %v334
      %v415 = vunpack.c.l.b16 %v335
      %v416 = vunpack.c.l.b16 %v336
      %v417 = vunpack.c.l.b16 %v337
      %v418 = vunpack.c.l.b16 %v338
      %v419 = vunpack.c.l.b16 %v339
      %v420 = vunpack.c.l.b16 %v340
      %v421 = vunpack.c.l.b16 %v341
      %v422 = vunpack.c.l.b16 %v342
      %v423 = vunpack.c.l.b16 %v343
      %v424 = vunpack.c.l.b16 %v344
      %v425 = vunpack.c.l.b16 %v345
      %v426 = vunpack.c.l.b16 %v346
      %v427 = vunpack.c.l.b16 %v347
      %v428 = vunpack.c.l.b16 %v348
      %v429 = vunpack.c.l.b16 %v349
      %v430 = vunpack.c.l.b16 %v350
      %v431 = vunpack.c.l.b16 %v351
      %v432 = vunpack.c.l.b16 %v352
      %v433 = vunpack.c.l.b16 %v353
      %v434 = vunpack.c.l.b16 %v354
      %v435 = vunpack.c.l.b16 %v355
      %v436 = vunpack.c.l.b16 %v356
      %v437 = vunpack.c.l.b16 %v357
      %v438 = vunpack.c.l.b16 %v358
      %v439 = vunpack.c.l.b16 %v359
      %v440 = vunpack.c.l.b16 %v360
      %v441 = vpack.c.b16 %v410, %v409
      %v442 = vpack.c.b16 %v412, %v411
      %v443 = vpack.c.b16 %v414, %v413
      %v444 = vpack.c.b16 %v416, %v415
      %v445 = vpack.c.b16 %v418, %v417
      %v446 = vpack.c.b16 %v420, %v419
      %v447 = vpack.c.b16 %v422, %v421
      %v448 = vpack.c.b16 %v424, %v423
      %v449 = vpack.c.b16 %v426, %v425
      %v450 = vpack.c.b16 %v428, %v427
      %v451 = vpack.c.b16 %v430, %v429
      %v452 = vpack.c.b16 %v432, %v431
      %v453 = vpack.c.b16 %v434, %v433
      %v454 = vpack.c.b16 %v436, %v435
      %v455 = vpack.c.b16 %v438, %v437
      %v456 = vpack.c.b16 %v440, %v439
      %v489 = vunpack.c.l.b16 %v361
      %v490 = vunpack.c.l.b16 %v362
      %v491 = vunpack.c.l.b16 %v363
      %v492 = vunpack.c.l.b16 %v364
      %v493 = vunpack.c.l.b16 %v365
      %v494 = vunpack.c.l.b16 %v366
      %v495 = vunpack.c.l.b16 %v367
      %v496 = vunpack.c.l.b16 %v368
      %v497 = vunpack.c.l.b16 %v369
      %v498 = vunpack.c.l.b16 %v370
      %v499 = vunpack.c.l.b16 %v371
      %v500 = vunpack.c.l.b16 %v372
      %v501 = vunpack.c.l.b16 %v373
      %v502 = vunpack.c.l.b16 %v374
      %v503 = vunpack.c.l.b16 %v375
      %v504 = vunpack.c.l.b16 %v376
      %v505 = vpack.c.b16 %v490, %v489
      %v506 = vpack.c.b16 %v492, %v491
      %v507 = vpack.c.b16 %v494, %v493
      %v508 = vpack.c.b16 %v496, %v495
      %v509 = vpack.c.b16 %v498, %v497
      %v510 = vpack.c.b16 %v500, %v499
      %v511 = vpack.c.b16 %v502, %v501
      %v512 = vpack.c.b16 %v504, %v503
      %521 = vmatprep.subr.bf16.mxu0 0
      %522 = vmatpush1.bf16.msra.mxu0 %v512
      %523 = vmatprep.subr.bf16.mxu0 0
      %524 = vmatpush1.bf16.msra.mxu0 %v511
      %525 = vmatprep.subr.bf16.mxu0 0
      %526 = vmatpush1.bf16.msra.mxu0 %v510
      %527 = vmatprep.subr.bf16.mxu0 0
      %528 = vmatpush1.bf16.msra.mxu0 %v509
      %529 = vmatprep.subr.bf16.mxu0 0
      %530 = vmatpush1.bf16.msra.mxu0 %v508
      %531 = vmatprep.subr.bf16.mxu0 0
      %532 = vmatpush1.bf16.msra.mxu0 %v507
      %533 = vmatprep.subr.bf16.mxu0 0
      %534 = vmatpush1.bf16.msra.mxu0 %v506
      %535 = vmatprep.subr.bf16.mxu0 0
      %536 = vmatpush1.bf16.msra.mxu0 %v505
      %537 = vmatprep.subr.bf16.mxu0 0
      %538 = vmatpush2.bf16.msra.mxu0 0
      %539 = vmatprep.subr.bf16.mxu0 0
      %540 = vmatpush2.bf16.msra.mxu0 0
      %541 = vmatprep.subr.bf16.mxu0 0
      %542 = vmatpush2.bf16.msra.mxu0 0
      %543 = vmatprep.subr.bf16.mxu0 0
      %544 = vmatpush2.bf16.msra.mxu0 0
      %545 = vmatprep.subr.bf16.mxu0 0
      %546 = vmatpush2.bf16.msra.mxu0 0
      %547 = vmatprep.subr.bf16.mxu0 0
      %548 = vmatpush2.bf16.msra.mxu0 0
      %549 = vmatprep.subr.bf16.mxu0 0
      %550 = vmatpush2.bf16.msra.mxu0 0
      %551 = vmatprep.subr.bf16.mxu0 0
      %552 = vmatpush2.bf16.msra.mxu0 0
      %553 = vmatprep.mubr.bf16.mxu0 0
      %554 = vmatmul.mubr.bf16.gmra.mxu0 %v441
      %v555 = vpop.f32.mrf.mxu0
      %v556 = vadd.f32 0.0, %v555
      %v557 = vpop.f32.mrf.mxu0
      %v558 = vpop.f32.mrf.mxu0
      %v559 = vadd.f32 0.0, %v558
      %v560 = vpop.f32.mrf.mxu0
      %561 = vmatprep.mubr.bf16.mxu0 0
      %562 = vmatmul.mubr.bf16.gmra.mxu0 %v442
      %v563 = vpop.f32.mrf.mxu0
      %v564 = vadd.f32 0.0, %v563
      %v565 = vpop.f32.mrf.mxu0
      %v566 = vpop.f32.mrf.mxu0
      %v567 = vadd.f32 0.0, %v566
      %v568 = vpop.f32.mrf.mxu0
      %569 = vmatprep.mubr.bf16.mxu0 0
      %570 = vmatmul.mubr.bf16.gmra.mxu0 %v443
      %v571 = vpop.f32.mrf.mxu0
      %v572 = vadd.f32 0.0, %v571
      %v573 = vpop.f32.mrf.mxu0
      %v574 = vpop.f32.mrf.mxu0
      %v575 = vadd.f32 0.0, %v574
      %v576 = vpop.f32.mrf.mxu0
      %577 = vmatprep.mubr.bf16.mxu0 0
      %578 = vmatmul.mubr.bf16.gmra.mxu0 %v444
      %v579 = vpop.f32.mrf.mxu0
      %v580 = vadd.f32 0.0, %v579
      %v581 = vpop.f32.mrf.mxu0
      %v582 = vpop.f32.mrf.mxu0
      %v583 = vadd.f32 0.0, %v582
      %v584 = vpop.f32.mrf.mxu0
      %585 = vmatprep.mubr.bf16.mxu0 0
      %586 = vmatmul.mubr.bf16.gmra.mxu0 %v445
      %v587 = vpop.f32.mrf.mxu0
      %v588 = vadd.f32 0.0, %v587
      %v589 = vpop.f32.mrf.mxu0
      %v590 = vpop.f32.mrf.mxu0
      %v591 = vadd.f32 0.0, %v590
      %v592 = vpop.f32.mrf.mxu0
      %593 = vmatprep.mubr.bf16.mxu0 0
      %594 = vmatmul.mubr.bf16.gmra.mxu0 %v446
      %v595 = vpop.f32.mrf.mxu0
      %v596 = vadd.f32 0.0, %v595
      %v597 = vpop.f32.mrf.mxu0
      %v598 = vpop.f32.mrf.mxu0
      %v599 = vadd.f32 0.0, %v598
      %v600 = vpop.f32.mrf.mxu0
      %601 = vmatprep.mubr.bf16.mxu0 0
      %602 = vmatmul.mubr.bf16.gmra.mxu0 %v447
      %v603 = vpop.f32.mrf.mxu0
      %v604 = vadd.f32 0.0, %v603
      %v605 = vpop.f32.mrf.mxu0
      %v606 = vpop.f32.mrf.mxu0
      %v607 = vadd.f32 0.0, %v606
      %v608 = vpop.f32.mrf.mxu0
      %609 = vmatprep.mubr.bf16.mxu0 0
      %610 = vmatmul.mubr.bf16.gmra.mxu0 %v448
      %v611 = vpop.f32.mrf.mxu0
      %v612 = vadd.f32 0.0, %v611
      %v613 = vpop.f32.mrf.mxu0
      %v614 = vpop.f32.mrf.mxu0
      %v615 = vadd.f32 0.0, %v614
      %v616 = vpop.f32.mrf.mxu0
      %617 = vmatprep.mubr.bf16.mxu0 0
      %618 = vmatmul.mubr.bf16.gmra.mxu0 %v449
      %v619 = vpop.f32.mrf.mxu0
      %v620 = vadd.f32 0.0, %v619
      %v621 = vpop.f32.mrf.mxu0
      %v622 = vpop.f32.mrf.mxu0
      %v623 = vadd.f32 0.0, %v622
      %v624 = vpop.f32.mrf.mxu0
      %625 = vmatprep.mubr.bf16.mxu0 0
      %626 = vmatmul.mubr.bf16.gmra.mxu0 %v450
      %v627 = vpop.f32.mrf.mxu0
      %v628 = vadd.f32 0.0, %v627
      %v629 = vpop.f32.mrf.mxu0
      %v630 = vpop.f32.mrf.mxu0
      %v631 = vadd.f32 0.0, %v630
      %v632 = vpop.f32.mrf.mxu0
      %633 = vmatprep.mubr.bf16.mxu0 0
      %634 = vmatmul.mubr.bf16.gmra.mxu0 %v451
      %v635 = vpop.f32.mrf.mxu0
      %v636 = vadd.f32 0.0, %v635
      %v637 = vpop.f32.mrf.mxu0
      %v638 = vpop.f32.mrf.mxu0
      %v639 = vadd.f32 0.0, %v638
      %v640 = vpop.f32.mrf.mxu0
      %641 = vmatprep.mubr.bf16.mxu0 0
      %642 = vmatmul.mubr.bf16.gmra.mxu0 %v452
      %v643 = vpop.f32.mrf.mxu0
      %v644 = vadd.f32 0.0, %v643
      %v645 = vpop.f32.mrf.mxu0
      %v646 = vpop.f32.mrf.mxu0
      %v647 = vadd.f32 0.0, %v646
      %v648 = vpop.f32.mrf.mxu0
      %649 = vmatprep.mubr.bf16.mxu0 0
      %650 = vmatmul.mubr.bf16.gmra.mxu0 %v453
      %v651 = vpop.f32.mrf.mxu0
      %v652 = vadd.f32 0.0, %v651
      %v653 = vpop.f32.mrf.mxu0
      %v654 = vpop.f32.mrf.mxu0
      %v655 = vadd.f32 0.0, %v654
      %v656 = vpop.f32.mrf.mxu0
      %657 = vmatprep.mubr.bf16.mxu0 0
      %658 = vmatmul.mubr.bf16.gmra.mxu0 %v454
      %v659 = vpop.f32.mrf.mxu0
      %v660 = vadd.f32 0.0, %v659
      %v661 = vpop.f32.mrf.mxu0
      %v662 = vpop.f32.mrf.mxu0
      %v663 = vadd.f32 0.0, %v662
      %v664 = vpop.f32.mrf.mxu0
      %665 = vmatprep.mubr.bf16.mxu0 0
      %666 = vmatmul.mubr.bf16.gmra.mxu0 %v455
      %v667 = vpop.f32.mrf.mxu0
      %v668 = vadd.f32 0.0, %v667
      %v669 = vpop.f32.mrf.mxu0
      %v670 = vpop.f32.mrf.mxu0
      %v671 = vadd.f32 0.0, %v670
      %v672 = vpop.f32.mrf.mxu0
      %673 = vmatprep.mubr.bf16.mxu0 0
      %674 = vmatmul.mubr.bf16.gmra.mxu0 %v456
      %v675 = vpop.f32.mrf.mxu0
      %v676 = vadd.f32 0.0, %v675
      %v677 = vpop.f32.mrf.mxu0
      %v678 = vpop.f32.mrf.mxu0
      %v679 = vadd.f32 0.0, %v678
      %v680 = vpop.f32.mrf.mxu0
      %681 = vdwg.mxu0
      %v682 = vadd.f32 %v297, %v556
      %v683 = vadd.f32 %v298, %v559
      %v684 = vadd.f32 %v299, %v564
      %v685 = vadd.f32 %v300, %v567
      %v686 = vadd.f32 %v301, %v572
      %v687 = vadd.f32 %v302, %v575
      %v688 = vadd.f32 %v303, %v580
      %v689 = vadd.f32 %v304, %v583
      %v690 = vadd.f32 %v305, %v588
      %v691 = vadd.f32 %v306, %v591
      %v692 = vadd.f32 %v307, %v596
      %v693 = vadd.f32 %v308, %v599
      %v694 = vadd.f32 %v309, %v604
      %v695 = vadd.f32 %v310, %v607
      %v696 = vadd.f32 %v311, %v612
      %v697 = vadd.f32 %v312, %v615
      %v698 = vadd.f32 %v313, %v620
      %v699 = vadd.f32 %v314, %v623
      %v700 = vadd.f32 %v315, %v628
      %v701 = vadd.f32 %v316, %v631
      %v702 = vadd.f32 %v317, %v636
      %v703 = vadd.f32 %v318, %v639
      %v704 = vadd.f32 %v319, %v644
      %v705 = vadd.f32 %v320, %v647
      %v706 = vadd.f32 %v321, %v652
      %v707 = vadd.f32 %v322, %v655
      %v708 = vadd.f32 %v323, %v660
      %v709 = vadd.f32 %v324, %v663
      %v710 = vadd.f32 %v325, %v668
      %v711 = vadd.f32 %v326, %v671
      %v712 = vadd.f32 %v327, %v676
      %v713 = vadd.f32 %v328, %v679
      %vm714 = vcmask 523264
      %715 = vst.msk [vmem:[#allocation2] sm:$0xff] %vm714, %v682
      %716 = vst.msk [vmem:[#allocation2 + $0x8] sm:$0xff] %vm714, %v683
      %717 = vst.msk [vmem:[#allocation2 + $0x10] sm:$0xff] %vm714, %v684
      %718 = vst.msk [vmem:[#allocation2 + $0x18] sm:$0xff] %vm714, %v685
      %719 = vst.msk [vmem:[#allocation2 + $0x20] sm:$0xff] %vm714, %v686
      %720 = vst.msk [vmem:[#allocation2 + $0x28] sm:$0xff] %vm714, %v687
      %721 = vst.msk [vmem:[#allocation2 + $0x30] sm:$0xff] %vm714, %v688
      %722 = vst.msk [vmem:[#allocation2 + $0x38] sm:$0xff] %vm714, %v689
      %723 = vst.msk [vmem:[#allocation2 + $0x40] sm:$0xff] %vm714, %v690
      %724 = vst.msk [vmem:[#allocation2 + $0x48] sm:$0xff] %vm714, %v691
      %725 = vst.msk [vmem:[#allocation2 + $0x50] sm:$0xff] %vm714, %v692
      %726 = vst.msk [vmem:[#allocation2 + $0x58] sm:$0xff] %vm714, %v693
      %727 = vst.msk [vmem:[#allocation2 + $0x60] sm:$0xff] %vm714, %v694
      %728 = vst.msk [vmem:[#allocation2 + $0x68] sm:$0xff] %vm714, %v695
      %729 = vst.msk [vmem:[#allocation2 + $0x70] sm:$0xff] %vm714, %v696
      %730 = vst.msk [vmem:[#allocation2 + $0x78] sm:$0xff] %vm714, %v697
      %731 = vst.msk [vmem:[#allocation2 + $0x80] sm:$0xff] %vm714, %v698
      %732 = vst.msk [vmem:[#allocation2 + $0x88] sm:$0xff] %vm714, %v699
      %733 = vst.msk [vmem:[#allocation2 + $0x90] sm:$0xff] %vm714, %v700
      %734 = vst.msk [vmem:[#allocation2 + $0x98] sm:$0xff] %vm714, %v701
      %735 = vst.msk [vmem:[#allocation2 + $0xa0] sm:$0xff] %vm714, %v702
      %736 = vst.msk [vmem:[#allocation2 + $0xa8] sm:$0xff] %vm714, %v703
      %737 = vst.msk [vmem:[#allocation2 + $0xb0] sm:$0xff] %vm714, %v704
      %738 = vst.msk [vmem:[#allocation2 + $0xb8] sm:$0xff] %vm714, %v705
      %739 = vst.msk [vmem:[#allocation2 + $0xc0] sm:$0xff] %vm714, %v706
      %740 = vst.msk [vmem:[#allocation2 + $0xc8] sm:$0xff] %vm714, %v707
      %741 = vst.msk [vmem:[#allocation2 + $0xd0] sm:$0xff] %vm714, %v708
      %742 = vst.msk [vmem:[#allocation2 + $0xd8] sm:$0xff] %vm714, %v709
      %743 = vst.msk [vmem:[#allocation2 + $0xe0] sm:$0xff] %vm714, %v710
      %744 = vst.msk [vmem:[#allocation2 + $0xe8] sm:$0xff] %vm714, %v711
      %745 = vst.msk [vmem:[#allocation2 + $0xf0] sm:$0xff] %vm714, %v712
      %746 = vst.msk [vmem:[#allocation2 + $0xf8] sm:$0xff] %vm714, %v713
      // Predicated region
      $region37: #{descriptor_cifar_forward.4} parent=31 // pred_check
        %p747 = pneg %p260
      $region38: #{descriptor_cifar_forward.4} parent=31 // pred_check_branch
        %749 = sbr.rel (%p747) target = $region40
      $region39: #{descriptor_cifar_forward.4} parent=31 // pred_region
        %v750 = vld [vmem:[#allocation2] sm:$0xff]
        %v751 = vld [vmem:[#allocation2 + $0x8] sm:$0xff]
        %v752 = vld [vmem:[#allocation2 + $0x10] sm:$0xff]
        %v753 = vld [vmem:[#allocation2 + $0x18] sm:$0xff]
        %v754 = vld [vmem:[#allocation2 + $0x20] sm:$0xff]
        %v755 = vld [vmem:[#allocation2 + $0x28] sm:$0xff]
        %v756 = vld [vmem:[#allocation2 + $0x30] sm:$0xff]
        %v757 = vld [vmem:[#allocation2 + $0x38] sm:$0xff]
        %v758 = vld [vmem:[#allocation2 + $0x40] sm:$0xff]
        %v759 = vld [vmem:[#allocation2 + $0x48] sm:$0xff]
        %v760 = vld [vmem:[#allocation2 + $0x50] sm:$0xff]
        %v761 = vld [vmem:[#allocation2 + $0x58] sm:$0xff]
        %v762 = vld [vmem:[#allocation2 + $0x60] sm:$0xff]
        %v763 = vld [vmem:[#allocation2 + $0x68] sm:$0xff]
        %v764 = vld [vmem:[#allocation2 + $0x70] sm:$0xff]
        %v765 = vld [vmem:[#allocation2 + $0x78] sm:$0xff]
        %v766 = vld [vmem:[#allocation2 + $0x80] sm:$0xff]
        %v767 = vld [vmem:[#allocation2 + $0x88] sm:$0xff]
        %v768 = vld [vmem:[#allocation2 + $0x90] sm:$0xff]
        %v769 = vld [vmem:[#allocation2 + $0x98] sm:$0xff]
        %v770 = vld [vmem:[#allocation2 + $0xa0] sm:$0xff]
        %v771 = vld [vmem:[#allocation2 + $0xa8] sm:$0xff]
        %v772 = vld [vmem:[#allocation2 + $0xb0] sm:$0xff]
        %v773 = vld [vmem:[#allocation2 + $0xb8] sm:$0xff]
        %v774 = vld [vmem:[#allocation2 + $0xc0] sm:$0xff]
        %v775 = vld [vmem:[#allocation2 + $0xc8] sm:$0xff]
        %v776 = vld [vmem:[#allocation2 + $0xd0] sm:$0xff]
        %v777 = vld [vmem:[#allocation2 + $0xd8] sm:$0xff]
        %v778 = vld [vmem:[#allocation2 + $0xe0] sm:$0xff]
        %v779 = vld [vmem:[#allocation2 + $0xe8] sm:$0xff]
        %v780 = vld [vmem:[#allocation2 + $0xf0] sm:$0xff]
        %v781 = vld [vmem:[#allocation2 + $0xf8] sm:$0xff]
        %v782 = vld [vmem:[%s249] sm:$0x1]
        %v784 = vlaneseq
        %v785 = vshrl.u32 %v784, 7
        %v786 = vsub.s32 0, %v785
        %v787 = vrot.slane %v782, %v786
        %v789 = vadd.f32 %v750, %v787
        %v790 = vadd.f32 %v751, %v787
        %v791 = vadd.f32 %v752, %v787
        %v792 = vadd.f32 %v753, %v787
        %v793 = vadd.f32 %v754, %v787
        %v794 = vadd.f32 %v755, %v787
        %v795 = vadd.f32 %v756, %v787
        %v796 = vadd.f32 %v757, %v787
        %v797 = vadd.f32 %v758, %v787
        %v798 = vadd.f32 %v759, %v787
        %v799 = vadd.f32 %v760, %v787
        %v800 = vadd.f32 %v761, %v787
        %v801 = vadd.f32 %v762, %v787
        %v802 = vadd.f32 %v763, %v787
        %v803 = vadd.f32 %v764, %v787
        %v804 = vadd.f32 %v765, %v787
        %v805 = vadd.f32 %v766, %v787
        %v806 = vadd.f32 %v767, %v787
        %v807 = vadd.f32 %v768, %v787
        %v808 = vadd.f32 %v769, %v787
        %v809 = vadd.f32 %v770, %v787
        %v810 = vadd.f32 %v771, %v787
        %v811 = vadd.f32 %v772, %v787
        %v812 = vadd.f32 %v773, %v787
        %v813 = vadd.f32 %v774, %v787
        %v814 = vadd.f32 %v775, %v787
        %v815 = vadd.f32 %v776, %v787
        %v816 = vadd.f32 %v777, %v787
        %v817 = vadd.f32 %v778, %v787
        %v818 = vadd.f32 %v779, %v787
        %v819 = vadd.f32 %v780, %v787
        %v820 = vadd.f32 %v781, %v787
        %vm821 = vcmp.ge.f32.partialorder %v789, 0.0
        %vm822 = vcmp.ge.f32.partialorder %v790, 0.0
        %vm823 = vcmp.ge.f32.partialorder %v791, 0.0
        %vm824 = vcmp.ge.f32.partialorder %v792, 0.0
        %vm825 = vcmp.ge.f32.partialorder %v793, 0.0
        %vm826 = vcmp.ge.f32.partialorder %v794, 0.0
        %vm827 = vcmp.ge.f32.partialorder %v795, 0.0
        %vm828 = vcmp.ge.f32.partialorder %v796, 0.0
        %vm829 = vcmp.ge.f32.partialorder %v797, 0.0
        %vm830 = vcmp.ge.f32.partialorder %v798, 0.0
        %vm831 = vcmp.ge.f32.partialorder %v799, 0.0
        %vm832 = vcmp.ge.f32.partialorder %v800, 0.0
        %vm833 = vcmp.ge.f32.partialorder %v801, 0.0
        %vm834 = vcmp.ge.f32.partialorder %v802, 0.0
        %vm835 = vcmp.ge.f32.partialorder %v803, 0.0
        %vm836 = vcmp.ge.f32.partialorder %v804, 0.0
        %vm837 = vcmp.ge.f32.partialorder %v805, 0.0
        %vm838 = vcmp.ge.f32.partialorder %v806, 0.0
        %vm839 = vcmp.ge.f32.partialorder %v807, 0.0
        %vm840 = vcmp.ge.f32.partialorder %v808, 0.0
        %vm841 = vcmp.ge.f32.partialorder %v809, 0.0
        %vm842 = vcmp.ge.f32.partialorder %v810, 0.0
        %vm843 = vcmp.ge.f32.partialorder %v811, 0.0
        %vm844 = vcmp.ge.f32.partialorder %v812, 0.0
        %vm845 = vcmp.ge.f32.partialorder %v813, 0.0
        %vm846 = vcmp.ge.f32.partialorder %v814, 0.0
        %vm847 = vcmp.ge.f32.partialorder %v815, 0.0
        %vm848 = vcmp.ge.f32.partialorder %v816, 0.0
        %vm849 = vcmp.ge.f32.partialorder %v817, 0.0
        %vm850 = vcmp.ge.f32.partialorder %v818, 0.0
        %vm851 = vcmp.ge.f32.partialorder %v819, 0.0
        %vm852 = vcmp.ge.f32.partialorder %v820, 0.0
        %v853 = vmul.f32 %v789, 0.01
        %v854 = vmul.f32 %v790, 0.01
        %v855 = vmul.f32 %v791, 0.01
        %v856 = vmul.f32 %v792, 0.01
        %v857 = vmul.f32 %v793, 0.01
        %v858 = vmul.f32 %v794, 0.01
        %v859 = vmul.f32 %v795, 0.01
        %v860 = vmul.f32 %v796, 0.01
        %v861 = vmul.f32 %v797, 0.01
        %v862 = vmul.f32 %v798, 0.01
        %v863 = vmul.f32 %v799, 0.01
        %v864 = vmul.f32 %v800, 0.01
        %v865 = vmul.f32 %v801, 0.01
        %v866 = vmul.f32 %v802, 0.01
        %v867 = vmul.f32 %v803, 0.01
        %v868 = vmul.f32 %v804, 0.01
        %v869 = vmul.f32 %v805, 0.01
        %v870 = vmul.f32 %v806, 0.01
        %v871 = vmul.f32 %v807, 0.01
        %v872 = vmul.f32 %v808, 0.01
        %v873 = vmul.f32 %v809, 0.01
        %v874 = vmul.f32 %v810, 0.01
        %v875 = vmul.f32 %v811, 0.01
        %v876 = vmul.f32 %v812, 0.01
        %v877 = vmul.f32 %v813, 0.01
        %v878 = vmul.f32 %v814, 0.01
        %v879 = vmul.f32 %v815, 0.01
        %v880 = vmul.f32 %v816, 0.01
        %v881 = vmul.f32 %v817, 0.01
        %v882 = vmul.f32 %v818, 0.01
        %v883 = vmul.f32 %v819, 0.01
        %v884 = vmul.f32 %v820, 0.01
        %v885 = vsel %vm821, %v789, %v853
        %v886 = vsel %vm822, %v790, %v854
        %v887 = vsel %vm823, %v791, %v855
        %v888 = vsel %vm824, %v792, %v856
        %v889 = vsel %vm825, %v793, %v857
        %v890 = vsel %vm826, %v794, %v858
        %v891 = vsel %vm827, %v795, %v859
        %v892 = vsel %vm828, %v796, %v860
        %v893 = vsel %vm829, %v797, %v861
        %v894 = vsel %vm830, %v798, %v862
        %v895 = vsel %vm831, %v799, %v863
        %v896 = vsel %vm832, %v800, %v864
        %v897 = vsel %vm833, %v801, %v865
        %v898 = vsel %vm834, %v802, %v866
        %v899 = vsel %vm835, %v803, %v867
        %v900 = vsel %vm836, %v804, %v868
        %v901 = vsel %vm837, %v805, %v869
        %v902 = vsel %vm838, %v806, %v870
        %v903 = vsel %vm839, %v807, %v871
        %v904 = vsel %vm840, %v808, %v872
        %v905 = vsel %vm841, %v809, %v873
        %v906 = vsel %vm842, %v810, %v874
        %v907 = vsel %vm843, %v811, %v875
        %v908 = vsel %vm844, %v812, %v876
        %v909 = vsel %vm845, %v813, %v877
        %v910 = vsel %vm846, %v814, %v878
        %v911 = vsel %vm847, %v815, %v879
        %v912 = vsel %vm848, %v816, %v880
        %v913 = vsel %vm849, %v817, %v881
        %v914 = vsel %vm850, %v818, %v882
        %v915 = vsel %vm851, %v819, %v883
        %v916 = vsel %vm852, %v820, %v884
        %v917 = vpack.c.bf16 %v886, %v885
        %v918 = vpack.c.bf16 %v888, %v887
        %v919 = vpack.c.bf16 %v890, %v889
        %v920 = vpack.c.bf16 %v892, %v891
        %v921 = vpack.c.bf16 %v894, %v893
        %v922 = vpack.c.bf16 %v896, %v895
        %v923 = vpack.c.bf16 %v898, %v897
        %v924 = vpack.c.bf16 %v900, %v899
        %v925 = vpack.c.bf16 %v902, %v901
        %v926 = vpack.c.bf16 %v904, %v903
        %v927 = vpack.c.bf16 %v906, %v905
        %v928 = vpack.c.bf16 %v908, %v907
        %v929 = vpack.c.bf16 %v910, %v909
        %v930 = vpack.c.bf16 %v912, %v911
        %v931 = vpack.c.bf16 %v914, %v913
        %v932 = vpack.c.bf16 %v916, %v915
        %v949 = vunpack.c.l.b16 %v917
        %v950 = vunpack.c.h.b16 %v917
        %v951 = vunpack.c.l.b16 %v918
        %v952 = vunpack.c.h.b16 %v918
        %v953 = vunpack.c.l.b16 %v919
        %v954 = vunpack.c.h.b16 %v919
        %v955 = vunpack.c.l.b16 %v920
        %v956 = vunpack.c.h.b16 %v920
        %v957 = vunpack.c.l.b16 %v921
        %v958 = vunpack.c.h.b16 %v921
        %v959 = vunpack.c.l.b16 %v922
        %v960 = vunpack.c.h.b16 %v922
        %v961 = vunpack.c.l.b16 %v923
        %v962 = vunpack.c.h.b16 %v923
        %v963 = vunpack.c.l.b16 %v924
        %v964 = vunpack.c.h.b16 %v924
        %v965 = vunpack.c.l.b16 %v925
        %v966 = vunpack.c.h.b16 %v925
        %v967 = vunpack.c.l.b16 %v926
        %v968 = vunpack.c.h.b16 %v926
        %v969 = vunpack.c.l.b16 %v927
        %v970 = vunpack.c.h.b16 %v927
        %v971 = vunpack.c.l.b16 %v928
        %v972 = vunpack.c.h.b16 %v928
        %v973 = vunpack.c.l.b16 %v929
        %v974 = vunpack.c.h.b16 %v929
        %v975 = vunpack.c.l.b16 %v930
        %v976 = vunpack.c.h.b16 %v930
        %v977 = vunpack.c.l.b16 %v931
        %v978 = vunpack.c.h.b16 %v931
        %v979 = vunpack.c.l.b16 %v932
        %v980 = vunpack.c.h.b16 %v932
        %v981 = vpack.c.b16 %v949, %v949
        %v982 = vpack.c.b16 %v950, %v950
        %v983 = vpack.c.b16 %v951, %v951
        %v984 = vpack.c.b16 %v952, %v952
        %v985 = vpack.c.b16 %v953, %v953
        %v986 = vpack.c.b16 %v954, %v954
        %v987 = vpack.c.b16 %v955, %v955
        %v988 = vpack.c.b16 %v956, %v956
        %v989 = vpack.c.b16 %v957, %v957
        %v990 = vpack.c.b16 %v958, %v958
        %v991 = vpack.c.b16 %v959, %v959
        %v992 = vpack.c.b16 %v960, %v960
        %v993 = vpack.c.b16 %v961, %v961
        %v994 = vpack.c.b16 %v962, %v962
        %v995 = vpack.c.b16 %v963, %v963
        %v996 = vpack.c.b16 %v964, %v964
        %v997 = vpack.c.b16 %v965, %v965
        %v998 = vpack.c.b16 %v966, %v966
        %v999 = vpack.c.b16 %v967, %v967
        %v1000 = vpack.c.b16 %v968, %v968
        %v1001 = vpack.c.b16 %v969, %v969
        %v1002 = vpack.c.b16 %v970, %v970
        %v1003 = vpack.c.b16 %v971, %v971
        %v1004 = vpack.c.b16 %v972, %v972
        %v1005 = vpack.c.b16 %v973, %v973
        %v1006 = vpack.c.b16 %v974, %v974
        %v1007 = vpack.c.b16 %v975, %v975
        %v1008 = vpack.c.b16 %v976, %v976
        %v1009 = vpack.c.b16 %v977, %v977
        %v1010 = vpack.c.b16 %v978, %v978
        %v1011 = vpack.c.b16 %v979, %v979
        %v1012 = vpack.c.b16 %v980, %v980
        %vm1045 = vcmask 519168
        %1046 = vst.msk [vmem:[%s257] sm:$0xf] %vm1045, %v981
        %1047 = vst.msk [vmem:[%s257 + $0x4] sm:$0xf] %vm1045, %v982
        %1048 = vst.msk [vmem:[%s257 + $0x8] sm:$0xf] %vm1045, %v983
        %1049 = vst.msk [vmem:[%s257 + $0xc] sm:$0xf] %vm1045, %v984
        %1050 = vst.msk [vmem:[%s257 + $0x10] sm:$0xf] %vm1045, %v985
        %1051 = vst.msk [vmem:[%s257 + $0x14] sm:$0xf] %vm1045, %v986
        %1052 = vst.msk [vmem:[%s257 + $0x18] sm:$0xf] %vm1045, %v987
        %1053 = vst.msk [vmem:[%s257 + $0x1c] sm:$0xf] %vm1045, %v988
        %1054 = vst.msk [vmem:[%s257 + $0x20] sm:$0xf] %vm1045, %v989
        %1055 = vst.msk [vmem:[%s257 + $0x24] sm:$0xf] %vm1045, %v990
        %1056 = vst.msk [vmem:[%s257 + $0x28] sm:$0xf] %vm1045, %v991
        %1057 = vst.msk [vmem:[%s257 + $0x2c] sm:$0xf] %vm1045, %v992
        %1058 = vst.msk [vmem:[%s257 + $0x30] sm:$0xf] %vm1045, %v993
        %1059 = vst.msk [vmem:[%s257 + $0x34] sm:$0xf] %vm1045, %v994
        %1060 = vst.msk [vmem:[%s257 + $0x38] sm:$0xf] %vm1045, %v995
        %1061 = vst.msk [vmem:[%s257 + $0x3c] sm:$0xf] %vm1045, %v996
        %1062 = vst.msk [vmem:[%s257 + $0x40] sm:$0xf] %vm1045, %v997
        %1063 = vst.msk [vmem:[%s257 + $0x44] sm:$0xf] %vm1045, %v998
        %1064 = vst.msk [vmem:[%s257 + $0x48] sm:$0xf] %vm1045, %v999
        %1065 = vst.msk [vmem:[%s257 + $0x4c] sm:$0xf] %vm1045, %v1000
        %1066 = vst.msk [vmem:[%s257 + $0x50] sm:$0xf] %vm1045, %v1001
        %1067 = vst.msk [vmem:[%s257 + $0x54] sm:$0xf] %vm1045, %v1002
        %1068 = vst.msk [vmem:[%s257 + $0x58] sm:$0xf] %vm1045, %v1003
        %1069 = vst.msk [vmem:[%s257 + $0x5c] sm:$0xf] %vm1045, %v1004
        %1070 = vst.msk [vmem:[%s257 + $0x60] sm:$0xf] %vm1045, %v1005
        %1071 = vst.msk [vmem:[%s257 + $0x64] sm:$0xf] %vm1045, %v1006
        %1072 = vst.msk [vmem:[%s257 + $0x68] sm:$0xf] %vm1045, %v1007
        %1073 = vst.msk [vmem:[%s257 + $0x6c] sm:$0xf] %vm1045, %v1008
        %1074 = vst.msk [vmem:[%s257 + $0x70] sm:$0xf] %vm1045, %v1009
        %1075 = vst.msk [vmem:[%s257 + $0x74] sm:$0xf] %vm1045, %v1010
        %1076 = vst.msk [vmem:[%s257 + $0x78] sm:$0xf] %vm1045, %v1011
        %1077 = vst.msk [vmem:[%s257 + $0x7c] sm:$0xf] %vm1045, %v1012
      $region40: #{descriptor_cifar_forward.4} parent=31 // pred_fallthru
        _
      %s1078 = smul.u32 32, %s19
      %p1079 = scmp.lt.s32.totalorder %s1078, 63
      %s1080 = scalar_select %p1079, %s1078, 63
      %p1081 = scmp.lt.s32.totalorder %s20, 0
      %s1082 = scalar_select %p1081, %s20, 0
      %s1083 = sadd.s32 %s1082, %s1080
      %s1084 = smul.addr %s1083, 4
      %s1085 = scalar_lea.vmem %s3, %s1084
      // Predicated region
      $region41: #{descriptor_cifar_forward.4} parent=31 // pred_check
        %p1086 = pneg %p135
      $region42: #{descriptor_cifar_forward.4} parent=31 // pred_check_branch
        %1088 = sbr.rel (%p1086) target = $region44
      $region43: #{descriptor_cifar_forward.4} parent=31 // pred_region
        %s1089 = smul.u32 32, %s19
      $region44: #{descriptor_cifar_forward.4} parent=31 // pred_fallthru
        _
    $region32: #{descriptor_cifar_forward.4} parent=5 // pred_fallthru
      _
    %p1090 = scmp.le.s32.totalorder 2, %s9
    // Predicated region
    $region45: #{descriptor_cifar_forward.4} parent=5 // pred_check
      %p1091 = pneg %p1090
    $region46: #{descriptor_cifar_forward.4} parent=5 // pred_check_branch
      %1093 = sbr.rel (%p1091) target = $region48
    $region47: #{descriptor_cifar_forward.4} parent=5 // pred_region
      %s1094 = ssub.s32 %s9, 2
      // Predicated region
      $region49: #{descriptor_cifar_forward.4} parent=47 // pred_check
        %p1095 = pneg %p141
      $region50: #{descriptor_cifar_forward.4} parent=47 // pred_check_branch
        %1097 = sbr.rel (%p1095) target = $region52
      $region51: #{descriptor_cifar_forward.4} parent=47 // pred_region
        %s1098 = smul.u32 32, %s22
        %p1099 = scmp.lt.s32.totalorder %s1098, 63
        %s1100 = scalar_select %p1099, %s1098, 63
        %p1101 = scmp.lt.s32.totalorder %s23, 0
        %s1102 = scalar_select %p1101, %s23, 0
        %s1103 = sadd.s32 %s1102, %s1100
        %s1104 = smul.addr %s1103, 4
        %s1105 = scalar_lea.vmem %s3, %s1104
      $region52: #{descriptor_cifar_forward.4} parent=47 // pred_fallthru
        _
    $region48: #{descriptor_cifar_forward.4} parent=5 // pred_fallthru
      _
  $region6: #{descriptor_cifar_forward.4} parent=0 // loop_footer
    %s13 = sadd.s32 1, %s9
  $region7: #{descriptor_cifar_forward.4} parent=0 // loop_footer_branch
    %8 = sbr.rel target = $region3
  $region8: #{descriptor_cifar_forward.4} parent=0 // loop_exit
    _

// kernel: descriptor_cifar_forward.5
$region0: #{descriptor_cifar_forward.5}
  #allocation0 [shape = 'u32[]', space=smem, size = 0x4, offset = 0x4, fixed_abs, tag = 'smem constant byte address 0x4 - core index']
  #allocation1 [shape = 'u32[144,128]{1,0:T(1,128)}', space=vmem, size = 0x12000, scoped, tag = 'internal scratch']
  #allocation2 [shape = 'f32[64,128]{1,0:T(8,128)}', space=vmem, size = 0x8000, scoped, tag = 'scratch operand']
  %s0 = inlined_call_operand.vmem [shape: bf16[128,640], index: 0, kind: input, shape index: {}]
  %s1 = inlined_call_operand.vmem [shape: bf16[640,128], index: 1, kind: input, shape index: {}]
  %s2 = inlined_call_operand.vmem [shape: f32[1,128], index: 2, kind: input, shape index: {}]
  %s3 = inlined_call_operand.vmem [shape: bf16[128,128], index: 3, kind: output, shape index: {}]
  %s4 = sld [smem:[#allocation0]]
  $region53: #{descriptor_cifar_forward.5} parent=0
    _
  %s6 = ssub.s32 1, %s4
  %s7 = scalar_select 0, %s6, %s4
  loop: start=0, step=1, limit=4
  $region2: #{descriptor_cifar_forward.5} parent=0 // loop_pre_header
    _
  $region3: #{descriptor_cifar_forward.5} parent=0 // loop_header
    %s9 = sphi 0, %s13
    %p10 = scmp.ge.s32.totalorder %s9, 4
    %s16 = sphi 0, %s35
    %s17 = sphi 0, %s31
    %s18 = sphi 0, %s27
    %s19 = sphi 0, %s16
    %s20 = sphi 0, %s17
    %s21 = sphi 0, %s18
    %s22 = sphi 0, %s19
    %s23 = sphi 0, %s20
    %s24 = sphi 0, %s21
    %s40 = sphi 0, %s42
    %s43 = sphi 0, %s40
    %s44 = sphi 0, %s43
    %s60 = sphi 0, %s44
    %s68 = sphi 0, %s70
    %s71 = sphi 0, %s68
    %s72 = sphi 0, %s71
    %s88 = sphi 0, %s72
    %s94 = sphi 0, %s96
    %s97 = sphi 0, %s94
    %s98 = sphi 0, %s97
    %s114 = sphi 0, %s98
    %s122 = sphi 0, %s124
    %s125 = sphi 0, %s122
    %s126 = sphi 0, %s125
    %s142 = sphi 0, %s126
  $region4: #{descriptor_cifar_forward.5} parent=0 // loop_header_branch
    %12 = sbr.rel (%p10) target = $region8
  $region5: #{descriptor_cifar_forward.5} parent=0 // loop_body
    %s14 = ssub.s32 %s9, 1
    %s15 = ssub.s32 %s9, 2
    %s25 = sadd.s32 1, %s18
    %p26 = scmp.ge.s32.totalorder %s25, 1
    %s27 = scalar_select %p26, 0, %s25
    %s28 = sadd.s32 1, %s17
    %s29 = scalar_select %p26, %s28, %s17
    %p30 = scmp.ge.s32.totalorder %s29, 1
    %s31 = scalar_select %p30, 0, %s29
    %s32 = sadd.s32 1, %s16
    %s33 = scalar_select %p30, %s32, %s16
    %p34 = scmp.ge.s32.totalorder %s33, 2
    %s35 = scalar_select %p34, 0, %s33
    %s36 = ssub.s32 %s16, %s35
    %s37 = ssub.s32 %s18, %s27
    %s38 = sor.u32 %s36, %s37
    %p39 = scmp.eq.s32.totalorder %s38, 0
    %s41 = sadd.s32 %s40, 1
    %s42 = scalar_select %p39, %s40, %s41
    %p45 = pneg %p39
    %p46 = scmp.eq.s32.totalorder %s9, 1
    %p47 = por %p45, %p46
    %p48 = scmp.ne.s32.totalorder %s40, %s43
    %p49 = scmp.eq.s32.totalorder %s9, 0
    %p50 = por %p48, %p49
    %p51 = scmp.ne.s32.totalorder %s40, %s43
    %p52 = scmp.eq.s32.totalorder %s14, 1
    %p53 = por %p51, %p52
    %p54 = scmp.ne.s32.totalorder %s43, %s44
    %p55 = scmp.eq.s32.totalorder %s14, 0
    %p56 = por %p54, %p55
    %p57 = scmp.ne.s32.totalorder %s43, %s44
    %p58 = scmp.eq.s32.totalorder %s15, 1
    %p59 = por %p57, %p58
    %p61 = scmp.ne.s32.totalorder %s44, %s60
    %p62 = scmp.eq.s32.totalorder %s15, 0
    %p63 = por %p61, %p62
    %s64 = ssub.s32 %s18, %s27
    %s65 = ssub.s32 %s17, %s31
    %s66 = sor.u32 %s64, %s65
    %p67 = scmp.eq.s32.totalorder %s66, 0
    %s69 = sadd.s32 %s68, 1
    %s70 = scalar_select %p67, %s68, %s69
    %p73 = pneg %p67
    %p74 = scmp.eq.s32.totalorder %s9, 1
    %p75 = por %p73, %p74
    %p76 = scmp.ne.s32.totalorder %s68, %s71
    %p77 = scmp.eq.s32.totalorder %s9, 0
    %p78 = por %p76, %p77
    %p79 = scmp.ne.s32.totalorder %s68, %s71
    %p80 = scmp.eq.s32.totalorder %s14, 1
    %p81 = por %p79, %p80
    %p82 = scmp.ne.s32.totalorder %s71, %s72
    %p83 = scmp.eq.s32.totalorder %s14, 0
    %p84 = por %p82, %p83
    %p85 = scmp.ne.s32.totalorder %s71, %s72
    %p86 = scmp.eq.s32.totalorder %s15, 1
    %p87 = por %p85, %p86
    %p89 = scmp.ne.s32.totalorder %s72, %s88
    %p90 = scmp.eq.s32.totalorder %s15, 0
    %p91 = por %p89, %p90
    %s92 = ssub.s32 %s17, %s31
    %p93 = scmp.eq.s32.totalorder %s92, 0
    %s95 = sadd.s32 %s94, 1
    %s96 = scalar_select %p93, %s94, %s95
    %p99 = pneg %p93
    %p100 = scmp.eq.s32.totalorder %s9, 1
    %p101 = por %p99, %p100
    %p102 = scmp.ne.s32.totalorder %s94, %s97
    %p103 = scmp.eq.s32.totalorder %s9, 0
    %p104 = por %p102, %p103
    %p105 = scmp.ne.s32.totalorder %s94, %s97
    %p106 = scmp.eq.s32.totalorder %s14, 1
    %p107 = por %p105, %p106
    %p108 = scmp.ne.s32.totalorder %s97, %s98
    %p109 = scmp.eq.s32.totalorder %s14, 0
    %p110 = por %p108, %p109
    %p111 = scmp.ne.s32.totalorder %s97, %s98
    %p112 = scmp.eq.s32.totalorder %s15, 1
    %p113 = por %p111, %p112
    %p115 = scmp.ne.s32.totalorder %s98, %s114
    %p116 = scmp.eq.s32.totalorder %s15, 0
    %p117 = por %p115, %p116
    %s118 = ssub.s32 %s16, %s35
    %s119 = ssub.s32 %s17, %s31
    %s120 = sor.u32 %s118, %s119
    %p121 = scmp.eq.s32.totalorder %s120, 0
    %s123 = sadd.s32 %s122, 1
    %s124 = scalar_select %p121, %s122, %s123
    %p127 = pneg %p121
    %p128 = scmp.eq.s32.totalorder %s9, 1
    %p129 = por %p127, %p128
    %p130 = scmp.ne.s32.totalorder %s122, %s125
    %p131 = scmp.eq.s32.totalorder %s9, 0
    %p132 = por %p130, %p131
    %p133 = scmp.ne.s32.totalorder %s122, %s125
    %p134 = scmp.eq.s32.totalorder %s14, 1
    %p135 = por %p133, %p134
    %p136 = scmp.ne.s32.totalorder %s125, %s126
    %p137 = scmp.eq.s32.totalorder %s14, 0
    %p138 = por %p136, %p137
    %p139 = scmp.ne.s32.totalorder %s125, %s126
    %p140 = scmp.eq.s32.totalorder %s15, 1
    %p141 = por %p139, %p140
    %p143 = scmp.ne.s32.totalorder %s126, %s142
    %p144 = scmp.eq.s32.totalorder %s15, 0
    %p145 = por %p143, %p144
    %p146 = scmp.le.s32.totalorder 1, %s9
    %p147 = scmp.lt.s32.totalorder %s9, 3
    %p148 = pnand %p146, %p147
    %p149 = pneg %p148
    // Predicated region
    $region9: #{descriptor_cifar_forward.5} parent=5 // pred_check
      _
    $region10: #{descriptor_cifar_forward.5} parent=5 // pred_check_branch
      %151 = sbr.rel (%p148) target = $region12
    $region11: #{descriptor_cifar_forward.5} parent=5 // pred_region
      %s152 = ssub.s32 %s9, 1
      // Predicated region
      $region13: #{descriptor_cifar_forward.5} parent=11 // pred_check
        %p153 = pneg %p84
      $region14: #{descriptor_cifar_forward.5} parent=11 // pred_check_branch
        %155 = sbr.rel (%p153) target = $region16
      $region15: #{descriptor_cifar_forward.5} parent=11 // pred_region
        %s156 = smul.u32 80, %s21
        %p157 = scmp.lt.s32.totalorder %s156, 79
        %s158 = scalar_select %p157, %s156, 79
        %p159 = scmp.lt.s32.totalorder %s20, 0
        %s160 = scalar_select %p159, %s20, 0
        %s161 = sadd.s32 %s160, %s158
        %s162 = smul.addr %s161, 4
        %s163 = scalar_lea.vmem %s1, %s162
        %s164 = smul.u32 80, %s21
      $region16: #{descriptor_cifar_forward.5} parent=11 // pred_fallthru
        _
      // Predicated region
      $region17: #{descriptor_cifar_forward.5} parent=11 // pred_check
        %p165 = pneg %p110
      $region18: #{descriptor_cifar_forward.5} parent=11 // pred_check_branch
        %167 = sbr.rel (%p165) target = $region20
      $region19: #{descriptor_cifar_forward.5} parent=11 // pred_region
        %p168 = scmp.lt.s32.totalorder %s20, 0
        %s169 = scalar_select %p168, %s20, 0
        %s170 = scalar_lea.vmem %s2, %s169
      $region20: #{descriptor_cifar_forward.5} parent=11 // pred_fallthru
        _
    $region12: #{descriptor_cifar_forward.5} parent=5 // pred_fallthru
      _
    %p171 = scmp.lt.s32.totalorder %s9, 2
    // Predicated region
    $region21: #{descriptor_cifar_forward.5} parent=5 // pred_check
      %p172 = pneg %p171
    $region22: #{descriptor_cifar_forward.5} parent=5 // pred_check_branch
      %174 = sbr.rel (%p172) target = $region24
    $region23: #{descriptor_cifar_forward.5} parent=5 // pred_region
      // Predicated region
      $region25: #{descriptor_cifar_forward.5} parent=23 // pred_check
        %p175 = pneg %p50
      $region26: #{descriptor_cifar_forward.5} parent=23 // pred_check_branch
        %177 = sbr.rel (%p175) target = $region28
      $region27: #{descriptor_cifar_forward.5} parent=23 // pred_region
        %s178 = smul.u32 8, %s16
        %s179 = smul.u32 5, %s18
        %p180 = scmp.lt.s32.totalorder %s178, 15
        %s181 = scalar_select %p180, %s178, 15
        %p182 = scmp.lt.s32.totalorder %s179, 4
        %s183 = scalar_select %p182, %s179, 4
        %s184 = smul.addr %s181, 5
        %s185 = sadd.s32 %s183, %s184
        %s186 = smul.addr %s185, 4
        %s187 = scalar_lea.vmem %s0, %s186
        %s188 = smul.u32 8, %s16
        %s189 = smul.u32 5, %s18
      $region28: #{descriptor_cifar_forward.5} parent=23 // pred_fallthru
        _
    $region24: #{descriptor_cifar_forward.5} parent=5 // pred_fallthru
      _
    %p190 = scmp.le.s32.totalorder 1, %s9
    %p191 = scmp.lt.s32.totalorder %s9, 3
    %p192 = pnand %p190, %p191
    %p193 = pneg %p192
    // Predicated region
    $region29: #{descriptor_cifar_forward.5} parent=5 // pred_check
      _
    $region30: #{descriptor_cifar_forward.5} parent=5 // pred_check_branch
      %195 = sbr.rel (%p192) target = $region32
    $region31: #{descriptor_cifar_forward.5} parent=5 // pred_region
      %s196 = ssub.s32 %s9, 1
      %s197 = smul.u32 8, %s19
      %s198 = smul.u32 5, %s21
      %p199 = scmp.lt.s32.totalorder %s197, 15
      %s200 = scalar_select %p199, %s197, 15
      %p201 = scmp.lt.s32.totalorder %s198, 4
      %s202 = scalar_select %p201, %s198, 4
      %s203 = smul.addr %s200, 5
      %s204 = sadd.s32 %s202, %s203
      %s205 = smul.addr %s204, 4
      %s206 = scalar_lea.vmem %s0, %s205
      %p207 = pneg %p56
      %p208 = pneg %p53
      %s209 = smul.u32 80, %s21
      %p210 = scmp.lt.s32.totalorder %s209, 79
      %s211 = scalar_select %p210, %s209, 79
      %p212 = scmp.lt.s32.totalorder %s20, 0
      %s213 = scalar_select %p212, %s20, 0
      %s214 = sadd.s32 %s213, %s211
      %s215 = smul.addr %s214, 4
      %s216 = scalar_lea.vmem %s1, %s215
      %p217 = pneg %p84
      %p218 = pneg %p81
      %p219 = scmp.lt.s32.totalorder %s20, 0
      %s220 = scalar_select %p219, %s20, 0
      %s221 = scalar_lea.vmem %s2, %s220
      %p222 = pneg %p110
      %p223 = pneg %p107
      %p224 = pneg %p138
      %p225 = pneg %p135
      %s226 = smul.u32 8, %s19
      %p227 = scmp.lt.s32.totalorder %s226, 15
      %s228 = scalar_select %p227, %s226, 15
      %p229 = scmp.lt.s32.totalorder %s20, 0
      %s230 = scalar_select %p229, %s20, 0
      %s231 = sadd.s32 %s230, %s228
      %s232 = smul.addr %s231, 4
      %s233 = scalar_lea.vmem %s3, %s232
      %s234 = smul.u32 8, %s19
      %s235 = smul.u32 5, %s21
      %p236 = scmp.lt.s32.totalorder %s234, 15
      %s237 = scalar_select %p236, %s234, 15
      %p238 = scmp.lt.s32.totalorder %s235, 4
      %s239 = scalar_select %p238, %s235, 4
      %s240 = smul.addr %s237, 5
      %s241 = sadd.s32 %s239, %s240
      %s242 = smul.addr %s241, 4
      %s243 = scalar_lea.vmem %s0, %s242
      %s244 = smul.u32 8, %s19
      %s245 = smul.u32 5, %s21
      %s246 = smul.u32 80, %s21
      %p247 = scmp.lt.s32.totalorder %s246, 79
      %s248 = scalar_select %p247, %s246, 79
      %p249 = scmp.lt.s32.totalorder %s20, 0
      %s250 = scalar_select %p249, %s20, 0
      %s251 = sadd.s32 %s250, %s248
      %s252 = smul.addr %s251, 4
      %s253 = scalar_lea.vmem %s1, %s252
      %s254 = smul.u32 80, %s21
      %p255 = scmp.lt.s32.totalorder %s20, 0
      %s256 = scalar_select %p255, %s20, 0
      %s257 = scalar_lea.vmem %s2, %s256
      %s258 = smul.u32 8, %s19
      %p259 = scmp.lt.s32.totalorder %s258, 15
      %s260 = scalar_select %p259, %s258, 15
      %p261 = scmp.lt.s32.totalorder %s20, 0
      %s262 = scalar_select %p261, %s20, 0
      %s263 = sadd.s32 %s262, %s260
      %s264 = smul.addr %s263, 4
      %s265 = scalar_lea.vmem %s3, %s264
      %s266 = smul.u32 8, %s19
      %p268 = scmp.eq.s32.totalorder %s21, 0
      // Predicated region
      $region33: #{descriptor_cifar_forward.5} parent=31 // pred_check
        %p269 = pneg %p268
      $region34: #{descriptor_cifar_forward.5} parent=31 // pred_check_branch
        %271 = sbr.rel (%p269) target = $region36
      $region35: #{descriptor_cifar_forward.5} parent=31 // pred_region
        %272 = vst [vmem:[#allocation2] sm:$0xff] 0.0
        %273 = vst [vmem:[#allocation2 + $0x8] sm:$0xff] 0.0
        %274 = vst [vmem:[#allocation2 + $0x10] sm:$0xff] 0.0
        %275 = vst [vmem:[#allocation2 + $0x18] sm:$0xff] 0.0
        %276 = vst [vmem:[#allocation2 + $0x20] sm:$0xff] 0.0
        %277 = vst [vmem:[#allocation2 + $0x28] sm:$0xff] 0.0
        %278 = vst [vmem:[#allocation2 + $0x30] sm:$0xff] 0.0
        %279 = vst [vmem:[#allocation2 + $0x38] sm:$0xff] 0.0
      $region36: #{descriptor_cifar_forward.5} parent=31 // pred_fallthru
        _
      %v280 = vld [vmem:[#allocation2] sm:$0xff]
      %v281 = vld [vmem:[#allocation2 + $0x8] sm:$0xff]
      %v282 = vld [vmem:[#allocation2 + $0x10] sm:$0xff]
      %v283 = vld [vmem:[#allocation2 + $0x18] sm:$0xff]
      %v284 = vld [vmem:[#allocation2 + $0x20] sm:$0xff]
      %v285 = vld [vmem:[#allocation2 + $0x28] sm:$0xff]
      %v286 = vld [vmem:[#allocation2 + $0x30] sm:$0xff]
      %v287 = vld [vmem:[#allocation2 + $0x38] sm:$0xff]
      %v288 = vld [vmem:[%s243] sm:$0xff]
      %v289 = vld [vmem:[%s243 + $0x8] sm:$0xff]
      %v290 = vld [vmem:[%s243 + $0x10] sm:$0xf]
      %v291 = vld [vmem:[%s243 + $0x14] sm:$0xff]
      %v292 = vld [vmem:[%s243 + $0x1c] sm:$0xff]
      %v293 = vld [vmem:[%s243 + $0x24] sm:$0xf]
      %v294 = vld [vmem:[%s243 + $0x28] sm:$0xff]
      %v295 = vld [vmem:[%s243 + $0x30] sm:$0xff]
      %v296 = vld [vmem:[%s243 + $0x38] sm:$0xf]
      %v297 = vld [vmem:[%s243 + $0x3c] sm:$0xff]
      %v298 = vld [vmem:[%s243 + $0x44] sm:$0xff]
      %v299 = vld [vmem:[%s243 + $0x4c] sm:$0xf]
      %v300 = vld [vmem:[%s243 + $0x50] sm:$0xff]
      %v301 = vld [vmem:[%s243 + $0x58] sm:$0xff]
      %v302 = vld [vmem:[%s243 + $0x60] sm:$0xf]
      %v303 = vld [vmem:[%s243 + $0x64] sm:$0xff]
      %v304 = vld [vmem:[%s243 + $0x6c] sm:$0xff]
      %v305 = vld [vmem:[%s243 + $0x74] sm:$0xf]
      %v306 = vld [vmem:[%s243 + $0x78] sm:$0xff]
      %v307 = vld [vmem:[%s243 + $0x80] sm:$0xff]
      %v308 = vld [vmem:[%s243 + $0x88] sm:$0xf]
      %v309 = vld [vmem:[%s243 + $0x8c] sm:$0xff]
      %v310 = vld [vmem:[%s243 + $0x94] sm:$0xff]
      %v311 = vld [vmem:[%s243 + $0x9c] sm:$0xf]
      %v312 = vld [vmem:[%s253] sm:$0xf]
      %v313 = vld [vmem:[%s253 + $0x4] sm:$0xf]
      %v314 = vld [vmem:[%s253 + $0x8] sm:$0xf]
      %v315 = vld [vmem:[%s253 + $0xc] sm:$0xf]
      %v316 = vld [vmem:[%s253 + $0x10] sm:$0xf]
      %v317 = vld [vmem:[%s253 + $0x14] sm:$0xf]
      %v318 = vld [vmem:[%s253 + $0x18] sm:$0xf]
      %v319 = vld [vmem:[%s253 + $0x1c] sm:$0xf]
      %v320 = vld [vmem:[%s253 + $0x20] sm:$0xf]
      %v321 = vld [vmem:[%s253 + $0x24] sm:$0xf]
      %v322 = vld [vmem:[%s253 + $0x28] sm:$0xf]
      %v323 = vld [vmem:[%s253 + $0x2c] sm:$0xf]
      %v324 = vld [vmem:[%s253 + $0x30] sm:$0xf]
      %v325 = vld [vmem:[%s253 + $0x34] sm:$0xf]
      %v326 = vld [vmem:[%s253 + $0x38] sm:$0xf]
      %v327 = vld [vmem:[%s253 + $0x3c] sm:$0xf]
      %v328 = vld [vmem:[%s253 + $0x40] sm:$0xf]
      %v329 = vld [vmem:[%s253 + $0x44] sm:$0xf]
      %v330 = vld [vmem:[%s253 + $0x48] sm:$0xf]
      %v331 = vld [vmem:[%s253 + $0x4c] sm:$0xf]
      %v332 = vld [vmem:[%s253 + $0x50] sm:$0xf]
      %v333 = vld [vmem:[%s253 + $0x54] sm:$0xf]
      %v334 = vld [vmem:[%s253 + $0x58] sm:$0xf]
      %v335 = vld [vmem:[%s253 + $0x5c] sm:$0xf]
      %v336 = vld [vmem:[%s253 + $0x60] sm:$0xf]
      %v337 = vld [vmem:[%s253 + $0x64] sm:$0xf]
      %v338 = vld [vmem:[%s253 + $0x68] sm:$0xf]
      %v339 = vld [vmem:[%s253 + $0x6c] sm:$0xf]
      %v340 = vld [vmem:[%s253 + $0x70] sm:$0xf]
      %v341 = vld [vmem:[%s253 + $0x74] sm:$0xf]
      %v342 = vld [vmem:[%s253 + $0x78] sm:$0xf]
      %v343 = vld [vmem:[%s253 + $0x7c] sm:$0xf]
      %v344 = vld [vmem:[%s253 + $0x80] sm:$0xf]
      %v345 = vld [vmem:[%s253 + $0x84] sm:$0xf]
      %v346 = vld [vmem:[%s253 + $0x88] sm:$0xf]
      %v347 = vld [vmem:[%s253 + $0x8c] sm:$0xf]
      %v348 = vld [vmem:[%s253 + $0x90] sm:$0xf]
      %v349 = vld [vmem:[%s253 + $0x94] sm:$0xf]
      %v350 = vld [vmem:[%s253 + $0x98] sm:$0xf]
      %v351 = vld [vmem:[%s253 + $0x9c] sm:$0xf]
      %v352 = vld [vmem:[%s253 + $0xa0] sm:$0xf]
      %v353 = vld [vmem:[%s253 + $0xa4] sm:$0xf]
      %v354 = vld [vmem:[%s253 + $0xa8] sm:$0xf]
      %v355 = vld [vmem:[%s253 + $0xac] sm:$0xf]
      %v356 = vld [vmem:[%s253 + $0xb0] sm:$0xf]
      %v357 = vld [vmem:[%s253 + $0xb4] sm:$0xf]
      %v358 = vld [vmem:[%s253 + $0xb8] sm:$0xf]
      %v359 = vld [vmem:[%s253 + $0xbc] sm:$0xf]
      %v360 = vld [vmem:[%s253 + $0xc0] sm:$0xf]
      %v361 = vld [vmem:[%s253 + $0xc4] sm:$0xf]
      %v362 = vld [vmem:[%s253 + $0xc8] sm:$0xf]
      %v363 = vld [vmem:[%s253 + $0xcc] sm:$0xf]
      %v364 = vld [vmem:[%s253 + $0xd0] sm:$0xf]
      %v365 = vld [vmem:[%s253 + $0xd4] sm:$0xf]
      %v366 = vld [vmem:[%s253 + $0xd8] sm:$0xf]
      %v367 = vld [vmem:[%s253 + $0xdc] sm:$0xf]
      %v368 = vld [vmem:[%s253 + $0xe0] sm:$0xf]
      %v369 = vld [vmem:[%s253 + $0xe4] sm:$0xf]
      %v370 = vld [vmem:[%s253 + $0xe8] sm:$0xf]
      %v371 = vld [vmem:[%s253 + $0xec] sm:$0xf]
      %v372 = vld [vmem:[%s253 + $0xf0] sm:$0xf]
      %v373 = vld [vmem:[%s253 + $0xf4] sm:$0xf]
      %v374 = vld [vmem:[%s253 + $0xf8] sm:$0xf]
      %v375 = vld [vmem:[%s253 + $0xfc] sm:$0xf]
      %v376 = vld [vmem:[%s253 + $0x100] sm:$0xf]
      %v377 = vld [vmem:[%s253 + $0x104] sm:$0xf]
      %v378 = vld [vmem:[%s253 + $0x108] sm:$0xf]
      %v379 = vld [vmem:[%s253 + $0x10c] sm:$0xf]
      %v380 = vld [vmem:[%s253 + $0x110] sm:$0xf]
      %v381 = vld [vmem:[%s253 + $0x114] sm:$0xf]
      %v382 = vld [vmem:[%s253 + $0x118] sm:$0xf]
      %v383 = vld [vmem:[%s253 + $0x11c] sm:$0xf]
      %v384 = vld [vmem:[%s253 + $0x120] sm:$0xf]
      %v385 = vld [vmem:[%s253 + $0x124] sm:$0xf]
      %v386 = vld [vmem:[%s253 + $0x128] sm:$0xf]
      %v387 = vld [vmem:[%s253 + $0x12c] sm:$0xf]
      %v388 = vld [vmem:[%s253 + $0x130] sm:$0xf]
      %v389 = vld [vmem:[%s253 + $0x134] sm:$0xf]
      %v390 = vld [vmem:[%s253 + $0x138] sm:$0xf]
      %v391 = vld [vmem:[%s253 + $0x13c] sm:$0xf]
      %v416 = vunpack.c.l.b16 %v288
      %v417 = vunpack.c.h.b16 %v288
      %v418 = vunpack.c.l.b16 %v289
      %v419 = vunpack.c.h.b16 %v289
      %v420 = vunpack.c.l.b16 %v290
      %v421 = vunpack.c.l.b16 %v291
      %v422 = vunpack.c.h.b16 %v291
      %v423 = vunpack.c.l.b16 %v292
      %v424 = vunpack.c.h.b16 %v292
      %v425 = vunpack.c.l.b16 %v293
      %v426 = vunpack.c.l.b16 %v294
      %v427 = vunpack.c.h.b16 %v294
      %v428 = vunpack.c.l.b16 %v295
      %v429 = vunpack.c.h.b16 %v295
      %v430 = vunpack.c.l.b16 %v296
      %v431 = vunpack.c.l.b16 %v297
      %v432 = vunpack.c.h.b16 %v297
      %v433 = vunpack.c.l.b16 %v298
      %v434 = vunpack.c.h.b16 %v298
      %v435 = vunpack.c.l.b16 %v299
      %v436 = vunpack.c.l.b16 %v300
      %v437 = vunpack.c.h.b16 %v300
      %v438 = vunpack.c.l.b16 %v301
      %v439 = vunpack.c.h.b16 %v301
      %v440 = vunpack.c.l.b16 %v302
      %v441 = vunpack.c.l.b16 %v303
      %v442 = vunpack.c.h.b16 %v303
      %v443 = vunpack.c.l.b16 %v304
      %v444 = vunpack.c.h.b16 %v304
      %v445 = vunpack.c.l.b16 %v305
      %v446 = vunpack.c.l.b16 %v306
      %v447 = vunpack.c.h.b16 %v306
      %v448 = vunpack.c.l.b16 %v307
      %v449 = vunpack.c.h.b16 %v307
      %v450 = vunpack.c.l.b16 %v308
      %v451 = vunpack.c.l.b16 %v309
      %v452 = vunpack.c.h.b16 %v309
      %v453 = vunpack.c.l.b16 %v310
      %v454 = vunpack.c.h.b16 %v310
      %v455 = vunpack.c.l.b16 %v311
      %v456 = vpack.c.b16 %v421, %v416
      %v457 = vpack.c.b16 %v422, %v417
      %v458 = vpack.c.b16 %v423, %v418
      %v459 = vpack.c.b16 %v424, %v419
      %v460 = vpack.c.b16 %v425, %v420
      %v461 = vpack.c.b16 %v431, %v426
      %v462 = vpack.c.b16 %v432, %v427
      %v463 = vpack.c.b16 %v433, %v428
      %v464 = vpack.c.b16 %v434, %v429
      %v465 = vpack.c.b16 %v435, %v430
      %v466 = vpack.c.b16 %v441, %v436
      %v467 = vpack.c.b16 %v442, %v437
      %v468 = vpack.c.b16 %v443, %v438
      %v469 = vpack.c.b16 %v444, %v439
      %v470 = vpack.c.b16 %v445, %v440
      %v471 = vpack.c.b16 %v451, %v446
      %v472 = vpack.c.b16 %v452, %v447
      %v473 = vpack.c.b16 %v453, %v448
      %v474 = vpack.c.b16 %v454, %v449
      %v475 = vpack.c.b16 %v455, %v450
      %v576 = vunpack.c.l.b16 %v312
      %v577 = vunpack.c.l.b16 %v313
      %v578 = vunpack.c.l.b16 %v314
      %v579 = vunpack.c.l.b16 %v315
      %v580 = vunpack.c.l.b16 %v316
      %v581 = vunpack.c.l.b16 %v317
      %v582 = vunpack.c.l.b16 %v318
      %v583 = vunpack.c.l.b16 %v319
      %v584 = vunpack.c.l.b16 %v320
      %v585 = vunpack.c.l.b16 %v321
      %v586 = vunpack.c.l.b16 %v322
      %v587 = vunpack.c.l.b16 %v323
      %v588 = vunpack.c.l.b16 %v324
      %v589 = vunpack.c.l.b16 %v325
      %v590 = vunpack.c.l.b16 %v326
      %v591 = vunpack.c.l.b16 %v327
      %v592 = vunpack.c.l.b16 %v328
      %v593 = vunpack.c.l.b16 %v329
      %v594 = vunpack.c.l.b16 %v330
      %v595 = vunpack.c.l.b16 %v331
      %v596 = vunpack.c.l.b16 %v332
      %v597 = vunpack.c.l.b16 %v333
      %v598 = vunpack.c.l.b16 %v334
      %v599 = vunpack.c.l.b16 %v335
      %v600 = vunpack.c.l.b16 %v336
      %v601 = vunpack.c.l.b16 %v337
      %v602 = vunpack.c.l.b16 %v338
      %v603 = vunpack.c.l.b16 %v339
      %v604 = vunpack.c.l.b16 %v340
      %v605 = vunpack.c.l.b16 %v341
      %v606 = vunpack.c.l.b16 %v342
      %v607 = vunpack.c.l.b16 %v343
      %v608 = vunpack.c.l.b16 %v344
      %v609 = vunpack.c.l.b16 %v345
      %v610 = vunpack.c.l.b16 %v346
      %v611 = vunpack.c.l.b16 %v347
      %v612 = vunpack.c.l.b16 %v348
      %v613 = vunpack.c.l.b16 %v349
      %v614 = vunpack.c.l.b16 %v350
      %v615 = vunpack.c.l.b16 %v351
      %v616 = vunpack.c.l.b16 %v352
      %v617 = vunpack.c.l.b16 %v353
      %v618 = vunpack.c.l.b16 %v354
      %v619 = vunpack.c.l.b16 %v355
      %v620 = vunpack.c.l.b16 %v356
      %v621 = vunpack.c.l.b16 %v357
      %v622 = vunpack.c.l.b16 %v358
      %v623 = vunpack.c.l.b16 %v359
      %v624 = vunpack.c.l.b16 %v360
      %v625 = vunpack.c.l.b16 %v361
      %v626 = vunpack.c.l.b16 %v362
      %v627 = vunpack.c.l.b16 %v363
      %v628 = vunpack.c.l.b16 %v364
      %v629 = vunpack.c.l.b16 %v365
      %v630 = vunpack.c.l.b16 %v366
      %v631 = vunpack.c.l.b16 %v367
      %v632 = vunpack.c.l.b16 %v368
      %v633 = vunpack.c.l.b16 %v369
      %v634 = vunpack.c.l.b16 %v370
      %v635 = vunpack.c.l.b16 %v371
      %v636 = vunpack.c.l.b16 %v372
      %v637 = vunpack.c.l.b16 %v373
      %v638 = vunpack.c.l.b16 %v374
      %v639 = vunpack.c.l.b16 %v375
      %v640 = vunpack.c.l.b16 %v376
      %v641 = vunpack.c.l.b16 %v377
      %v642 = vunpack.c.l.b16 %v378
      %v643 = vunpack.c.l.b16 %v379
      %v644 = vunpack.c.l.b16 %v380
      %v645 = vunpack.c.l.b16 %v381
      %v646 = vunpack.c.l.b16 %v382
      %v647 = vunpack.c.l.b16 %v383
      %v648 = vunpack.c.l.b16 %v384
      %v649 = vunpack.c.l.b16 %v385
      %v650 = vunpack.c.l.b16 %v386
      %v651 = vunpack.c.l.b16 %v387
      %v652 = vunpack.c.l.b16 %v388
      %v653 = vunpack.c.l.b16 %v389
      %v654 = vunpack.c.l.b16 %v390
      %v655 = vunpack.c.l.b16 %v391
      %v656 = vpack.c.b16 %v577, %v576
      %v657 = vpack.c.b16 %v579, %v578
      %v658 = vpack.c.b16 %v581, %v580
      %v659 = vpack.c.b16 %v583, %v582
      %v660 = vpack.c.b16 %v585, %v584
      %v661 = vpack.c.b16 %v587, %v586
      %v662 = vpack.c.b16 %v589, %v588
      %v663 = vpack.c.b16 %v591, %v590
      %v664 = vpack.c.b16 %v593, %v592
      %v665 = vpack.c.b16 %v595, %v594
      %v666 = vpack.c.b16 %v597, %v596
      %v667 = vpack.c.b16 %v599, %v598
      %v668 = vpack.c.b16 %v601, %v600
      %v669 = vpack.c.b16 %v603, %v602
      %v670 = vpack.c.b16 %v605, %v604
      %v671 = vpack.c.b16 %v607, %v606
      %v672 = vpack.c.b16 %v609, %v608
      %v673 = vpack.c.b16 %v611, %v610
      %v674 = vpack.c.b16 %v613, %v612
      %v675 = vpack.c.b16 %v615, %v614
      %v676 = vpack.c.b16 %v617, %v616
      %v677 = vpack.c.b16 %v619, %v618
      %v678 = vpack.c.b16 %v621, %v620
      %v679 = vpack.c.b16 %v623, %v622
      %v680 = vpack.c.b16 %v625, %v624
      %v681 = vpack.c.b16 %v627, %v626
      %v682 = vpack.c.b16 %v629, %v628
      %v683 = vpack.c.b16 %v631, %v630
      %v684 = vpack.c.b16 %v633, %v632
      %v685 = vpack.c.b16 %v635, %v634
      %v686 = vpack.c.b16 %v637, %v636
      %v687 = vpack.c.b16 %v639, %v638
      %v688 = vpack.c.b16 %v641, %v640
      %v689 = vpack.c.b16 %v643, %v642
      %v690 = vpack.c.b16 %v645, %v644
      %v691 = vpack.c.b16 %v647, %v646
      %v692 = vpack.c.b16 %v649, %v648
      %v693 = vpack.c.b16 %v651, %v650
      %v694 = vpack.c.b16 %v653, %v652
      %v695 = vpack.c.b16 %v655, %v654
      %736 = vmatprep.subr.bf16.mxu0 0
      %737 = vmatpush1.bf16.msra.mxu0 %v663
      %738 = vmatprep.subr.bf16.mxu0 0
      %739 = vmatpush1.bf16.msra.mxu0 %v662
      %740 = vmatprep.subr.bf16.mxu0 0
      %741 = vmatpush1.bf16.msra.mxu0 %v661
      %742 = vmatprep.subr.bf16.mxu0 0
      %743 = vmatpush1.bf16.msra.mxu0 %v660
      %744 = vmatprep.subr.bf16.mxu0 0
      %745 = vmatpush1.bf16.msra.mxu0 %v659
      %746 = vmatprep.subr.bf16.mxu0 0
      %747 = vmatpush1.bf16.msra.mxu0 %v658
      %748 = vmatprep.subr.bf16.mxu0 0
      %749 = vmatpush1.bf16.msra.mxu0 %v657
      %750 = vmatprep.subr.bf16.mxu0 0
      %751 = vmatpush1.bf16.msra.mxu0 %v656
      %752 = vmatprep.subr.bf16.mxu0 0
      %753 = vmatpush2.bf16.msra.mxu0 %v671
      %754 = vmatprep.subr.bf16.mxu0 0
      %755 = vmatpush2.bf16.msra.mxu0 %v670
      %756 = vmatprep.subr.bf16.mxu0 0
      %757 = vmatpush2.bf16.msra.mxu0 %v669
      %758 = vmatprep.subr.bf16.mxu0 0
      %759 = vmatpush2.bf16.msra.mxu0 %v668
      %760 = vmatprep.subr.bf16.mxu0 0
      %761 = vmatpush2.bf16.msra.mxu0 %v667
      %762 = vmatprep.subr.bf16.mxu0 0
      %763 = vmatpush2.bf16.msra.mxu0 %v666
      %764 = vmatprep.subr.bf16.mxu0 0
      %765 = vmatpush2.bf16.msra.mxu0 %v665
      %766 = vmatprep.subr.bf16.mxu0 0
      %767 = vmatpush2.bf16.msra.mxu0 %v664
      %768 = vmatprep.mubr.bf16.mxu0 %v457
      %769 = vmatmul.mubr.bf16.gmra.mxu0 %v456
      %v770 = vpop.f32.mrf.mxu0
      %v771 = vadd.f32 0.0, %v770
      %v772 = vpop.f32.mrf.mxu0
      %v773 = vpop.f32.mrf.mxu0
      %v774 = vadd.f32 0.0, %v773
      %v775 = vpop.f32.mrf.mxu0
      %776 = vmatprep.mubr.bf16.mxu0 %v462
      %777 = vmatmul.mubr.bf16.gmra.mxu0 %v461
      %v778 = vpop.f32.mrf.mxu0
      %v779 = vadd.f32 0.0, %v778
      %v780 = vpop.f32.mrf.mxu0
      %v781 = vpop.f32.mrf.mxu0
      %v782 = vadd.f32 0.0, %v781
      %v783 = vpop.f32.mrf.mxu0
      %784 = vmatprep.mubr.bf16.mxu0 %v467
      %785 = vmatmul.mubr.bf16.gmra.mxu0 %v466
      %v786 = vpop.f32.mrf.mxu0
      %v787 = vadd.f32 0.0, %v786
      %v788 = vpop.f32.mrf.mxu0
      %v789 = vpop.f32.mrf.mxu0
      %v790 = vadd.f32 0.0, %v789
      %v791 = vpop.f32.mrf.mxu0
      %792 = vmatprep.mubr.bf16.mxu0 %v472
      %793 = vmatmul.mubr.bf16.gmra.mxu0 %v471
      %v794 = vpop.f32.mrf.mxu0
      %v795 = vadd.f32 0.0, %v794
      %v796 = vpop.f32.mrf.mxu0
      %v797 = vpop.f32.mrf.mxu0
      %v798 = vadd.f32 0.0, %v797
      %v799 = vpop.f32.mrf.mxu0
      %800 = vdwg.mxu0
      %801 = vmatprep.subr.bf16.mxu0 0
      %802 = vmatpush1.bf16.msra.mxu0 %v679
      %803 = vmatprep.subr.bf16.mxu0 0
      %804 = vmatpush1.bf16.msra.mxu0 %v678
      %805 = vmatprep.subr.bf16.mxu0 0
      %806 = vmatpush1.bf16.msra.mxu0 %v677
      %807 = vmatprep.subr.bf16.mxu0 0
      %808 = vmatpush1.bf16.msra.mxu0 %v676
      %809 = vmatprep.subr.bf16.mxu0 0
      %810 = vmatpush1.bf16.msra.mxu0 %v675
      %811 = vmatprep.subr.bf16.mxu0 0
      %812 = vmatpush1.bf16.msra.mxu0 %v674
      %813 = vmatprep.subr.bf16.mxu0 0
      %814 = vmatpush1.bf16.msra.mxu0 %v673
      %815 = vmatprep.subr.bf16.mxu0 0
      %816 = vmatpush1.bf16.msra.mxu0 %v672
      %817 = vmatprep.subr.bf16.mxu0 0
      %818 = vmatpush2.bf16.msra.mxu0 %v687
      %819 = vmatprep.subr.bf16.mxu0 0
      %820 = vmatpush2.bf16.msra.mxu0 %v686
      %821 = vmatprep.subr.bf16.mxu0 0
      %822 = vmatpush2.bf16.msra.mxu0 %v685
      %823 = vmatprep.subr.bf16.mxu0 0
      %824 = vmatpush2.bf16.msra.mxu0 %v684
      %825 = vmatprep.subr.bf16.mxu0 0
      %826 = vmatpush2.bf16.msra.mxu0 %v683
      %827 = vmatprep.subr.bf16.mxu0 0
      %828 = vmatpush2.bf16.msra.mxu0 %v682
      %829 = vmatprep.subr.bf16.mxu0 0
      %830 = vmatpush2.bf16.msra.mxu0 %v681
      %831 = vmatprep.subr.bf16.mxu0 0
      %832 = vmatpush2.bf16.msra.mxu0 %v680
      %833 = vmatprep.mubr.bf16.mxu0 %v459
      %834 = vmatmul.mubr.bf16.gmra.mxu0 %v458
      %v835 = vpop.f32.mrf.mxu0
      %v836 = vadd.f32 %v771, %v835
      %v837 = vpop.f32.mrf.mxu0
      %v838 = vpop.f32.mrf.mxu0
      %v839 = vadd.f32 %v774, %v838
      %v840 = vpop.f32.mrf.mxu0
      %841 = vmatprep.mubr.bf16.mxu0 %v464
      %842 = vmatmul.mubr.bf16.gmra.mxu0 %v463
      %v843 = vpop.f32.mrf.mxu0
      %v844 = vadd.f32 %v779, %v843
      %v845 = vpop.f32.mrf.mxu0
      %v846 = vpop.f32.mrf.mxu0
      %v847 = vadd.f32 %v782, %v846
      %v848 = vpop.f32.mrf.mxu0
      %849 = vmatprep.mubr.bf16.mxu0 %v469
      %850 = vmatmul.mubr.bf16.gmra.mxu0 %v468
      %v851 = vpop.f32.mrf.mxu0
      %v852 = vadd.f32 %v787, %v851
      %v853 = vpop.f32.mrf.mxu0
      %v854 = vpop.f32.mrf.mxu0
      %v855 = vadd.f32 %v790, %v854
      %v856 = vpop.f32.mrf.mxu0
      %857 = vmatprep.mubr.bf16.mxu0 %v474
      %858 = vmatmul.mubr.bf16.gmra.mxu0 %v473
      %v859 = vpop.f32.mrf.mxu0
      %v860 = vadd.f32 %v795, %v859
      %v861 = vpop.f32.mrf.mxu0
      %v862 = vpop.f32.mrf.mxu0
      %v863 = vadd.f32 %v798, %v862
      %v864 = vpop.f32.mrf.mxu0
      %865 = vdwg.mxu0
      %866 = vmatprep.subr.bf16.mxu0 0
      %867 = vmatpush1.bf16.msra.mxu0 %v695
      %868 = vmatprep.subr.bf16.mxu0 0
      %869 = vmatpush1.bf16.msra.mxu0 %v694
      %870 = vmatprep.subr.bf16.mxu0 0
      %871 = vmatpush1.bf16.msra.mxu0 %v693
      %872 = vmatprep.subr.bf16.mxu0 0
      %873 = vmatpush1.bf16.msra.mxu0 %v692
      %874 = vmatprep.subr.bf16.mxu0 0
      %875 = vmatpush1.bf16.msra.mxu0 %v691
      %876 = vmatprep.subr.bf16.mxu0 0
      %877 = vmatpush1.bf16.msra.mxu0 %v690
      %878 = vmatprep.subr.bf16.mxu0 0
      %879 = vmatpush1.bf16.msra.mxu0 %v689
      %880 = vmatprep.subr.bf16.mxu0 0
      %881 = vmatpush1.bf16.msra.mxu0 %v688
      %882 = vmatprep.subr.bf16.mxu0 0
      %883 = vmatpush2.bf16.msra.mxu0 0
      %884 = vmatprep.subr.bf16.mxu0 0
      %885 = vmatpush2.bf16.msra.mxu0 0
      %886 = vmatprep.subr.bf16.mxu0 0
      %887 = vmatpush2.bf16.msra.mxu0 0
      %888 = vmatprep.subr.bf16.mxu0 0
      %889 = vmatpush2.bf16.msra.mxu0 0
      %890 = vmatprep.subr.bf16.mxu0 0
      %891 = vmatpush2.bf16.msra.mxu0 0
      %892 = vmatprep.subr.bf16.mxu0 0
      %893 = vmatpush2.bf16.msra.mxu0 0
      %894 = vmatprep.subr.bf16.mxu0 0
      %895 = vmatpush2.bf16.msra.mxu0 0
      %896 = vmatprep.subr.bf16.mxu0 0
      %897 = vmatpush2.bf16.msra.mxu0 0
      %898 = vmatprep.mubr.bf16.mxu0 0
      %899 = vmatmul.mubr.bf16.gmra.mxu0 %v460
      %v900 = vpop.f32.mrf.mxu0
      %v901 = vadd.f32 %v836, %v900
      %v902 = vpop.f32.mrf.mxu0
      %v903 = vpop.f32.mrf.mxu0
      %v904 = vadd.f32 %v839, %v903
      %v905 = vpop.f32.mrf.mxu0
      %906 = vmatprep.mubr.bf16.mxu0 0
      %907 = vmatmul.mubr.bf16.gmra.mxu0 %v465
      %v908 = vpop.f32.mrf.mxu0
      %v909 = vadd.f32 %v844, %v908
      %v910 = vpop.f32.mrf.mxu0
      %v911 = vpop.f32.mrf.mxu0
      %v912 = vadd.f32 %v847, %v911
      %v913 = vpop.f32.mrf.mxu0
      %914 = vmatprep.mubr.bf16.mxu0 0
      %915 = vmatmul.mubr.bf16.gmra.mxu0 %v470
      %v916 = vpop.f32.mrf.mxu0
      %v917 = vadd.f32 %v852, %v916
      %v918 = vpop.f32.mrf.mxu0
      %v919 = vpop.f32.mrf.mxu0
      %v920 = vadd.f32 %v855, %v919
      %v921 = vpop.f32.mrf.mxu0
      %922 = vmatprep.mubr.bf16.mxu0 0
      %923 = vmatmul.mubr.bf16.gmra.mxu0 %v475
      %v924 = vpop.f32.mrf.mxu0
      %v925 = vadd.f32 %v860, %v924
      %v926 = vpop.f32.mrf.mxu0
      %v927 = vpop.f32.mrf.mxu0
      %v928 = vadd.f32 %v863, %v927
      %v929 = vpop.f32.mrf.mxu0
      %930 = vdwg.mxu0
      %v931 = vadd.f32 %v280, %v901
      %v932 = vadd.f32 %v281, %v904
      %v933 = vadd.f32 %v282, %v909
      %v934 = vadd.f32 %v283, %v912
      %v935 = vadd.f32 %v284, %v917
      %v936 = vadd.f32 %v285, %v920
      %v937 = vadd.f32 %v286, %v925
      %v938 = vadd.f32 %v287, %v928
      %939 = vst [vmem:[#allocation2] sm:$0xff] %v931
      %940 = vst [vmem:[#allocation2 + $0x8] sm:$0xff] %v932
      %941 = vst [vmem:[#allocation2 + $0x10] sm:$0xff] %v933
      %942 = vst [vmem:[#allocation2 + $0x18] sm:$0xff] %v934
      %943 = vst [vmem:[#allocation2 + $0x20] sm:$0xff] %v935
      %944 = vst [vmem:[#allocation2 + $0x28] sm:$0xff] %v936
      %945 = vst [vmem:[#allocation2 + $0x30] sm:$0xff] %v937
      %946 = vst [vmem:[#allocation2 + $0x38] sm:$0xff] %v938
      // Predicated region
      $region37: #{descriptor_cifar_forward.5} parent=31 // pred_check
        %p947 = pneg %p268
      $region38: #{descriptor_cifar_forward.5} parent=31 // pred_check_branch
        %949 = sbr.rel (%p947) target = $region40
      $region39: #{descriptor_cifar_forward.5} parent=31 // pred_region
        %v950 = vld [vmem:[#allocation2] sm:$0xff]
        %v951 = vld [vmem:[#allocation2 + $0x8] sm:$0xff]
        %v952 = vld [vmem:[#allocation2 + $0x10] sm:$0xff]
        %v953 = vld [vmem:[#allocation2 + $0x18] sm:$0xff]
        %v954 = vld [vmem:[#allocation2 + $0x20] sm:$0xff]
        %v955 = vld [vmem:[#allocation2 + $0x28] sm:$0xff]
        %v956 = vld [vmem:[#allocation2 + $0x30] sm:$0xff]
        %v957 = vld [vmem:[#allocation2 + $0x38] sm:$0xff]
        %v958 = vld [vmem:[%s257] sm:$0x1]
        %v960 = vlaneseq
        %v961 = vshrl.u32 %v960, 7
        %v962 = vsub.s32 0, %v961
        %v963 = vrot.slane %v958, %v962
        %v965 = vadd.f32 %v950, %v963
        %v966 = vadd.f32 %v951, %v963
        %v967 = vadd.f32 %v952, %v963
        %v968 = vadd.f32 %v953, %v963
        %v969 = vadd.f32 %v954, %v963
        %v970 = vadd.f32 %v955, %v963
        %v971 = vadd.f32 %v956, %v963
        %v972 = vadd.f32 %v957, %v963
        %vm973 = vcmp.ge.f32.partialorder %v965, 0.0
        %vm974 = vcmp.ge.f32.partialorder %v966, 0.0
        %vm975 = vcmp.ge.f32.partialorder %v967, 0.0
        %vm976 = vcmp.ge.f32.partialorder %v968, 0.0
        %vm977 = vcmp.ge.f32.partialorder %v969, 0.0
        %vm978 = vcmp.ge.f32.partialorder %v970, 0.0
        %vm979 = vcmp.ge.f32.partialorder %v971, 0.0
        %vm980 = vcmp.ge.f32.partialorder %v972, 0.0
        %v981 = vmul.f32 %v965, 0.01
        %v982 = vmul.f32 %v966, 0.01
        %v983 = vmul.f32 %v967, 0.01
        %v984 = vmul.f32 %v968, 0.01
        %v985 = vmul.f32 %v969, 0.01
        %v986 = vmul.f32 %v970, 0.01
        %v987 = vmul.f32 %v971, 0.01
        %v988 = vmul.f32 %v972, 0.01
        %v989 = vsel %vm973, %v965, %v981
        %v990 = vsel %vm974, %v966, %v982
        %v991 = vsel %vm975, %v967, %v983
        %v992 = vsel %vm976, %v968, %v984
        %v993 = vsel %vm977, %v969, %v985
        %v994 = vsel %vm978, %v970, %v986
        %v995 = vsel %vm979, %v971, %v987
        %v996 = vsel %vm980, %v972, %v988
        %v997 = vpack.c.bf16 %v990, %v989
        %v998 = vpack.c.bf16 %v992, %v991
        %v999 = vpack.c.bf16 %v994, %v993
        %v1000 = vpack.c.bf16 %v996, %v995
        %v1005 = vunpack.c.l.b16 %v997
        %v1006 = vunpack.c.h.b16 %v997
        %v1007 = vunpack.c.l.b16 %v998
        %v1008 = vunpack.c.h.b16 %v998
        %v1009 = vunpack.c.l.b16 %v999
        %v1010 = vunpack.c.h.b16 %v999
        %v1011 = vunpack.c.l.b16 %v1000
        %v1012 = vunpack.c.h.b16 %v1000
        %v1013 = vpack.c.b16 %v1005, %v1005
        %v1014 = vpack.c.b16 %v1006, %v1006
        %v1015 = vpack.c.b16 %v1007, %v1007
        %v1016 = vpack.c.b16 %v1008, %v1008
        %v1017 = vpack.c.b16 %v1009, %v1009
        %v1018 = vpack.c.b16 %v1010, %v1010
        %v1019 = vpack.c.b16 %v1011, %v1011
        %v1020 = vpack.c.b16 %v1012, %v1012
        %1029 = vst [vmem:[%s265] sm:$0xf] %v1013
        %1030 = vst [vmem:[%s265 + $0x4] sm:$0xf] %v1014
        %1031 = vst [vmem:[%s265 + $0x8] sm:$0xf] %v1015
        %1032 = vst [vmem:[%s265 + $0xc] sm:$0xf] %v1016
        %1033 = vst [vmem:[%s265 + $0x10] sm:$0xf] %v1017
        %1034 = vst [vmem:[%s265 + $0x14] sm:$0xf] %v1018
        %1035 = vst [vmem:[%s265 + $0x18] sm:$0xf] %v1019
        %1036 = vst [vmem:[%s265 + $0x1c] sm:$0xf] %v1020
      $region40: #{descriptor_cifar_forward.5} parent=31 // pred_fallthru
        _
      %s1037 = smul.u32 8, %s19
      %p1038 = scmp.lt.s32.totalorder %s1037, 15
      %s1039 = scalar_select %p1038, %s1037, 15
      %p1040 = scmp.lt.s32.totalorder %s20, 0
      %s1041 = scalar_select %p1040, %s20, 0
      %s1042 = sadd.s32 %s1041, %s1039
      %s1043 = smul.addr %s1042, 4
      %s1044 = scalar_lea.vmem %s3, %s1043
      // Predicated region
      $region41: #{descriptor_cifar_forward.5} parent=31 // pred_check
        %p1045 = pneg %p135
      $region42: #{descriptor_cifar_forward.5} parent=31 // pred_check_branch
        %1047 = sbr.rel (%p1045) target = $region44
      $region43: #{descriptor_cifar_forward.5} parent=31 // pred_region
        %s1048 = smul.u32 8, %s19
      $region44: #{descriptor_cifar_forward.5} parent=31 // pred_fallthru
        _
    $region32: #{descriptor_cifar_forward.5} parent=5 // pred_fallthru
      _
    %p1049 = scmp.le.s32.totalorder 2, %s9
    // Predicated region
    $region45: #{descriptor_cifar_forward.5} parent=5 // pred_check
      %p1050 = pneg %p1049
    $region46: #{descriptor_cifar_forward.5} parent=5 // pred_check_branch
      %1052 = sbr.rel (%p1050) target = $region48
    $region47: #{descriptor_cifar_forward.5} parent=5 // pred_region
      %s1053 = ssub.s32 %s9, 2
      // Predicated region
      $region49: #{descriptor_cifar_forward.5} parent=47 // pred_check
        %p1054 = pneg %p141
      $region50: #{descriptor_cifar_forward.5} parent=47 // pred_check_branch
        %1056 = sbr.rel (%p1054) target = $region52
      $region51: #{descriptor_cifar_forward.5} parent=47 // pred_region
        %s1057 = smul.u32 8, %s22
        %p1058 = scmp.lt.s32.totalorder %s1057, 15
        %s1059 = scalar_select %p1058, %s1057, 15
        %p1060 = scmp.lt.s32.totalorder %s23, 0
        %s1061 = scalar_select %p1060, %s23, 0
        %s1062 = sadd.s32 %s1061, %s1059
        %s1063 = smul.addr %s1062, 4
        %s1064 = scalar_lea.vmem %s3, %s1063
      $region52: #{descriptor_cifar_forward.5} parent=47 // pred_fallthru
        _
    $region48: #{descriptor_cifar_forward.5} parent=5 // pred_fallthru
      _
  $region6: #{descriptor_cifar_forward.5} parent=0 // loop_footer
    %s13 = sadd.s32 1, %s9
  $region7: #{descriptor_cifar_forward.5} parent=0 // loop_footer_branch
    %8 = sbr.rel target = $region3
  $region8: #{descriptor_cifar_forward.5} parent=0 // loop_exit
    _

// kernel: descriptor_cifar_forward.6
$region0: #{descriptor_cifar_forward.6}
  #allocation0 [shape = 'u32[]', space=smem, size = 0x4, offset = 0x4, fixed_abs, tag = 'smem constant byte address 0x4 - core index']
  #allocation1 [shape = 'u32[144,128]{1,0:T(1,128)}', space=vmem, size = 0x12000, scoped, tag = 'internal scratch']
  #allocation2 [shape = 'f32[128,128]{1,0:T(8,128)}', space=vmem, size = 0x10000, scoped, tag = 'scratch operand']
  %s0 = inlined_call_operand.vmem [shape: bf16[128,1152], index: 0, kind: input, shape index: {}]
  %s1 = inlined_call_operand.vmem [shape: bf16[1152,256], index: 1, kind: input, shape index: {}]
  %s2 = inlined_call_operand.vmem [shape: f32[1,256], index: 2, kind: input, shape index: {}]
  %s3 = inlined_call_operand.vmem [shape: bf16[128,256], index: 3, kind: output, shape index: {}]
  %s4 = sld [smem:[#allocation0]]
  $region131: #{descriptor_cifar_forward.6} parent=0
    _
  %s6 = ssub.s32 1, %s4
  %s7 = scalar_select 0, %s6, %s4
  $region1: #{descriptor_cifar_forward.6} parent=0
    #allocation3 [shape = 'u8[589824]{0}', space=vmem, size = 0x90000, scoped, tag = 'input window, operand 1']
    #allocation4 [shape = 'u8[65536]{0}', space=vmem, size = 0x10000, scoped, tag = 'output window, operand 0']
    loop: start=0, step=1, limit=4
    $region2: #{descriptor_cifar_forward.6} parent=1 // loop_pre_header
      _
    $region3: #{descriptor_cifar_forward.6} parent=1 // loop_header
      %s9 = sphi 0, %s13
      %p10 = scmp.ge.s32.totalorder %s9, 4
      %s16 = sphi 0, %s35
      %s17 = sphi 0, %s31
      %s18 = sphi 0, %s27
      %s19 = sphi 0, %s16
      %s20 = sphi 0, %s17
      %s21 = sphi 0, %s18
      %s22 = sphi 0, %s19
      %s23 = sphi 0, %s20
      %s24 = sphi 0, %s21
      %s40 = sphi 0, %s42
      %s43 = sphi 0, %s40
      %s44 = sphi 0, %s43
      %s60 = sphi 0, %s44
      %s68 = sphi 0, %s70
      %s71 = sphi 0, %s68
      %s72 = sphi 0, %s71
      %s88 = sphi 0, %s72
      %s94 = sphi 0, %s96
      %s97 = sphi 0, %s94
      %s98 = sphi 0, %s97
      %s114 = sphi 0, %s98
      %s122 = sphi 0, %s124
      %s125 = sphi 0, %s122
      %s126 = sphi 0, %s125
      %s142 = sphi 0, %s126
    $region4: #{descriptor_cifar_forward.6} parent=1 // loop_header_branch
      %12 = sbr.rel (%p10) target = $region8
    $region5: #{descriptor_cifar_forward.6} parent=1 // loop_body
      %s14 = ssub.s32 %s9, 1
      %s15 = ssub.s32 %s9, 2
      %s25 = sadd.s32 1, %s18
      %p26 = scmp.ge.s32.totalorder %s25, 1
      %s27 = scalar_select %p26, 0, %s25
      %s28 = sadd.s32 1, %s17
      %s29 = scalar_select %p26, %s28, %s17
      %p30 = scmp.ge.s32.totalorder %s29, 2
      %s31 = scalar_select %p30, 0, %s29
      %s32 = sadd.s32 1, %s16
      %s33 = scalar_select %p30, %s32, %s16
      %p34 = scmp.ge.s32.totalorder %s33, 1
      %s35 = scalar_select %p34, 0, %s33
      %s36 = ssub.s32 %s16, %s35
      %s37 = ssub.s32 %s18, %s27
      %s38 = sor.u32 %s36, %s37
      %p39 = scmp.eq.s32.totalorder %s38, 0
      %s41 = sadd.s32 %s40, 1
      %s42 = scalar_select %p39, %s40, %s41
      %p45 = pneg %p39
      %p46 = scmp.eq.s32.totalorder %s9, 1
      %p47 = por %p45, %p46
      %p48 = scmp.ne.s32.totalorder %s40, %s43
      %p49 = scmp.eq.s32.totalorder %s9, 0
      %p50 = por %p48, %p49
      %p51 = scmp.ne.s32.totalorder %s40, %s43
      %p52 = scmp.eq.s32.totalorder %s14, 1
      %p53 = por %p51, %p52
      %p54 = scmp.ne.s32.totalorder %s43, %s44
      %p55 = scmp.eq.s32.totalorder %s14, 0
      %p56 = por %p54, %p55
      %p57 = scmp.ne.s32.totalorder %s43, %s44
      %p58 = scmp.eq.s32.totalorder %s15, 1
      %p59 = por %p57, %p58
      %p61 = scmp.ne.s32.totalorder %s44, %s60
      %p62 = scmp.eq.s32.totalorder %s15, 0
      %p63 = por %p61, %p62
      %s64 = ssub.s32 %s18, %s27
      %s65 = ssub.s32 %s17, %s31
      %s66 = sor.u32 %s64, %s65
      %p67 = scmp.eq.s32.totalorder %s66, 0
      %s69 = sadd.s32 %s68, 1
      %s70 = scalar_select %p67, %s68, %s69
      %p73 = pneg %p67
      %p74 = scmp.eq.s32.totalorder %s9, 1
      %p75 = por %p73, %p74
      %p76 = scmp.ne.s32.totalorder %s68, %s71
      %p77 = scmp.eq.s32.totalorder %s9, 0
      %p78 = por %p76, %p77
      %p79 = scmp.ne.s32.totalorder %s68, %s71
      %p80 = scmp.eq.s32.totalorder %s14, 1
      %p81 = por %p79, %p80
      %p82 = scmp.ne.s32.totalorder %s71, %s72
      %p83 = scmp.eq.s32.totalorder %s14, 0
      %p84 = por %p82, %p83
      %p85 = scmp.ne.s32.totalorder %s71, %s72
      %p86 = scmp.eq.s32.totalorder %s15, 1
      %p87 = por %p85, %p86
      %p89 = scmp.ne.s32.totalorder %s72, %s88
      %p90 = scmp.eq.s32.totalorder %s15, 0
      %p91 = por %p89, %p90
      %s92 = ssub.s32 %s17, %s31
      %p93 = scmp.eq.s32.totalorder %s92, 0
      %s95 = sadd.s32 %s94, 1
      %s96 = scalar_select %p93, %s94, %s95
      %p99 = pneg %p93
      %p100 = scmp.eq.s32.totalorder %s9, 1
      %p101 = por %p99, %p100
      %p102 = scmp.ne.s32.totalorder %s94, %s97
      %p103 = scmp.eq.s32.totalorder %s9, 0
      %p104 = por %p102, %p103
      %p105 = scmp.ne.s32.totalorder %s94, %s97
      %p106 = scmp.eq.s32.totalorder %s14, 1
      %p107 = por %p105, %p106
      %p108 = scmp.ne.s32.totalorder %s97, %s98
      %p109 = scmp.eq.s32.totalorder %s14, 0
      %p110 = por %p108, %p109
      %p111 = scmp.ne.s32.totalorder %s97, %s98
      %p112 = scmp.eq.s32.totalorder %s15, 1
      %p113 = por %p111, %p112
      %p115 = scmp.ne.s32.totalorder %s98, %s114
      %p116 = scmp.eq.s32.totalorder %s15, 0
      %p117 = por %p115, %p116
      %s118 = ssub.s32 %s16, %s35
      %s119 = ssub.s32 %s17, %s31
      %s120 = sor.u32 %s118, %s119
      %p121 = scmp.eq.s32.totalorder %s120, 0
      %s123 = sadd.s32 %s122, 1
      %s124 = scalar_select %p121, %s122, %s123
      %p127 = pneg %p121
      %p128 = scmp.eq.s32.totalorder %s9, 1
      %p129 = por %p127, %p128
      %p130 = scmp.ne.s32.totalorder %s122, %s125
      %p131 = scmp.eq.s32.totalorder %s9, 0
      %p132 = por %p130, %p131
      %p133 = scmp.ne.s32.totalorder %s122, %s125
      %p134 = scmp.eq.s32.totalorder %s14, 1
      %p135 = por %p133, %p134
      %p136 = scmp.ne.s32.totalorder %s125, %s126
      %p137 = scmp.eq.s32.totalorder %s14, 0
      %p138 = por %p136, %p137
      %p139 = scmp.ne.s32.totalorder %s125, %s126
      %p140 = scmp.eq.s32.totalorder %s15, 1
      %p141 = por %p139, %p140
      %p143 = scmp.ne.s32.totalorder %s126, %s142
      %p144 = scmp.eq.s32.totalorder %s15, 0
      %p145 = por %p143, %p144
      %p146 = scmp.le.s32.totalorder 1, %s9
      %p147 = scmp.lt.s32.totalorder %s9, 3
      %p148 = pnand %p146, %p147
      %p149 = pneg %p148
      // Predicated region
      $region9: #{descriptor_cifar_forward.6} parent=5 // pred_check
        _
      $region10: #{descriptor_cifar_forward.6} parent=5 // pred_check_branch
        %151 = sbr.rel (%p148) target = $region12
      $region11: #{descriptor_cifar_forward.6} parent=5 // pred_region
        %s152 = ssub.s32 %s9, 1
        // Predicated region
        $region13: #{descriptor_cifar_forward.6} parent=11 // pred_check
          %p153 = pneg %p56
        $region14: #{descriptor_cifar_forward.6} parent=11 // pred_check_branch
          %155 = sbr.rel (%p153) target = $region16
        $region15: #{descriptor_cifar_forward.6} parent=11 // pred_region
          %s156 = smul.u32 16, %s19
          %s157 = smul.u32 9, %s21
          %p158 = scmp.lt.s32.totalorder %s156, 15
          %s159 = scalar_select %p158, %s156, 15
          %p160 = scmp.lt.s32.totalorder %s157, 8
          %s161 = scalar_select %p160, %s157, 8
          %s162 = smul.addr %s159, 9
          %s163 = sadd.s32 %s161, %s162
          %s164 = smul.addr %s163, 4
          %s165 = scalar_lea.vmem %s0, %s164
          %s166 = smul.u32 16, %s19
          %s167 = smul.u32 9, %s21
        $region16: #{descriptor_cifar_forward.6} parent=11 // pred_fallthru
          _
      $region12: #{descriptor_cifar_forward.6} parent=5 // pred_fallthru
        _
      %p168 = scmp.lt.s32.totalorder %s9, 2
      // Predicated region
      $region17: #{descriptor_cifar_forward.6} parent=5 // pred_check
        %p169 = pneg %p168
      $region18: #{descriptor_cifar_forward.6} parent=5 // pred_check_branch
        %171 = sbr.rel (%p169) target = $region20
      $region19: #{descriptor_cifar_forward.6} parent=5 // pred_region
        // Predicated region
        $region21: #{descriptor_cifar_forward.6} parent=19 // pred_check
          %p172 = pneg %p78
        $region22: #{descriptor_cifar_forward.6} parent=19 // pred_check_branch
          %174 = sbr.rel (%p172) target = $region24
        $region23: #{descriptor_cifar_forward.6} parent=19 // pred_region
          %s175 = sand.u32 %s68, 1
          %s176 = sand.u32 %s68, 1
          %s177 = smul.addr %s176, 576
          %s178 = scalar_lea.vmem [#allocation3], %s177
          %s179 = smul.u32 144, %s18
          %s180 = smul.addr %s179, 2
          %s181 = sadd.s32 %s17, %s180
          %s182 = smul.addr %s181, 4
          %s183 = scalar_lea.vmem %s1, %s182
          // Predicated region
          $region25: #{descriptor_cifar_forward.6} parent=23 // pred_check
            _
          $region26: #{descriptor_cifar_forward.6} parent=23 // pred_check_branch
            %185 = sbr.rel (0) target = $region28
          $region27: #{descriptor_cifar_forward.6} parent=23 // pred_region
            // Predicated region
            $region29: #{descriptor_cifar_forward.6} parent=27 // pred_check
              _
            $region30: #{descriptor_cifar_forward.6} parent=27 // pred_check_branch
              %187 = sbr.rel target = $region32
            $region31: #{descriptor_cifar_forward.6} parent=27 // pred_region
              // Predicated region
              $region44: #{descriptor_cifar_forward.6} parent=31 // pred_check
                _
              $region45: #{descriptor_cifar_forward.6} parent=31 // pred_check_branch
                %489 = sbr.rel (0) target = $region47
              $region46: #{descriptor_cifar_forward.6} parent=31 // pred_region
                loop: start=0, step=1, limit=1
                $region48: #{descriptor_cifar_forward.6} parent=46 // loop_pre_header
                  _
                $region49: #{descriptor_cifar_forward.6} parent=46 // loop_header
                  %s491 = sphi 0, %s495
                  %p492 = scmp.ge.s32.totalorder %s491, 1
                  %s496 = sphi %s183, %s183
                  %s497 = sphi %s178, %s178
                $region50: #{descriptor_cifar_forward.6} parent=46 // loop_header_branch
                  %494 = sbr.rel (%p492) target = $region54
                $region51: #{descriptor_cifar_forward.6} parent=46 // loop_body
                  _
                $region52: #{descriptor_cifar_forward.6} parent=46 // loop_footer
                  %s495 = sadd.s32 1, %s491
                $region53: #{descriptor_cifar_forward.6} parent=46 // loop_footer_branch
                  %490 = sbr.rel target = $region49
                $region54: #{descriptor_cifar_forward.6} parent=46 // loop_exit
                  _
                %s499 = ssub.s32 16, 1
                loop: start=0, step=1, limit=1
                $region55: #{descriptor_cifar_forward.6} parent=46 // loop_pre_header
                  _
                $region56: #{descriptor_cifar_forward.6} parent=46 // loop_header
                  %s501 = sphi 0, %s505
                  %p502 = scmp.ge.s32.totalorder %s501, 1
                  %s506 = sphi %s183, %s183
                  %s507 = sphi %s178, %s178
                $region57: #{descriptor_cifar_forward.6} parent=46 // loop_header_branch
                  %504 = sbr.rel (%p502) target = $region61
                $region58: #{descriptor_cifar_forward.6} parent=46 // loop_body
                  %v508 = vld [vmem:[%s506] sm:%s499]
                  %509 = vst [vmem:[%s507] sm:%s499] %v508
                  %v510 = vld [vmem:[%s506 + $0x8] sm:%s499]
                  %511 = vst [vmem:[%s507 + $0x4] sm:%s499] %v510
                  %v512 = vld [vmem:[%s506 + $0x10] sm:%s499]
                  %513 = vst [vmem:[%s507 + $0x8] sm:%s499] %v512
                  %v514 = vld [vmem:[%s506 + $0x18] sm:%s499]
                  %515 = vst [vmem:[%s507 + $0xc] sm:%s499] %v514
                  %v516 = vld [vmem:[%s506 + $0x20] sm:%s499]
                  %517 = vst [vmem:[%s507 + $0x10] sm:%s499] %v516
                  %v518 = vld [vmem:[%s506 + $0x28] sm:%s499]
                  %519 = vst [vmem:[%s507 + $0x14] sm:%s499] %v518
                  %v520 = vld [vmem:[%s506 + $0x30] sm:%s499]
                  %521 = vst [vmem:[%s507 + $0x18] sm:%s499] %v520
                  %v522 = vld [vmem:[%s506 + $0x38] sm:%s499]
                  %523 = vst [vmem:[%s507 + $0x1c] sm:%s499] %v522
                  %v524 = vld [vmem:[%s506 + $0x40] sm:%s499]
                  %525 = vst [vmem:[%s507 + $0x20] sm:%s499] %v524
                  %v526 = vld [vmem:[%s506 + $0x48] sm:%s499]
                  %527 = vst [vmem:[%s507 + $0x24] sm:%s499] %v526
                  %v528 = vld [vmem:[%s506 + $0x50] sm:%s499]
                  %529 = vst [vmem:[%s507 + $0x28] sm:%s499] %v528
                  %v530 = vld [vmem:[%s506 + $0x58] sm:%s499]
                  %531 = vst [vmem:[%s507 + $0x2c] sm:%s499] %v530
                  %v532 = vld [vmem:[%s506 + $0x60] sm:%s499]
                  %533 = vst [vmem:[%s507 + $0x30] sm:%s499] %v532
                  %v534 = vld [vmem:[%s506 + $0x68] sm:%s499]
                  %535 = vst [vmem:[%s507 + $0x34] sm:%s499] %v534
                  %v536 = vld [vmem:[%s506 + $0x70] sm:%s499]
                  %537 = vst [vmem:[%s507 + $0x38] sm:%s499] %v536
                  %v538 = vld [vmem:[%s506 + $0x78] sm:%s499]
                  %539 = vst [vmem:[%s507 + $0x3c] sm:%s499] %v538
                  %v540 = vld [vmem:[%s506 + $0x80] sm:%s499]
                  %541 = vst [vmem:[%s507 + $0x40] sm:%s499] %v540
                  %v542 = vld [vmem:[%s506 + $0x88] sm:%s499]
                  %543 = vst [vmem:[%s507 + $0x44] sm:%s499] %v542
                  %v544 = vld [vmem:[%s506 + $0x90] sm:%s499]
                  %545 = vst [vmem:[%s507 + $0x48] sm:%s499] %v544
                  %v546 = vld [vmem:[%s506 + $0x98] sm:%s499]
                  %547 = vst [vmem:[%s507 + $0x4c] sm:%s499] %v546
                  %v548 = vld [vmem:[%s506 + $0xa0] sm:%s499]
                  %549 = vst [vmem:[%s507 + $0x50] sm:%s499] %v548
                  %v550 = vld [vmem:[%s506 + $0xa8] sm:%s499]
                  %551 = vst [vmem:[%s507 + $0x54] sm:%s499] %v550
                  %v552 = vld [vmem:[%s506 + $0xb0] sm:%s499]
                  %553 = vst [vmem:[%s507 + $0x58] sm:%s499] %v552
                  %v554 = vld [vmem:[%s506 + $0xb8] sm:%s499]
                  %555 = vst [vmem:[%s507 + $0x5c] sm:%s499] %v554
                  %v556 = vld [vmem:[%s506 + $0xc0] sm:%s499]
                  %557 = vst [vmem:[%s507 + $0x60] sm:%s499] %v556
                  %v558 = vld [vmem:[%s506 + $0xc8] sm:%s499]
                  %559 = vst [vmem:[%s507 + $0x64] sm:%s499] %v558
                  %v560 = vld [vmem:[%s506 + $0xd0] sm:%s499]
                  %561 = vst [vmem:[%s507 + $0x68] sm:%s499] %v560
                  %v562 = vld [vmem:[%s506 + $0xd8] sm:%s499]
                  %563 = vst [vmem:[%s507 + $0x6c] sm:%s499] %v562
                  %v564 = vld [vmem:[%s506 + $0xe0] sm:%s499]
                  %565 = vst [vmem:[%s507 + $0x70] sm:%s499] %v564
                  %v566 = vld [vmem:[%s506 + $0xe8] sm:%s499]
                  %567 = vst [vmem:[%s507 + $0x74] sm:%s499] %v566
                  %v568 = vld [vmem:[%s506 + $0xf0] sm:%s499]
                  %569 = vst [vmem:[%s507 + $0x78] sm:%s499] %v568
                  %v570 = vld [vmem:[%s506 + $0xf8] sm:%s499]
                  %571 = vst [vmem:[%s507 + $0x7c] sm:%s499] %v570
                  %v572 = vld [vmem:[%s506 + $0x100] sm:%s499]
                  %573 = vst [vmem:[%s507 + $0x80] sm:%s499] %v572
                  %v574 = vld [vmem:[%s506 + $0x108] sm:%s499]
                  %575 = vst [vmem:[%s507 + $0x84] sm:%s499] %v574
                  %v576 = vld [vmem:[%s506 + $0x110] sm:%s499]
                  %577 = vst [vmem:[%s507 + $0x88] sm:%s499] %v576
                  %v578 = vld [vmem:[%s506 + $0x118] sm:%s499]
                  %579 = vst [vmem:[%s507 + $0x8c] sm:%s499] %v578
                  %v580 = vld [vmem:[%s506 + $0x120] sm:%s499]
                  %581 = vst [vmem:[%s507 + $0x90] sm:%s499] %v580
                  %v582 = vld [vmem:[%s506 + $0x128] sm:%s499]
                  %583 = vst [vmem:[%s507 + $0x94] sm:%s499] %v582
                  %v584 = vld [vmem:[%s506 + $0x130] sm:%s499]
                  %585 = vst [vmem:[%s507 + $0x98] sm:%s499] %v584
                  %v586 = vld [vmem:[%s506 + $0x138] sm:%s499]
                  %587 = vst [vmem:[%s507 + $0x9c] sm:%s499] %v586
                  %v588 = vld [vmem:[%s506 + $0x140] sm:%s499]
                  %589 = vst [vmem:[%s507 + $0xa0] sm:%s499] %v588
                  %v590 = vld [vmem:[%s506 + $0x148] sm:%s499]
                  %591 = vst [vmem:[%s507 + $0xa4] sm:%s499] %v590
                  %v592 = vld [vmem:[%s506 + $0x150] sm:%s499]
                  %593 = vst [vmem:[%s507 + $0xa8] sm:%s499] %v592
                  %v594 = vld [vmem:[%s506 + $0x158] sm:%s499]
                  %595 = vst [vmem:[%s507 + $0xac] sm:%s499] %v594
                  %v596 = vld [vmem:[%s506 + $0x160] sm:%s499]
                  %597 = vst [vmem:[%s507 + $0xb0] sm:%s499] %v596
                  %v598 = vld [vmem:[%s506 + $0x168] sm:%s499]
                  %599 = vst [vmem:[%s507 + $0xb4] sm:%s499] %v598
                  %v600 = vld [vmem:[%s506 + $0x170] sm:%s499]
                  %601 = vst [vmem:[%s507 + $0xb8] sm:%s499] %v600
                  %v602 = vld [vmem:[%s506 + $0x178] sm:%s499]
                  %603 = vst [vmem:[%s507 + $0xbc] sm:%s499] %v602
                  %v604 = vld [vmem:[%s506 + $0x180] sm:%s499]
                  %605 = vst [vmem:[%s507 + $0xc0] sm:%s499] %v604
                  %v606 = vld [vmem:[%s506 + $0x188] sm:%s499]
                  %607 = vst [vmem:[%s507 + $0xc4] sm:%s499] %v606
                  %v608 = vld [vmem:[%s506 + $0x190] sm:%s499]
                  %609 = vst [vmem:[%s507 + $0xc8] sm:%s499] %v608
                  %v610 = vld [vmem:[%s506 + $0x198] sm:%s499]
                  %611 = vst [vmem:[%s507 + $0xcc] sm:%s499] %v610
                  %v612 = vld [vmem:[%s506 + $0x1a0] sm:%s499]
                  %613 = vst [vmem:[%s507 + $0xd0] sm:%s499] %v612
                  %v614 = vld [vmem:[%s506 + $0x1a8] sm:%s499]
                  %615 = vst [vmem:[%s507 + $0xd4] sm:%s499] %v614
                  %v616 = vld [vmem:[%s506 + $0x1b0] sm:%s499]
                  %617 = vst [vmem:[%s507 + $0xd8] sm:%s499] %v616
                  %v618 = vld [vmem:[%s506 + $0x1b8] sm:%s499]
                  %619 = vst [vmem:[%s507 + $0xdc] sm:%s499] %v618
                  %v620 = vld [vmem:[%s506 + $0x1c0] sm:%s499]
                  %621 = vst [vmem:[%s507 + $0xe0] sm:%s499] %v620
                  %v622 = vld [vmem:[%s506 + $0x1c8] sm:%s499]
                  %623 = vst [vmem:[%s507 + $0xe4] sm:%s499] %v622
                  %v624 = vld [vmem:[%s506 + $0x1d0] sm:%s499]
                  %625 = vst [vmem:[%s507 + $0xe8] sm:%s499] %v624
                  %v626 = vld [vmem:[%s506 + $0x1d8] sm:%s499]
                  %627 = vst [vmem:[%s507 + $0xec] sm:%s499] %v626
                  %v628 = vld [vmem:[%s506 + $0x1e0] sm:%s499]
                  %629 = vst [vmem:[%s507 + $0xf0] sm:%s499] %v628
                  %v630 = vld [vmem:[%s506 + $0x1e8] sm:%s499]
                  %631 = vst [vmem:[%s507 + $0xf4] sm:%s499] %v630
                  %v632 = vld [vmem:[%s506 + $0x1f0] sm:%s499]
                  %633 = vst [vmem:[%s507 + $0xf8] sm:%s499] %v632
                  %v634 = vld [vmem:[%s506 + $0x1f8] sm:%s499]
                  %635 = vst [vmem:[%s507 + $0xfc] sm:%s499] %v634
                  %v636 = vld [vmem:[%s506 + $0x200] sm:%s499]
                  %637 = vst [vmem:[%s507 + $0x100] sm:%s499] %v636
                  %v638 = vld [vmem:[%s506 + $0x208] sm:%s499]
                  %639 = vst [vmem:[%s507 + $0x104] sm:%s499] %v638
                  %v640 = vld [vmem:[%s506 + $0x210] sm:%s499]
                  %641 = vst [vmem:[%s507 + $0x108] sm:%s499] %v640
                  %v642 = vld [vmem:[%s506 + $0x218] sm:%s499]
                  %643 = vst [vmem:[%s507 + $0x10c] sm:%s499] %v642
                  %v644 = vld [vmem:[%s506 + $0x220] sm:%s499]
                  %645 = vst [vmem:[%s507 + $0x110] sm:%s499] %v644
                  %v646 = vld [vmem:[%s506 + $0x228] sm:%s499]
                  %647 = vst [vmem:[%s507 + $0x114] sm:%s499] %v646
                  %v648 = vld [vmem:[%s506 + $0x230] sm:%s499]
                  %649 = vst [vmem:[%s507 + $0x118] sm:%s499] %v648
                  %v650 = vld [vmem:[%s506 + $0x238] sm:%s499]
                  %651 = vst [vmem:[%s507 + $0x11c] sm:%s499] %v650
                  %v652 = vld [vmem:[%s506 + $0x240] sm:%s499]
                  %653 = vst [vmem:[%s507 + $0x120] sm:%s499] %v652
                  %v654 = vld [vmem:[%s506 + $0x248] sm:%s499]
                  %655 = vst [vmem:[%s507 + $0x124] sm:%s499] %v654
                  %v656 = vld [vmem:[%s506 + $0x250] sm:%s499]
                  %657 = vst [vmem:[%s507 + $0x128] sm:%s499] %v656
                  %v658 = vld [vmem:[%s506 + $0x258] sm:%s499]
                  %659 = vst [vmem:[%s507 + $0x12c] sm:%s499] %v658
                  %v660 = vld [vmem:[%s506 + $0x260] sm:%s499]
                  %661 = vst [vmem:[%s507 + $0x130] sm:%s499] %v660
                  %v662 = vld [vmem:[%s506 + $0x268] sm:%s499]
                  %663 = vst [vmem:[%s507 + $0x134] sm:%s499] %v662
                  %v664 = vld [vmem:[%s506 + $0x270] sm:%s499]
                  %665 = vst [vmem:[%s507 + $0x138] sm:%s499] %v664
                  %v666 = vld [vmem:[%s506 + $0x278] sm:%s499]
                  %667 = vst [vmem:[%s507 + $0x13c] sm:%s499] %v666
                  %v668 = vld [vmem:[%s506 + $0x280] sm:%s499]
                  %669 = vst [vmem:[%s507 + $0x140] sm:%s499] %v668
                  %v670 = vld [vmem:[%s506 + $0x288] sm:%s499]
                  %671 = vst [vmem:[%s507 + $0x144] sm:%s499] %v670
                  %v672 = vld [vmem:[%s506 + $0x290] sm:%s499]
                  %673 = vst [vmem:[%s507 + $0x148] sm:%s499] %v672
                  %v674 = vld [vmem:[%s506 + $0x298] sm:%s499]
                  %675 = vst [vmem:[%s507 + $0x14c] sm:%s499] %v674
                  %v676 = vld [vmem:[%s506 + $0x2a0] sm:%s499]
                  %677 = vst [vmem:[%s507 + $0x150] sm:%s499] %v676
                  %v678 = vld [vmem:[%s506 + $0x2a8] sm:%s499]
                  %679 = vst [vmem:[%s507 + $0x154] sm:%s499] %v678
                  %v680 = vld [vmem:[%s506 + $0x2b0] sm:%s499]
                  %681 = vst [vmem:[%s507 + $0x158] sm:%s499] %v680
                  %v682 = vld [vmem:[%s506 + $0x2b8] sm:%s499]
                  %683 = vst [vmem:[%s507 + $0x15c] sm:%s499] %v682
                  %v684 = vld [vmem:[%s506 + $0x2c0] sm:%s499]
                  %685 = vst [vmem:[%s507 + $0x160] sm:%s499] %v684
                  %v686 = vld [vmem:[%s506 + $0x2c8] sm:%s499]
                  %687 = vst [vmem:[%s507 + $0x164] sm:%s499] %v686
                  %v688 = vld [vmem:[%s506 + $0x2d0] sm:%s499]
                  %689 = vst [vmem:[%s507 + $0x168] sm:%s499] %v688
                  %v690 = vld [vmem:[%s506 + $0x2d8] sm:%s499]
                  %691 = vst [vmem:[%s507 + $0x16c] sm:%s499] %v690
                  %v692 = vld [vmem:[%s506 + $0x2e0] sm:%s499]
                  %693 = vst [vmem:[%s507 + $0x170] sm:%s499] %v692
                  %v694 = vld [vmem:[%s506 + $0x2e8] sm:%s499]
                  %695 = vst [vmem:[%s507 + $0x174] sm:%s499] %v694
                  %v696 = vld [vmem:[%s506 + $0x2f0] sm:%s499]
                  %697 = vst [vmem:[%s507 + $0x178] sm:%s499] %v696
                  %v698 = vld [vmem:[%s506 + $0x2f8] sm:%s499]
                  %699 = vst [vmem:[%s507 + $0x17c] sm:%s499] %v698
                  %v700 = vld [vmem:[%s506 + $0x300] sm:%s499]
                  %701 = vst [vmem:[%s507 + $0x180] sm:%s499] %v700
                  %v702 = vld [vmem:[%s506 + $0x308] sm:%s499]
                  %703 = vst [vmem:[%s507 + $0x184] sm:%s499] %v702
                  %v704 = vld [vmem:[%s506 + $0x310] sm:%s499]
                  %705 = vst [vmem:[%s507 + $0x188] sm:%s499] %v704
                  %v706 = vld [vmem:[%s506 + $0x318] sm:%s499]
                  %707 = vst [vmem:[%s507 + $0x18c] sm:%s499] %v706
                  %v708 = vld [vmem:[%s506 + $0x320] sm:%s499]
                  %709 = vst [vmem:[%s507 + $0x190] sm:%s499] %v708
                  %v710 = vld [vmem:[%s506 + $0x328] sm:%s499]
                  %711 = vst [vmem:[%s507 + $0x194] sm:%s499] %v710
                  %v712 = vld [vmem:[%s506 + $0x330] sm:%s499]
                  %713 = vst [vmem:[%s507 + $0x198] sm:%s499] %v712
                  %v714 = vld [vmem:[%s506 + $0x338] sm:%s499]
                  %715 = vst [vmem:[%s507 + $0x19c] sm:%s499] %v714
                  %v716 = vld [vmem:[%s506 + $0x340] sm:%s499]
                  %717 = vst [vmem:[%s507 + $0x1a0] sm:%s499] %v716
                  %v718 = vld [vmem:[%s506 + $0x348] sm:%s499]
                  %719 = vst [vmem:[%s507 + $0x1a4] sm:%s499] %v718
                  %v720 = vld [vmem:[%s506 + $0x350] sm:%s499]
                  %721 = vst [vmem:[%s507 + $0x1a8] sm:%s499] %v720
                  %v722 = vld [vmem:[%s506 + $0x358] sm:%s499]
                  %723 = vst [vmem:[%s507 + $0x1ac] sm:%s499] %v722
                  %v724 = vld [vmem:[%s506 + $0x360] sm:%s499]
                  %725 = vst [vmem:[%s507 + $0x1b0] sm:%s499] %v724
                  %v726 = vld [vmem:[%s506 + $0x368] sm:%s499]
                  %727 = vst [vmem:[%s507 + $0x1b4] sm:%s499] %v726
                  %v728 = vld [vmem:[%s506 + $0x370] sm:%s499]
                  %729 = vst [vmem:[%s507 + $0x1b8] sm:%s499] %v728
                  %v730 = vld [vmem:[%s506 + $0x378] sm:%s499]
                  %731 = vst [vmem:[%s507 + $0x1bc] sm:%s499] %v730
                  %v732 = vld [vmem:[%s506 + $0x380] sm:%s499]
                  %733 = vst [vmem:[%s507 + $0x1c0] sm:%s499] %v732
                  %v734 = vld [vmem:[%s506 + $0x388] sm:%s499]
                  %735 = vst [vmem:[%s507 + $0x1c4] sm:%s499] %v734
                  %v736 = vld [vmem:[%s506 + $0x390] sm:%s499]
                  %737 = vst [vmem:[%s507 + $0x1c8] sm:%s499] %v736
                  %v738 = vld [vmem:[%s506 + $0x398] sm:%s499]
                  %739 = vst [vmem:[%s507 + $0x1cc] sm:%s499] %v738
                  %v740 = vld [vmem:[%s506 + $0x3a0] sm:%s499]
                  %741 = vst [vmem:[%s507 + $0x1d0] sm:%s499] %v740
                  %v742 = vld [vmem:[%s506 + $0x3a8] sm:%s499]
                  %743 = vst [vmem:[%s507 + $0x1d4] sm:%s499] %v742
                  %v744 = vld [vmem:[%s506 + $0x3b0] sm:%s499]
                  %745 = vst [vmem:[%s507 + $0x1d8] sm:%s499] %v744
                  %v746 = vld [vmem:[%s506 + $0x3b8] sm:%s499]
                  %747 = vst [vmem:[%s507 + $0x1dc] sm:%s499] %v746
                  %v748 = vld [vmem:[%s506 + $0x3c0] sm:%s499]
                  %749 = vst [vmem:[%s507 + $0x1e0] sm:%s499] %v748
                  %v750 = vld [vmem:[%s506 + $0x3c8] sm:%s499]
                  %751 = vst [vmem:[%s507 + $0x1e4] sm:%s499] %v750
                  %v752 = vld [vmem:[%s506 + $0x3d0] sm:%s499]
                  %753 = vst [vmem:[%s507 + $0x1e8] sm:%s499] %v752
                  %v754 = vld [vmem:[%s506 + $0x3d8] sm:%s499]
                  %755 = vst [vmem:[%s507 + $0x1ec] sm:%s499] %v754
                  %v756 = vld [vmem:[%s506 + $0x3e0] sm:%s499]
                  %757 = vst [vmem:[%s507 + $0x1f0] sm:%s499] %v756
                  %v758 = vld [vmem:[%s506 + $0x3e8] sm:%s499]
                  %759 = vst [vmem:[%s507 + $0x1f4] sm:%s499] %v758
                  %v760 = vld [vmem:[%s506 + $0x3f0] sm:%s499]
                  %761 = vst [vmem:[%s507 + $0x1f8] sm:%s499] %v760
                  %v762 = vld [vmem:[%s506 + $0x3f8] sm:%s499]
                  %763 = vst [vmem:[%s507 + $0x1fc] sm:%s499] %v762
                  %v764 = vld [vmem:[%s506 + $0x400] sm:%s499]
                  %765 = vst [vmem:[%s507 + $0x200] sm:%s499] %v764
                  %v766 = vld [vmem:[%s506 + $0x408] sm:%s499]
                  %767 = vst [vmem:[%s507 + $0x204] sm:%s499] %v766
                  %v768 = vld [vmem:[%s506 + $0x410] sm:%s499]
                  %769 = vst [vmem:[%s507 + $0x208] sm:%s499] %v768
                  %v770 = vld [vmem:[%s506 + $0x418] sm:%s499]
                  %771 = vst [vmem:[%s507 + $0x20c] sm:%s499] %v770
                  %v772 = vld [vmem:[%s506 + $0x420] sm:%s499]
                  %773 = vst [vmem:[%s507 + $0x210] sm:%s499] %v772
                  %v774 = vld [vmem:[%s506 + $0x428] sm:%s499]
                  %775 = vst [vmem:[%s507 + $0x214] sm:%s499] %v774
                  %v776 = vld [vmem:[%s506 + $0x430] sm:%s499]
                  %777 = vst [vmem:[%s507 + $0x218] sm:%s499] %v776
                  %v778 = vld [vmem:[%s506 + $0x438] sm:%s499]
                  %779 = vst [vmem:[%s507 + $0x21c] sm:%s499] %v778
                  %v780 = vld [vmem:[%s506 + $0x440] sm:%s499]
                  %781 = vst [vmem:[%s507 + $0x220] sm:%s499] %v780
                  %v782 = vld [vmem:[%s506 + $0x448] sm:%s499]
                  %783 = vst [vmem:[%s507 + $0x224] sm:%s499] %v782
                  %v784 = vld [vmem:[%s506 + $0x450] sm:%s499]
                  %785 = vst [vmem:[%s507 + $0x228] sm:%s499] %v784
                  %v786 = vld [vmem:[%s506 + $0x458] sm:%s499]
                  %787 = vst [vmem:[%s507 + $0x22c] sm:%s499] %v786
                  %v788 = vld [vmem:[%s506 + $0x460] sm:%s499]
                  %789 = vst [vmem:[%s507 + $0x230] sm:%s499] %v788
                  %v790 = vld [vmem:[%s506 + $0x468] sm:%s499]
                  %791 = vst [vmem:[%s507 + $0x234] sm:%s499] %v790
                  %v792 = vld [vmem:[%s506 + $0x470] sm:%s499]
                  %793 = vst [vmem:[%s507 + $0x238] sm:%s499] %v792
                  %v794 = vld [vmem:[%s506 + $0x478] sm:%s499]
                  %795 = vst [vmem:[%s507 + $0x23c] sm:%s499] %v794
                $region59: #{descriptor_cifar_forward.6} parent=46 // loop_footer
                  %s505 = sadd.s32 1, %s501
                $region60: #{descriptor_cifar_forward.6} parent=46 // loop_footer_branch
                  %500 = sbr.rel target = $region56
                $region61: #{descriptor_cifar_forward.6} parent=46 // loop_exit
                  _
              $region47: #{descriptor_cifar_forward.6} parent=31 // pred_fallthru
                _
            $region32: #{descriptor_cifar_forward.6} parent=27 // pred_fallthru
              _
            // Predicated region
            $region33: #{descriptor_cifar_forward.6} parent=27 // pred_check
              _
            $region34: #{descriptor_cifar_forward.6} parent=27 // pred_check_branch
              %189 = sbr.rel (0) target = $region36
            $region35: #{descriptor_cifar_forward.6} parent=27 // pred_region
              %s191 = ssub.s32 16, 1
              loop: start=0, step=1, limit=1
              $region37: #{descriptor_cifar_forward.6} parent=35 // loop_pre_header
                _
              $region38: #{descriptor_cifar_forward.6} parent=35 // loop_header
                %s193 = sphi 0, %s197
                %p194 = scmp.ge.s32.totalorder %s193, 1
                %s198 = sphi %s183, %s183
                %s199 = sphi %s178, %s178
              $region39: #{descriptor_cifar_forward.6} parent=35 // loop_header_branch
                %196 = sbr.rel (%p194) target = $region43
              $region40: #{descriptor_cifar_forward.6} parent=35 // loop_body
                %v200 = vld [vmem:[%s198] sm:%s191]
                %201 = vst [vmem:[%s199] sm:%s191] %v200
                %v202 = vld [vmem:[%s198 + $0x8] sm:%s191]
                %203 = vst [vmem:[%s199 + $0x4] sm:%s191] %v202
                %v204 = vld [vmem:[%s198 + $0x10] sm:%s191]
                %205 = vst [vmem:[%s199 + $0x8] sm:%s191] %v204
                %v206 = vld [vmem:[%s198 + $0x18] sm:%s191]
                %207 = vst [vmem:[%s199 + $0xc] sm:%s191] %v206
                %v208 = vld [vmem:[%s198 + $0x20] sm:%s191]
                %209 = vst [vmem:[%s199 + $0x10] sm:%s191] %v208
                %v210 = vld [vmem:[%s198 + $0x28] sm:%s191]
                %211 = vst [vmem:[%s199 + $0x14] sm:%s191] %v210
                %v212 = vld [vmem:[%s198 + $0x30] sm:%s191]
                %213 = vst [vmem:[%s199 + $0x18] sm:%s191] %v212
                %v214 = vld [vmem:[%s198 + $0x38] sm:%s191]
                %215 = vst [vmem:[%s199 + $0x1c] sm:%s191] %v214
                %v216 = vld [vmem:[%s198 + $0x40] sm:%s191]
                %217 = vst [vmem:[%s199 + $0x20] sm:%s191] %v216
                %v218 = vld [vmem:[%s198 + $0x48] sm:%s191]
                %219 = vst [vmem:[%s199 + $0x24] sm:%s191] %v218
                %v220 = vld [vmem:[%s198 + $0x50] sm:%s191]
                %221 = vst [vmem:[%s199 + $0x28] sm:%s191] %v220
                %v222 = vld [vmem:[%s198 + $0x58] sm:%s191]
                %223 = vst [vmem:[%s199 + $0x2c] sm:%s191] %v222
                %v224 = vld [vmem:[%s198 + $0x60] sm:%s191]
                %225 = vst [vmem:[%s199 + $0x30] sm:%s191] %v224
                %v226 = vld [vmem:[%s198 + $0x68] sm:%s191]
                %227 = vst [vmem:[%s199 + $0x34] sm:%s191] %v226
                %v228 = vld [vmem:[%s198 + $0x70] sm:%s191]
                %229 = vst [vmem:[%s199 + $0x38] sm:%s191] %v228
                %v230 = vld [vmem:[%s198 + $0x78] sm:%s191]
                %231 = vst [vmem:[%s199 + $0x3c] sm:%s191] %v230
                %v232 = vld [vmem:[%s198 + $0x80] sm:%s191]
                %233 = vst [vmem:[%s199 + $0x40] sm:%s191] %v232
                %v234 = vld [vmem:[%s198 + $0x88] sm:%s191]
                %235 = vst [vmem:[%s199 + $0x44] sm:%s191] %v234
                %v236 = vld [vmem:[%s198 + $0x90] sm:%s191]
                %237 = vst [vmem:[%s199 + $0x48] sm:%s191] %v236
                %v238 = vld [vmem:[%s198 + $0x98] sm:%s191]
                %239 = vst [vmem:[%s199 + $0x4c] sm:%s191] %v238
                %v240 = vld [vmem:[%s198 + $0xa0] sm:%s191]
                %241 = vst [vmem:[%s199 + $0x50] sm:%s191] %v240
                %v242 = vld [vmem:[%s198 + $0xa8] sm:%s191]
                %243 = vst [vmem:[%s199 + $0x54] sm:%s191] %v242
                %v244 = vld [vmem:[%s198 + $0xb0] sm:%s191]
                %245 = vst [vmem:[%s199 + $0x58] sm:%s191] %v244
                %v246 = vld [vmem:[%s198 + $0xb8] sm:%s191]
                %247 = vst [vmem:[%s199 + $0x5c] sm:%s191] %v246
                %v248 = vld [vmem:[%s198 + $0xc0] sm:%s191]
                %249 = vst [vmem:[%s199 + $0x60] sm:%s191] %v248
                %v250 = vld [vmem:[%s198 + $0xc8] sm:%s191]
                %251 = vst [vmem:[%s199 + $0x64] sm:%s191] %v250
                %v252 = vld [vmem:[%s198 + $0xd0] sm:%s191]
                %253 = vst [vmem:[%s199 + $0x68] sm:%s191] %v252
                %v254 = vld [vmem:[%s198 + $0xd8] sm:%s191]
                %255 = vst [vmem:[%s199 + $0x6c] sm:%s191] %v254
                %v256 = vld [vmem:[%s198 + $0xe0] sm:%s191]
                %257 = vst [vmem:[%s199 + $0x70] sm:%s191] %v256
                %v258 = vld [vmem:[%s198 + $0xe8] sm:%s191]
                %259 = vst [vmem:[%s199 + $0x74] sm:%s191] %v258
                %v260 = vld [vmem:[%s198 + $0xf0] sm:%s191]
                %261 = vst [vmem:[%s199 + $0x78] sm:%s191] %v260
                %v262 = vld [vmem:[%s198 + $0xf8] sm:%s191]
                %263 = vst [vmem:[%s199 + $0x7c] sm:%s191] %v262
                %v264 = vld [vmem:[%s198 + $0x100] sm:%s191]
                %265 = vst [vmem:[%s199 + $0x80] sm:%s191] %v264
                %v266 = vld [vmem:[%s198 + $0x108] sm:%s191]
                %267 = vst [vmem:[%s199 + $0x84] sm:%s191] %v266
                %v268 = vld [vmem:[%s198 + $0x110] sm:%s191]
                %269 = vst [vmem:[%s199 + $0x88] sm:%s191] %v268
                %v270 = vld [vmem:[%s198 + $0x118] sm:%s191]
                %271 = vst [vmem:[%s199 + $0x8c] sm:%s191] %v270
                %v272 = vld [vmem:[%s198 + $0x120] sm:%s191]
                %273 = vst [vmem:[%s199 + $0x90] sm:%s191] %v272
                %v274 = vld [vmem:[%s198 + $0x128] sm:%s191]
                %275 = vst [vmem:[%s199 + $0x94] sm:%s191] %v274
                %v276 = vld [vmem:[%s198 + $0x130] sm:%s191]
                %277 = vst [vmem:[%s199 + $0x98] sm:%s191] %v276
                %v278 = vld [vmem:[%s198 + $0x138] sm:%s191]
                %279 = vst [vmem:[%s199 + $0x9c] sm:%s191] %v278
                %v280 = vld [vmem:[%s198 + $0x140] sm:%s191]
                %281 = vst [vmem:[%s199 + $0xa0] sm:%s191] %v280
                %v282 = vld [vmem:[%s198 + $0x148] sm:%s191]
                %283 = vst [vmem:[%s199 + $0xa4] sm:%s191] %v282
                %v284 = vld [vmem:[%s198 + $0x150] sm:%s191]
                %285 = vst [vmem:[%s199 + $0xa8] sm:%s191] %v284
                %v286 = vld [vmem:[%s198 + $0x158] sm:%s191]
                %287 = vst [vmem:[%s199 + $0xac] sm:%s191] %v286
                %v288 = vld [vmem:[%s198 + $0x160] sm:%s191]
                %289 = vst [vmem:[%s199 + $0xb0] sm:%s191] %v288
                %v290 = vld [vmem:[%s198 + $0x168] sm:%s191]
                %291 = vst [vmem:[%s199 + $0xb4] sm:%s191] %v290
                %v292 = vld [vmem:[%s198 + $0x170] sm:%s191]
                %293 = vst [vmem:[%s199 + $0xb8] sm:%s191] %v292
                %v294 = vld [vmem:[%s198 + $0x178] sm:%s191]
                %295 = vst [vmem:[%s199 + $0xbc] sm:%s191] %v294
                %v296 = vld [vmem:[%s198 + $0x180] sm:%s191]
                %297 = vst [vmem:[%s199 + $0xc0] sm:%s191] %v296
                %v298 = vld [vmem:[%s198 + $0x188] sm:%s191]
                %299 = vst [vmem:[%s199 + $0xc4] sm:%s191] %v298
                %v300 = vld [vmem:[%s198 + $0x190] sm:%s191]
                %301 = vst [vmem:[%s199 + $0xc8] sm:%s191] %v300
                %v302 = vld [vmem:[%s198 + $0x198] sm:%s191]
                %303 = vst [vmem:[%s199 + $0xcc] sm:%s191] %v302
                %v304 = vld [vmem:[%s198 + $0x1a0] sm:%s191]
                %305 = vst [vmem:[%s199 + $0xd0] sm:%s191] %v304
                %v306 = vld [vmem:[%s198 + $0x1a8] sm:%s191]
                %307 = vst [vmem:[%s199 + $0xd4] sm:%s191] %v306
                %v308 = vld [vmem:[%s198 + $0x1b0] sm:%s191]
                %309 = vst [vmem:[%s199 + $0xd8] sm:%s191] %v308
                %v310 = vld [vmem:[%s198 + $0x1b8] sm:%s191]
                %311 = vst [vmem:[%s199 + $0xdc] sm:%s191] %v310
                %v312 = vld [vmem:[%s198 + $0x1c0] sm:%s191]
                %313 = vst [vmem:[%s199 + $0xe0] sm:%s191] %v312
                %v314 = vld [vmem:[%s198 + $0x1c8] sm:%s191]
                %315 = vst [vmem:[%s199 + $0xe4] sm:%s191] %v314
                %v316 = vld [vmem:[%s198 + $0x1d0] sm:%s191]
                %317 = vst [vmem:[%s199 + $0xe8] sm:%s191] %v316
                %v318 = vld [vmem:[%s198 + $0x1d8] sm:%s191]
                %319 = vst [vmem:[%s199 + $0xec] sm:%s191] %v318
                %v320 = vld [vmem:[%s198 + $0x1e0] sm:%s191]
                %321 = vst [vmem:[%s199 + $0xf0] sm:%s191] %v320
                %v322 = vld [vmem:[%s198 + $0x1e8] sm:%s191]
                %323 = vst [vmem:[%s199 + $0xf4] sm:%s191] %v322
                %v324 = vld [vmem:[%s198 + $0x1f0] sm:%s191]
                %325 = vst [vmem:[%s199 + $0xf8] sm:%s191] %v324
                %v326 = vld [vmem:[%s198 + $0x1f8] sm:%s191]
                %327 = vst [vmem:[%s199 + $0xfc] sm:%s191] %v326
                %v328 = vld [vmem:[%s198 + $0x200] sm:%s191]
                %329 = vst [vmem:[%s199 + $0x100] sm:%s191] %v328
                %v330 = vld [vmem:[%s198 + $0x208] sm:%s191]
                %331 = vst [vmem:[%s199 + $0x104] sm:%s191] %v330
                %v332 = vld [vmem:[%s198 + $0x210] sm:%s191]
                %333 = vst [vmem:[%s199 + $0x108] sm:%s191] %v332
                %v334 = vld [vmem:[%s198 + $0x218] sm:%s191]
                %335 = vst [vmem:[%s199 + $0x10c] sm:%s191] %v334
                %v336 = vld [vmem:[%s198 + $0x220] sm:%s191]
                %337 = vst [vmem:[%s199 + $0x110] sm:%s191] %v336
                %v338 = vld [vmem:[%s198 + $0x228] sm:%s191]
                %339 = vst [vmem:[%s199 + $0x114] sm:%s191] %v338
                %v340 = vld [vmem:[%s198 + $0x230] sm:%s191]
                %341 = vst [vmem:[%s199 + $0x118] sm:%s191] %v340
                %v342 = vld [vmem:[%s198 + $0x238] sm:%s191]
                %343 = vst [vmem:[%s199 + $0x11c] sm:%s191] %v342
                %v344 = vld [vmem:[%s198 + $0x240] sm:%s191]
                %345 = vst [vmem:[%s199 + $0x120] sm:%s191] %v344
                %v346 = vld [vmem:[%s198 + $0x248] sm:%s191]
                %347 = vst [vmem:[%s199 + $0x124] sm:%s191] %v346
                %v348 = vld [vmem:[%s198 + $0x250] sm:%s191]
                %349 = vst [vmem:[%s199 + $0x128] sm:%s191] %v348
                %v350 = vld [vmem:[%s198 + $0x258] sm:%s191]
                %351 = vst [vmem:[%s199 + $0x12c] sm:%s191] %v350
                %v352 = vld [vmem:[%s198 + $0x260] sm:%s191]
                %353 = vst [vmem:[%s199 + $0x130] sm:%s191] %v352
                %v354 = vld [vmem:[%s198 + $0x268] sm:%s191]
                %355 = vst [vmem:[%s199 + $0x134] sm:%s191] %v354
                %v356 = vld [vmem:[%s198 + $0x270] sm:%s191]
                %357 = vst [vmem:[%s199 + $0x138] sm:%s191] %v356
                %v358 = vld [vmem:[%s198 + $0x278] sm:%s191]
                %359 = vst [vmem:[%s199 + $0x13c] sm:%s191] %v358
                %v360 = vld [vmem:[%s198 + $0x280] sm:%s191]
                %361 = vst [vmem:[%s199 + $0x140] sm:%s191] %v360
                %v362 = vld [vmem:[%s198 + $0x288] sm:%s191]
                %363 = vst [vmem:[%s199 + $0x144] sm:%s191] %v362
                %v364 = vld [vmem:[%s198 + $0x290] sm:%s191]
                %365 = vst [vmem:[%s199 + $0x148] sm:%s191] %v364
                %v366 = vld [vmem:[%s198 + $0x298] sm:%s191]
                %367 = vst [vmem:[%s199 + $0x14c] sm:%s191] %v366
                %v368 = vld [vmem:[%s198 + $0x2a0] sm:%s191]
                %369 = vst [vmem:[%s199 + $0x150] sm:%s191] %v368
                %v370 = vld [vmem:[%s198 + $0x2a8] sm:%s191]
                %371 = vst [vmem:[%s199 + $0x154] sm:%s191] %v370
                %v372 = vld [vmem:[%s198 + $0x2b0] sm:%s191]
                %373 = vst [vmem:[%s199 + $0x158] sm:%s191] %v372
                %v374 = vld [vmem:[%s198 + $0x2b8] sm:%s191]
                %375 = vst [vmem:[%s199 + $0x15c] sm:%s191] %v374
                %v376 = vld [vmem:[%s198 + $0x2c0] sm:%s191]
                %377 = vst [vmem:[%s199 + $0x160] sm:%s191] %v376
                %v378 = vld [vmem:[%s198 + $0x2c8] sm:%s191]
                %379 = vst [vmem:[%s199 + $0x164] sm:%s191] %v378
                %v380 = vld [vmem:[%s198 + $0x2d0] sm:%s191]
                %381 = vst [vmem:[%s199 + $0x168] sm:%s191] %v380
                %v382 = vld [vmem:[%s198 + $0x2d8] sm:%s191]
                %383 = vst [vmem:[%s199 + $0x16c] sm:%s191] %v382
                %v384 = vld [vmem:[%s198 + $0x2e0] sm:%s191]
                %385 = vst [vmem:[%s199 + $0x170] sm:%s191] %v384
                %v386 = vld [vmem:[%s198 + $0x2e8] sm:%s191]
                %387 = vst [vmem:[%s199 + $0x174] sm:%s191] %v386
                %v388 = vld [vmem:[%s198 + $0x2f0] sm:%s191]
                %389 = vst [vmem:[%s199 + $0x178] sm:%s191] %v388
                %v390 = vld [vmem:[%s198 + $0x2f8] sm:%s191]
                %391 = vst [vmem:[%s199 + $0x17c] sm:%s191] %v390
                %v392 = vld [vmem:[%s198 + $0x300] sm:%s191]
                %393 = vst [vmem:[%s199 + $0x180] sm:%s191] %v392
                %v394 = vld [vmem:[%s198 + $0x308] sm:%s191]
                %395 = vst [vmem:[%s199 + $0x184] sm:%s191] %v394
                %v396 = vld [vmem:[%s198 + $0x310] sm:%s191]
                %397 = vst [vmem:[%s199 + $0x188] sm:%s191] %v396
                %v398 = vld [vmem:[%s198 + $0x318] sm:%s191]
                %399 = vst [vmem:[%s199 + $0x18c] sm:%s191] %v398
                %v400 = vld [vmem:[%s198 + $0x320] sm:%s191]
                %401 = vst [vmem:[%s199 + $0x190] sm:%s191] %v400
                %v402 = vld [vmem:[%s198 + $0x328] sm:%s191]
                %403 = vst [vmem:[%s199 + $0x194] sm:%s191] %v402
                %v404 = vld [vmem:[%s198 + $0x330] sm:%s191]
                %405 = vst [vmem:[%s199 + $0x198] sm:%s191] %v404
                %v406 = vld [vmem:[%s198 + $0x338] sm:%s191]
                %407 = vst [vmem:[%s199 + $0x19c] sm:%s191] %v406
                %v408 = vld [vmem:[%s198 + $0x340] sm:%s191]
                %409 = vst [vmem:[%s199 + $0x1a0] sm:%s191] %v408
                %v410 = vld [vmem:[%s198 + $0x348] sm:%s191]
                %411 = vst [vmem:[%s199 + $0x1a4] sm:%s191] %v410
                %v412 = vld [vmem:[%s198 + $0x350] sm:%s191]
                %413 = vst [vmem:[%s199 + $0x1a8] sm:%s191] %v412
                %v414 = vld [vmem:[%s198 + $0x358] sm:%s191]
                %415 = vst [vmem:[%s199 + $0x1ac] sm:%s191] %v414
                %v416 = vld [vmem:[%s198 + $0x360] sm:%s191]
                %417 = vst [vmem:[%s199 + $0x1b0] sm:%s191] %v416
                %v418 = vld [vmem:[%s198 + $0x368] sm:%s191]
                %419 = vst [vmem:[%s199 + $0x1b4] sm:%s191] %v418
                %v420 = vld [vmem:[%s198 + $0x370] sm:%s191]
                %421 = vst [vmem:[%s199 + $0x1b8] sm:%s191] %v420
                %v422 = vld [vmem:[%s198 + $0x378] sm:%s191]
                %423 = vst [vmem:[%s199 + $0x1bc] sm:%s191] %v422
                %v424 = vld [vmem:[%s198 + $0x380] sm:%s191]
                %425 = vst [vmem:[%s199 + $0x1c0] sm:%s191] %v424
                %v426 = vld [vmem:[%s198 + $0x388] sm:%s191]
                %427 = vst [vmem:[%s199 + $0x1c4] sm:%s191] %v426
                %v428 = vld [vmem:[%s198 + $0x390] sm:%s191]
                %429 = vst [vmem:[%s199 + $0x1c8] sm:%s191] %v428
                %v430 = vld [vmem:[%s198 + $0x398] sm:%s191]
                %431 = vst [vmem:[%s199 + $0x1cc] sm:%s191] %v430
                %v432 = vld [vmem:[%s198 + $0x3a0] sm:%s191]
                %433 = vst [vmem:[%s199 + $0x1d0] sm:%s191] %v432
                %v434 = vld [vmem:[%s198 + $0x3a8] sm:%s191]
                %435 = vst [vmem:[%s199 + $0x1d4] sm:%s191] %v434
                %v436 = vld [vmem:[%s198 + $0x3b0] sm:%s191]
                %437 = vst [vmem:[%s199 + $0x1d8] sm:%s191] %v436
                %v438 = vld [vmem:[%s198 + $0x3b8] sm:%s191]
                %439 = vst [vmem:[%s199 + $0x1dc] sm:%s191] %v438
                %v440 = vld [vmem:[%s198 + $0x3c0] sm:%s191]
                %441 = vst [vmem:[%s199 + $0x1e0] sm:%s191] %v440
                %v442 = vld [vmem:[%s198 + $0x3c8] sm:%s191]
                %443 = vst [vmem:[%s199 + $0x1e4] sm:%s191] %v442
                %v444 = vld [vmem:[%s198 + $0x3d0] sm:%s191]
                %445 = vst [vmem:[%s199 + $0x1e8] sm:%s191] %v444
                %v446 = vld [vmem:[%s198 + $0x3d8] sm:%s191]
                %447 = vst [vmem:[%s199 + $0x1ec] sm:%s191] %v446
                %v448 = vld [vmem:[%s198 + $0x3e0] sm:%s191]
                %449 = vst [vmem:[%s199 + $0x1f0] sm:%s191] %v448
                %v450 = vld [vmem:[%s198 + $0x3e8] sm:%s191]
                %451 = vst [vmem:[%s199 + $0x1f4] sm:%s191] %v450
                %v452 = vld [vmem:[%s198 + $0x3f0] sm:%s191]
                %453 = vst [vmem:[%s199 + $0x1f8] sm:%s191] %v452
                %v454 = vld [vmem:[%s198 + $0x3f8] sm:%s191]
                %455 = vst [vmem:[%s199 + $0x1fc] sm:%s191] %v454
                %v456 = vld [vmem:[%s198 + $0x400] sm:%s191]
                %457 = vst [vmem:[%s199 + $0x200] sm:%s191] %v456
                %v458 = vld [vmem:[%s198 + $0x408] sm:%s191]
                %459 = vst [vmem:[%s199 + $0x204] sm:%s191] %v458
                %v460 = vld [vmem:[%s198 + $0x410] sm:%s191]
                %461 = vst [vmem:[%s199 + $0x208] sm:%s191] %v460
                %v462 = vld [vmem:[%s198 + $0x418] sm:%s191]
                %463 = vst [vmem:[%s199 + $0x20c] sm:%s191] %v462
                %v464 = vld [vmem:[%s198 + $0x420] sm:%s191]
                %465 = vst [vmem:[%s199 + $0x210] sm:%s191] %v464
                %v466 = vld [vmem:[%s198 + $0x428] sm:%s191]
                %467 = vst [vmem:[%s199 + $0x214] sm:%s191] %v466
                %v468 = vld [vmem:[%s198 + $0x430] sm:%s191]
                %469 = vst [vmem:[%s199 + $0x218] sm:%s191] %v468
                %v470 = vld [vmem:[%s198 + $0x438] sm:%s191]
                %471 = vst [vmem:[%s199 + $0x21c] sm:%s191] %v470
                %v472 = vld [vmem:[%s198 + $0x440] sm:%s191]
                %473 = vst [vmem:[%s199 + $0x220] sm:%s191] %v472
                %v474 = vld [vmem:[%s198 + $0x448] sm:%s191]
                %475 = vst [vmem:[%s199 + $0x224] sm:%s191] %v474
                %v476 = vld [vmem:[%s198 + $0x450] sm:%s191]
                %477 = vst [vmem:[%s199 + $0x228] sm:%s191] %v476
                %v478 = vld [vmem:[%s198 + $0x458] sm:%s191]
                %479 = vst [vmem:[%s199 + $0x22c] sm:%s191] %v478
                %v480 = vld [vmem:[%s198 + $0x460] sm:%s191]
                %481 = vst [vmem:[%s199 + $0x230] sm:%s191] %v480
                %v482 = vld [vmem:[%s198 + $0x468] sm:%s191]
                %483 = vst [vmem:[%s199 + $0x234] sm:%s191] %v482
                %v484 = vld [vmem:[%s198 + $0x470] sm:%s191]
                %485 = vst [vmem:[%s199 + $0x238] sm:%s191] %v484
                %v486 = vld [vmem:[%s198 + $0x478] sm:%s191]
                %487 = vst [vmem:[%s199 + $0x23c] sm:%s191] %v486
              $region41: #{descriptor_cifar_forward.6} parent=35 // loop_footer
                %s197 = sadd.s32 1, %s193
              $region42: #{descriptor_cifar_forward.6} parent=35 // loop_footer_branch
                %192 = sbr.rel target = $region38
              $region43: #{descriptor_cifar_forward.6} parent=35 // loop_exit
                _
            $region36: #{descriptor_cifar_forward.6} parent=27 // pred_fallthru
              _
          $region28: #{descriptor_cifar_forward.6} parent=23 // pred_fallthru
            _
          %796 = vnop
        $region24: #{descriptor_cifar_forward.6} parent=19 // pred_fallthru
          _
        // Predicated region
        $region62: #{descriptor_cifar_forward.6} parent=19 // pred_check
          %p797 = pneg %p104
        $region63: #{descriptor_cifar_forward.6} parent=19 // pred_check_branch
          %799 = sbr.rel (%p797) target = $region65
        $region64: #{descriptor_cifar_forward.6} parent=19 // pred_region
          %p800 = scmp.lt.s32.totalorder %s17, 1
          %s801 = scalar_select %p800, %s17, 1
          %s802 = scalar_lea.vmem %s2, %s801
        $region65: #{descriptor_cifar_forward.6} parent=19 // pred_fallthru
          _
      $region20: #{descriptor_cifar_forward.6} parent=5 // pred_fallthru
        _
      %p803 = scmp.le.s32.totalorder 1, %s9
      %p804 = scmp.lt.s32.totalorder %s9, 3
      %p805 = pnand %p803, %p804
      %p806 = pneg %p805
      // Predicated region
      $region66: #{descriptor_cifar_forward.6} parent=5 // pred_check
        _
      $region67: #{descriptor_cifar_forward.6} parent=5 // pred_check_branch
        %808 = sbr.rel (%p805) target = $region69
      $region68: #{descriptor_cifar_forward.6} parent=5 // pred_region
        %s809 = ssub.s32 %s9, 1
        %s810 = sand.u32 %s71, 1
        %s811 = sand.u32 %s71, 1
        %s812 = smul.addr %s811, 576
        %s813 = scalar_lea.vmem [#allocation3], %s812
        // Predicated region
        $region70: #{descriptor_cifar_forward.6} parent=68 // pred_check
          %p814 = pneg %p84
        $region71: #{descriptor_cifar_forward.6} parent=68 // pred_check_branch
          %816 = sbr.rel (%p814) target = $region73
        $region72: #{descriptor_cifar_forward.6} parent=68 // pred_region
          _
        $region73: #{descriptor_cifar_forward.6} parent=68 // pred_fallthru
          _
        %s817 = smul.u32 16, %s19
        %s818 = smul.u32 9, %s21
        %p819 = scmp.lt.s32.totalorder %s817, 15
        %s820 = scalar_select %p819, %s817, 15
        %p821 = scmp.lt.s32.totalorder %s818, 8
        %s822 = scalar_select %p821, %s818, 8
        %s823 = smul.addr %s820, 9
        %s824 = sadd.s32 %s822, %s823
        %s825 = smul.addr %s824, 4
        %s826 = scalar_lea.vmem %s0, %s825
        %p827 = pneg %p56
        %p828 = pneg %p53
        %s829 = sand.u32 %s71, 1
        %s830 = sand.u32 %s71, 1
        %s831 = smul.addr %s830, 576
        %s832 = scalar_lea.vmem [#allocation3], %s831
        %p833 = pneg %p84
        %p834 = pneg %p81
        %p835 = scmp.lt.s32.totalorder %s20, 1
        %s836 = scalar_select %p835, %s20, 1
        %s837 = scalar_lea.vmem %s2, %s836
        %p838 = pneg %p110
        %p839 = pneg %p107
        %p840 = pneg %p138
        %p841 = pneg %p135
        %s842 = sand.u32 %s125, 1
        %s843 = sand.u32 %s125, 1
        %s844 = smul.addr %s843, 64
        %s845 = scalar_lea.vmem [#allocation4], %s844
        %s846 = smul.u32 16, %s19
        %s847 = smul.u32 9, %s21
        %p848 = scmp.lt.s32.totalorder %s846, 15
        %s849 = scalar_select %p848, %s846, 15
        %p850 = scmp.lt.s32.totalorder %s847, 8
        %s851 = scalar_select %p850, %s847, 8
        %s852 = smul.addr %s849, 9
        %s853 = sadd.s32 %s851, %s852
        %s854 = smul.addr %s853, 4
        %s855 = scalar_lea.vmem %s0, %s854
        %s856 = smul.u32 16, %s19
        %s857 = smul.u32 9, %s21
        %s858 = smul.u32 144, %s21
        %p859 = scmp.lt.s32.totalorder %s20, 1
        %s860 = scalar_select %p859, %s20, 1
        %s861 = scalar_lea.vmem %s2, %s860
        %s862 = smul.u32 16, %s19
        %p864 = scmp.eq.s32.totalorder %s21, 0
        // Predicated region
        $region74: #{descriptor_cifar_forward.6} parent=68 // pred_check
          %p865 = pneg %p864
        $region75: #{descriptor_cifar_forward.6} parent=68 // pred_check_branch
          %867 = sbr.rel (%p865) target = $region77
        $region76: #{descriptor_cifar_forward.6} parent=68 // pred_region
          %868 = vst [vmem:[#allocation2] sm:$0xff] 0.0
          %869 = vst [vmem:[#allocation2 + $0x8] sm:$0xff] 0.0
          %870 = vst [vmem:[#allocation2 + $0x10] sm:$0xff] 0.0
          %871 = vst [vmem:[#allocation2 + $0x18] sm:$0xff] 0.0
          %872 = vst [vmem:[#allocation2 + $0x20] sm:$0xff] 0.0
          %873 = vst [vmem:[#allocation2 + $0x28] sm:$0xff] 0.0
          %874 = vst [vmem:[#allocation2 + $0x30] sm:$0xff] 0.0
          %875 = vst [vmem:[#allocation2 + $0x38] sm:$0xff] 0.0
          %876 = vst [vmem:[#allocation2 + $0x40] sm:$0xff] 0.0
          %877 = vst [vmem:[#allocation2 + $0x48] sm:$0xff] 0.0
          %878 = vst [vmem:[#allocation2 + $0x50] sm:$0xff] 0.0
          %879 = vst [vmem:[#allocation2 + $0x58] sm:$0xff] 0.0
          %880 = vst [vmem:[#allocation2 + $0x60] sm:$0xff] 0.0
          %881 = vst [vmem:[#allocation2 + $0x68] sm:$0xff] 0.0
          %882 = vst [vmem:[#allocation2 + $0x70] sm:$0xff] 0.0
          %883 = vst [vmem:[#allocation2 + $0x78] sm:$0xff] 0.0
        $region77: #{descriptor_cifar_forward.6} parent=68 // pred_fallthru
          _
        %v884 = vld [vmem:[#allocation2] sm:$0xff]
        %v885 = vld [vmem:[#allocation2 + $0x8] sm:$0xff]
        %v886 = vld [vmem:[#allocation2 + $0x10] sm:$0xff]
        %v887 = vld [vmem:[#allocation2 + $0x18] sm:$0xff]
        %v888 = vld [vmem:[#allocation2 + $0x20] sm:$0xff]
        %v889 = vld [vmem:[#allocation2 + $0x28] sm:$0xff]
        %v890 = vld [vmem:[#allocation2 + $0x30] sm:$0xff]
        %v891 = vld [vmem:[#allocation2 + $0x38] sm:$0xff]
        %v892 = vld [vmem:[#allocation2 + $0x40] sm:$0xff]
        %v893 = vld [vmem:[#allocation2 + $0x48] sm:$0xff]
        %v894 = vld [vmem:[#allocation2 + $0x50] sm:$0xff]
        %v895 = vld [vmem:[#allocation2 + $0x58] sm:$0xff]
        %v896 = vld [vmem:[#allocation2 + $0x60] sm:$0xff]
        %v897 = vld [vmem:[#allocation2 + $0x68] sm:$0xff]
        %v898 = vld [vmem:[#allocation2 + $0x70] sm:$0xff]
        %v899 = vld [vmem:[#allocation2 + $0x78] sm:$0xff]
        %v900 = vld [vmem:[%s855] sm:$0xff]
        %v901 = vld [vmem:[%s855 + $0x8] sm:$0xff]
        %v902 = vld [vmem:[%s855 + $0x10] sm:$0xff]
        %v903 = vld [vmem:[%s855 + $0x18] sm:$0xff]
        %v904 = vld [vmem:[%s855 + $0x20] sm:$0xf]
        %v905 = vld [vmem:[%s855 + $0x24] sm:$0xff]
        %v906 = vld [vmem:[%s855 + $0x2c] sm:$0xff]
        %v907 = vld [vmem:[%s855 + $0x34] sm:$0xff]
        %v908 = vld [vmem:[%s855 + $0x3c] sm:$0xff]
        %v909 = vld [vmem:[%s855 + $0x44] sm:$0xf]
        %v910 = vld [vmem:[%s855 + $0x48] sm:$0xff]
        %v911 = vld [vmem:[%s855 + $0x50] sm:$0xff]
        %v912 = vld [vmem:[%s855 + $0x58] sm:$0xff]
        %v913 = vld [vmem:[%s855 + $0x60] sm:$0xff]
        %v914 = vld [vmem:[%s855 + $0x68] sm:$0xf]
        %v915 = vld [vmem:[%s855 + $0x6c] sm:$0xff]
        %v916 = vld [vmem:[%s855 + $0x74] sm:$0xff]
        %v917 = vld [vmem:[%s855 + $0x7c] sm:$0xff]
        %v918 = vld [vmem:[%s855 + $0x84] sm:$0xff]
        %v919 = vld [vmem:[%s855 + $0x8c] sm:$0xf]
        %v920 = vld [vmem:[%s855 + $0x90] sm:$0xff]
        %v921 = vld [vmem:[%s855 + $0x98] sm:$0xff]
        %v922 = vld [vmem:[%s855 + $0xa0] sm:$0xff]
        %v923 = vld [vmem:[%s855 + $0xa8] sm:$0xff]
        %v924 = vld [vmem:[%s855 + $0xb0] sm:$0xf]
        %v925 = vld [vmem:[%s855 + $0xb4] sm:$0xff]
        %v926 = vld [vmem:[%s855 + $0xbc] sm:$0xff]
        %v927 = vld [vmem:[%s855 + $0xc4] sm:$0xff]
        %v928 = vld [vmem:[%s855 + $0xcc] sm:$0xff]
        %v929 = vld [vmem:[%s855 + $0xd4] sm:$0xf]
        %v930 = vld [vmem:[%s855 + $0xd8] sm:$0xff]
        %v931 = vld [vmem:[%s855 + $0xe0] sm:$0xff]
        %v932 = vld [vmem:[%s855 + $0xe8] sm:$0xff]
        %v933 = vld [vmem:[%s855 + $0xf0] sm:$0xff]
        %v934 = vld [vmem:[%s855 + $0xf8] sm:$0xf]
        %v935 = vld [vmem:[%s855 + $0xfc] sm:$0xff]
        %v936 = vld [vmem:[%s855 + $0x104] sm:$0xff]
        %v937 = vld [vmem:[%s855 + $0x10c] sm:$0xff]
        %v938 = vld [vmem:[%s855 + $0x114] sm:$0xff]
        %v939 = vld [vmem:[%s855 + $0x11c] sm:$0xf]
        %v940 = vld [vmem:[%s855 + $0x120] sm:$0xff]
        %v941 = vld [vmem:[%s855 + $0x128] sm:$0xff]
        %v942 = vld [vmem:[%s855 + $0x130] sm:$0xff]
        %v943 = vld [vmem:[%s855 + $0x138] sm:$0xff]
        %v944 = vld [vmem:[%s855 + $0x140] sm:$0xf]
        %v945 = vld [vmem:[%s855 + $0x144] sm:$0xff]
        %v946 = vld [vmem:[%s855 + $0x14c] sm:$0xff]
        %v947 = vld [vmem:[%s855 + $0x154] sm:$0xff]
        %v948 = vld [vmem:[%s855 + $0x15c] sm:$0xff]
        %v949 = vld [vmem:[%s855 + $0x164] sm:$0xf]
        %v950 = vld [vmem:[%s855 + $0x168] sm:$0xff]
        %v951 = vld [vmem:[%s855 + $0x170] sm:$0xff]
        %v952 = vld [vmem:[%s855 + $0x178] sm:$0xff]
        %v953 = vld [vmem:[%s855 + $0x180] sm:$0xff]
        %v954 = vld [vmem:[%s855 + $0x188] sm:$0xf]
        %v955 = vld [vmem:[%s855 + $0x18c] sm:$0xff]
        %v956 = vld [vmem:[%s855 + $0x194] sm:$0xff]
        %v957 = vld [vmem:[%s855 + $0x19c] sm:$0xff]
        %v958 = vld [vmem:[%s855 + $0x1a4] sm:$0xff]
        %v959 = vld [vmem:[%s855 + $0x1ac] sm:$0xf]
        %v960 = vld [vmem:[%s855 + $0x1b0] sm:$0xff]
        %v961 = vld [vmem:[%s855 + $0x1b8] sm:$0xff]
        %v962 = vld [vmem:[%s855 + $0x1c0] sm:$0xff]
        %v963 = vld [vmem:[%s855 + $0x1c8] sm:$0xff]
        %v964 = vld [vmem:[%s855 + $0x1d0] sm:$0xf]
        %v965 = vld [vmem:[%s855 + $0x1d4] sm:$0xff]
        %v966 = vld [vmem:[%s855 + $0x1dc] sm:$0xff]
        %v967 = vld [vmem:[%s855 + $0x1e4] sm:$0xff]
        %v968 = vld [vmem:[%s855 + $0x1ec] sm:$0xff]
        %v969 = vld [vmem:[%s855 + $0x1f4] sm:$0xf]
        %v970 = vld [vmem:[%s855 + $0x1f8] sm:$0xff]
        %v971 = vld [vmem:[%s855 + $0x200] sm:$0xff]
        %v972 = vld [vmem:[%s855 + $0x208] sm:$0xff]
        %v973 = vld [vmem:[%s855 + $0x210] sm:$0xff]
        %v974 = vld [vmem:[%s855 + $0x218] sm:$0xf]
        %v975 = vld [vmem:[%s855 + $0x21c] sm:$0xff]
        %v976 = vld [vmem:[%s855 + $0x224] sm:$0xff]
        %v977 = vld [vmem:[%s855 + $0x22c] sm:$0xff]
        %v978 = vld [vmem:[%s855 + $0x234] sm:$0xff]
        %v979 = vld [vmem:[%s855 + $0x23c] sm:$0xf]
        %v980 = vld [vmem:[%s813] sm:$0xf]
        %v981 = vld [vmem:[%s813 + $0x4] sm:$0xf]
        %v982 = vld [vmem:[%s813 + $0x8] sm:$0xf]
        %v983 = vld [vmem:[%s813 + $0xc] sm:$0xf]
        %v984 = vld [vmem:[%s813 + $0x10] sm:$0xf]
        %v985 = vld [vmem:[%s813 + $0x14] sm:$0xf]
        %v986 = vld [vmem:[%s813 + $0x18] sm:$0xf]
        %v987 = vld [vmem:[%s813 + $0x1c] sm:$0xf]
        %v988 = vld [vmem:[%s813 + $0x20] sm:$0xf]
        %v989 = vld [vmem:[%s813 + $0x24] sm:$0xf]
        %v990 = vld [vmem:[%s813 + $0x28] sm:$0xf]
        %v991 = vld [vmem:[%s813 + $0x2c] sm:$0xf]
        %v992 = vld [vmem:[%s813 + $0x30] sm:$0xf]
        %v993 = vld [vmem:[%s813 + $0x34] sm:$0xf]
        %v994 = vld [vmem:[%s813 + $0x38] sm:$0xf]
        %v995 = vld [vmem:[%s813 + $0x3c] sm:$0xf]
        %v996 = vld [vmem:[%s813 + $0x40] sm:$0xf]
        %v997 = vld [vmem:[%s813 + $0x44] sm:$0xf]
        %v998 = vld [vmem:[%s813 + $0x48] sm:$0xf]
        %v999 = vld [vmem:[%s813 + $0x4c] sm:$0xf]
        %v1000 = vld [vmem:[%s813 + $0x50] sm:$0xf]
        %v1001 = vld [vmem:[%s813 + $0x54] sm:$0xf]
        %v1002 = vld [vmem:[%s813 + $0x58] sm:$0xf]
        %v1003 = vld [vmem:[%s813 + $0x5c] sm:$0xf]
        %v1004 = vld [vmem:[%s813 + $0x60] sm:$0xf]
        %v1005 = vld [vmem:[%s813 + $0x64] sm:$0xf]
        %v1006 = vld [vmem:[%s813 + $0x68] sm:$0xf]
        %v1007 = vld [vmem:[%s813 + $0x6c] sm:$0xf]
        %v1008 = vld [vmem:[%s813 + $0x70] sm:$0xf]
        %v1009 = vld [vmem:[%s813 + $0x74] sm:$0xf]
        %v1010 = vld [vmem:[%s813 + $0x78] sm:$0xf]
        %v1011 = vld [vmem:[%s813 + $0x7c] sm:$0xf]
        %v1012 = vld [vmem:[%s813 + $0x80] sm:$0xf]
        %v1013 = vld [vmem:[%s813 + $0x84] sm:$0xf]
        %v1014 = vld [vmem:[%s813 + $0x88] sm:$0xf]
        %v1015 = vld [vmem:[%s813 + $0x8c] sm:$0xf]
        %v1016 = vld [vmem:[%s813 + $0x90] sm:$0xf]
        %v1017 = vld [vmem:[%s813 + $0x94] sm:$0xf]
        %v1018 = vld [vmem:[%s813 + $0x98] sm:$0xf]
        %v1019 = vld [vmem:[%s813 + $0x9c] sm:$0xf]
        %v1020 = vld [vmem:[%s813 + $0xa0] sm:$0xf]
        %v1021 = vld [vmem:[%s813 + $0xa4] sm:$0xf]
        %v1022 = vld [vmem:[%s813 + $0xa8] sm:$0xf]
        %v1023 = vld [vmem:[%s813 + $0xac] sm:$0xf]
        %v1024 = vld [vmem:[%s813 + $0xb0] sm:$0xf]
        %v1025 = vld [vmem:[%s813 + $0xb4] sm:$0xf]
        %v1026 = vld [vmem:[%s813 + $0xb8] sm:$0xf]
        %v1027 = vld [vmem:[%s813 + $0xbc] sm:$0xf]
        %v1028 = vld [vmem:[%s813 + $0xc0] sm:$0xf]
        %v1029 = vld [vmem:[%s813 + $0xc4] sm:$0xf]
        %v1030 = vld [vmem:[%s813 + $0xc8] sm:$0xf]
        %v1031 = vld [vmem:[%s813 + $0xcc] sm:$0xf]
        %v1032 = vld [vmem:[%s813 + $0xd0] sm:$0xf]
        %v1033 = vld [vmem:[%s813 + $0xd4] sm:$0xf]
        %v1034 = vld [vmem:[%s813 + $0xd8] sm:$0xf]
        %v1035 = vld [vmem:[%s813 + $0xdc] sm:$0xf]
        %v1036 = vld [vmem:[%s813 + $0xe0] sm:$0xf]
        %v1037 = vld [vmem:[%s813 + $0xe4] sm:$0xf]
        %v1038 = vld [vmem:[%s813 + $0xe8] sm:$0xf]
        %v1039 = vld [vmem:[%s813 + $0xec] sm:$0xf]
        %v1040 = vld [vmem:[%s813 + $0xf0] sm:$0xf]
        %v1041 = vld [vmem:[%s813 + $0xf4] sm:$0xf]
        %v1042 = vld [vmem:[%s813 + $0xf8] sm:$0xf]
        %v1043 = vld [vmem:[%s813 + $0xfc] sm:$0xf]
        %v1044 = vld [vmem:[%s813 + $0x100] sm:$0xf]
        %v1045 = vld [vmem:[%s813 + $0x104] sm:$0xf]
        %v1046 = vld [vmem:[%s813 + $0x108] sm:$0xf]
        %v1047 = vld [vmem:[%s813 + $0x10c] sm:$0xf]
        %v1048 = vld [vmem:[%s813 + $0x110] sm:$0xf]
        %v1049 = vld [vmem:[%s813 + $0x114] sm:$0xf]
        %v1050 = vld [vmem:[%s813 + $0x118] sm:$0xf]
        %v1051 = vld [vmem:[%s813 + $0x11c] sm:$0xf]
        %v1052 = vld [vmem:[%s813 + $0x120] sm:$0xf]
        %v1053 = vld [vmem:[%s813 + $0x124] sm:$0xf]
        %v1054 = vld [vmem:[%s813 + $0x128] sm:$0xf]
        %v1055 = vld [vmem:[%s813 + $0x12c] sm:$0xf]
        %v1056 = vld [vmem:[%s813 + $0x130] sm:$0xf]
        %v1057 = vld [vmem:[%s813 + $0x134] sm:$0xf]
        %v1058 = vld [vmem:[%s813 + $0x138] sm:$0xf]
        %v1059 = vld [vmem:[%s813 + $0x13c] sm:$0xf]
        %v1060 = vld [vmem:[%s813 + $0x140] sm:$0xf]
        %v1061 = vld [vmem:[%s813 + $0x144] sm:$0xf]
        %v1062 = vld [vmem:[%s813 + $0x148] sm:$0xf]
        %v1063 = vld [vmem:[%s813 + $0x14c] sm:$0xf]
        %v1064 = vld [vmem:[%s813 + $0x150] sm:$0xf]
        %v1065 = vld [vmem:[%s813 + $0x154] sm:$0xf]
        %v1066 = vld [vmem:[%s813 + $0x158] sm:$0xf]
        %v1067 = vld [vmem:[%s813 + $0x15c] sm:$0xf]
        %v1068 = vld [vmem:[%s813 + $0x160] sm:$0xf]
        %v1069 = vld [vmem:[%s813 + $0x164] sm:$0xf]
        %v1070 = vld [vmem:[%s813 + $0x168] sm:$0xf]
        %v1071 = vld [vmem:[%s813 + $0x16c] sm:$0xf]
        %v1072 = vld [vmem:[%s813 + $0x170] sm:$0xf]
        %v1073 = vld [vmem:[%s813 + $0x174] sm:$0xf]
        %v1074 = vld [vmem:[%s813 + $0x178] sm:$0xf]
        %v1075 = vld [vmem:[%s813 + $0x17c] sm:$0xf]
        %v1076 = vld [vmem:[%s813 + $0x180] sm:$0xf]
        %v1077 = vld [vmem:[%s813 + $0x184] sm:$0xf]
        %v1078 = vld [vmem:[%s813 + $0x188] sm:$0xf]
        %v1079 = vld [vmem:[%s813 + $0x18c] sm:$0xf]
        %v1080 = vld [vmem:[%s813 + $0x190] sm:$0xf]
        %v1081 = vld [vmem:[%s813 + $0x194] sm:$0xf]
        %v1082 = vld [vmem:[%s813 + $0x198] sm:$0xf]
        %v1083 = vld [vmem:[%s813 + $0x19c] sm:$0xf]
        %v1084 = vld [vmem:[%s813 + $0x1a0] sm:$0xf]
        %v1085 = vld [vmem:[%s813 + $0x1a4] sm:$0xf]
        %v1086 = vld [vmem:[%s813 + $0x1a8] sm:$0xf]
        %v1087 = vld [vmem:[%s813 + $0x1ac] sm:$0xf]
        %v1088 = vld [vmem:[%s813 + $0x1b0] sm:$0xf]
        %v1089 = vld [vmem:[%s813 + $0x1b4] sm:$0xf]
        %v1090 = vld [vmem:[%s813 + $0x1b8] sm:$0xf]
        %v1091 = vld [vmem:[%s813 + $0x1bc] sm:$0xf]
        %v1092 = vld [vmem:[%s813 + $0x1c0] sm:$0xf]
        %v1093 = vld [vmem:[%s813 + $0x1c4] sm:$0xf]
        %v1094 = vld [vmem:[%s813 + $0x1c8] sm:$0xf]
        %v1095 = vld [vmem:[%s813 + $0x1cc] sm:$0xf]
        %v1096 = vld [vmem:[%s813 + $0x1d0] sm:$0xf]
        %v1097 = vld [vmem:[%s813 + $0x1d4] sm:$0xf]
        %v1098 = vld [vmem:[%s813 + $0x1d8] sm:$0xf]
        %v1099 = vld [vmem:[%s813 + $0x1dc] sm:$0xf]
        %v1100 = vld [vmem:[%s813 + $0x1e0] sm:$0xf]
        %v1101 = vld [vmem:[%s813 + $0x1e4] sm:$0xf]
        %v1102 = vld [vmem:[%s813 + $0x1e8] sm:$0xf]
        %v1103 = vld [vmem:[%s813 + $0x1ec] sm:$0xf]
        %v1104 = vld [vmem:[%s813 + $0x1f0] sm:$0xf]
        %v1105 = vld [vmem:[%s813 + $0x1f4] sm:$0xf]
        %v1106 = vld [vmem:[%s813 + $0x1f8] sm:$0xf]
        %v1107 = vld [vmem:[%s813 + $0x1fc] sm:$0xf]
        %v1108 = vld [vmem:[%s813 + $0x200] sm:$0xf]
        %v1109 = vld [vmem:[%s813 + $0x204] sm:$0xf]
        %v1110 = vld [vmem:[%s813 + $0x208] sm:$0xf]
        %v1111 = vld [vmem:[%s813 + $0x20c] sm:$0xf]
        %v1112 = vld [vmem:[%s813 + $0x210] sm:$0xf]
        %v1113 = vld [vmem:[%s813 + $0x214] sm:$0xf]
        %v1114 = vld [vmem:[%s813 + $0x218] sm:$0xf]
        %v1115 = vld [vmem:[%s813 + $0x21c] sm:$0xf]
        %v1116 = vld [vmem:[%s813 + $0x220] sm:$0xf]
        %v1117 = vld [vmem:[%s813 + $0x224] sm:$0xf]
        %v1118 = vld [vmem:[%s813 + $0x228] sm:$0xf]
        %v1119 = vld [vmem:[%s813 + $0x22c] sm:$0xf]
        %v1120 = vld [vmem:[%s813 + $0x230] sm:$0xf]
        %v1121 = vld [vmem:[%s813 + $0x234] sm:$0xf]
        %v1122 = vld [vmem:[%s813 + $0x238] sm:$0xf]
        %v1123 = vld [vmem:[%s813 + $0x23c] sm:$0xf]
        %v1204 = vunpack.c.l.b16 %v900
        %v1205 = vunpack.c.h.b16 %v900
        %v1206 = vunpack.c.l.b16 %v901
        %v1207 = vunpack.c.h.b16 %v901
        %v1208 = vunpack.c.l.b16 %v902
        %v1209 = vunpack.c.h.b16 %v902
        %v1210 = vunpack.c.l.b16 %v903
        %v1211 = vunpack.c.h.b16 %v903
        %v1212 = vunpack.c.l.b16 %v904
        %v1213 = vunpack.c.l.b16 %v905
        %v1214 = vunpack.c.h.b16 %v905
        %v1215 = vunpack.c.l.b16 %v906
        %v1216 = vunpack.c.h.b16 %v906
        %v1217 = vunpack.c.l.b16 %v907
        %v1218 = vunpack.c.h.b16 %v907
        %v1219 = vunpack.c.l.b16 %v908
        %v1220 = vunpack.c.h.b16 %v908
        %v1221 = vunpack.c.l.b16 %v909
        %v1222 = vunpack.c.l.b16 %v910
        %v1223 = vunpack.c.h.b16 %v910
        %v1224 = vunpack.c.l.b16 %v911
        %v1225 = vunpack.c.h.b16 %v911
        %v1226 = vunpack.c.l.b16 %v912
        %v1227 = vunpack.c.h.b16 %v912
        %v1228 = vunpack.c.l.b16 %v913
        %v1229 = vunpack.c.h.b16 %v913
        %v1230 = vunpack.c.l.b16 %v914
        %v1231 = vunpack.c.l.b16 %v915
        %v1232 = vunpack.c.h.b16 %v915
        %v1233 = vunpack.c.l.b16 %v916
        %v1234 = vunpack.c.h.b16 %v916
        %v1235 = vunpack.c.l.b16 %v917
        %v1236 = vunpack.c.h.b16 %v917
        %v1237 = vunpack.c.l.b16 %v918
        %v1238 = vunpack.c.h.b16 %v918
        %v1239 = vunpack.c.l.b16 %v919
        %v1240 = vunpack.c.l.b16 %v920
        %v1241 = vunpack.c.h.b16 %v920
        %v1242 = vunpack.c.l.b16 %v921
        %v1243 = vunpack.c.h.b16 %v921
        %v1244 = vunpack.c.l.b16 %v922
        %v1245 = vunpack.c.h.b16 %v922
        %v1246 = vunpack.c.l.b16 %v923
        %v1247 = vunpack.c.h.b16 %v923
        %v1248 = vunpack.c.l.b16 %v924
        %v1249 = vunpack.c.l.b16 %v925
        %v1250 = vunpack.c.h.b16 %v925
        %v1251 = vunpack.c.l.b16 %v926
        %v1252 = vunpack.c.h.b16 %v926
        %v1253 = vunpack.c.l.b16 %v927
        %v1254 = vunpack.c.h.b16 %v927
        %v1255 = vunpack.c.l.b16 %v928
        %v1256 = vunpack.c.h.b16 %v928
        %v1257 = vunpack.c.l.b16 %v929
        %v1258 = vunpack.c.l.b16 %v930
        %v1259 = vunpack.c.h.b16 %v930
        %v1260 = vunpack.c.l.b16 %v931
        %v1261 = vunpack.c.h.b16 %v931
        %v1262 = vunpack.c.l.b16 %v932
        %v1263 = vunpack.c.h.b16 %v932
        %v1264 = vunpack.c.l.b16 %v933
        %v1265 = vunpack.c.h.b16 %v933
        %v1266 = vunpack.c.l.b16 %v934
        %v1267 = vunpack.c.l.b16 %v935
        %v1268 = vunpack.c.h.b16 %v935
        %v1269 = vunpack.c.l.b16 %v936
        %v1270 = vunpack.c.h.b16 %v936
        %v1271 = vunpack.c.l.b16 %v937
        %v1272 = vunpack.c.h.b16 %v937
        %v1273 = vunpack.c.l.b16 %v938
        %v1274 = vunpack.c.h.b16 %v938
        %v1275 = vunpack.c.l.b16 %v939
        %v1276 = vunpack.c.l.b16 %v940
        %v1277 = vunpack.c.h.b16 %v940
        %v1278 = vunpack.c.l.b16 %v941
        %v1279 = vunpack.c.h.b16 %v941
        %v1280 = vunpack.c.l.b16 %v942
        %v1281 = vunpack.c.h.b16 %v942
        %v1282 = vunpack.c.l.b16 %v943
        %v1283 = vunpack.c.h.b16 %v943
        %v1284 = vunpack.c.l.b16 %v944
        %v1285 = vunpack.c.l.b16 %v945
        %v1286 = vunpack.c.h.b16 %v945
        %v1287 = vunpack.c.l.b16 %v946
        %v1288 = vunpack.c.h.b16 %v946
        %v1289 = vunpack.c.l.b16 %v947
        %v1290 = vunpack.c.h.b16 %v947
        %v1291 = vunpack.c.l.b16 %v948
        %v1292 = vunpack.c.h.b16 %v948
        %v1293 = vunpack.c.l.b16 %v949
        %v1294 = vunpack.c.l.b16 %v950
        %v1295 = vunpack.c.h.b16 %v950
        %v1296 = vunpack.c.l.b16 %v951
        %v1297 = vunpack.c.h.b16 %v951
        %v1298 = vunpack.c.l.b16 %v952
        %v1299 = vunpack.c.h.b16 %v952
        %v1300 = vunpack.c.l.b16 %v953
        %v1301 = vunpack.c.h.b16 %v953
        %v1302 = vunpack.c.l.b16 %v954
        %v1303 = vunpack.c.l.b16 %v955
        %v1304 = vunpack.c.h.b16 %v955
        %v1305 = vunpack.c.l.b16 %v956
        %v1306 = vunpack.c.h.b16 %v956
        %v1307 = vunpack.c.l.b16 %v957
        %v1308 = vunpack.c.h.b16 %v957
        %v1309 = vunpack.c.l.b16 %v958
        %v1310 = vunpack.c.h.b16 %v958
        %v1311 = vunpack.c.l.b16 %v959
        %v1312 = vunpack.c.l.b16 %v960
        %v1313 = vunpack.c.h.b16 %v960
        %v1314 = vunpack.c.l.b16 %v961
        %v1315 = vunpack.c.h.b16 %v961
        %v1316 = vunpack.c.l.b16 %v962
        %v1317 = vunpack.c.h.b16 %v962
        %v1318 = vunpack.c.l.b16 %v963
        %v1319 = vunpack.c.h.b16 %v963
        %v1320 = vunpack.c.l.b16 %v964
        %v1321 = vunpack.c.l.b16 %v965
        %v1322 = vunpack.c.h.b16 %v965
        %v1323 = vunpack.c.l.b16 %v966
        %v1324 = vunpack.c.h.b16 %v966
        %v1325 = vunpack.c.l.b16 %v967
        %v1326 = vunpack.c.h.b16 %v967
        %v1327 = vunpack.c.l.b16 %v968
        %v1328 = vunpack.c.h.b16 %v968
        %v1329 = vunpack.c.l.b16 %v969
        %v1330 = vunpack.c.l.b16 %v970
        %v1331 = vunpack.c.h.b16 %v970
        %v1332 = vunpack.c.l.b16 %v971
        %v1333 = vunpack.c.h.b16 %v971
        %v1334 = vunpack.c.l.b16 %v972
        %v1335 = vunpack.c.h.b16 %v972
        %v1336 = vunpack.c.l.b16 %v973
        %v1337 = vunpack.c.h.b16 %v973
        %v1338 = vunpack.c.l.b16 %v974
        %v1339 = vunpack.c.l.b16 %v975
        %v1340 = vunpack.c.h.b16 %v975
        %v1341 = vunpack.c.l.b16 %v976
        %v1342 = vunpack.c.h.b16 %v976
        %v1343 = vunpack.c.l.b16 %v977
        %v1344 = vunpack.c.h.b16 %v977
        %v1345 = vunpack.c.l.b16 %v978
        %v1346 = vunpack.c.h.b16 %v978
        %v1347 = vunpack.c.l.b16 %v979
        %v1348 = vpack.c.b16 %v1213, %v1204
        %v1349 = vpack.c.b16 %v1214, %v1205
        %v1350 = vpack.c.b16 %v1215, %v1206
        %v1351 = vpack.c.b16 %v1216, %v1207
        %v1352 = vpack.c.b16 %v1217, %v1208
        %v1353 = vpack.c.b16 %v1218, %v1209
        %v1354 = vpack.c.b16 %v1219, %v1210
        %v1355 = vpack.c.b16 %v1220, %v1211
        %v1356 = vpack.c.b16 %v1221, %v1212
        %v1357 = vpack.c.b16 %v1231, %v1222
        %v1358 = vpack.c.b16 %v1232, %v1223
        %v1359 = vpack.c.b16 %v1233, %v1224
        %v1360 = vpack.c.b16 %v1234, %v1225
        %v1361 = vpack.c.b16 %v1235, %v1226
        %v1362 = vpack.c.b16 %v1236, %v1227
        %v1363 = vpack.c.b16 %v1237, %v1228
        %v1364 = vpack.c.b16 %v1238, %v1229
        %v1365 = vpack.c.b16 %v1239, %v1230
        %v1366 = vpack.c.b16 %v1249, %v1240
        %v1367 = vpack.c.b16 %v1250, %v1241
        %v1368 = vpack.c.b16 %v1251, %v1242
        %v1369 = vpack.c.b16 %v1252, %v1243
        %v1370 = vpack.c.b16 %v1253, %v1244
        %v1371 = vpack.c.b16 %v1254, %v1245
        %v1372 = vpack.c.b16 %v1255, %v1246
        %v1373 = vpack.c.b16 %v1256, %v1247
        %v1374 = vpack.c.b16 %v1257, %v1248
        %v1375 = vpack.c.b16 %v1267, %v1258
        %v1376 = vpack.c.b16 %v1268, %v1259
        %v1377 = vpack.c.b16 %v1269, %v1260
        %v1378 = vpack.c.b16 %v1270, %v1261
        %v1379 = vpack.c.b16 %v1271, %v1262
        %v1380 = vpack.c.b16 %v1272, %v1263
        %v1381 = vpack.c.b16 %v1273, %v1264
        %v1382 = vpack.c.b16 %v1274, %v1265
        %v1383 = vpack.c.b16 %v1275, %v1266
        %v1384 = vpack.c.b16 %v1285, %v1276
        %v1385 = vpack.c.b16 %v1286, %v1277
        %v1386 = vpack.c.b16 %v1287, %v1278
        %v1387 = vpack.c.b16 %v1288, %v1279
        %v1388 = vpack.c.b16 %v1289, %v1280
        %v1389 = vpack.c.b16 %v1290, %v1281
        %v1390 = vpack.c.b16 %v1291, %v1282
        %v1391 = vpack.c.b16 %v1292, %v1283
        %v1392 = vpack.c.b16 %v1293, %v1284
        %v1393 = vpack.c.b16 %v1303, %v1294
        %v1394 = vpack.c.b16 %v1304, %v1295
        %v1395 = vpack.c.b16 %v1305, %v1296
        %v1396 = vpack.c.b16 %v1306, %v1297
        %v1397 = vpack.c.b16 %v1307, %v1298
        %v1398 = vpack.c.b16 %v1308, %v1299
        %v1399 = vpack.c.b16 %v1309, %v1300
        %v1400 = vpack.c.b16 %v1310, %v1301
        %v1401 = vpack.c.b16 %v1311, %v1302
        %v1402 = vpack.c.b16 %v1321, %v1312
        %v1403 = vpack.c.b16 %v1322, %v1313
        %v1404 = vpack.c.b16 %v1323, %v1314
        %v1405 = vpack.c.b16 %v1324, %v1315
        %v1406 = vpack.c.b16 %v1325, %v1316
        %v1407 = vpack.c.b16 %v1326, %v1317
        %v1408 = vpack.c.b16 %v1327, %v1318
        %v1409 = vpack.c.b16 %v1328, %v1319
        %v1410 = vpack.c.b16 %v1329, %v1320
        %v1411 = vpack.c.b16 %v1339, %v1330
        %v1412 = vpack.c.b16 %v1340, %v1331
        %v1413 = vpack.c.b16 %v1341, %v1332
        %v1414 = vpack.c.b16 %v1342, %v1333
        %v1415 = vpack.c.b16 %v1343, %v1334
        %v1416 = vpack.c.b16 %v1344, %v1335
        %v1417 = vpack.c.b16 %v1345, %v1336
        %v1418 = vpack.c.b16 %v1346, %v1337
        %v1419 = vpack.c.b16 %v1347, %v1338
        %v1636 = vunpack.c.l.b16 %v980
        %v1637 = vunpack.c.l.b16 %v981
        %v1638 = vunpack.c.l.b16 %v982
        %v1639 = vunpack.c.l.b16 %v983
        %v1640 = vunpack.c.l.b16 %v984
        %v1641 = vunpack.c.l.b16 %v985
        %v1642 = vunpack.c.l.b16 %v986
        %v1643 = vunpack.c.l.b16 %v987
        %v1644 = vunpack.c.l.b16 %v988
        %v1645 = vunpack.c.l.b16 %v989
        %v1646 = vunpack.c.l.b16 %v990
        %v1647 = vunpack.c.l.b16 %v991
        %v1648 = vunpack.c.l.b16 %v992
        %v1649 = vunpack.c.l.b16 %v993
        %v1650 = vunpack.c.l.b16 %v994
        %v1651 = vunpack.c.l.b16 %v995
        %v1652 = vunpack.c.l.b16 %v996
        %v1653 = vunpack.c.l.b16 %v997
        %v1654 = vunpack.c.l.b16 %v998
        %v1655 = vunpack.c.l.b16 %v999
        %v1656 = vunpack.c.l.b16 %v1000
        %v1657 = vunpack.c.l.b16 %v1001
        %v1658 = vunpack.c.l.b16 %v1002
        %v1659 = vunpack.c.l.b16 %v1003
        %v1660 = vunpack.c.l.b16 %v1004
        %v1661 = vunpack.c.l.b16 %v1005
        %v1662 = vunpack.c.l.b16 %v1006
        %v1663 = vunpack.c.l.b16 %v1007
        %v1664 = vunpack.c.l.b16 %v1008
        %v1665 = vunpack.c.l.b16 %v1009
        %v1666 = vunpack.c.l.b16 %v1010
        %v1667 = vunpack.c.l.b16 %v1011
        %v1668 = vunpack.c.l.b16 %v1012
        %v1669 = vunpack.c.l.b16 %v1013
        %v1670 = vunpack.c.l.b16 %v1014
        %v1671 = vunpack.c.l.b16 %v1015
        %v1672 = vunpack.c.l.b16 %v1016
        %v1673 = vunpack.c.l.b16 %v1017
        %v1674 = vunpack.c.l.b16 %v1018
        %v1675 = vunpack.c.l.b16 %v1019
        %v1676 = vunpack.c.l.b16 %v1020
        %v1677 = vunpack.c.l.b16 %v1021
        %v1678 = vunpack.c.l.b16 %v1022
        %v1679 = vunpack.c.l.b16 %v1023
        %v1680 = vunpack.c.l.b16 %v1024
        %v1681 = vunpack.c.l.b16 %v1025
        %v1682 = vunpack.c.l.b16 %v1026
        %v1683 = vunpack.c.l.b16 %v1027
        %v1684 = vunpack.c.l.b16 %v1028
        %v1685 = vunpack.c.l.b16 %v1029
        %v1686 = vunpack.c.l.b16 %v1030
        %v1687 = vunpack.c.l.b16 %v1031
        %v1688 = vunpack.c.l.b16 %v1032
        %v1689 = vunpack.c.l.b16 %v1033
        %v1690 = vunpack.c.l.b16 %v1034
        %v1691 = vunpack.c.l.b16 %v1035
        %v1692 = vunpack.c.l.b16 %v1036
        %v1693 = vunpack.c.l.b16 %v1037
        %v1694 = vunpack.c.l.b16 %v1038
        %v1695 = vunpack.c.l.b16 %v1039
        %v1696 = vunpack.c.l.b16 %v1040
        %v1697 = vunpack.c.l.b16 %v1041
        %v1698 = vunpack.c.l.b16 %v1042
        %v1699 = vunpack.c.l.b16 %v1043
        %v1700 = vunpack.c.l.b16 %v1044
        %v1701 = vunpack.c.l.b16 %v1045
        %v1702 = vunpack.c.l.b16 %v1046
        %v1703 = vunpack.c.l.b16 %v1047
        %v1704 = vunpack.c.l.b16 %v1048
        %v1705 = vunpack.c.l.b16 %v1049
        %v1706 = vunpack.c.l.b16 %v1050
        %v1707 = vunpack.c.l.b16 %v1051
        %v1708 = vunpack.c.l.b16 %v1052
        %v1709 = vunpack.c.l.b16 %v1053
        %v1710 = vunpack.c.l.b16 %v1054
        %v1711 = vunpack.c.l.b16 %v1055
        %v1712 = vunpack.c.l.b16 %v1056
        %v1713 = vunpack.c.l.b16 %v1057
        %v1714 = vunpack.c.l.b16 %v1058
        %v1715 = vunpack.c.l.b16 %v1059
        %v1716 = vunpack.c.l.b16 %v1060
        %v1717 = vunpack.c.l.b16 %v1061
        %v1718 = vunpack.c.l.b16 %v1062
        %v1719 = vunpack.c.l.b16 %v1063
        %v1720 = vunpack.c.l.b16 %v1064
        %v1721 = vunpack.c.l.b16 %v1065
        %v1722 = vunpack.c.l.b16 %v1066
        %v1723 = vunpack.c.l.b16 %v1067
        %v1724 = vunpack.c.l.b16 %v1068
        %v1725 = vunpack.c.l.b16 %v1069
        %v1726 = vunpack.c.l.b16 %v1070
        %v1727 = vunpack.c.l.b16 %v1071
        %v1728 = vunpack.c.l.b16 %v1072
        %v1729 = vunpack.c.l.b16 %v1073
        %v1730 = vunpack.c.l.b16 %v1074
        %v1731 = vunpack.c.l.b16 %v1075
        %v1732 = vunpack.c.l.b16 %v1076
        %v1733 = vunpack.c.l.b16 %v1077
        %v1734 = vunpack.c.l.b16 %v1078
        %v1735 = vunpack.c.l.b16 %v1079
        %v1736 = vunpack.c.l.b16 %v1080
        %v1737 = vunpack.c.l.b16 %v1081
        %v1738 = vunpack.c.l.b16 %v1082
        %v1739 = vunpack.c.l.b16 %v1083
        %v1740 = vunpack.c.l.b16 %v1084
        %v1741 = vunpack.c.l.b16 %v1085
        %v1742 = vunpack.c.l.b16 %v1086
        %v1743 = vunpack.c.l.b16 %v1087
        %v1744 = vunpack.c.l.b16 %v1088
        %v1745 = vunpack.c.l.b16 %v1089
        %v1746 = vunpack.c.l.b16 %v1090
        %v1747 = vunpack.c.l.b16 %v1091
        %v1748 = vunpack.c.l.b16 %v1092
        %v1749 = vunpack.c.l.b16 %v1093
        %v1750 = vunpack.c.l.b16 %v1094
        %v1751 = vunpack.c.l.b16 %v1095
        %v1752 = vunpack.c.l.b16 %v1096
        %v1753 = vunpack.c.l.b16 %v1097
        %v1754 = vunpack.c.l.b16 %v1098
        %v1755 = vunpack.c.l.b16 %v1099
        %v1756 = vunpack.c.l.b16 %v1100
        %v1757 = vunpack.c.l.b16 %v1101
        %v1758 = vunpack.c.l.b16 %v1102
        %v1759 = vunpack.c.l.b16 %v1103
        %v1760 = vunpack.c.l.b16 %v1104
        %v1761 = vunpack.c.l.b16 %v1105
        %v1762 = vunpack.c.l.b16 %v1106
        %v1763 = vunpack.c.l.b16 %v1107
        %v1764 = vunpack.c.l.b16 %v1108
        %v1765 = vunpack.c.l.b16 %v1109
        %v1766 = vunpack.c.l.b16 %v1110
        %v1767 = vunpack.c.l.b16 %v1111
        %v1768 = vunpack.c.l.b16 %v1112
        %v1769 = vunpack.c.l.b16 %v1113
        %v1770 = vunpack.c.l.b16 %v1114
        %v1771 = vunpack.c.l.b16 %v1115
        %v1772 = vunpack.c.l.b16 %v1116
        %v1773 = vunpack.c.l.b16 %v1117
        %v1774 = vunpack.c.l.b16 %v1118
        %v1775 = vunpack.c.l.b16 %v1119
        %v1776 = vunpack.c.l.b16 %v1120
        %v1777 = vunpack.c.l.b16 %v1121
        %v1778 = vunpack.c.l.b16 %v1122
        %v1779 = vunpack.c.l.b16 %v1123
        %v1780 = vpack.c.b16 %v1637, %v1636
        %v1781 = vpack.c.b16 %v1639, %v1638
        %v1782 = vpack.c.b16 %v1641, %v1640
        %v1783 = vpack.c.b16 %v1643, %v1642
        %v1784 = vpack.c.b16 %v1645, %v1644
        %v1785 = vpack.c.b16 %v1647, %v1646
        %v1786 = vpack.c.b16 %v1649, %v1648
        %v1787 = vpack.c.b16 %v1651, %v1650
        %v1788 = vpack.c.b16 %v1653, %v1652
        %v1789 = vpack.c.b16 %v1655, %v1654
        %v1790 = vpack.c.b16 %v1657, %v1656
        %v1791 = vpack.c.b16 %v1659, %v1658
        %v1792 = vpack.c.b16 %v1661, %v1660
        %v1793 = vpack.c.b16 %v1663, %v1662
        %v1794 = vpack.c.b16 %v1665, %v1664
        %v1795 = vpack.c.b16 %v1667, %v1666
        %v1796 = vpack.c.b16 %v1669, %v1668
        %v1797 = vpack.c.b16 %v1671, %v1670
        %v1798 = vpack.c.b16 %v1673, %v1672
        %v1799 = vpack.c.b16 %v1675, %v1674
        %v1800 = vpack.c.b16 %v1677, %v1676
        %v1801 = vpack.c.b16 %v1679, %v1678
        %v1802 = vpack.c.b16 %v1681, %v1680
        %v1803 = vpack.c.b16 %v1683, %v1682
        %v1804 = vpack.c.b16 %v1685, %v1684
        %v1805 = vpack.c.b16 %v1687, %v1686
        %v1806 = vpack.c.b16 %v1689, %v1688
        %v1807 = vpack.c.b16 %v1691, %v1690
        %v1808 = vpack.c.b16 %v1693, %v1692
        %v1809 = vpack.c.b16 %v1695, %v1694
        %v1810 = vpack.c.b16 %v1697, %v1696
        %v1811 = vpack.c.b16 %v1699, %v1698
        %v1812 = vpack.c.b16 %v1701, %v1700
        %v1813 = vpack.c.b16 %v1703, %v1702
        %v1814 = vpack.c.b16 %v1705, %v1704
        %v1815 = vpack.c.b16 %v1707, %v1706
        %v1816 = vpack.c.b16 %v1709, %v1708
        %v1817 = vpack.c.b16 %v1711, %v1710
        %v1818 = vpack.c.b16 %v1713, %v1712
        %v1819 = vpack.c.b16 %v1715, %v1714
        %v1820 = vpack.c.b16 %v1717, %v1716
        %v1821 = vpack.c.b16 %v1719, %v1718
        %v1822 = vpack.c.b16 %v1721, %v1720
        %v1823 = vpack.c.b16 %v1723, %v1722
        %v1824 = vpack.c.b16 %v1725, %v1724
        %v1825 = vpack.c.b16 %v1727, %v1726
        %v1826 = vpack.c.b16 %v1729, %v1728
        %v1827 = vpack.c.b16 %v1731, %v1730
        %v1828 = vpack.c.b16 %v1733, %v1732
        %v1829 = vpack.c.b16 %v1735, %v1734
        %v1830 = vpack.c.b16 %v1737, %v1736
        %v1831 = vpack.c.b16 %v1739, %v1738
        %v1832 = vpack.c.b16 %v1741, %v1740
        %v1833 = vpack.c.b16 %v1743, %v1742
        %v1834 = vpack.c.b16 %v1745, %v1744
        %v1835 = vpack.c.b16 %v1747, %v1746
        %v1836 = vpack.c.b16 %v1749, %v1748
        %v1837 = vpack.c.b16 %v1751, %v1750
        %v1838 = vpack.c.b16 %v1753, %v1752
        %v1839 = vpack.c.b16 %v1755, %v1754
        %v1840 = vpack.c.b16 %v1757, %v1756
        %v1841 = vpack.c.b16 %v1759, %v1758
        %v1842 = vpack.c.b16 %v1761, %v1760
        %v1843 = vpack.c.b16 %v1763, %v1762
        %v1844 = vpack.c.b16 %v1765, %v1764
        %v1845 = vpack.c.b16 %v1767, %v1766
        %v1846 = vpack.c.b16 %v1769, %v1768
        %v1847 = vpack.c.b16 %v1771, %v1770
        %v1848 = vpack.c.b16 %v1773, %v1772
        %v1849 = vpack.c.b16 %v1775, %v1774
        %v1850 = vpack.c.b16 %v1777, %v1776
        %v1851 = vpack.c.b16 %v1779, %v1778
        %1924 = vmatprep.subr.bf16.mxu0 0
        %1925 = vmatpush1.bf16.msra.mxu0 %v1787
        %1926 = vmatprep.subr.bf16.mxu0 0
        %1927 = vmatpush1.bf16.msra.mxu0 %v1786
        %1928 = vmatprep.subr.bf16.mxu0 0
        %1929 = vmatpush1.bf16.msra.mxu0 %v1785
        %1930 = vmatprep.subr.bf16.mxu0 0
        %1931 = vmatpush1.bf16.msra.mxu0 %v1784
        %1932 = vmatprep.subr.bf16.mxu0 0
        %1933 = vmatpush1.bf16.msra.mxu0 %v1783
        %1934 = vmatprep.subr.bf16.mxu0 0
        %1935 = vmatpush1.bf16.msra.mxu0 %v1782
        %1936 = vmatprep.subr.bf16.mxu0 0
        %1937 = vmatpush1.bf16.msra.mxu0 %v1781
        %1938 = vmatprep.subr.bf16.mxu0 0
        %1939 = vmatpush1.bf16.msra.mxu0 %v1780
        %1940 = vmatprep.subr.bf16.mxu0 0
        %1941 = vmatpush2.bf16.msra.mxu0 %v1795
        %1942 = vmatprep.subr.bf16.mxu0 0
        %1943 = vmatpush2.bf16.msra.mxu0 %v1794
        %1944 = vmatprep.subr.bf16.mxu0 0
        %1945 = vmatpush2.bf16.msra.mxu0 %v1793
        %1946 = vmatprep.subr.bf16.mxu0 0
        %1947 = vmatpush2.bf16.msra.mxu0 %v1792
        %1948 = vmatprep.subr.bf16.mxu0 0
        %1949 = vmatpush2.bf16.msra.mxu0 %v1791
        %1950 = vmatprep.subr.bf16.mxu0 0
        %1951 = vmatpush2.bf16.msra.mxu0 %v1790
        %1952 = vmatprep.subr.bf16.mxu0 0
        %1953 = vmatpush2.bf16.msra.mxu0 %v1789
        %1954 = vmatprep.subr.bf16.mxu0 0
        %1955 = vmatpush2.bf16.msra.mxu0 %v1788
        %1956 = vmatprep.mubr.bf16.mxu0 %v1349
        %1957 = vmatmul.mubr.bf16.gmra.mxu0 %v1348
        %v1958 = vpop.f32.mrf.mxu0
        %v1959 = vadd.f32 0.0, %v1958
        %v1960 = vpop.f32.mrf.mxu0
        %v1961 = vpop.f32.mrf.mxu0
        %v1962 = vadd.f32 0.0, %v1961
        %v1963 = vpop.f32.mrf.mxu0
        %1964 = vmatprep.mubr.bf16.mxu0 %v1358
        %1965 = vmatmul.mubr.bf16.gmra.mxu0 %v1357
        %v1966 = vpop.f32.mrf.mxu0
        %v1967 = vadd.f32 0.0, %v1966
        %v1968 = vpop.f32.mrf.mxu0
        %v1969 = vpop.f32.mrf.mxu0
        %v1970 = vadd.f32 0.0, %v1969
        %v1971 = vpop.f32.mrf.mxu0
        %1972 = vmatprep.mubr.bf16.mxu0 %v1367
        %1973 = vmatmul.mubr.bf16.gmra.mxu0 %v1366
        %v1974 = vpop.f32.mrf.mxu0
        %v1975 = vadd.f32 0.0, %v1974
        %v1976 = vpop.f32.mrf.mxu0
        %v1977 = vpop.f32.mrf.mxu0
        %v1978 = vadd.f32 0.0, %v1977
        %v1979 = vpop.f32.mrf.mxu0
        %1980 = vmatprep.mubr.bf16.mxu0 %v1376
        %1981 = vmatmul.mubr.bf16.gmra.mxu0 %v1375
        %v1982 = vpop.f32.mrf.mxu0
        %v1983 = vadd.f32 0.0, %v1982
        %v1984 = vpop.f32.mrf.mxu0
        %v1985 = vpop.f32.mrf.mxu0
        %v1986 = vadd.f32 0.0, %v1985
        %v1987 = vpop.f32.mrf.mxu0
        %1988 = vmatprep.mubr.bf16.mxu0 %v1385
        %1989 = vmatmul.mubr.bf16.gmra.mxu0 %v1384
        %v1990 = vpop.f32.mrf.mxu0
        %v1991 = vadd.f32 0.0, %v1990
        %v1992 = vpop.f32.mrf.mxu0
        %v1993 = vpop.f32.mrf.mxu0
        %v1994 = vadd.f32 0.0, %v1993
        %v1995 = vpop.f32.mrf.mxu0
        %1996 = vmatprep.mubr.bf16.mxu0 %v1394
        %1997 = vmatmul.mubr.bf16.gmra.mxu0 %v1393
        %v1998 = vpop.f32.mrf.mxu0
        %v1999 = vadd.f32 0.0, %v1998
        %v2000 = vpop.f32.mrf.mxu0
        %v2001 = vpop.f32.mrf.mxu0
        %v2002 = vadd.f32 0.0, %v2001
        %v2003 = vpop.f32.mrf.mxu0
        %2004 = vmatprep.mubr.bf16.mxu0 %v1403
        %2005 = vmatmul.mubr.bf16.gmra.mxu0 %v1402
        %v2006 = vpop.f32.mrf.mxu0
        %v2007 = vadd.f32 0.0, %v2006
        %v2008 = vpop.f32.mrf.mxu0
        %v2009 = vpop.f32.mrf.mxu0
        %v2010 = vadd.f32 0.0, %v2009
        %v2011 = vpop.f32.mrf.mxu0
        %2012 = vmatprep.mubr.bf16.mxu0 %v1412
        %2013 = vmatmul.mubr.bf16.gmra.mxu0 %v1411
        %v2014 = vpop.f32.mrf.mxu0
        %v2015 = vadd.f32 0.0, %v2014
        %v2016 = vpop.f32.mrf.mxu0
        %v2017 = vpop.f32.mrf.mxu0
        %v2018 = vadd.f32 0.0, %v2017
        %v2019 = vpop.f32.mrf.mxu0
        %2020 = vdwg.mxu0
        %2021 = vmatprep.subr.bf16.mxu0 0
        %2022 = vmatpush1.bf16.msra.mxu0 %v1803
        %2023 = vmatprep.subr.bf16.mxu0 0
        %2024 = vmatpush1.bf16.msra.mxu0 %v1802
        %2025 = vmatprep.subr.bf16.mxu0 0
        %2026 = vmatpush1.bf16.msra.mxu0 %v1801
        %2027 = vmatprep.subr.bf16.mxu0 0
        %2028 = vmatpush1.bf16.msra.mxu0 %v1800
        %2029 = vmatprep.subr.bf16.mxu0 0
        %2030 = vmatpush1.bf16.msra.mxu0 %v1799
        %2031 = vmatprep.subr.bf16.mxu0 0
        %2032 = vmatpush1.bf16.msra.mxu0 %v1798
        %2033 = vmatprep.subr.bf16.mxu0 0
        %2034 = vmatpush1.bf16.msra.mxu0 %v1797
        %2035 = vmatprep.subr.bf16.mxu0 0
        %2036 = vmatpush1.bf16.msra.mxu0 %v1796
        %2037 = vmatprep.subr.bf16.mxu0 0
        %2038 = vmatpush2.bf16.msra.mxu0 %v1811
        %2039 = vmatprep.subr.bf16.mxu0 0
        %2040 = vmatpush2.bf16.msra.mxu0 %v1810
        %2041 = vmatprep.subr.bf16.mxu0 0
        %2042 = vmatpush2.bf16.msra.mxu0 %v1809
        %2043 = vmatprep.subr.bf16.mxu0 0
        %2044 = vmatpush2.bf16.msra.mxu0 %v1808
        %2045 = vmatprep.subr.bf16.mxu0 0
        %2046 = vmatpush2.bf16.msra.mxu0 %v1807
        %2047 = vmatprep.subr.bf16.mxu0 0
        %2048 = vmatpush2.bf16.msra.mxu0 %v1806
        %2049 = vmatprep.subr.bf16.mxu0 0
        %2050 = vmatpush2.bf16.msra.mxu0 %v1805
        %2051 = vmatprep.subr.bf16.mxu0 0
        %2052 = vmatpush2.bf16.msra.mxu0 %v1804
        %2053 = vmatprep.mubr.bf16.mxu0 %v1351
        %2054 = vmatmul.mubr.bf16.gmra.mxu0 %v1350
        %v2055 = vpop.f32.mrf.mxu0
        %v2056 = vadd.f32 %v1959, %v2055
        %v2057 = vpop.f32.mrf.mxu0
        %v2058 = vpop.f32.mrf.mxu0
        %v2059 = vadd.f32 %v1962, %v2058
        %v2060 = vpop.f32.mrf.mxu0
        %2061 = vmatprep.mubr.bf16.mxu0 %v1360
        %2062 = vmatmul.mubr.bf16.gmra.mxu0 %v1359
        %v2063 = vpop.f32.mrf.mxu0
        %v2064 = vadd.f32 %v1967, %v2063
        %v2065 = vpop.f32.mrf.mxu0
        %v2066 = vpop.f32.mrf.mxu0
        %v2067 = vadd.f32 %v1970, %v2066
        %v2068 = vpop.f32.mrf.mxu0
        %2069 = vmatprep.mubr.bf16.mxu0 %v1369
        %2070 = vmatmul.mubr.bf16.gmra.mxu0 %v1368
        %v2071 = vpop.f32.mrf.mxu0
        %v2072 = vadd.f32 %v1975, %v2071
        %v2073 = vpop.f32.mrf.mxu0
        %v2074 = vpop.f32.mrf.mxu0
        %v2075 = vadd.f32 %v1978, %v2074
        %v2076 = vpop.f32.mrf.mxu0
        %2077 = vmatprep.mubr.bf16.mxu0 %v1378
        %2078 = vmatmul.mubr.bf16.gmra.mxu0 %v1377
        %v2079 = vpop.f32.mrf.mxu0
        %v2080 = vadd.f32 %v1983, %v2079
        %v2081 = vpop.f32.mrf.mxu0
        %v2082 = vpop.f32.mrf.mxu0
        %v2083 = vadd.f32 %v1986, %v2082
        %v2084 = vpop.f32.mrf.mxu0
        %2085 = vmatprep.mubr.bf16.mxu0 %v1387
        %2086 = vmatmul.mubr.bf16.gmra.mxu0 %v1386
        %v2087 = vpop.f32.mrf.mxu0
        %v2088 = vadd.f32 %v1991, %v2087
        %v2089 = vpop.f32.mrf.mxu0
        %v2090 = vpop.f32.mrf.mxu0
        %v2091 = vadd.f32 %v1994, %v2090
        %v2092 = vpop.f32.mrf.mxu0
        %2093 = vmatprep.mubr.bf16.mxu0 %v1396
        %2094 = vmatmul.mubr.bf16.gmra.mxu0 %v1395
        %v2095 = vpop.f32.mrf.mxu0
        %v2096 = vadd.f32 %v1999, %v2095
        %v2097 = vpop.f32.mrf.mxu0
        %v2098 = vpop.f32.mrf.mxu0
        %v2099 = vadd.f32 %v2002, %v2098
        %v2100 = vpop.f32.mrf.mxu0
        %2101 = vmatprep.mubr.bf16.mxu0 %v1405
        %2102 = vmatmul.mubr.bf16.gmra.mxu0 %v1404
        %v2103 = vpop.f32.mrf.mxu0
        %v2104 = vadd.f32 %v2007, %v2103
        %v2105 = vpop.f32.mrf.mxu0
        %v2106 = vpop.f32.mrf.mxu0
        %v2107 = vadd.f32 %v2010, %v2106
        %v2108 = vpop.f32.mrf.mxu0
        %2109 = vmatprep.mubr.bf16.mxu0 %v1414
        %2110 = vmatmul.mubr.bf16.gmra.mxu0 %v1413
        %v2111 = vpop.f32.mrf.mxu0
        %v2112 = vadd.f32 %v2015, %v2111
        %v2113 = vpop.f32.mrf.mxu0
        %v2114 = vpop.f32.mrf.mxu0
        %v2115 = vadd.f32 %v2018, %v2114
        %v2116 = vpop.f32.mrf.mxu0
        %2117 = vdwg.mxu0
        %2118 = vmatprep.subr.bf16.mxu0 0
        %2119 = vmatpush1.bf16.msra.mxu0 %v1819
        %2120 = vmatprep.subr.bf16.mxu0 0
        %2121 = vmatpush1.bf16.msra.mxu0 %v1818
        %2122 = vmatprep.subr.bf16.mxu0 0
        %2123 = vmatpush1.bf16.msra.mxu0 %v1817
        %2124 = vmatprep.subr.bf16.mxu0 0
        %2125 = vmatpush1.bf16.msra.mxu0 %v1816
        %2126 = vmatprep.subr.bf16.mxu0 0
        %2127 = vmatpush1.bf16.msra.mxu0 %v1815
        %2128 = vmatprep.subr.bf16.mxu0 0
        %2129 = vmatpush1.bf16.msra.mxu0 %v1814
        %2130 = vmatprep.subr.bf16.mxu0 0
        %2131 = vmatpush1.bf16.msra.mxu0 %v1813
        %2132 = vmatprep.subr.bf16.mxu0 0
        %2133 = vmatpush1.bf16.msra.mxu0 %v1812
        %2134 = vmatprep.subr.bf16.mxu0 0
        %2135 = vmatpush2.bf16.msra.mxu0 %v1827
        %2136 = vmatprep.subr.bf16.mxu0 0
        %2137 = vmatpush2.bf16.msra.mxu0 %v1826
        %2138 = vmatprep.subr.bf16.mxu0 0
        %2139 = vmatpush2.bf16.msra.mxu0 %v1825
        %2140 = vmatprep.subr.bf16.mxu0 0
        %2141 = vmatpush2.bf16.msra.mxu0 %v1824
        %2142 = vmatprep.subr.bf16.mxu0 0
        %2143 = vmatpush2.bf16.msra.mxu0 %v1823
        %2144 = vmatprep.subr.bf16.mxu0 0
        %2145 = vmatpush2.bf16.msra.mxu0 %v1822
        %2146 = vmatprep.subr.bf16.mxu0 0
        %2147 = vmatpush2.bf16.msra.mxu0 %v1821
        %2148 = vmatprep.subr.bf16.mxu0 0
        %2149 = vmatpush2.bf16.msra.mxu0 %v1820
        %2150 = vmatprep.mubr.bf16.mxu0 %v1353
        %2151 = vmatmul.mubr.bf16.gmra.mxu0 %v1352
        %v2152 = vpop.f32.mrf.mxu0
        %v2153 = vadd.f32 %v2056, %v2152
        %v2154 = vpop.f32.mrf.mxu0
        %v2155 = vpop.f32.mrf.mxu0
        %v2156 = vadd.f32 %v2059, %v2155
        %v2157 = vpop.f32.mrf.mxu0
        %2158 = vmatprep.mubr.bf16.mxu0 %v1362
        %2159 = vmatmul.mubr.bf16.gmra.mxu0 %v1361
        %v2160 = vpop.f32.mrf.mxu0
        %v2161 = vadd.f32 %v2064, %v2160
        %v2162 = vpop.f32.mrf.mxu0
        %v2163 = vpop.f32.mrf.mxu0
        %v2164 = vadd.f32 %v2067, %v2163
        %v2165 = vpop.f32.mrf.mxu0
        %2166 = vmatprep.mubr.bf16.mxu0 %v1371
        %2167 = vmatmul.mubr.bf16.gmra.mxu0 %v1370
        %v2168 = vpop.f32.mrf.mxu0
        %v2169 = vadd.f32 %v2072, %v2168
        %v2170 = vpop.f32.mrf.mxu0
        %v2171 = vpop.f32.mrf.mxu0
        %v2172 = vadd.f32 %v2075, %v2171
        %v2173 = vpop.f32.mrf.mxu0
        %2174 = vmatprep.mubr.bf16.mxu0 %v1380
        %2175 = vmatmul.mubr.bf16.gmra.mxu0 %v1379
        %v2176 = vpop.f32.mrf.mxu0
        %v2177 = vadd.f32 %v2080, %v2176
        %v2178 = vpop.f32.mrf.mxu0
        %v2179 = vpop.f32.mrf.mxu0
        %v2180 = vadd.f32 %v2083, %v2179
        %v2181 = vpop.f32.mrf.mxu0
        %2182 = vmatprep.mubr.bf16.mxu0 %v1389
        %2183 = vmatmul.mubr.bf16.gmra.mxu0 %v1388
        %v2184 = vpop.f32.mrf.mxu0
        %v2185 = vadd.f32 %v2088, %v2184
        %v2186 = vpop.f32.mrf.mxu0
        %v2187 = vpop.f32.mrf.mxu0
        %v2188 = vadd.f32 %v2091, %v2187
        %v2189 = vpop.f32.mrf.mxu0
        %2190 = vmatprep.mubr.bf16.mxu0 %v1398
        %2191 = vmatmul.mubr.bf16.gmra.mxu0 %v1397
        %v2192 = vpop.f32.mrf.mxu0
        %v2193 = vadd.f32 %v2096, %v2192
        %v2194 = vpop.f32.mrf.mxu0
        %v2195 = vpop.f32.mrf.mxu0
        %v2196 = vadd.f32 %v2099, %v2195
        %v2197 = vpop.f32.mrf.mxu0
        %2198 = vmatprep.mubr.bf16.mxu0 %v1407
        %2199 = vmatmul.mubr.bf16.gmra.mxu0 %v1406
        %v2200 = vpop.f32.mrf.mxu0
        %v2201 = vadd.f32 %v2104, %v2200
        %v2202 = vpop.f32.mrf.mxu0
        %v2203 = vpop.f32.mrf.mxu0
        %v2204 = vadd.f32 %v2107, %v2203
        %v2205 = vpop.f32.mrf.mxu0
        %2206 = vmatprep.mubr.bf16.mxu0 %v1416
        %2207 = vmatmul.mubr.bf16.gmra.mxu0 %v1415
        %v2208 = vpop.f32.mrf.mxu0
        %v2209 = vadd.f32 %v2112, %v2208
        %v2210 = vpop.f32.mrf.mxu0
        %v2211 = vpop.f32.mrf.mxu0
        %v2212 = vadd.f32 %v2115, %v2211
        %v2213 = vpop.f32.mrf.mxu0
        %2214 = vdwg.mxu0
        %2215 = vmatprep.subr.bf16.mxu0 0
        %2216 = vmatpush1.bf16.msra.mxu0 %v1835
        %2217 = vmatprep.subr.bf16.mxu0 0
        %2218 = vmatpush1.bf16.msra.mxu0 %v1834
        %2219 = vmatprep.subr.bf16.mxu0 0
        %2220 = vmatpush1.bf16.msra.mxu0 %v1833
        %2221 = vmatprep.subr.bf16.mxu0 0
        %2222 = vmatpush1.bf16.msra.mxu0 %v1832
        %2223 = vmatprep.subr.bf16.mxu0 0
        %2224 = vmatpush1.bf16.msra.mxu0 %v1831
        %2225 = vmatprep.subr.bf16.mxu0 0
        %2226 = vmatpush1.bf16.msra.mxu0 %v1830
        %2227 = vmatprep.subr.bf16.mxu0 0
        %2228 = vmatpush1.bf16.msra.mxu0 %v1829
        %2229 = vmatprep.subr.bf16.mxu0 0
        %2230 = vmatpush1.bf16.msra.mxu0 %v1828
        %2231 = vmatprep.subr.bf16.mxu0 0
        %2232 = vmatpush2.bf16.msra.mxu0 %v1843
        %2233 = vmatprep.subr.bf16.mxu0 0
        %2234 = vmatpush2.bf16.msra.mxu0 %v1842
        %2235 = vmatprep.subr.bf16.mxu0 0
        %2236 = vmatpush2.bf16.msra.mxu0 %v1841
        %2237 = vmatprep.subr.bf16.mxu0 0
        %2238 = vmatpush2.bf16.msra.mxu0 %v1840
        %2239 = vmatprep.subr.bf16.mxu0 0
        %2240 = vmatpush2.bf16.msra.mxu0 %v1839
        %2241 = vmatprep.subr.bf16.mxu0 0
        %2242 = vmatpush2.bf16.msra.mxu0 %v1838
        %2243 = vmatprep.subr.bf16.mxu0 0
        %2244 = vmatpush2.bf16.msra.mxu0 %v1837
        %2245 = vmatprep.subr.bf16.mxu0 0
        %2246 = vmatpush2.bf16.msra.mxu0 %v1836
        %2247 = vmatprep.mubr.bf16.mxu0 %v1355
        %2248 = vmatmul.mubr.bf16.gmra.mxu0 %v1354
        %v2249 = vpop.f32.mrf.mxu0
        %v2250 = vadd.f32 %v2153, %v2249
        %v2251 = vpop.f32.mrf.mxu0
        %v2252 = vpop.f32.mrf.mxu0
        %v2253 = vadd.f32 %v2156, %v2252
        %v2254 = vpop.f32.mrf.mxu0
        %2255 = vmatprep.mubr.bf16.mxu0 %v1364
        %2256 = vmatmul.mubr.bf16.gmra.mxu0 %v1363
        %v2257 = vpop.f32.mrf.mxu0
        %v2258 = vadd.f32 %v2161, %v2257
        %v2259 = vpop.f32.mrf.mxu0
        %v2260 = vpop.f32.mrf.mxu0
        %v2261 = vadd.f32 %v2164, %v2260
        %v2262 = vpop.f32.mrf.mxu0
        %2263 = vmatprep.mubr.bf16.mxu0 %v1373
        %2264 = vmatmul.mubr.bf16.gmra.mxu0 %v1372
        %v2265 = vpop.f32.mrf.mxu0
        %v2266 = vadd.f32 %v2169, %v2265
        %v2267 = vpop.f32.mrf.mxu0
        %v2268 = vpop.f32.mrf.mxu0
        %v2269 = vadd.f32 %v2172, %v2268
        %v2270 = vpop.f32.mrf.mxu0
        %2271 = vmatprep.mubr.bf16.mxu0 %v1382
        %2272 = vmatmul.mubr.bf16.gmra.mxu0 %v1381
        %v2273 = vpop.f32.mrf.mxu0
        %v2274 = vadd.f32 %v2177, %v2273
        %v2275 = vpop.f32.mrf.mxu0
        %v2276 = vpop.f32.mrf.mxu0
        %v2277 = vadd.f32 %v2180, %v2276
        %v2278 = vpop.f32.mrf.mxu0
        %2279 = vmatprep.mubr.bf16.mxu0 %v1391
        %2280 = vmatmul.mubr.bf16.gmra.mxu0 %v1390
        %v2281 = vpop.f32.mrf.mxu0
        %v2282 = vadd.f32 %v2185, %v2281
        %v2283 = vpop.f32.mrf.mxu0
        %v2284 = vpop.f32.mrf.mxu0
        %v2285 = vadd.f32 %v2188, %v2284
        %v2286 = vpop.f32.mrf.mxu0
        %2287 = vmatprep.mubr.bf16.mxu0 %v1400
        %2288 = vmatmul.mubr.bf16.gmra.mxu0 %v1399
        %v2289 = vpop.f32.mrf.mxu0
        %v2290 = vadd.f32 %v2193, %v2289
        %v2291 = vpop.f32.mrf.mxu0
        %v2292 = vpop.f32.mrf.mxu0
        %v2293 = vadd.f32 %v2196, %v2292
        %v2294 = vpop.f32.mrf.mxu0
        %2295 = vmatprep.mubr.bf16.mxu0 %v1409
        %2296 = vmatmul.mubr.bf16.gmra.mxu0 %v1408
        %v2297 = vpop.f32.mrf.mxu0
        %v2298 = vadd.f32 %v2201, %v2297
        %v2299 = vpop.f32.mrf.mxu0
        %v2300 = vpop.f32.mrf.mxu0
        %v2301 = vadd.f32 %v2204, %v2300
        %v2302 = vpop.f32.mrf.mxu0
        %2303 = vmatprep.mubr.bf16.mxu0 %v1418
        %2304 = vmatmul.mubr.bf16.gmra.mxu0 %v1417
        %v2305 = vpop.f32.mrf.mxu0
        %v2306 = vadd.f32 %v2209, %v2305
        %v2307 = vpop.f32.mrf.mxu0
        %v2308 = vpop.f32.mrf.mxu0
        %v2309 = vadd.f32 %v2212, %v2308
        %v2310 = vpop.f32.mrf.mxu0
        %2311 = vdwg.mxu0
        %2312 = vmatprep.subr.bf16.mxu0 0
        %2313 = vmatpush1.bf16.msra.mxu0 %v1851
        %2314 = vmatprep.subr.bf16.mxu0 0
        %2315 = vmatpush1.bf16.msra.mxu0 %v1850
        %2316 = vmatprep.subr.bf16.mxu0 0
        %2317 = vmatpush1.bf16.msra.mxu0 %v1849
        %2318 = vmatprep.subr.bf16.mxu0 0
        %2319 = vmatpush1.bf16.msra.mxu0 %v1848
        %2320 = vmatprep.subr.bf16.mxu0 0
        %2321 = vmatpush1.bf16.msra.mxu0 %v1847
        %2322 = vmatprep.subr.bf16.mxu0 0
        %2323 = vmatpush1.bf16.msra.mxu0 %v1846
        %2324 = vmatprep.subr.bf16.mxu0 0
        %2325 = vmatpush1.bf16.msra.mxu0 %v1845
        %2326 = vmatprep.subr.bf16.mxu0 0
        %2327 = vmatpush1.bf16.msra.mxu0 %v1844
        %2328 = vmatprep.subr.bf16.mxu0 0
        %2329 = vmatpush2.bf16.msra.mxu0 0
        %2330 = vmatprep.subr.bf16.mxu0 0
        %2331 = vmatpush2.bf16.msra.mxu0 0
        %2332 = vmatprep.subr.bf16.mxu0 0
        %2333 = vmatpush2.bf16.msra.mxu0 0
        %2334 = vmatprep.subr.bf16.mxu0 0
        %2335 = vmatpush2.bf16.msra.mxu0 0
        %2336 = vmatprep.subr.bf16.mxu0 0
        %2337 = vmatpush2.bf16.msra.mxu0 0
        %2338 = vmatprep.subr.bf16.mxu0 0
        %2339 = vmatpush2.bf16.msra.mxu0 0
        %2340 = vmatprep.subr.bf16.mxu0 0
        %2341 = vmatpush2.bf16.msra.mxu0 0
        %2342 = vmatprep.subr.bf16.mxu0 0
        %2343 = vmatpush2.bf16.msra.mxu0 0
        %2344 = vmatprep.mubr.bf16.mxu0 0
        %2345 = vmatmul.mubr.bf16.gmra.mxu0 %v1356
        %v2346 = vpop.f32.mrf.mxu0
        %v2347 = vadd.f32 %v2250, %v2346
        %v2348 = vpop.f32.mrf.mxu0
        %v2349 = vpop.f32.mrf.mxu0
        %v2350 = vadd.f32 %v2253, %v2349
        %v2351 = vpop.f32.mrf.mxu0
        %2352 = vmatprep.mubr.bf16.mxu0 0
        %2353 = vmatmul.mubr.bf16.gmra.mxu0 %v1365
        %v2354 = vpop.f32.mrf.mxu0
        %v2355 = vadd.f32 %v2258, %v2354
        %v2356 = vpop.f32.mrf.mxu0
        %v2357 = vpop.f32.mrf.mxu0
        %v2358 = vadd.f32 %v2261, %v2357
        %v2359 = vpop.f32.mrf.mxu0
        %2360 = vmatprep.mubr.bf16.mxu0 0
        %2361 = vmatmul.mubr.bf16.gmra.mxu0 %v1374
        %v2362 = vpop.f32.mrf.mxu0
        %v2363 = vadd.f32 %v2266, %v2362
        %v2364 = vpop.f32.mrf.mxu0
        %v2365 = vpop.f32.mrf.mxu0
        %v2366 = vadd.f32 %v2269, %v2365
        %v2367 = vpop.f32.mrf.mxu0
        %2368 = vmatprep.mubr.bf16.mxu0 0
        %2369 = vmatmul.mubr.bf16.gmra.mxu0 %v1383
        %v2370 = vpop.f32.mrf.mxu0
        %v2371 = vadd.f32 %v2274, %v2370
        %v2372 = vpop.f32.mrf.mxu0
        %v2373 = vpop.f32.mrf.mxu0
        %v2374 = vadd.f32 %v2277, %v2373
        %v2375 = vpop.f32.mrf.mxu0
        %2376 = vmatprep.mubr.bf16.mxu0 0
        %2377 = vmatmul.mubr.bf16.gmra.mxu0 %v1392
        %v2378 = vpop.f32.mrf.mxu0
        %v2379 = vadd.f32 %v2282, %v2378
        %v2380 = vpop.f32.mrf.mxu0
        %v2381 = vpop.f32.mrf.mxu0
        %v2382 = vadd.f32 %v2285, %v2381
        %v2383 = vpop.f32.mrf.mxu0
        %2384 = vmatprep.mubr.bf16.mxu0 0
        %2385 = vmatmul.mubr.bf16.gmra.mxu0 %v1401
        %v2386 = vpop.f32.mrf.mxu0
        %v2387 = vadd.f32 %v2290, %v2386
        %v2388 = vpop.f32.mrf.mxu0
        %v2389 = vpop.f32.mrf.mxu0
        %v2390 = vadd.f32 %v2293, %v2389
        %v2391 = vpop.f32.mrf.mxu0
        %2392 = vmatprep.mubr.bf16.mxu0 0
        %2393 = vmatmul.mubr.bf16.gmra.mxu0 %v1410
        %v2394 = vpop.f32.mrf.mxu0
        %v2395 = vadd.f32 %v2298, %v2394
        %v2396 = vpop.f32.mrf.mxu0
        %v2397 = vpop.f32.mrf.mxu0
        %v2398 = vadd.f32 %v2301, %v2397
        %v2399 = vpop.f32.mrf.mxu0
        %2400 = vmatprep.mubr.bf16.mxu0 0
        %2401 = vmatmul.mubr.bf16.gmra.mxu0 %v1419
        %v2402 = vpop.f32.mrf.mxu0
        %v2403 = vadd.f32 %v2306, %v2402
        %v2404 = vpop.f32.mrf.mxu0
        %v2405 = vpop.f32.mrf.mxu0
        %v2406 = vadd.f32 %v2309, %v2405
        %v2407 = vpop.f32.mrf.mxu0
        %2408 = vdwg.mxu0
        %v2409 = vadd.f32 %v884, %v2347
        %v2410 = vadd.f32 %v885, %v2350
        %v2411 = vadd.f32 %v886, %v2355
        %v2412 = vadd.f32 %v887, %v2358
        %v2413 = vadd.f32 %v888, %v2363
        %v2414 = vadd.f32 %v889, %v2366
        %v2415 = vadd.f32 %v890, %v2371
        %v2416 = vadd.f32 %v891, %v2374
        %v2417 = vadd.f32 %v892, %v2379
        %v2418 = vadd.f32 %v893, %v2382
        %v2419 = vadd.f32 %v894, %v2387
        %v2420 = vadd.f32 %v895, %v2390
        %v2421 = vadd.f32 %v896, %v2395
        %v2422 = vadd.f32 %v897, %v2398
        %v2423 = vadd.f32 %v898, %v2403
        %v2424 = vadd.f32 %v899, %v2406
        %2425 = vst [vmem:[#allocation2] sm:$0xff] %v2409
        %2426 = vst [vmem:[#allocation2 + $0x8] sm:$0xff] %v2410
        %2427 = vst [vmem:[#allocation2 + $0x10] sm:$0xff] %v2411
        %2428 = vst [vmem:[#allocation2 + $0x18] sm:$0xff] %v2412
        %2429 = vst [vmem:[#allocation2 + $0x20] sm:$0xff] %v2413
        %2430 = vst [vmem:[#allocation2 + $0x28] sm:$0xff] %v2414
        %2431 = vst [vmem:[#allocation2 + $0x30] sm:$0xff] %v2415
        %2432 = vst [vmem:[#allocation2 + $0x38] sm:$0xff] %v2416
        %2433 = vst [vmem:[#allocation2 + $0x40] sm:$0xff] %v2417
        %2434 = vst [vmem:[#allocation2 + $0x48] sm:$0xff] %v2418
        %2435 = vst [vmem:[#allocation2 + $0x50] sm:$0xff] %v2419
        %2436 = vst [vmem:[#allocation2 + $0x58] sm:$0xff] %v2420
        %2437 = vst [vmem:[#allocation2 + $0x60] sm:$0xff] %v2421
        %2438 = vst [vmem:[#allocation2 + $0x68] sm:$0xff] %v2422
        %2439 = vst [vmem:[#allocation2 + $0x70] sm:$0xff] %v2423
        %2440 = vst [vmem:[#allocation2 + $0x78] sm:$0xff] %v2424
        // Predicated region
        $region78: #{descriptor_cifar_forward.6} parent=68 // pred_check
          %p2441 = pneg %p864
        $region79: #{descriptor_cifar_forward.6} parent=68 // pred_check_branch
          %2443 = sbr.rel (%p2441) target = $region81
        $region80: #{descriptor_cifar_forward.6} parent=68 // pred_region
          %v2444 = vld [vmem:[#allocation2] sm:$0xff]
          %v2445 = vld [vmem:[#allocation2 + $0x8] sm:$0xff]
          %v2446 = vld [vmem:[#allocation2 + $0x10] sm:$0xff]
          %v2447 = vld [vmem:[#allocation2 + $0x18] sm:$0xff]
          %v2448 = vld [vmem:[#allocation2 + $0x20] sm:$0xff]
          %v2449 = vld [vmem:[#allocation2 + $0x28] sm:$0xff]
          %v2450 = vld [vmem:[#allocation2 + $0x30] sm:$0xff]
          %v2451 = vld [vmem:[#allocation2 + $0x38] sm:$0xff]
          %v2452 = vld [vmem:[#allocation2 + $0x40] sm:$0xff]
          %v2453 = vld [vmem:[#allocation2 + $0x48] sm:$0xff]
          %v2454 = vld [vmem:[#allocation2 + $0x50] sm:$0xff]
          %v2455 = vld [vmem:[#allocation2 + $0x58] sm:$0xff]
          %v2456 = vld [vmem:[#allocation2 + $0x60] sm:$0xff]
          %v2457 = vld [vmem:[#allocation2 + $0x68] sm:$0xff]
          %v2458 = vld [vmem:[#allocation2 + $0x70] sm:$0xff]
          %v2459 = vld [vmem:[#allocation2 + $0x78] sm:$0xff]
          %v2460 = vld [vmem:[%s861] sm:$0x1]
          %v2462 = vlaneseq
          %v2463 = vshrl.u32 %v2462, 7
          %v2464 = vsub.s32 0, %v2463
          %v2465 = vrot.slane %v2460, %v2464
          %v2467 = vadd.f32 %v2444, %v2465
          %v2468 = vadd.f32 %v2445, %v2465
          %v2469 = vadd.f32 %v2446, %v2465
          %v2470 = vadd.f32 %v2447, %v2465
          %v2471 = vadd.f32 %v2448, %v2465
          %v2472 = vadd.f32 %v2449, %v2465
          %v2473 = vadd.f32 %v2450, %v2465
          %v2474 = vadd.f32 %v2451, %v2465
          %v2475 = vadd.f32 %v2452, %v2465
          %v2476 = vadd.f32 %v2453, %v2465
          %v2477 = vadd.f32 %v2454, %v2465
          %v2478 = vadd.f32 %v2455, %v2465
          %v2479 = vadd.f32 %v2456, %v2465
          %v2480 = vadd.f32 %v2457, %v2465
          %v2481 = vadd.f32 %v2458, %v2465
          %v2482 = vadd.f32 %v2459, %v2465
          %vm2483 = vcmp.ge.f32.partialorder %v2467, 0.0
          %vm2484 = vcmp.ge.f32.partialorder %v2468, 0.0
          %vm2485 = vcmp.ge.f32.partialorder %v2469, 0.0
          %vm2486 = vcmp.ge.f32.partialorder %v2470, 0.0
          %vm2487 = vcmp.ge.f32.partialorder %v2471, 0.0
          %vm2488 = vcmp.ge.f32.partialorder %v2472, 0.0
          %vm2489 = vcmp.ge.f32.partialorder %v2473, 0.0
          %vm2490 = vcmp.ge.f32.partialorder %v2474, 0.0
          %vm2491 = vcmp.ge.f32.partialorder %v2475, 0.0
          %vm2492 = vcmp.ge.f32.partialorder %v2476, 0.0
          %vm2493 = vcmp.ge.f32.partialorder %v2477, 0.0
          %vm2494 = vcmp.ge.f32.partialorder %v2478, 0.0
          %vm2495 = vcmp.ge.f32.partialorder %v2479, 0.0
          %vm2496 = vcmp.ge.f32.partialorder %v2480, 0.0
          %vm2497 = vcmp.ge.f32.partialorder %v2481, 0.0
          %vm2498 = vcmp.ge.f32.partialorder %v2482, 0.0
          %v2499 = vmul.f32 %v2467, 0.01
          %v2500 = vmul.f32 %v2468, 0.01
          %v2501 = vmul.f32 %v2469, 0.01
          %v2502 = vmul.f32 %v2470, 0.01
          %v2503 = vmul.f32 %v2471, 0.01
          %v2504 = vmul.f32 %v2472, 0.01
          %v2505 = vmul.f32 %v2473, 0.01
          %v2506 = vmul.f32 %v2474, 0.01
          %v2507 = vmul.f32 %v2475, 0.01
          %v2508 = vmul.f32 %v2476, 0.01
          %v2509 = vmul.f32 %v2477, 0.01
          %v2510 = vmul.f32 %v2478, 0.01
          %v2511 = vmul.f32 %v2479, 0.01
          %v2512 = vmul.f32 %v2480, 0.01
          %v2513 = vmul.f32 %v2481, 0.01
          %v2514 = vmul.f32 %v2482, 0.01
          %v2515 = vsel %vm2483, %v2467, %v2499
          %v2516 = vsel %vm2484, %v2468, %v2500
          %v2517 = vsel %vm2485, %v2469, %v2501
          %v2518 = vsel %vm2486, %v2470, %v2502
          %v2519 = vsel %vm2487, %v2471, %v2503
          %v2520 = vsel %vm2488, %v2472, %v2504
          %v2521 = vsel %vm2489, %v2473, %v2505
          %v2522 = vsel %vm2490, %v2474, %v2506
          %v2523 = vsel %vm2491, %v2475, %v2507
          %v2524 = vsel %vm2492, %v2476, %v2508
          %v2525 = vsel %vm2493, %v2477, %v2509
          %v2526 = vsel %vm2494, %v2478, %v2510
          %v2527 = vsel %vm2495, %v2479, %v2511
          %v2528 = vsel %vm2496, %v2480, %v2512
          %v2529 = vsel %vm2497, %v2481, %v2513
          %v2530 = vsel %vm2498, %v2482, %v2514
          %v2531 = vpack.c.bf16 %v2516, %v2515
          %v2532 = vpack.c.bf16 %v2518, %v2517
          %v2533 = vpack.c.bf16 %v2520, %v2519
          %v2534 = vpack.c.bf16 %v2522, %v2521
          %v2535 = vpack.c.bf16 %v2524, %v2523
          %v2536 = vpack.c.bf16 %v2526, %v2525
          %v2537 = vpack.c.bf16 %v2528, %v2527
          %v2538 = vpack.c.bf16 %v2530, %v2529
          %v2547 = vunpack.c.l.b16 %v2531
          %v2548 = vunpack.c.h.b16 %v2531
          %v2549 = vunpack.c.l.b16 %v2532
          %v2550 = vunpack.c.h.b16 %v2532
          %v2551 = vunpack.c.l.b16 %v2533
          %v2552 = vunpack.c.h.b16 %v2533
          %v2553 = vunpack.c.l.b16 %v2534
          %v2554 = vunpack.c.h.b16 %v2534
          %v2555 = vunpack.c.l.b16 %v2535
          %v2556 = vunpack.c.h.b16 %v2535
          %v2557 = vunpack.c.l.b16 %v2536
          %v2558 = vunpack.c.h.b16 %v2536
          %v2559 = vunpack.c.l.b16 %v2537
          %v2560 = vunpack.c.h.b16 %v2537
          %v2561 = vunpack.c.l.b16 %v2538
          %v2562 = vunpack.c.h.b16 %v2538
          %v2563 = vpack.c.b16 %v2547, %v2547
          %v2564 = vpack.c.b16 %v2548, %v2548
          %v2565 = vpack.c.b16 %v2549, %v2549
          %v2566 = vpack.c.b16 %v2550, %v2550
          %v2567 = vpack.c.b16 %v2551, %v2551
          %v2568 = vpack.c.b16 %v2552, %v2552
          %v2569 = vpack.c.b16 %v2553, %v2553
          %v2570 = vpack.c.b16 %v2554, %v2554
          %v2571 = vpack.c.b16 %v2555, %v2555
          %v2572 = vpack.c.b16 %v2556, %v2556
          %v2573 = vpack.c.b16 %v2557, %v2557
          %v2574 = vpack.c.b16 %v2558, %v2558
          %v2575 = vpack.c.b16 %v2559, %v2559
          %v2576 = vpack.c.b16 %v2560, %v2560
          %v2577 = vpack.c.b16 %v2561, %v2561
          %v2578 = vpack.c.b16 %v2562, %v2562
          %2595 = vst [vmem:[%s845] sm:$0xf] %v2563
          %2596 = vst [vmem:[%s845 + $0x4] sm:$0xf] %v2564
          %2597 = vst [vmem:[%s845 + $0x8] sm:$0xf] %v2565
          %2598 = vst [vmem:[%s845 + $0xc] sm:$0xf] %v2566
          %2599 = vst [vmem:[%s845 + $0x10] sm:$0xf] %v2567
          %2600 = vst [vmem:[%s845 + $0x14] sm:$0xf] %v2568
          %2601 = vst [vmem:[%s845 + $0x18] sm:$0xf] %v2569
          %2602 = vst [vmem:[%s845 + $0x1c] sm:$0xf] %v2570
          %2603 = vst [vmem:[%s845 + $0x20] sm:$0xf] %v2571
          %2604 = vst [vmem:[%s845 + $0x24] sm:$0xf] %v2572
          %2605 = vst [vmem:[%s845 + $0x28] sm:$0xf] %v2573
          %2606 = vst [vmem:[%s845 + $0x2c] sm:$0xf] %v2574
          %2607 = vst [vmem:[%s845 + $0x30] sm:$0xf] %v2575
          %2608 = vst [vmem:[%s845 + $0x34] sm:$0xf] %v2576
          %2609 = vst [vmem:[%s845 + $0x38] sm:$0xf] %v2577
          %2610 = vst [vmem:[%s845 + $0x3c] sm:$0xf] %v2578
        $region81: #{descriptor_cifar_forward.6} parent=68 // pred_fallthru
          _
        %s2611 = sand.u32 %s125, 1
        %s2612 = sand.u32 %s125, 1
        %s2613 = smul.addr %s2612, 64
        %s2614 = scalar_lea.vmem [#allocation4], %s2613
        // Predicated region
        $region82: #{descriptor_cifar_forward.6} parent=68 // pred_check
          %p2615 = pneg %p135
        $region83: #{descriptor_cifar_forward.6} parent=68 // pred_check_branch
          %2617 = sbr.rel (%p2615) target = $region85
        $region84: #{descriptor_cifar_forward.6} parent=68 // pred_region
          %s2618 = smul.u32 16, %s19
          %s2619 = smul.addr %s2618, 2
          %s2620 = sadd.s32 %s20, %s2619
          %s2621 = smul.addr %s2620, 4
          %s2622 = scalar_lea.vmem %s3, %s2621
          // Predicated region
          $region86: #{descriptor_cifar_forward.6} parent=84 // pred_check
            _
          $region87: #{descriptor_cifar_forward.6} parent=84 // pred_check_branch
            %2624 = sbr.rel (0) target = $region89
          $region88: #{descriptor_cifar_forward.6} parent=84 // pred_region
            // Predicated region
            $region90: #{descriptor_cifar_forward.6} parent=88 // pred_check
              _
            $region91: #{descriptor_cifar_forward.6} parent=88 // pred_check_branch
              %2626 = sbr.rel target = $region93
            $region92: #{descriptor_cifar_forward.6} parent=88 // pred_region
              // Predicated region
              $region105: #{descriptor_cifar_forward.6} parent=92 // pred_check
                _
              $region106: #{descriptor_cifar_forward.6} parent=92 // pred_check_branch
                %2672 = sbr.rel (0) target = $region108
              $region107: #{descriptor_cifar_forward.6} parent=92 // pred_region
                loop: start=0, step=1, limit=1
                $region109: #{descriptor_cifar_forward.6} parent=107 // loop_pre_header
                  _
                $region110: #{descriptor_cifar_forward.6} parent=107 // loop_header
                  %s2674 = sphi 0, %s2678
                  %p2675 = scmp.ge.s32.totalorder %s2674, 1
                  %s2679 = sphi %s2614, %s2614
                  %s2680 = sphi %s2622, %s2622
                $region111: #{descriptor_cifar_forward.6} parent=107 // loop_header_branch
                  %2677 = sbr.rel (%p2675) target = $region115
                $region112: #{descriptor_cifar_forward.6} parent=107 // loop_body
                  _
                $region113: #{descriptor_cifar_forward.6} parent=107 // loop_footer
                  %s2678 = sadd.s32 1, %s2674
                $region114: #{descriptor_cifar_forward.6} parent=107 // loop_footer_branch
                  %2673 = sbr.rel target = $region110
                $region115: #{descriptor_cifar_forward.6} parent=107 // loop_exit
                  _
                %s2682 = ssub.s32 16, 1
                loop: start=0, step=1, limit=1
                $region116: #{descriptor_cifar_forward.6} parent=107 // loop_pre_header
                  _
                $region117: #{descriptor_cifar_forward.6} parent=107 // loop_header
                  %s2684 = sphi 0, %s2688
                  %p2685 = scmp.ge.s32.totalorder %s2684, 1
                  %s2689 = sphi %s2614, %s2614
                  %s2690 = sphi %s2622, %s2622
                $region118: #{descriptor_cifar_forward.6} parent=107 // loop_header_branch
                  %2687 = sbr.rel (%p2685) target = $region122
                $region119: #{descriptor_cifar_forward.6} parent=107 // loop_body
                  %v2691 = vld [vmem:[%s2689] sm:%s2682]
                  %2692 = vst [vmem:[%s2690] sm:%s2682] %v2691
                  %v2693 = vld [vmem:[%s2689 + $0x4] sm:%s2682]
                  %2694 = vst [vmem:[%s2690 + $0x8] sm:%s2682] %v2693
                  %v2695 = vld [vmem:[%s2689 + $0x8] sm:%s2682]
                  %2696 = vst [vmem:[%s2690 + $0x10] sm:%s2682] %v2695
                  %v2697 = vld [vmem:[%s2689 + $0xc] sm:%s2682]
                  %2698 = vst [vmem:[%s2690 + $0x18] sm:%s2682] %v2697
                  %v2699 = vld [vmem:[%s2689 + $0x10] sm:%s2682]
                  %2700 = vst [vmem:[%s2690 + $0x20] sm:%s2682] %v2699
                  %v2701 = vld [vmem:[%s2689 + $0x14] sm:%s2682]
                  %2702 = vst [vmem:[%s2690 + $0x28] sm:%s2682] %v2701
                  %v2703 = vld [vmem:[%s2689 + $0x18] sm:%s2682]
                  %2704 = vst [vmem:[%s2690 + $0x30] sm:%s2682] %v2703
                  %v2705 = vld [vmem:[%s2689 + $0x1c] sm:%s2682]
                  %2706 = vst [vmem:[%s2690 + $0x38] sm:%s2682] %v2705
                  %v2707 = vld [vmem:[%s2689 + $0x20] sm:%s2682]
                  %2708 = vst [vmem:[%s2690 + $0x40] sm:%s2682] %v2707
                  %v2709 = vld [vmem:[%s2689 + $0x24] sm:%s2682]
                  %2710 = vst [vmem:[%s2690 + $0x48] sm:%s2682] %v2709
                  %v2711 = vld [vmem:[%s2689 + $0x28] sm:%s2682]
                  %2712 = vst [vmem:[%s2690 + $0x50] sm:%s2682] %v2711
                  %v2713 = vld [vmem:[%s2689 + $0x2c] sm:%s2682]
                  %2714 = vst [vmem:[%s2690 + $0x58] sm:%s2682] %v2713
                  %v2715 = vld [vmem:[%s2689 + $0x30] sm:%s2682]
                  %2716 = vst [vmem:[%s2690 + $0x60] sm:%s2682] %v2715
                  %v2717 = vld [vmem:[%s2689 + $0x34] sm:%s2682]
                  %2718 = vst [vmem:[%s2690 + $0x68] sm:%s2682] %v2717
                  %v2719 = vld [vmem:[%s2689 + $0x38] sm:%s2682]
                  %2720 = vst [vmem:[%s2690 + $0x70] sm:%s2682] %v2719
                  %v2721 = vld [vmem:[%s2689 + $0x3c] sm:%s2682]
                  %2722 = vst [vmem:[%s2690 + $0x78] sm:%s2682] %v2721
                $region120: #{descriptor_cifar_forward.6} parent=107 // loop_footer
                  %s2688 = sadd.s32 1, %s2684
                $region121: #{descriptor_cifar_forward.6} parent=107 // loop_footer_branch
                  %2683 = sbr.rel target = $region117
                $region122: #{descriptor_cifar_forward.6} parent=107 // loop_exit
                  _
              $region108: #{descriptor_cifar_forward.6} parent=92 // pred_fallthru
                _
            $region93: #{descriptor_cifar_forward.6} parent=88 // pred_fallthru
              _
            // Predicated region
            $region94: #{descriptor_cifar_forward.6} parent=88 // pred_check
              _
            $region95: #{descriptor_cifar_forward.6} parent=88 // pred_check_branch
              %2628 = sbr.rel (0) target = $region97
            $region96: #{descriptor_cifar_forward.6} parent=88 // pred_region
              %s2630 = ssub.s32 16, 1
              loop: start=0, step=1, limit=1
              $region98: #{descriptor_cifar_forward.6} parent=96 // loop_pre_header
                _
              $region99: #{descriptor_cifar_forward.6} parent=96 // loop_header
                %s2632 = sphi 0, %s2636
                %p2633 = scmp.ge.s32.totalorder %s2632, 1
                %s2637 = sphi %s2614, %s2614
                %s2638 = sphi %s2622, %s2622
              $region100: #{descriptor_cifar_forward.6} parent=96 // loop_header_branch
                %2635 = sbr.rel (%p2633) target = $region104
              $region101: #{descriptor_cifar_forward.6} parent=96 // loop_body
                %v2639 = vld [vmem:[%s2637] sm:%s2630]
                %2640 = vst [vmem:[%s2638] sm:%s2630] %v2639
                %v2641 = vld [vmem:[%s2637 + $0x4] sm:%s2630]
                %2642 = vst [vmem:[%s2638 + $0x8] sm:%s2630] %v2641
                %v2643 = vld [vmem:[%s2637 + $0x8] sm:%s2630]
                %2644 = vst [vmem:[%s2638 + $0x10] sm:%s2630] %v2643
                %v2645 = vld [vmem:[%s2637 + $0xc] sm:%s2630]
                %2646 = vst [vmem:[%s2638 + $0x18] sm:%s2630] %v2645
                %v2647 = vld [vmem:[%s2637 + $0x10] sm:%s2630]
                %2648 = vst [vmem:[%s2638 + $0x20] sm:%s2630] %v2647
                %v2649 = vld [vmem:[%s2637 + $0x14] sm:%s2630]
                %2650 = vst [vmem:[%s2638 + $0x28] sm:%s2630] %v2649
                %v2651 = vld [vmem:[%s2637 + $0x18] sm:%s2630]
                %2652 = vst [vmem:[%s2638 + $0x30] sm:%s2630] %v2651
                %v2653 = vld [vmem:[%s2637 + $0x1c] sm:%s2630]
                %2654 = vst [vmem:[%s2638 + $0x38] sm:%s2630] %v2653
                %v2655 = vld [vmem:[%s2637 + $0x20] sm:%s2630]
                %2656 = vst [vmem:[%s2638 + $0x40] sm:%s2630] %v2655
                %v2657 = vld [vmem:[%s2637 + $0x24] sm:%s2630]
                %2658 = vst [vmem:[%s2638 + $0x48] sm:%s2630] %v2657
                %v2659 = vld [vmem:[%s2637 + $0x28] sm:%s2630]
                %2660 = vst [vmem:[%s2638 + $0x50] sm:%s2630] %v2659
                %v2661 = vld [vmem:[%s2637 + $0x2c] sm:%s2630]
                %2662 = vst [vmem:[%s2638 + $0x58] sm:%s2630] %v2661
                %v2663 = vld [vmem:[%s2637 + $0x30] sm:%s2630]
                %2664 = vst [vmem:[%s2638 + $0x60] sm:%s2630] %v2663
                %v2665 = vld [vmem:[%s2637 + $0x34] sm:%s2630]
                %2666 = vst [vmem:[%s2638 + $0x68] sm:%s2630] %v2665
                %v2667 = vld [vmem:[%s2637 + $0x38] sm:%s2630]
                %2668 = vst [vmem:[%s2638 + $0x70] sm:%s2630] %v2667
                %v2669 = vld [vmem:[%s2637 + $0x3c] sm:%s2630]
                %2670 = vst [vmem:[%s2638 + $0x78] sm:%s2630] %v2669
              $region102: #{descriptor_cifar_forward.6} parent=96 // loop_footer
                %s2636 = sadd.s32 1, %s2632
              $region103: #{descriptor_cifar_forward.6} parent=96 // loop_footer_branch
                %2631 = sbr.rel target = $region99
              $region104: #{descriptor_cifar_forward.6} parent=96 // loop_exit
                _
            $region97: #{descriptor_cifar_forward.6} parent=88 // pred_fallthru
              _
          $region89: #{descriptor_cifar_forward.6} parent=84 // pred_fallthru
            _
          %2723 = vnop
        $region85: #{descriptor_cifar_forward.6} parent=68 // pred_fallthru
          _
      $region69: #{descriptor_cifar_forward.6} parent=5 // pred_fallthru
        _
      %p2724 = scmp.le.s32.totalorder 2, %s9
      // Predicated region
      $region123: #{descriptor_cifar_forward.6} parent=5 // pred_check
        %p2725 = pneg %p2724
      $region124: #{descriptor_cifar_forward.6} parent=5 // pred_check_branch
        %2727 = sbr.rel (%p2725) target = $region126
      $region125: #{descriptor_cifar_forward.6} parent=5 // pred_region
        %s2728 = ssub.s32 %s9, 2
        // Predicated region
        $region127: #{descriptor_cifar_forward.6} parent=125 // pred_check
          %p2729 = pneg %p141
        $region128: #{descriptor_cifar_forward.6} parent=125 // pred_check_branch
          %2731 = sbr.rel (%p2729) target = $region130
        $region129: #{descriptor_cifar_forward.6} parent=125 // pred_region
          %s2732 = sand.u32 %s126, 1
          %s2733 = sand.u32 %s126, 1
          %s2734 = smul.addr %s2733, 64
          %s2735 = scalar_lea.vmem [#allocation4], %s2734
        $region130: #{descriptor_cifar_forward.6} parent=125 // pred_fallthru
          _
      $region126: #{descriptor_cifar_forward.6} parent=5 // pred_fallthru
        _
    $region6: #{descriptor_cifar_forward.6} parent=1 // loop_footer
      %s13 = sadd.s32 1, %s9
    $region7: #{descriptor_cifar_forward.6} parent=1 // loop_footer_branch
      %8 = sbr.rel target = $region3
    $region8: #{descriptor_cifar_forward.6} parent=1 // loop_exit
      _

// kernel: descriptor_cifar_forward.7
$region0: #{descriptor_cifar_forward.7}
  #allocation0 [shape = 'u32[]', space=smem, size = 0x4, offset = 0x4, fixed_abs, tag = 'smem constant byte address 0x4 - core index']
  #allocation1 [shape = 'u32[144,128]{1,0:T(1,128)}', space=vmem, size = 0x12000, scoped, tag = 'internal scratch']
  #allocation2 [shape = 'f32[8,32]{1,0:T(8,128)}', space=vmem, size = 0x1000, scoped, tag = 'scratch operand']
  %s0 = inlined_call_operand.vmem [shape: bf16[8,16384], index: 0, kind: input, shape index: {}]
  %s1 = inlined_call_operand.vmem [shape: bf16[16384,32], index: 1, kind: input, shape index: {}]
  %s2 = inlined_call_operand.vmem [shape: f32[1,32], index: 2, kind: input, shape index: {}]
  %s3 = inlined_call_operand.vmem [shape: f32[8,32], index: 3, kind: output, shape index: {}]
  %s4 = sld [smem:[#allocation0]]
  $region53: #{descriptor_cifar_forward.7} parent=0
    _
  %s6 = ssub.s32 1, %s4
  %s7 = scalar_select 0, %s6, %s4
  loop: start=0, step=1, limit=6
  $region2: #{descriptor_cifar_forward.7} parent=0 // loop_pre_header
    _
  $region3: #{descriptor_cifar_forward.7} parent=0 // loop_header
    %s9 = sphi 0, %s13
    %p10 = scmp.ge.s32.totalorder %s9, 6
    %s16 = sphi 0, %s35
    %s17 = sphi 0, %s31
    %s18 = sphi 0, %s27
    %s19 = sphi 0, %s16
    %s20 = sphi 0, %s17
    %s21 = sphi 0, %s18
    %s22 = sphi 0, %s19
    %s23 = sphi 0, %s20
    %s24 = sphi 0, %s21
    %s40 = sphi 0, %s42
    %s43 = sphi 0, %s40
    %s44 = sphi 0, %s43
    %s60 = sphi 0, %s44
    %s68 = sphi 0, %s70
    %s71 = sphi 0, %s68
    %s72 = sphi 0, %s71
    %s88 = sphi 0, %s72
    %s94 = sphi 0, %s96
    %s97 = sphi 0, %s94
    %s98 = sphi 0, %s97
    %s114 = sphi 0, %s98
    %s122 = sphi 0, %s124
    %s125 = sphi 0, %s122
    %s126 = sphi 0, %s125
    %s142 = sphi 0, %s126
  $region4: #{descriptor_cifar_forward.7} parent=0 // loop_header_branch
    %12 = sbr.rel (%p10) target = $region8
  $region5: #{descriptor_cifar_forward.7} parent=0 // loop_body
    %s14 = ssub.s32 %s9, 1
    %s15 = ssub.s32 %s9, 2
    %s25 = sadd.s32 1, %s18
    %p26 = scmp.ge.s32.totalorder %s25, 4
    %s27 = scalar_select %p26, 0, %s25
    %s28 = sadd.s32 1, %s17
    %s29 = scalar_select %p26, %s28, %s17
    %p30 = scmp.ge.s32.totalorder %s29, 1
    %s31 = scalar_select %p30, 0, %s29
    %s32 = sadd.s32 1, %s16
    %s33 = scalar_select %p30, %s32, %s16
    %p34 = scmp.ge.s32.totalorder %s33, 1
    %s35 = scalar_select %p34, 0, %s33
    %s36 = ssub.s32 %s16, %s35
    %s37 = ssub.s32 %s18, %s27
    %s38 = sor.u32 %s36, %s37
    %p39 = scmp.eq.s32.totalorder %s38, 0
    %s41 = sadd.s32 %s40, 1
    %s42 = scalar_select %p39, %s40, %s41
    %p45 = pneg %p39
    %p46 = scmp.eq.s32.totalorder %s9, 3
    %p47 = por %p45, %p46
    %p48 = scmp.ne.s32.totalorder %s40, %s43
    %p49 = scmp.eq.s32.totalorder %s9, 0
    %p50 = por %p48, %p49
    %p51 = scmp.ne.s32.totalorder %s40, %s43
    %p52 = scmp.eq.s32.totalorder %s14, 3
    %p53 = por %p51, %p52
    %p54 = scmp.ne.s32.totalorder %s43, %s44
    %p55 = scmp.eq.s32.totalorder %s14, 0
    %p56 = por %p54, %p55
    %p57 = scmp.ne.s32.totalorder %s43, %s44
    %p58 = scmp.eq.s32.totalorder %s15, 3
    %p59 = por %p57, %p58
    %p61 = scmp.ne.s32.totalorder %s44, %s60
    %p62 = scmp.eq.s32.totalorder %s15, 0
    %p63 = por %p61, %p62
    %s64 = ssub.s32 %s18, %s27
    %s65 = ssub.s32 %s17, %s31
    %s66 = sor.u32 %s64, %s65
    %p67 = scmp.eq.s32.totalorder %s66, 0
    %s69 = sadd.s32 %s68, 1
    %s70 = scalar_select %p67, %s68, %s69
    %p73 = pneg %p67
    %p74 = scmp.eq.s32.totalorder %s9, 3
    %p75 = por %p73, %p74
    %p76 = scmp.ne.s32.totalorder %s68, %s71
    %p77 = scmp.eq.s32.totalorder %s9, 0
    %p78 = por %p76, %p77
    %p79 = scmp.ne.s32.totalorder %s68, %s71
    %p80 = scmp.eq.s32.totalorder %s14, 3
    %p81 = por %p79, %p80
    %p82 = scmp.ne.s32.totalorder %s71, %s72
    %p83 = scmp.eq.s32.totalorder %s14, 0
    %p84 = por %p82, %p83
    %p85 = scmp.ne.s32.totalorder %s71, %s72
    %p86 = scmp.eq.s32.totalorder %s15, 3
    %p87 = por %p85, %p86
    %p89 = scmp.ne.s32.totalorder %s72, %s88
    %p90 = scmp.eq.s32.totalorder %s15, 0
    %p91 = por %p89, %p90
    %s92 = ssub.s32 %s17, %s31
    %p93 = scmp.eq.s32.totalorder %s92, 0
    %s95 = sadd.s32 %s94, 1
    %s96 = scalar_select %p93, %s94, %s95
    %p99 = pneg %p93
    %p100 = scmp.eq.s32.totalorder %s9, 3
    %p101 = por %p99, %p100
    %p102 = scmp.ne.s32.totalorder %s94, %s97
    %p103 = scmp.eq.s32.totalorder %s9, 0
    %p104 = por %p102, %p103
    %p105 = scmp.ne.s32.totalorder %s94, %s97
    %p106 = scmp.eq.s32.totalorder %s14, 3
    %p107 = por %p105, %p106
    %p108 = scmp.ne.s32.totalorder %s97, %s98
    %p109 = scmp.eq.s32.totalorder %s14, 0
    %p110 = por %p108, %p109
    %p111 = scmp.ne.s32.totalorder %s97, %s98
    %p112 = scmp.eq.s32.totalorder %s15, 3
    %p113 = por %p111, %p112
    %p115 = scmp.ne.s32.totalorder %s98, %s114
    %p116 = scmp.eq.s32.totalorder %s15, 0
    %p117 = por %p115, %p116
    %s118 = ssub.s32 %s16, %s35
    %s119 = ssub.s32 %s17, %s31
    %s120 = sor.u32 %s118, %s119
    %p121 = scmp.eq.s32.totalorder %s120, 0
    %s123 = sadd.s32 %s122, 1
    %s124 = scalar_select %p121, %s122, %s123
    %p127 = pneg %p121
    %p128 = scmp.eq.s32.totalorder %s9, 3
    %p129 = por %p127, %p128
    %p130 = scmp.ne.s32.totalorder %s122, %s125
    %p131 = scmp.eq.s32.totalorder %s9, 0
    %p132 = por %p130, %p131
    %p133 = scmp.ne.s32.totalorder %s122, %s125
    %p134 = scmp.eq.s32.totalorder %s14, 3
    %p135 = por %p133, %p134
    %p136 = scmp.ne.s32.totalorder %s125, %s126
    %p137 = scmp.eq.s32.totalorder %s14, 0
    %p138 = por %p136, %p137
    %p139 = scmp.ne.s32.totalorder %s125, %s126
    %p140 = scmp.eq.s32.totalorder %s15, 3
    %p141 = por %p139, %p140
    %p143 = scmp.ne.s32.totalorder %s126, %s142
    %p144 = scmp.eq.s32.totalorder %s15, 0
    %p145 = por %p143, %p144
    %p146 = scmp.le.s32.totalorder 1, %s9
    %p147 = scmp.lt.s32.totalorder %s9, 5
    %p148 = pnand %p146, %p147
    %p149 = pneg %p148
    // Predicated region
    $region9: #{descriptor_cifar_forward.7} parent=5 // pred_check
      _
    $region10: #{descriptor_cifar_forward.7} parent=5 // pred_check_branch
      %151 = sbr.rel (%p148) target = $region12
    $region11: #{descriptor_cifar_forward.7} parent=5 // pred_region
      %s152 = ssub.s32 %s9, 1
      // Predicated region
      $region13: #{descriptor_cifar_forward.7} parent=11 // pred_check
        %p153 = pneg %p110
      $region14: #{descriptor_cifar_forward.7} parent=11 // pred_check_branch
        %155 = sbr.rel (%p153) target = $region16
      $region15: #{descriptor_cifar_forward.7} parent=11 // pred_region
        %p156 = scmp.lt.s32.totalorder %s20, 0
        %s157 = scalar_select %p156, %s20, 0
        %s158 = scalar_lea.vmem %s2, %s157
      $region16: #{descriptor_cifar_forward.7} parent=11 // pred_fallthru
        _
    $region12: #{descriptor_cifar_forward.7} parent=5 // pred_fallthru
      _
    %p159 = scmp.lt.s32.totalorder %s9, 4
    // Predicated region
    $region17: #{descriptor_cifar_forward.7} parent=5 // pred_check
      %p160 = pneg %p159
    $region18: #{descriptor_cifar_forward.7} parent=5 // pred_check_branch
      %162 = sbr.rel (%p160) target = $region20
    $region19: #{descriptor_cifar_forward.7} parent=5 // pred_region
      // Predicated region
      $region21: #{descriptor_cifar_forward.7} parent=19 // pred_check
        %p163 = pneg %p50
      $region22: #{descriptor_cifar_forward.7} parent=19 // pred_check_branch
        %165 = sbr.rel (%p163) target = $region24
      $region23: #{descriptor_cifar_forward.7} parent=19 // pred_region
        %s166 = smul.u32 32, %s18
        %p167 = scmp.lt.s32.totalorder %s16, 0
        %s168 = scalar_select %p167, %s16, 0
        %p169 = scmp.lt.s32.totalorder %s166, 127
        %s170 = scalar_select %p169, %s166, 127
        %s171 = smul.addr %s168, 128
        %s172 = sadd.s32 %s170, %s171
        %s173 = smul.addr %s172, 4
        %s174 = scalar_lea.vmem %s0, %s173
        %s175 = smul.u32 32, %s18
      $region24: #{descriptor_cifar_forward.7} parent=19 // pred_fallthru
        _
      // Predicated region
      $region25: #{descriptor_cifar_forward.7} parent=19 // pred_check
        %p176 = pneg %p78
      $region26: #{descriptor_cifar_forward.7} parent=19 // pred_check_branch
        %178 = sbr.rel (%p176) target = $region28
      $region27: #{descriptor_cifar_forward.7} parent=19 // pred_region
        %s179 = smul.u32 512, %s18
        %p180 = scmp.lt.s32.totalorder %s179, 2047
        %s181 = scalar_select %p180, %s179, 2047
        %p182 = scmp.lt.s32.totalorder %s17, 0
        %s183 = scalar_select %p182, %s17, 0
        %s184 = sadd.s32 %s183, %s181
        %s185 = smul.addr %s184, 4
        %s186 = scalar_lea.vmem %s1, %s185
        %s187 = smul.u32 512, %s18
      $region28: #{descriptor_cifar_forward.7} parent=19 // pred_fallthru
        _
    $region20: #{descriptor_cifar_forward.7} parent=5 // pred_fallthru
      _
    %p188 = scmp.le.s32.totalorder 1, %s9
    %p189 = scmp.lt.s32.totalorder %s9, 5
    %p190 = pnand %p188, %p189
    %p191 = pneg %p190
    // Predicated region
    $region29: #{descriptor_cifar_forward.7} parent=5 // pred_check
      _
    $region30: #{descriptor_cifar_forward.7} parent=5 // pred_check_branch
      %193 = sbr.rel (%p190) target = $region32
    $region31: #{descriptor_cifar_forward.7} parent=5 // pred_region
      %s194 = ssub.s32 %s9, 1
      %s195 = smul.u32 32, %s21
      %p196 = scmp.lt.s32.totalorder %s19, 0
      %s197 = scalar_select %p196, %s19, 0
      %p198 = scmp.lt.s32.totalorder %s195, 127
      %s199 = scalar_select %p198, %s195, 127
      %s200 = smul.addr %s197, 128
      %s201 = sadd.s32 %s199, %s200
      %s202 = smul.addr %s201, 4
      %s203 = scalar_lea.vmem %s0, %s202
      %p204 = pneg %p56
      %p205 = pneg %p53
      %s206 = smul.u32 512, %s21
      %p207 = scmp.lt.s32.totalorder %s206, 2047
      %s208 = scalar_select %p207, %s206, 2047
      %p209 = scmp.lt.s32.totalorder %s20, 0
      %s210 = scalar_select %p209, %s20, 0
      %s211 = sadd.s32 %s210, %s208
      %s212 = smul.addr %s211, 4
      %s213 = scalar_lea.vmem %s1, %s212
      %p214 = pneg %p84
      %p215 = pneg %p81
      %p216 = scmp.lt.s32.totalorder %s20, 0
      %s217 = scalar_select %p216, %s20, 0
      %s218 = scalar_lea.vmem %s2, %s217
      %p219 = pneg %p110
      %p220 = pneg %p107
      %p221 = pneg %p138
      %p222 = pneg %p135
      %p223 = scmp.lt.s32.totalorder %s19, 0
      %s224 = scalar_select %p223, %s19, 0
      %p225 = scmp.lt.s32.totalorder %s20, 0
      %s226 = scalar_select %p225, %s20, 0
      %s227 = sadd.s32 %s226, %s224
      %s228 = smul.addr %s227, 8
      %s229 = scalar_lea.vmem %s3, %s228
      %s230 = smul.u32 32, %s21
      %p231 = scmp.lt.s32.totalorder %s19, 0
      %s232 = scalar_select %p231, %s19, 0
      %p233 = scmp.lt.s32.totalorder %s230, 127
      %s234 = scalar_select %p233, %s230, 127
      %s235 = smul.addr %s232, 128
      %s236 = sadd.s32 %s234, %s235
      %s237 = smul.addr %s236, 4
      %s238 = scalar_lea.vmem %s0, %s237
      %s239 = smul.u32 32, %s21
      %s240 = smul.u32 512, %s21
      %p241 = scmp.lt.s32.totalorder %s240, 2047
      %s242 = scalar_select %p241, %s240, 2047
      %p243 = scmp.lt.s32.totalorder %s20, 0
      %s244 = scalar_select %p243, %s20, 0
      %s245 = sadd.s32 %s244, %s242
      %s246 = smul.addr %s245, 4
      %s247 = scalar_lea.vmem %s1, %s246
      %s248 = smul.u32 512, %s21
      %p249 = scmp.lt.s32.totalorder %s20, 0
      %s250 = scalar_select %p249, %s20, 0
      %s251 = scalar_lea.vmem %s2, %s250
      %p252 = scmp.lt.s32.totalorder %s19, 0
      %s253 = scalar_select %p252, %s19, 0
      %p254 = scmp.lt.s32.totalorder %s20, 0
      %s255 = scalar_select %p254, %s20, 0
      %s256 = sadd.s32 %s255, %s253
      %s257 = smul.addr %s256, 8
      %s258 = scalar_lea.vmem %s3, %s257
      %p260 = scmp.eq.s32.totalorder %s21, 0
      // Predicated region
      $region33: #{descriptor_cifar_forward.7} parent=31 // pred_check
        %p261 = pneg %p260
      $region34: #{descriptor_cifar_forward.7} parent=31 // pred_check_branch
        %263 = sbr.rel (%p261) target = $region36
      $region35: #{descriptor_cifar_forward.7} parent=31 // pred_region
        %vm264 = vcmask 261120
        %265 = vst.msk [vmem:[#allocation2] sm:$0xff] %vm264, 0.0
      $region36: #{descriptor_cifar_forward.7} parent=31 // pred_fallthru
        _
      %v266 = vld [vmem:[#allocation2] sm:$0xff]
      %v267 = vld [vmem:[%s238] sm:$0xff]
      %v268 = vld [vmem:[%s238 + $0x8] sm:$0xff]
      %v269 = vld [vmem:[%s238 + $0x10] sm:$0xff]
      %v270 = vld [vmem:[%s238 + $0x18] sm:$0xff]
      %v271 = vld [vmem:[%s238 + $0x20] sm:$0xff]
      %v272 = vld [vmem:[%s238 + $0x28] sm:$0xff]
      %v273 = vld [vmem:[%s238 + $0x30] sm:$0xff]
      %v274 = vld [vmem:[%s238 + $0x38] sm:$0xff]
      %v275 = vld [vmem:[%s238 + $0x40] sm:$0xff]
      %v276 = vld [vmem:[%s238 + $0x48] sm:$0xff]
      %v277 = vld [vmem:[%s238 + $0x50] sm:$0xff]
      %v278 = vld [vmem:[%s238 + $0x58] sm:$0xff]
      %v279 = vld [vmem:[%s238 + $0x60] sm:$0xff]
      %v280 = vld [vmem:[%s238 + $0x68] sm:$0xff]
      %v281 = vld [vmem:[%s238 + $0x70] sm:$0xff]
      %v282 = vld [vmem:[%s238 + $0x78] sm:$0xff]
      %v283 = vld [vmem:[%s247] sm:$0xf]
      %v284 = vld [vmem:[%s247 + $0x4] sm:$0xf]
      %v285 = vld [vmem:[%s247 + $0x8] sm:$0xf]
      %v286 = vld [vmem:[%s247 + $0xc] sm:$0xf]
      %v287 = vld [vmem:[%s247 + $0x10] sm:$0xf]
      %v288 = vld [vmem:[%s247 + $0x14] sm:$0xf]
      %v289 = vld [vmem:[%s247 + $0x18] sm:$0xf]
      %v290 = vld [vmem:[%s247 + $0x1c] sm:$0xf]
      %v291 = vld [vmem:[%s247 + $0x20] sm:$0xf]
      %v292 = vld [vmem:[%s247 + $0x24] sm:$0xf]
      %v293 = vld [vmem:[%s247 + $0x28] sm:$0xf]
      %v294 = vld [vmem:[%s247 + $0x2c] sm:$0xf]
      %v295 = vld [vmem:[%s247 + $0x30] sm:$0xf]
      %v296 = vld [vmem:[%s247 + $0x34] sm:$0xf]
      %v297 = vld [vmem:[%s247 + $0x38] sm:$0xf]
      %v298 = vld [vmem:[%s247 + $0x3c] sm:$0xf]
      %v299 = vld [vmem:[%s247 + $0x40] sm:$0xf]
      %v300 = vld [vmem:[%s247 + $0x44] sm:$0xf]
      %v301 = vld [vmem:[%s247 + $0x48] sm:$0xf]
      %v302 = vld [vmem:[%s247 + $0x4c] sm:$0xf]
      %v303 = vld [vmem:[%s247 + $0x50] sm:$0xf]
      %v304 = vld [vmem:[%s247 + $0x54] sm:$0xf]
      %v305 = vld [vmem:[%s247 + $0x58] sm:$0xf]
      %v306 = vld [vmem:[%s247 + $0x5c] sm:$0xf]
      %v307 = vld [vmem:[%s247 + $0x60] sm:$0xf]
      %v308 = vld [vmem:[%s247 + $0x64] sm:$0xf]
      %v309 = vld [vmem:[%s247 + $0x68] sm:$0xf]
      %v310 = vld [vmem:[%s247 + $0x6c] sm:$0xf]
      %v311 = vld [vmem:[%s247 + $0x70] sm:$0xf]
      %v312 = vld [vmem:[%s247 + $0x74] sm:$0xf]
      %v313 = vld [vmem:[%s247 + $0x78] sm:$0xf]
      %v314 = vld [vmem:[%s247 + $0x7c] sm:$0xf]
      %v315 = vld [vmem:[%s247 + $0x80] sm:$0xf]
      %v316 = vld [vmem:[%s247 + $0x84] sm:$0xf]
      %v317 = vld [vmem:[%s247 + $0x88] sm:$0xf]
      %v318 = vld [vmem:[%s247 + $0x8c] sm:$0xf]
      %v319 = vld [vmem:[%s247 + $0x90] sm:$0xf]
      %v320 = vld [vmem:[%s247 + $0x94] sm:$0xf]
      %v321 = vld [vmem:[%s247 + $0x98] sm:$0xf]
      %v322 = vld [vmem:[%s247 + $0x9c] sm:$0xf]
      %v323 = vld [vmem:[%s247 + $0xa0] sm:$0xf]
      %v324 = vld [vmem:[%s247 + $0xa4] sm:$0xf]
      %v325 = vld [vmem:[%s247 + $0xa8] sm:$0xf]
      %v326 = vld [vmem:[%s247 + $0xac] sm:$0xf]
      %v327 = vld [vmem:[%s247 + $0xb0] sm:$0xf]
      %v328 = vld [vmem:[%s247 + $0xb4] sm:$0xf]
      %v329 = vld [vmem:[%s247 + $0xb8] sm:$0xf]
      %v330 = vld [vmem:[%s247 + $0xbc] sm:$0xf]
      %v331 = vld [vmem:[%s247 + $0xc0] sm:$0xf]
      %v332 = vld [vmem:[%s247 + $0xc4] sm:$0xf]
      %v333 = vld [vmem:[%s247 + $0xc8] sm:$0xf]
      %v334 = vld [vmem:[%s247 + $0xcc] sm:$0xf]
      %v335 = vld [vmem:[%s247 + $0xd0] sm:$0xf]
      %v336 = vld [vmem:[%s247 + $0xd4] sm:$0xf]
      %v337 = vld [vmem:[%s247 + $0xd8] sm:$0xf]
      %v338 = vld [vmem:[%s247 + $0xdc] sm:$0xf]
      %v339 = vld [vmem:[%s247 + $0xe0] sm:$0xf]
      %v340 = vld [vmem:[%s247 + $0xe4] sm:$0xf]
      %v341 = vld [vmem:[%s247 + $0xe8] sm:$0xf]
      %v342 = vld [vmem:[%s247 + $0xec] sm:$0xf]
      %v343 = vld [vmem:[%s247 + $0xf0] sm:$0xf]
      %v344 = vld [vmem:[%s247 + $0xf4] sm:$0xf]
      %v345 = vld [vmem:[%s247 + $0xf8] sm:$0xf]
      %v346 = vld [vmem:[%s247 + $0xfc] sm:$0xf]
      %v347 = vld [vmem:[%s247 + $0x100] sm:$0xf]
      %v348 = vld [vmem:[%s247 + $0x104] sm:$0xf]
      %v349 = vld [vmem:[%s247 + $0x108] sm:$0xf]
      %v350 = vld [vmem:[%s247 + $0x10c] sm:$0xf]
      %v351 = vld [vmem:[%s247 + $0x110] sm:$0xf]
      %v352 = vld [vmem:[%s247 + $0x114] sm:$0xf]
      %v353 = vld [vmem:[%s247 + $0x118] sm:$0xf]
      %v354 = vld [vmem:[%s247 + $0x11c] sm:$0xf]
      %v355 = vld [vmem:[%s247 + $0x120] sm:$0xf]
      %v356 = vld [vmem:[%s247 + $0x124] sm:$0xf]
      %v357 = vld [vmem:[%s247 + $0x128] sm:$0xf]
      %v358 = vld [vmem:[%s247 + $0x12c] sm:$0xf]
      %v359 = vld [vmem:[%s247 + $0x130] sm:$0xf]
      %v360 = vld [vmem:[%s247 + $0x134] sm:$0xf]
      %v361 = vld [vmem:[%s247 + $0x138] sm:$0xf]
      %v362 = vld [vmem:[%s247 + $0x13c] sm:$0xf]
      %v363 = vld [vmem:[%s247 + $0x140] sm:$0xf]
      %v364 = vld [vmem:[%s247 + $0x144] sm:$0xf]
      %v365 = vld [vmem:[%s247 + $0x148] sm:$0xf]
      %v366 = vld [vmem:[%s247 + $0x14c] sm:$0xf]
      %v367 = vld [vmem:[%s247 + $0x150] sm:$0xf]
      %v368 = vld [vmem:[%s247 + $0x154] sm:$0xf]
      %v369 = vld [vmem:[%s247 + $0x158] sm:$0xf]
      %v370 = vld [vmem:[%s247 + $0x15c] sm:$0xf]
      %v371 = vld [vmem:[%s247 + $0x160] sm:$0xf]
      %v372 = vld [vmem:[%s247 + $0x164] sm:$0xf]
      %v373 = vld [vmem:[%s247 + $0x168] sm:$0xf]
      %v374 = vld [vmem:[%s247 + $0x16c] sm:$0xf]
      %v375 = vld [vmem:[%s247 + $0x170] sm:$0xf]
      %v376 = vld [vmem:[%s247 + $0x174] sm:$0xf]
      %v377 = vld [vmem:[%s247 + $0x178] sm:$0xf]
      %v378 = vld [vmem:[%s247 + $0x17c] sm:$0xf]
      %v379 = vld [vmem:[%s247 + $0x180] sm:$0xf]
      %v380 = vld [vmem:[%s247 + $0x184] sm:$0xf]
      %v381 = vld [vmem:[%s247 + $0x188] sm:$0xf]
      %v382 = vld [vmem:[%s247 + $0x18c] sm:$0xf]
      %v383 = vld [vmem:[%s247 + $0x190] sm:$0xf]
      %v384 = vld [vmem:[%s247 + $0x194] sm:$0xf]
      %v385 = vld [vmem:[%s247 + $0x198] sm:$0xf]
      %v386 = vld [vmem:[%s247 + $0x19c] sm:$0xf]
      %v387 = vld [vmem:[%s247 + $0x1a0] sm:$0xf]
      %v388 = vld [vmem:[%s247 + $0x1a4] sm:$0xf]
      %v389 = vld [vmem:[%s247 + $0x1a8] sm:$0xf]
      %v390 = vld [vmem:[%s247 + $0x1ac] sm:$0xf]
      %v391 = vld [vmem:[%s247 + $0x1b0] sm:$0xf]
      %v392 = vld [vmem:[%s247 + $0x1b4] sm:$0xf]
      %v393 = vld [vmem:[%s247 + $0x1b8] sm:$0xf]
      %v394 = vld [vmem:[%s247 + $0x1bc] sm:$0xf]
      %v395 = vld [vmem:[%s247 + $0x1c0] sm:$0xf]
      %v396 = vld [vmem:[%s247 + $0x1c4] sm:$0xf]
      %v397 = vld [vmem:[%s247 + $0x1c8] sm:$0xf]
      %v398 = vld [vmem:[%s247 + $0x1cc] sm:$0xf]
      %v399 = vld [vmem:[%s247 + $0x1d0] sm:$0xf]
      %v400 = vld [vmem:[%s247 + $0x1d4] sm:$0xf]
      %v401 = vld [vmem:[%s247 + $0x1d8] sm:$0xf]
      %v402 = vld [vmem:[%s247 + $0x1dc] sm:$0xf]
      %v403 = vld [vmem:[%s247 + $0x1e0] sm:$0xf]
      %v404 = vld [vmem:[%s247 + $0x1e4] sm:$0xf]
      %v405 = vld [vmem:[%s247 + $0x1e8] sm:$0xf]
      %v406 = vld [vmem:[%s247 + $0x1ec] sm:$0xf]
      %v407 = vld [vmem:[%s247 + $0x1f0] sm:$0xf]
      %v408 = vld [vmem:[%s247 + $0x1f4] sm:$0xf]
      %v409 = vld [vmem:[%s247 + $0x1f8] sm:$0xf]
      %v410 = vld [vmem:[%s247 + $0x1fc] sm:$0xf]
      %v411 = vld [vmem:[%s247 + $0x200] sm:$0xf]
      %v412 = vld [vmem:[%s247 + $0x204] sm:$0xf]
      %v413 = vld [vmem:[%s247 + $0x208] sm:$0xf]
      %v414 = vld [vmem:[%s247 + $0x20c] sm:$0xf]
      %v415 = vld [vmem:[%s247 + $0x210] sm:$0xf]
      %v416 = vld [vmem:[%s247 + $0x214] sm:$0xf]
      %v417 = vld [vmem:[%s247 + $0x218] sm:$0xf]
      %v418 = vld [vmem:[%s247 + $0x21c] sm:$0xf]
      %v419 = vld [vmem:[%s247 + $0x220] sm:$0xf]
      %v420 = vld [vmem:[%s247 + $0x224] sm:$0xf]
      %v421 = vld [vmem:[%s247 + $0x228] sm:$0xf]
      %v422 = vld [vmem:[%s247 + $0x22c] sm:$0xf]
      %v423 = vld [vmem:[%s247 + $0x230] sm:$0xf]
      %v424 = vld [vmem:[%s247 + $0x234] sm:$0xf]
      %v425 = vld [vmem:[%s247 + $0x238] sm:$0xf]
      %v426 = vld [vmem:[%s247 + $0x23c] sm:$0xf]
      %v427 = vld [vmem:[%s247 + $0x240] sm:$0xf]
      %v428 = vld [vmem:[%s247 + $0x244] sm:$0xf]
      %v429 = vld [vmem:[%s247 + $0x248] sm:$0xf]
      %v430 = vld [vmem:[%s247 + $0x24c] sm:$0xf]
      %v431 = vld [vmem:[%s247 + $0x250] sm:$0xf]
      %v432 = vld [vmem:[%s247 + $0x254] sm:$0xf]
      %v433 = vld [vmem:[%s247 + $0x258] sm:$0xf]
      %v434 = vld [vmem:[%s247 + $0x25c] sm:$0xf]
      %v435 = vld [vmem:[%s247 + $0x260] sm:$0xf]
      %v436 = vld [vmem:[%s247 + $0x264] sm:$0xf]
      %v437 = vld [vmem:[%s247 + $0x268] sm:$0xf]
      %v438 = vld [vmem:[%s247 + $0x26c] sm:$0xf]
      %v439 = vld [vmem:[%s247 + $0x270] sm:$0xf]
      %v440 = vld [vmem:[%s247 + $0x274] sm:$0xf]
      %v441 = vld [vmem:[%s247 + $0x278] sm:$0xf]
      %v442 = vld [vmem:[%s247 + $0x27c] sm:$0xf]
      %v443 = vld [vmem:[%s247 + $0x280] sm:$0xf]
      %v444 = vld [vmem:[%s247 + $0x284] sm:$0xf]
      %v445 = vld [vmem:[%s247 + $0x288] sm:$0xf]
      %v446 = vld [vmem:[%s247 + $0x28c] sm:$0xf]
      %v447 = vld [vmem:[%s247 + $0x290] sm:$0xf]
      %v448 = vld [vmem:[%s247 + $0x294] sm:$0xf]
      %v449 = vld [vmem:[%s247 + $0x298] sm:$0xf]
      %v450 = vld [vmem:[%s247 + $0x29c] sm:$0xf]
      %v451 = vld [vmem:[%s247 + $0x2a0] sm:$0xf]
      %v452 = vld [vmem:[%s247 + $0x2a4] sm:$0xf]
      %v453 = vld [vmem:[%s247 + $0x2a8] sm:$0xf]
      %v454 = vld [vmem:[%s247 + $0x2ac] sm:$0xf]
      %v455 = vld [vmem:[%s247 + $0x2b0] sm:$0xf]
      %v456 = vld [vmem:[%s247 + $0x2b4] sm:$0xf]
      %v457 = vld [vmem:[%s247 + $0x2b8] sm:$0xf]
      %v458 = vld [vmem:[%s247 + $0x2bc] sm:$0xf]
      %v459 = vld [vmem:[%s247 + $0x2c0] sm:$0xf]
      %v460 = vld [vmem:[%s247 + $0x2c4] sm:$0xf]
      %v461 = vld [vmem:[%s247 + $0x2c8] sm:$0xf]
      %v462 = vld [vmem:[%s247 + $0x2cc] sm:$0xf]
      %v463 = vld [vmem:[%s247 + $0x2d0] sm:$0xf]
      %v464 = vld [vmem:[%s247 + $0x2d4] sm:$0xf]
      %v465 = vld [vmem:[%s247 + $0x2d8] sm:$0xf]
      %v466 = vld [vmem:[%s247 + $0x2dc] sm:$0xf]
      %v467 = vld [vmem:[%s247 + $0x2e0] sm:$0xf]
      %v468 = vld [vmem:[%s247 + $0x2e4] sm:$0xf]
      %v469 = vld [vmem:[%s247 + $0x2e8] sm:$0xf]
      %v470 = vld [vmem:[%s247 + $0x2ec] sm:$0xf]
      %v471 = vld [vmem:[%s247 + $0x2f0] sm:$0xf]
      %v472 = vld [vmem:[%s247 + $0x2f4] sm:$0xf]
      %v473 = vld [vmem:[%s247 + $0x2f8] sm:$0xf]
      %v474 = vld [vmem:[%s247 + $0x2fc] sm:$0xf]
      %v475 = vld [vmem:[%s247 + $0x300] sm:$0xf]
      %v476 = vld [vmem:[%s247 + $0x304] sm:$0xf]
      %v477 = vld [vmem:[%s247 + $0x308] sm:$0xf]
      %v478 = vld [vmem:[%s247 + $0x30c] sm:$0xf]
      %v479 = vld [vmem:[%s247 + $0x310] sm:$0xf]
      %v480 = vld [vmem:[%s247 + $0x314] sm:$0xf]
      %v481 = vld [vmem:[%s247 + $0x318] sm:$0xf]
      %v482 = vld [vmem:[%s247 + $0x31c] sm:$0xf]
      %v483 = vld [vmem:[%s247 + $0x320] sm:$0xf]
      %v484 = vld [vmem:[%s247 + $0x324] sm:$0xf]
      %v485 = vld [vmem:[%s247 + $0x328] sm:$0xf]
      %v486 = vld [vmem:[%s247 + $0x32c] sm:$0xf]
      %v487 = vld [vmem:[%s247 + $0x330] sm:$0xf]
      %v488 = vld [vmem:[%s247 + $0x334] sm:$0xf]
      %v489 = vld [vmem:[%s247 + $0x338] sm:$0xf]
      %v490 = vld [vmem:[%s247 + $0x33c] sm:$0xf]
      %v491 = vld [vmem:[%s247 + $0x340] sm:$0xf]
      %v492 = vld [vmem:[%s247 + $0x344] sm:$0xf]
      %v493 = vld [vmem:[%s247 + $0x348] sm:$0xf]
      %v494 = vld [vmem:[%s247 + $0x34c] sm:$0xf]
      %v495 = vld [vmem:[%s247 + $0x350] sm:$0xf]
      %v496 = vld [vmem:[%s247 + $0x354] sm:$0xf]
      %v497 = vld [vmem:[%s247 + $0x358] sm:$0xf]
      %v498 = vld [vmem:[%s247 + $0x35c] sm:$0xf]
      %v499 = vld [vmem:[%s247 + $0x360] sm:$0xf]
      %v500 = vld [vmem:[%s247 + $0x364] sm:$0xf]
      %v501 = vld [vmem:[%s247 + $0x368] sm:$0xf]
      %v502 = vld [vmem:[%s247 + $0x36c] sm:$0xf]
      %v503 = vld [vmem:[%s247 + $0x370] sm:$0xf]
      %v504 = vld [vmem:[%s247 + $0x374] sm:$0xf]
      %v505 = vld [vmem:[%s247 + $0x378] sm:$0xf]
      %v506 = vld [vmem:[%s247 + $0x37c] sm:$0xf]
      %v507 = vld [vmem:[%s247 + $0x380] sm:$0xf]
      %v508 = vld [vmem:[%s247 + $0x384] sm:$0xf]
      %v509 = vld [vmem:[%s247 + $0x388] sm:$0xf]
      %v510 = vld [vmem:[%s247 + $0x38c] sm:$0xf]
      %v511 = vld [vmem:[%s247 + $0x390] sm:$0xf]
      %v512 = vld [vmem:[%s247 + $0x394] sm:$0xf]
      %v513 = vld [vmem:[%s247 + $0x398] sm:$0xf]
      %v514 = vld [vmem:[%s247 + $0x39c] sm:$0xf]
      %v515 = vld [vmem:[%s247 + $0x3a0] sm:$0xf]
      %v516 = vld [vmem:[%s247 + $0x3a4] sm:$0xf]
      %v517 = vld [vmem:[%s247 + $0x3a8] sm:$0xf]
      %v518 = vld [vmem:[%s247 + $0x3ac] sm:$0xf]
      %v519 = vld [vmem:[%s247 + $0x3b0] sm:$0xf]
      %v520 = vld [vmem:[%s247 + $0x3b4] sm:$0xf]
      %v521 = vld [vmem:[%s247 + $0x3b8] sm:$0xf]
      %v522 = vld [vmem:[%s247 + $0x3bc] sm:$0xf]
      %v523 = vld [vmem:[%s247 + $0x3c0] sm:$0xf]
      %v524 = vld [vmem:[%s247 + $0x3c4] sm:$0xf]
      %v525 = vld [vmem:[%s247 + $0x3c8] sm:$0xf]
      %v526 = vld [vmem:[%s247 + $0x3cc] sm:$0xf]
      %v527 = vld [vmem:[%s247 + $0x3d0] sm:$0xf]
      %v528 = vld [vmem:[%s247 + $0x3d4] sm:$0xf]
      %v529 = vld [vmem:[%s247 + $0x3d8] sm:$0xf]
      %v530 = vld [vmem:[%s247 + $0x3dc] sm:$0xf]
      %v531 = vld [vmem:[%s247 + $0x3e0] sm:$0xf]
      %v532 = vld [vmem:[%s247 + $0x3e4] sm:$0xf]
      %v533 = vld [vmem:[%s247 + $0x3e8] sm:$0xf]
      %v534 = vld [vmem:[%s247 + $0x3ec] sm:$0xf]
      %v535 = vld [vmem:[%s247 + $0x3f0] sm:$0xf]
      %v536 = vld [vmem:[%s247 + $0x3f4] sm:$0xf]
      %v537 = vld [vmem:[%s247 + $0x3f8] sm:$0xf]
      %v538 = vld [vmem:[%s247 + $0x3fc] sm:$0xf]
      %v539 = vld [vmem:[%s247 + $0x400] sm:$0xf]
      %v540 = vld [vmem:[%s247 + $0x404] sm:$0xf]
      %v541 = vld [vmem:[%s247 + $0x408] sm:$0xf]
      %v542 = vld [vmem:[%s247 + $0x40c] sm:$0xf]
      %v543 = vld [vmem:[%s247 + $0x410] sm:$0xf]
      %v544 = vld [vmem:[%s247 + $0x414] sm:$0xf]
      %v545 = vld [vmem:[%s247 + $0x418] sm:$0xf]
      %v546 = vld [vmem:[%s247 + $0x41c] sm:$0xf]
      %v547 = vld [vmem:[%s247 + $0x420] sm:$0xf]
      %v548 = vld [vmem:[%s247 + $0x424] sm:$0xf]
      %v549 = vld [vmem:[%s247 + $0x428] sm:$0xf]
      %v550 = vld [vmem:[%s247 + $0x42c] sm:$0xf]
      %v551 = vld [vmem:[%s247 + $0x430] sm:$0xf]
      %v552 = vld [vmem:[%s247 + $0x434] sm:$0xf]
      %v553 = vld [vmem:[%s247 + $0x438] sm:$0xf]
      %v554 = vld [vmem:[%s247 + $0x43c] sm:$0xf]
      %v555 = vld [vmem:[%s247 + $0x440] sm:$0xf]
      %v556 = vld [vmem:[%s247 + $0x444] sm:$0xf]
      %v557 = vld [vmem:[%s247 + $0x448] sm:$0xf]
      %v558 = vld [vmem:[%s247 + $0x44c] sm:$0xf]
      %v559 = vld [vmem:[%s247 + $0x450] sm:$0xf]
      %v560 = vld [vmem:[%s247 + $0x454] sm:$0xf]
      %v561 = vld [vmem:[%s247 + $0x458] sm:$0xf]
      %v562 = vld [vmem:[%s247 + $0x45c] sm:$0xf]
      %v563 = vld [vmem:[%s247 + $0x460] sm:$0xf]
      %v564 = vld [vmem:[%s247 + $0x464] sm:$0xf]
      %v565 = vld [vmem:[%s247 + $0x468] sm:$0xf]
      %v566 = vld [vmem:[%s247 + $0x46c] sm:$0xf]
      %v567 = vld [vmem:[%s247 + $0x470] sm:$0xf]
      %v568 = vld [vmem:[%s247 + $0x474] sm:$0xf]
      %v569 = vld [vmem:[%s247 + $0x478] sm:$0xf]
      %v570 = vld [vmem:[%s247 + $0x47c] sm:$0xf]
      %v571 = vld [vmem:[%s247 + $0x480] sm:$0xf]
      %v572 = vld [vmem:[%s247 + $0x484] sm:$0xf]
      %v573 = vld [vmem:[%s247 + $0x488] sm:$0xf]
      %v574 = vld [vmem:[%s247 + $0x48c] sm:$0xf]
      %v575 = vld [vmem:[%s247 + $0x490] sm:$0xf]
      %v576 = vld [vmem:[%s247 + $0x494] sm:$0xf]
      %v577 = vld [vmem:[%s247 + $0x498] sm:$0xf]
      %v578 = vld [vmem:[%s247 + $0x49c] sm:$0xf]
      %v579 = vld [vmem:[%s247 + $0x4a0] sm:$0xf]
      %v580 = vld [vmem:[%s247 + $0x4a4] sm:$0xf]
      %v581 = vld [vmem:[%s247 + $0x4a8] sm:$0xf]
      %v582 = vld [vmem:[%s247 + $0x4ac] sm:$0xf]
      %v583 = vld [vmem:[%s247 + $0x4b0] sm:$0xf]
      %v584 = vld [vmem:[%s247 + $0x4b4] sm:$0xf]
      %v585 = vld [vmem:[%s247 + $0x4b8] sm:$0xf]
      %v586 = vld [vmem:[%s247 + $0x4bc] sm:$0xf]
      %v587 = vld [vmem:[%s247 + $0x4c0] sm:$0xf]
      %v588 = vld [vmem:[%s247 + $0x4c4] sm:$0xf]
      %v589 = vld [vmem:[%s247 + $0x4c8] sm:$0xf]
      %v590 = vld [vmem:[%s247 + $0x4cc] sm:$0xf]
      %v591 = vld [vmem:[%s247 + $0x4d0] sm:$0xf]
      %v592 = vld [vmem:[%s247 + $0x4d4] sm:$0xf]
      %v593 = vld [vmem:[%s247 + $0x4d8] sm:$0xf]
      %v594 = vld [vmem:[%s247 + $0x4dc] sm:$0xf]
      %v595 = vld [vmem:[%s247 + $0x4e0] sm:$0xf]
      %v596 = vld [vmem:[%s247 + $0x4e4] sm:$0xf]
      %v597 = vld [vmem:[%s247 + $0x4e8] sm:$0xf]
      %v598 = vld [vmem:[%s247 + $0x4ec] sm:$0xf]
      %v599 = vld [vmem:[%s247 + $0x4f0] sm:$0xf]
      %v600 = vld [vmem:[%s247 + $0x4f4] sm:$0xf]
      %v601 = vld [vmem:[%s247 + $0x4f8] sm:$0xf]
      %v602 = vld [vmem:[%s247 + $0x4fc] sm:$0xf]
      %v603 = vld [vmem:[%s247 + $0x500] sm:$0xf]
      %v604 = vld [vmem:[%s247 + $0x504] sm:$0xf]
      %v605 = vld [vmem:[%s247 + $0x508] sm:$0xf]
      %v606 = vld [vmem:[%s247 + $0x50c] sm:$0xf]
      %v607 = vld [vmem:[%s247 + $0x510] sm:$0xf]
      %v608 = vld [vmem:[%s247 + $0x514] sm:$0xf]
      %v609 = vld [vmem:[%s247 + $0x518] sm:$0xf]
      %v610 = vld [vmem:[%s247 + $0x51c] sm:$0xf]
      %v611 = vld [vmem:[%s247 + $0x520] sm:$0xf]
      %v612 = vld [vmem:[%s247 + $0x524] sm:$0xf]
      %v613 = vld [vmem:[%s247 + $0x528] sm:$0xf]
      %v614 = vld [vmem:[%s247 + $0x52c] sm:$0xf]
      %v615 = vld [vmem:[%s247 + $0x530] sm:$0xf]
      %v616 = vld [vmem:[%s247 + $0x534] sm:$0xf]
      %v617 = vld [vmem:[%s247 + $0x538] sm:$0xf]
      %v618 = vld [vmem:[%s247 + $0x53c] sm:$0xf]
      %v619 = vld [vmem:[%s247 + $0x540] sm:$0xf]
      %v620 = vld [vmem:[%s247 + $0x544] sm:$0xf]
      %v621 = vld [vmem:[%s247 + $0x548] sm:$0xf]
      %v622 = vld [vmem:[%s247 + $0x54c] sm:$0xf]
      %v623 = vld [vmem:[%s247 + $0x550] sm:$0xf]
      %v624 = vld [vmem:[%s247 + $0x554] sm:$0xf]
      %v625 = vld [vmem:[%s247 + $0x558] sm:$0xf]
      %v626 = vld [vmem:[%s247 + $0x55c] sm:$0xf]
      %v627 = vld [vmem:[%s247 + $0x560] sm:$0xf]
      %v628 = vld [vmem:[%s247 + $0x564] sm:$0xf]
      %v629 = vld [vmem:[%s247 + $0x568] sm:$0xf]
      %v630 = vld [vmem:[%s247 + $0x56c] sm:$0xf]
      %v631 = vld [vmem:[%s247 + $0x570] sm:$0xf]
      %v632 = vld [vmem:[%s247 + $0x574] sm:$0xf]
      %v633 = vld [vmem:[%s247 + $0x578] sm:$0xf]
      %v634 = vld [vmem:[%s247 + $0x57c] sm:$0xf]
      %v635 = vld [vmem:[%s247 + $0x580] sm:$0xf]
      %v636 = vld [vmem:[%s247 + $0x584] sm:$0xf]
      %v637 = vld [vmem:[%s247 + $0x588] sm:$0xf]
      %v638 = vld [vmem:[%s247 + $0x58c] sm:$0xf]
      %v639 = vld [vmem:[%s247 + $0x590] sm:$0xf]
      %v640 = vld [vmem:[%s247 + $0x594] sm:$0xf]
      %v641 = vld [vmem:[%s247 + $0x598] sm:$0xf]
      %v642 = vld [vmem:[%s247 + $0x59c] sm:$0xf]
      %v643 = vld [vmem:[%s247 + $0x5a0] sm:$0xf]
      %v644 = vld [vmem:[%s247 + $0x5a4] sm:$0xf]
      %v645 = vld [vmem:[%s247 + $0x5a8] sm:$0xf]
      %v646 = vld [vmem:[%s247 + $0x5ac] sm:$0xf]
      %v647 = vld [vmem:[%s247 + $0x5b0] sm:$0xf]
      %v648 = vld [vmem:[%s247 + $0x5b4] sm:$0xf]
      %v649 = vld [vmem:[%s247 + $0x5b8] sm:$0xf]
      %v650 = vld [vmem:[%s247 + $0x5bc] sm:$0xf]
      %v651 = vld [vmem:[%s247 + $0x5c0] sm:$0xf]
      %v652 = vld [vmem:[%s247 + $0x5c4] sm:$0xf]
      %v653 = vld [vmem:[%s247 + $0x5c8] sm:$0xf]
      %v654 = vld [vmem:[%s247 + $0x5cc] sm:$0xf]
      %v655 = vld [vmem:[%s247 + $0x5d0] sm:$0xf]
      %v656 = vld [vmem:[%s247 + $0x5d4] sm:$0xf]
      %v657 = vld [vmem:[%s247 + $0x5d8] sm:$0xf]
      %v658 = vld [vmem:[%s247 + $0x5dc] sm:$0xf]
      %v659 = vld [vmem:[%s247 + $0x5e0] sm:$0xf]
      %v660 = vld [vmem:[%s247 + $0x5e4] sm:$0xf]
      %v661 = vld [vmem:[%s247 + $0x5e8] sm:$0xf]
      %v662 = vld [vmem:[%s247 + $0x5ec] sm:$0xf]
      %v663 = vld [vmem:[%s247 + $0x5f0] sm:$0xf]
      %v664 = vld [vmem:[%s247 + $0x5f4] sm:$0xf]
      %v665 = vld [vmem:[%s247 + $0x5f8] sm:$0xf]
      %v666 = vld [vmem:[%s247 + $0x5fc] sm:$0xf]
      %v667 = vld [vmem:[%s247 + $0x600] sm:$0xf]
      %v668 = vld [vmem:[%s247 + $0x604] sm:$0xf]
      %v669 = vld [vmem:[%s247 + $0x608] sm:$0xf]
      %v670 = vld [vmem:[%s247 + $0x60c] sm:$0xf]
      %v671 = vld [vmem:[%s247 + $0x610] sm:$0xf]
      %v672 = vld [vmem:[%s247 + $0x614] sm:$0xf]
      %v673 = vld [vmem:[%s247 + $0x618] sm:$0xf]
      %v674 = vld [vmem:[%s247 + $0x61c] sm:$0xf]
      %v675 = vld [vmem:[%s247 + $0x620] sm:$0xf]
      %v676 = vld [vmem:[%s247 + $0x624] sm:$0xf]
      %v677 = vld [vmem:[%s247 + $0x628] sm:$0xf]
      %v678 = vld [vmem:[%s247 + $0x62c] sm:$0xf]
      %v679 = vld [vmem:[%s247 + $0x630] sm:$0xf]
      %v680 = vld [vmem:[%s247 + $0x634] sm:$0xf]
      %v681 = vld [vmem:[%s247 + $0x638] sm:$0xf]
      %v682 = vld [vmem:[%s247 + $0x63c] sm:$0xf]
      %v683 = vld [vmem:[%s247 + $0x640] sm:$0xf]
      %v684 = vld [vmem:[%s247 + $0x644] sm:$0xf]
      %v685 = vld [vmem:[%s247 + $0x648] sm:$0xf]
      %v686 = vld [vmem:[%s247 + $0x64c] sm:$0xf]
      %v687 = vld [vmem:[%s247 + $0x650] sm:$0xf]
      %v688 = vld [vmem:[%s247 + $0x654] sm:$0xf]
      %v689 = vld [vmem:[%s247 + $0x658] sm:$0xf]
      %v690 = vld [vmem:[%s247 + $0x65c] sm:$0xf]
      %v691 = vld [vmem:[%s247 + $0x660] sm:$0xf]
      %v692 = vld [vmem:[%s247 + $0x664] sm:$0xf]
      %v693 = vld [vmem:[%s247 + $0x668] sm:$0xf]
      %v694 = vld [vmem:[%s247 + $0x66c] sm:$0xf]
      %v695 = vld [vmem:[%s247 + $0x670] sm:$0xf]
      %v696 = vld [vmem:[%s247 + $0x674] sm:$0xf]
      %v697 = vld [vmem:[%s247 + $0x678] sm:$0xf]
      %v698 = vld [vmem:[%s247 + $0x67c] sm:$0xf]
      %v699 = vld [vmem:[%s247 + $0x680] sm:$0xf]
      %v700 = vld [vmem:[%s247 + $0x684] sm:$0xf]
      %v701 = vld [vmem:[%s247 + $0x688] sm:$0xf]
      %v702 = vld [vmem:[%s247 + $0x68c] sm:$0xf]
      %v703 = vld [vmem:[%s247 + $0x690] sm:$0xf]
      %v704 = vld [vmem:[%s247 + $0x694] sm:$0xf]
      %v705 = vld [vmem:[%s247 + $0x698] sm:$0xf]
      %v706 = vld [vmem:[%s247 + $0x69c] sm:$0xf]
      %v707 = vld [vmem:[%s247 + $0x6a0] sm:$0xf]
      %v708 = vld [vmem:[%s247 + $0x6a4] sm:$0xf]
      %v709 = vld [vmem:[%s247 + $0x6a8] sm:$0xf]
      %v710 = vld [vmem:[%s247 + $0x6ac] sm:$0xf]
      %v711 = vld [vmem:[%s247 + $0x6b0] sm:$0xf]
      %v712 = vld [vmem:[%s247 + $0x6b4] sm:$0xf]
      %v713 = vld [vmem:[%s247 + $0x6b8] sm:$0xf]
      %v714 = vld [vmem:[%s247 + $0x6bc] sm:$0xf]
      %v715 = vld [vmem:[%s247 + $0x6c0] sm:$0xf]
      %v716 = vld [vmem:[%s247 + $0x6c4] sm:$0xf]
      %v717 = vld [vmem:[%s247 + $0x6c8] sm:$0xf]
      %v718 = vld [vmem:[%s247 + $0x6cc] sm:$0xf]
      %v719 = vld [vmem:[%s247 + $0x6d0] sm:$0xf]
      %v720 = vld [vmem:[%s247 + $0x6d4] sm:$0xf]
      %v721 = vld [vmem:[%s247 + $0x6d8] sm:$0xf]
      %v722 = vld [vmem:[%s247 + $0x6dc] sm:$0xf]
      %v723 = vld [vmem:[%s247 + $0x6e0] sm:$0xf]
      %v724 = vld [vmem:[%s247 + $0x6e4] sm:$0xf]
      %v725 = vld [vmem:[%s247 + $0x6e8] sm:$0xf]
      %v726 = vld [vmem:[%s247 + $0x6ec] sm:$0xf]
      %v727 = vld [vmem:[%s247 + $0x6f0] sm:$0xf]
      %v728 = vld [vmem:[%s247 + $0x6f4] sm:$0xf]
      %v729 = vld [vmem:[%s247 + $0x6f8] sm:$0xf]
      %v730 = vld [vmem:[%s247 + $0x6fc] sm:$0xf]
      %v731 = vld [vmem:[%s247 + $0x700] sm:$0xf]
      %v732 = vld [vmem:[%s247 + $0x704] sm:$0xf]
      %v733 = vld [vmem:[%s247 + $0x708] sm:$0xf]
      %v734 = vld [vmem:[%s247 + $0x70c] sm:$0xf]
      %v735 = vld [vmem:[%s247 + $0x710] sm:$0xf]
      %v736 = vld [vmem:[%s247 + $0x714] sm:$0xf]
      %v737 = vld [vmem:[%s247 + $0x718] sm:$0xf]
      %v738 = vld [vmem:[%s247 + $0x71c] sm:$0xf]
      %v739 = vld [vmem:[%s247 + $0x720] sm:$0xf]
      %v740 = vld [vmem:[%s247 + $0x724] sm:$0xf]
      %v741 = vld [vmem:[%s247 + $0x728] sm:$0xf]
      %v742 = vld [vmem:[%s247 + $0x72c] sm:$0xf]
      %v743 = vld [vmem:[%s247 + $0x730] sm:$0xf]
      %v744 = vld [vmem:[%s247 + $0x734] sm:$0xf]
      %v745 = vld [vmem:[%s247 + $0x738] sm:$0xf]
      %v746 = vld [vmem:[%s247 + $0x73c] sm:$0xf]
      %v747 = vld [vmem:[%s247 + $0x740] sm:$0xf]
      %v748 = vld [vmem:[%s247 + $0x744] sm:$0xf]
      %v749 = vld [vmem:[%s247 + $0x748] sm:$0xf]
      %v750 = vld [vmem:[%s247 + $0x74c] sm:$0xf]
      %v751 = vld [vmem:[%s247 + $0x750] sm:$0xf]
      %v752 = vld [vmem:[%s247 + $0x754] sm:$0xf]
      %v753 = vld [vmem:[%s247 + $0x758] sm:$0xf]
      %v754 = vld [vmem:[%s247 + $0x75c] sm:$0xf]
      %v755 = vld [vmem:[%s247 + $0x760] sm:$0xf]
      %v756 = vld [vmem:[%s247 + $0x764] sm:$0xf]
      %v757 = vld [vmem:[%s247 + $0x768] sm:$0xf]
      %v758 = vld [vmem:[%s247 + $0x76c] sm:$0xf]
      %v759 = vld [vmem:[%s247 + $0x770] sm:$0xf]
      %v760 = vld [vmem:[%s247 + $0x774] sm:$0xf]
      %v761 = vld [vmem:[%s247 + $0x778] sm:$0xf]
      %v762 = vld [vmem:[%s247 + $0x77c] sm:$0xf]
      %v763 = vld [vmem:[%s247 + $0x780] sm:$0xf]
      %v764 = vld [vmem:[%s247 + $0x784] sm:$0xf]
      %v765 = vld [vmem:[%s247 + $0x788] sm:$0xf]
      %v766 = vld [vmem:[%s247 + $0x78c] sm:$0xf]
      %v767 = vld [vmem:[%s247 + $0x790] sm:$0xf]
      %v768 = vld [vmem:[%s247 + $0x794] sm:$0xf]
      %v769 = vld [vmem:[%s247 + $0x798] sm:$0xf]
      %v770 = vld [vmem:[%s247 + $0x79c] sm:$0xf]
      %v771 = vld [vmem:[%s247 + $0x7a0] sm:$0xf]
      %v772 = vld [vmem:[%s247 + $0x7a4] sm:$0xf]
      %v773 = vld [vmem:[%s247 + $0x7a8] sm:$0xf]
      %v774 = vld [vmem:[%s247 + $0x7ac] sm:$0xf]
      %v775 = vld [vmem:[%s247 + $0x7b0] sm:$0xf]
      %v776 = vld [vmem:[%s247 + $0x7b4] sm:$0xf]
      %v777 = vld [vmem:[%s247 + $0x7b8] sm:$0xf]
      %v778 = vld [vmem:[%s247 + $0x7bc] sm:$0xf]
      %v779 = vld [vmem:[%s247 + $0x7c0] sm:$0xf]
      %v780 = vld [vmem:[%s247 + $0x7c4] sm:$0xf]
      %v781 = vld [vmem:[%s247 + $0x7c8] sm:$0xf]
      %v782 = vld [vmem:[%s247 + $0x7cc] sm:$0xf]
      %v783 = vld [vmem:[%s247 + $0x7d0] sm:$0xf]
      %v784 = vld [vmem:[%s247 + $0x7d4] sm:$0xf]
      %v785 = vld [vmem:[%s247 + $0x7d8] sm:$0xf]
      %v786 = vld [vmem:[%s247 + $0x7dc] sm:$0xf]
      %v787 = vld [vmem:[%s247 + $0x7e0] sm:$0xf]
      %v788 = vld [vmem:[%s247 + $0x7e4] sm:$0xf]
      %v789 = vld [vmem:[%s247 + $0x7e8] sm:$0xf]
      %v790 = vld [vmem:[%s247 + $0x7ec] sm:$0xf]
      %v791 = vld [vmem:[%s247 + $0x7f0] sm:$0xf]
      %v792 = vld [vmem:[%s247 + $0x7f4] sm:$0xf]
      %v793 = vld [vmem:[%s247 + $0x7f8] sm:$0xf]
      %v794 = vld [vmem:[%s247 + $0x7fc] sm:$0xf]
      %v811 = vunpack.c.l.b16 %v267
      %v812 = vunpack.c.h.b16 %v267
      %v813 = vunpack.c.l.b16 %v268
      %v814 = vunpack.c.h.b16 %v268
      %v815 = vunpack.c.l.b16 %v269
      %v816 = vunpack.c.h.b16 %v269
      %v817 = vunpack.c.l.b16 %v270
      %v818 = vunpack.c.h.b16 %v270
      %v819 = vunpack.c.l.b16 %v271
      %v820 = vunpack.c.h.b16 %v271
      %v821 = vunpack.c.l.b16 %v272
      %v822 = vunpack.c.h.b16 %v272
      %v823 = vunpack.c.l.b16 %v273
      %v824 = vunpack.c.h.b16 %v273
      %v825 = vunpack.c.l.b16 %v274
      %v826 = vunpack.c.h.b16 %v274
      %v827 = vunpack.c.l.b16 %v275
      %v828 = vunpack.c.h.b16 %v275
      %v829 = vunpack.c.l.b16 %v276
      %v830 = vunpack.c.h.b16 %v276
      %v831 = vunpack.c.l.b16 %v277
      %v832 = vunpack.c.h.b16 %v277
      %v833 = vunpack.c.l.b16 %v278
      %v834 = vunpack.c.h.b16 %v278
      %v835 = vunpack.c.l.b16 %v279
      %v836 = vunpack.c.h.b16 %v279
      %v837 = vunpack.c.l.b16 %v280
      %v838 = vunpack.c.h.b16 %v280
      %v839 = vunpack.c.l.b16 %v281
      %v840 = vunpack.c.h.b16 %v281
      %v841 = vunpack.c.l.b16 %v282
      %v842 = vunpack.c.h.b16 %v282
      %v843 = vpack.c.b16 %v811, %v811
      %v844 = vpack.c.b16 %v812, %v812
      %v845 = vpack.c.b16 %v813, %v813
      %v846 = vpack.c.b16 %v814, %v814
      %v847 = vpack.c.b16 %v815, %v815
      %v848 = vpack.c.b16 %v816, %v816
      %v849 = vpack.c.b16 %v817, %v817
      %v850 = vpack.c.b16 %v818, %v818
      %v851 = vpack.c.b16 %v819, %v819
      %v852 = vpack.c.b16 %v820, %v820
      %v853 = vpack.c.b16 %v821, %v821
      %v854 = vpack.c.b16 %v822, %v822
      %v855 = vpack.c.b16 %v823, %v823
      %v856 = vpack.c.b16 %v824, %v824
      %v857 = vpack.c.b16 %v825, %v825
      %v858 = vpack.c.b16 %v826, %v826
      %v859 = vpack.c.b16 %v827, %v827
      %v860 = vpack.c.b16 %v828, %v828
      %v861 = vpack.c.b16 %v829, %v829
      %v862 = vpack.c.b16 %v830, %v830
      %v863 = vpack.c.b16 %v831, %v831
      %v864 = vpack.c.b16 %v832, %v832
      %v865 = vpack.c.b16 %v833, %v833
      %v866 = vpack.c.b16 %v834, %v834
      %v867 = vpack.c.b16 %v835, %v835
      %v868 = vpack.c.b16 %v836, %v836
      %v869 = vpack.c.b16 %v837, %v837
      %v870 = vpack.c.b16 %v838, %v838
      %v871 = vpack.c.b16 %v839, %v839
      %v872 = vpack.c.b16 %v840, %v840
      %v873 = vpack.c.b16 %v841, %v841
      %v874 = vpack.c.b16 %v842, %v842
      %v1419 = vunpack.c.l.b16 %v283
      %v1420 = vunpack.c.l.b16 %v284
      %v1421 = vunpack.c.l.b16 %v285
      %v1422 = vunpack.c.l.b16 %v286
      %v1423 = vunpack.c.l.b16 %v287
      %v1424 = vunpack.c.l.b16 %v288
      %v1425 = vunpack.c.l.b16 %v289
      %v1426 = vunpack.c.l.b16 %v290
      %v1427 = vunpack.c.l.b16 %v291
      %v1428 = vunpack.c.l.b16 %v292
      %v1429 = vunpack.c.l.b16 %v293
      %v1430 = vunpack.c.l.b16 %v294
      %v1431 = vunpack.c.l.b16 %v295
      %v1432 = vunpack.c.l.b16 %v296
      %v1433 = vunpack.c.l.b16 %v297
      %v1434 = vunpack.c.l.b16 %v298
      %v1435 = vunpack.c.l.b16 %v299
      %v1436 = vunpack.c.l.b16 %v300
      %v1437 = vunpack.c.l.b16 %v301
      %v1438 = vunpack.c.l.b16 %v302
      %v1439 = vunpack.c.l.b16 %v303
      %v1440 = vunpack.c.l.b16 %v304
      %v1441 = vunpack.c.l.b16 %v305
      %v1442 = vunpack.c.l.b16 %v306
      %v1443 = vunpack.c.l.b16 %v307
      %v1444 = vunpack.c.l.b16 %v308
      %v1445 = vunpack.c.l.b16 %v309
      %v1446 = vunpack.c.l.b16 %v310
      %v1447 = vunpack.c.l.b16 %v311
      %v1448 = vunpack.c.l.b16 %v312
      %v1449 = vunpack.c.l.b16 %v313
      %v1450 = vunpack.c.l.b16 %v314
      %v1451 = vunpack.c.l.b16 %v315
      %v1452 = vunpack.c.l.b16 %v316
      %v1453 = vunpack.c.l.b16 %v317
      %v1454 = vunpack.c.l.b16 %v318
      %v1455 = vunpack.c.l.b16 %v319
      %v1456 = vunpack.c.l.b16 %v320
      %v1457 = vunpack.c.l.b16 %v321
      %v1458 = vunpack.c.l.b16 %v322
      %v1459 = vunpack.c.l.b16 %v323
      %v1460 = vunpack.c.l.b16 %v324
      %v1461 = vunpack.c.l.b16 %v325
      %v1462 = vunpack.c.l.b16 %v326
      %v1463 = vunpack.c.l.b16 %v327
      %v1464 = vunpack.c.l.b16 %v328
      %v1465 = vunpack.c.l.b16 %v329
      %v1466 = vunpack.c.l.b16 %v330
      %v1467 = vunpack.c.l.b16 %v331
      %v1468 = vunpack.c.l.b16 %v332
      %v1469 = vunpack.c.l.b16 %v333
      %v1470 = vunpack.c.l.b16 %v334
      %v1471 = vunpack.c.l.b16 %v335
      %v1472 = vunpack.c.l.b16 %v336
      %v1473 = vunpack.c.l.b16 %v337
      %v1474 = vunpack.c.l.b16 %v338
      %v1475 = vunpack.c.l.b16 %v339
      %v1476 = vunpack.c.l.b16 %v340
      %v1477 = vunpack.c.l.b16 %v341
      %v1478 = vunpack.c.l.b16 %v342
      %v1479 = vunpack.c.l.b16 %v343
      %v1480 = vunpack.c.l.b16 %v344
      %v1481 = vunpack.c.l.b16 %v345
      %v1482 = vunpack.c.l.b16 %v346
      %v1483 = vunpack.c.l.b16 %v347
      %v1484 = vunpack.c.l.b16 %v348
      %v1485 = vunpack.c.l.b16 %v349
      %v1486 = vunpack.c.l.b16 %v350
      %v1487 = vunpack.c.l.b16 %v351
      %v1488 = vunpack.c.l.b16 %v352
      %v1489 = vunpack.c.l.b16 %v353
      %v1490 = vunpack.c.l.b16 %v354
      %v1491 = vunpack.c.l.b16 %v355
      %v1492 = vunpack.c.l.b16 %v356
      %v1493 = vunpack.c.l.b16 %v357
      %v1494 = vunpack.c.l.b16 %v358
      %v1495 = vunpack.c.l.b16 %v359
      %v1496 = vunpack.c.l.b16 %v360
      %v1497 = vunpack.c.l.b16 %v361
      %v1498 = vunpack.c.l.b16 %v362
      %v1499 = vunpack.c.l.b16 %v363
      %v1500 = vunpack.c.l.b16 %v364
      %v1501 = vunpack.c.l.b16 %v365
      %v1502 = vunpack.c.l.b16 %v366
      %v1503 = vunpack.c.l.b16 %v367
      %v1504 = vunpack.c.l.b16 %v368
      %v1505 = vunpack.c.l.b16 %v369
      %v1506 = vunpack.c.l.b16 %v370
      %v1507 = vunpack.c.l.b16 %v371
      %v1508 = vunpack.c.l.b16 %v372
      %v1509 = vunpack.c.l.b16 %v373
      %v1510 = vunpack.c.l.b16 %v374
      %v1511 = vunpack.c.l.b16 %v375
      %v1512 = vunpack.c.l.b16 %v376
      %v1513 = vunpack.c.l.b16 %v377
      %v1514 = vunpack.c.l.b16 %v378
      %v1515 = vunpack.c.l.b16 %v379
      %v1516 = vunpack.c.l.b16 %v380
      %v1517 = vunpack.c.l.b16 %v381
      %v1518 = vunpack.c.l.b16 %v382
      %v1519 = vunpack.c.l.b16 %v383
      %v1520 = vunpack.c.l.b16 %v384
      %v1521 = vunpack.c.l.b16 %v385
      %v1522 = vunpack.c.l.b16 %v386
      %v1523 = vunpack.c.l.b16 %v387
      %v1524 = vunpack.c.l.b16 %v388
      %v1525 = vunpack.c.l.b16 %v389
      %v1526 = vunpack.c.l.b16 %v390
      %v1527 = vunpack.c.l.b16 %v391
      %v1528 = vunpack.c.l.b16 %v392
      %v1529 = vunpack.c.l.b16 %v393
      %v1530 = vunpack.c.l.b16 %v394
      %v1531 = vunpack.c.l.b16 %v395
      %v1532 = vunpack.c.l.b16 %v396
      %v1533 = vunpack.c.l.b16 %v397
      %v1534 = vunpack.c.l.b16 %v398
      %v1535 = vunpack.c.l.b16 %v399
      %v1536 = vunpack.c.l.b16 %v400
      %v1537 = vunpack.c.l.b16 %v401
      %v1538 = vunpack.c.l.b16 %v402
      %v1539 = vunpack.c.l.b16 %v403
      %v1540 = vunpack.c.l.b16 %v404
      %v1541 = vunpack.c.l.b16 %v405
      %v1542 = vunpack.c.l.b16 %v406
      %v1543 = vunpack.c.l.b16 %v407
      %v1544 = vunpack.c.l.b16 %v408
      %v1545 = vunpack.c.l.b16 %v409
      %v1546 = vunpack.c.l.b16 %v410
      %v1547 = vunpack.c.l.b16 %v411
      %v1548 = vunpack.c.l.b16 %v412
      %v1549 = vunpack.c.l.b16 %v413
      %v1550 = vunpack.c.l.b16 %v414
      %v1551 = vunpack.c.l.b16 %v415
      %v1552 = vunpack.c.l.b16 %v416
      %v1553 = vunpack.c.l.b16 %v417
      %v1554 = vunpack.c.l.b16 %v418
      %v1555 = vunpack.c.l.b16 %v419
      %v1556 = vunpack.c.l.b16 %v420
      %v1557 = vunpack.c.l.b16 %v421
      %v1558 = vunpack.c.l.b16 %v422
      %v1559 = vunpack.c.l.b16 %v423
      %v1560 = vunpack.c.l.b16 %v424
      %v1561 = vunpack.c.l.b16 %v425
      %v1562 = vunpack.c.l.b16 %v426
      %v1563 = vunpack.c.l.b16 %v427
      %v1564 = vunpack.c.l.b16 %v428
      %v1565 = vunpack.c.l.b16 %v429
      %v1566 = vunpack.c.l.b16 %v430
      %v1567 = vunpack.c.l.b16 %v431
      %v1568 = vunpack.c.l.b16 %v432
      %v1569 = vunpack.c.l.b16 %v433
      %v1570 = vunpack.c.l.b16 %v434
      %v1571 = vunpack.c.l.b16 %v435
      %v1572 = vunpack.c.l.b16 %v436
      %v1573 = vunpack.c.l.b16 %v437
      %v1574 = vunpack.c.l.b16 %v438
      %v1575 = vunpack.c.l.b16 %v439
      %v1576 = vunpack.c.l.b16 %v440
      %v1577 = vunpack.c.l.b16 %v441
      %v1578 = vunpack.c.l.b16 %v442
      %v1579 = vunpack.c.l.b16 %v443
      %v1580 = vunpack.c.l.b16 %v444
      %v1581 = vunpack.c.l.b16 %v445
      %v1582 = vunpack.c.l.b16 %v446
      %v1583 = vunpack.c.l.b16 %v447
      %v1584 = vunpack.c.l.b16 %v448
      %v1585 = vunpack.c.l.b16 %v449
      %v1586 = vunpack.c.l.b16 %v450
      %v1587 = vunpack.c.l.b16 %v451
      %v1588 = vunpack.c.l.b16 %v452
      %v1589 = vunpack.c.l.b16 %v453
      %v1590 = vunpack.c.l.b16 %v454
      %v1591 = vunpack.c.l.b16 %v455
      %v1592 = vunpack.c.l.b16 %v456
      %v1593 = vunpack.c.l.b16 %v457
      %v1594 = vunpack.c.l.b16 %v458
      %v1595 = vunpack.c.l.b16 %v459
      %v1596 = vunpack.c.l.b16 %v460
      %v1597 = vunpack.c.l.b16 %v461
      %v1598 = vunpack.c.l.b16 %v462
      %v1599 = vunpack.c.l.b16 %v463
      %v1600 = vunpack.c.l.b16 %v464
      %v1601 = vunpack.c.l.b16 %v465
      %v1602 = vunpack.c.l.b16 %v466
      %v1603 = vunpack.c.l.b16 %v467
      %v1604 = vunpack.c.l.b16 %v468
      %v1605 = vunpack.c.l.b16 %v469
      %v1606 = vunpack.c.l.b16 %v470
      %v1607 = vunpack.c.l.b16 %v471
      %v1608 = vunpack.c.l.b16 %v472
      %v1609 = vunpack.c.l.b16 %v473
      %v1610 = vunpack.c.l.b16 %v474
      %v1611 = vunpack.c.l.b16 %v475
      %v1612 = vunpack.c.l.b16 %v476
      %v1613 = vunpack.c.l.b16 %v477
      %v1614 = vunpack.c.l.b16 %v478
      %v1615 = vunpack.c.l.b16 %v479
      %v1616 = vunpack.c.l.b16 %v480
      %v1617 = vunpack.c.l.b16 %v481
      %v1618 = vunpack.c.l.b16 %v482
      %v1619 = vunpack.c.l.b16 %v483
      %v1620 = vunpack.c.l.b16 %v484
      %v1621 = vunpack.c.l.b16 %v485
      %v1622 = vunpack.c.l.b16 %v486
      %v1623 = vunpack.c.l.b16 %v487
      %v1624 = vunpack.c.l.b16 %v488
      %v1625 = vunpack.c.l.b16 %v489
      %v1626 = vunpack.c.l.b16 %v490
      %v1627 = vunpack.c.l.b16 %v491
      %v1628 = vunpack.c.l.b16 %v492
      %v1629 = vunpack.c.l.b16 %v493
      %v1630 = vunpack.c.l.b16 %v494
      %v1631 = vunpack.c.l.b16 %v495
      %v1632 = vunpack.c.l.b16 %v496
      %v1633 = vunpack.c.l.b16 %v497
      %v1634 = vunpack.c.l.b16 %v498
      %v1635 = vunpack.c.l.b16 %v499
      %v1636 = vunpack.c.l.b16 %v500
      %v1637 = vunpack.c.l.b16 %v501
      %v1638 = vunpack.c.l.b16 %v502
      %v1639 = vunpack.c.l.b16 %v503
      %v1640 = vunpack.c.l.b16 %v504
      %v1641 = vunpack.c.l.b16 %v505
      %v1642 = vunpack.c.l.b16 %v506
      %v1643 = vunpack.c.l.b16 %v507
      %v1644 = vunpack.c.l.b16 %v508
      %v1645 = vunpack.c.l.b16 %v509
      %v1646 = vunpack.c.l.b16 %v510
      %v1647 = vunpack.c.l.b16 %v511
      %v1648 = vunpack.c.l.b16 %v512
      %v1649 = vunpack.c.l.b16 %v513
      %v1650 = vunpack.c.l.b16 %v514
      %v1651 = vunpack.c.l.b16 %v515
      %v1652 = vunpack.c.l.b16 %v516
      %v1653 = vunpack.c.l.b16 %v517
      %v1654 = vunpack.c.l.b16 %v518
      %v1655 = vunpack.c.l.b16 %v519
      %v1656 = vunpack.c.l.b16 %v520
      %v1657 = vunpack.c.l.b16 %v521
      %v1658 = vunpack.c.l.b16 %v522
      %v1659 = vunpack.c.l.b16 %v523
      %v1660 = vunpack.c.l.b16 %v524
      %v1661 = vunpack.c.l.b16 %v525
      %v1662 = vunpack.c.l.b16 %v526
      %v1663 = vunpack.c.l.b16 %v527
      %v1664 = vunpack.c.l.b16 %v528
      %v1665 = vunpack.c.l.b16 %v529
      %v1666 = vunpack.c.l.b16 %v530
      %v1667 = vunpack.c.l.b16 %v531
      %v1668 = vunpack.c.l.b16 %v532
      %v1669 = vunpack.c.l.b16 %v533
      %v1670 = vunpack.c.l.b16 %v534
      %v1671 = vunpack.c.l.b16 %v535
      %v1672 = vunpack.c.l.b16 %v536
      %v1673 = vunpack.c.l.b16 %v537
      %v1674 = vunpack.c.l.b16 %v538
      %v1675 = vunpack.c.l.b16 %v539
      %v1676 = vunpack.c.l.b16 %v540
      %v1677 = vunpack.c.l.b16 %v541
      %v1678 = vunpack.c.l.b16 %v542
      %v1679 = vunpack.c.l.b16 %v543
      %v1680 = vunpack.c.l.b16 %v544
      %v1681 = vunpack.c.l.b16 %v545
      %v1682 = vunpack.c.l.b16 %v546
      %v1683 = vunpack.c.l.b16 %v547
      %v1684 = vunpack.c.l.b16 %v548
      %v1685 = vunpack.c.l.b16 %v549
      %v1686 = vunpack.c.l.b16 %v550
      %v1687 = vunpack.c.l.b16 %v551
      %v1688 = vunpack.c.l.b16 %v552
      %v1689 = vunpack.c.l.b16 %v553
      %v1690 = vunpack.c.l.b16 %v554
      %v1691 = vunpack.c.l.b16 %v555
      %v1692 = vunpack.c.l.b16 %v556
      %v1693 = vunpack.c.l.b16 %v557
      %v1694 = vunpack.c.l.b16 %v558
      %v1695 = vunpack.c.l.b16 %v559
      %v1696 = vunpack.c.l.b16 %v560
      %v1697 = vunpack.c.l.b16 %v561
      %v1698 = vunpack.c.l.b16 %v562
      %v1699 = vunpack.c.l.b16 %v563
      %v1700 = vunpack.c.l.b16 %v564
      %v1701 = vunpack.c.l.b16 %v565
      %v1702 = vunpack.c.l.b16 %v566
      %v1703 = vunpack.c.l.b16 %v567
      %v1704 = vunpack.c.l.b16 %v568
      %v1705 = vunpack.c.l.b16 %v569
      %v1706 = vunpack.c.l.b16 %v570
      %v1707 = vunpack.c.l.b16 %v571
      %v1708 = vunpack.c.l.b16 %v572
      %v1709 = vunpack.c.l.b16 %v573
      %v1710 = vunpack.c.l.b16 %v574
      %v1711 = vunpack.c.l.b16 %v575
      %v1712 = vunpack.c.l.b16 %v576
      %v1713 = vunpack.c.l.b16 %v577
      %v1714 = vunpack.c.l.b16 %v578
      %v1715 = vunpack.c.l.b16 %v579
      %v1716 = vunpack.c.l.b16 %v580
      %v1717 = vunpack.c.l.b16 %v581
      %v1718 = vunpack.c.l.b16 %v582
      %v1719 = vunpack.c.l.b16 %v583
      %v1720 = vunpack.c.l.b16 %v584
      %v1721 = vunpack.c.l.b16 %v585
      %v1722 = vunpack.c.l.b16 %v586
      %v1723 = vunpack.c.l.b16 %v587
      %v1724 = vunpack.c.l.b16 %v588
      %v1725 = vunpack.c.l.b16 %v589
      %v1726 = vunpack.c.l.b16 %v590
      %v1727 = vunpack.c.l.b16 %v591
      %v1728 = vunpack.c.l.b16 %v592
      %v1729 = vunpack.c.l.b16 %v593
      %v1730 = vunpack.c.l.b16 %v594
      %v1731 = vunpack.c.l.b16 %v595
      %v1732 = vunpack.c.l.b16 %v596
      %v1733 = vunpack.c.l.b16 %v597
      %v1734 = vunpack.c.l.b16 %v598
      %v1735 = vunpack.c.l.b16 %v599
      %v1736 = vunpack.c.l.b16 %v600
      %v1737 = vunpack.c.l.b16 %v601
      %v1738 = vunpack.c.l.b16 %v602
      %v1739 = vunpack.c.l.b16 %v603
      %v1740 = vunpack.c.l.b16 %v604
      %v1741 = vunpack.c.l.b16 %v605
      %v1742 = vunpack.c.l.b16 %v606
      %v1743 = vunpack.c.l.b16 %v607
      %v1744 = vunpack.c.l.b16 %v608
      %v1745 = vunpack.c.l.b16 %v609
      %v1746 = vunpack.c.l.b16 %v610
      %v1747 = vunpack.c.l.b16 %v611
      %v1748 = vunpack.c.l.b16 %v612
      %v1749 = vunpack.c.l.b16 %v613
      %v1750 = vunpack.c.l.b16 %v614
      %v1751 = vunpack.c.l.b16 %v615
      %v1752 = vunpack.c.l.b16 %v616
      %v1753 = vunpack.c.l.b16 %v617
      %v1754 = vunpack.c.l.b16 %v618
      %v1755 = vunpack.c.l.b16 %v619
      %v1756 = vunpack.c.l.b16 %v620
      %v1757 = vunpack.c.l.b16 %v621
      %v1758 = vunpack.c.l.b16 %v622
      %v1759 = vunpack.c.l.b16 %v623
      %v1760 = vunpack.c.l.b16 %v624
      %v1761 = vunpack.c.l.b16 %v625
      %v1762 = vunpack.c.l.b16 %v626
      %v1763 = vunpack.c.l.b16 %v627
      %v1764 = vunpack.c.l.b16 %v628
      %v1765 = vunpack.c.l.b16 %v629
      %v1766 = vunpack.c.l.b16 %v630
      %v1767 = vunpack.c.l.b16 %v631
      %v1768 = vunpack.c.l.b16 %v632
      %v1769 = vunpack.c.l.b16 %v633
      %v1770 = vunpack.c.l.b16 %v634
      %v1771 = vunpack.c.l.b16 %v635
      %v1772 = vunpack.c.l.b16 %v636
      %v1773 = vunpack.c.l.b16 %v637
      %v1774 = vunpack.c.l.b16 %v638
      %v1775 = vunpack.c.l.b16 %v639
      %v1776 = vunpack.c.l.b16 %v640
      %v1777 = vunpack.c.l.b16 %v641
      %v1778 = vunpack.c.l.b16 %v642
      %v1779 = vunpack.c.l.b16 %v643
      %v1780 = vunpack.c.l.b16 %v644
      %v1781 = vunpack.c.l.b16 %v645
      %v1782 = vunpack.c.l.b16 %v646
      %v1783 = vunpack.c.l.b16 %v647
      %v1784 = vunpack.c.l.b16 %v648
      %v1785 = vunpack.c.l.b16 %v649
      %v1786 = vunpack.c.l.b16 %v650
      %v1787 = vunpack.c.l.b16 %v651
      %v1788 = vunpack.c.l.b16 %v652
      %v1789 = vunpack.c.l.b16 %v653
      %v1790 = vunpack.c.l.b16 %v654
      %v1791 = vunpack.c.l.b16 %v655
      %v1792 = vunpack.c.l.b16 %v656
      %v1793 = vunpack.c.l.b16 %v657
      %v1794 = vunpack.c.l.b16 %v658
      %v1795 = vunpack.c.l.b16 %v659
      %v1796 = vunpack.c.l.b16 %v660
      %v1797 = vunpack.c.l.b16 %v661
      %v1798 = vunpack.c.l.b16 %v662
      %v1799 = vunpack.c.l.b16 %v663
      %v1800 = vunpack.c.l.b16 %v664
      %v1801 = vunpack.c.l.b16 %v665
      %v1802 = vunpack.c.l.b16 %v666
      %v1803 = vunpack.c.l.b16 %v667
      %v1804 = vunpack.c.l.b16 %v668
      %v1805 = vunpack.c.l.b16 %v669
      %v1806 = vunpack.c.l.b16 %v670
      %v1807 = vunpack.c.l.b16 %v671
      %v1808 = vunpack.c.l.b16 %v672
      %v1809 = vunpack.c.l.b16 %v673
      %v1810 = vunpack.c.l.b16 %v674
      %v1811 = vunpack.c.l.b16 %v675
      %v1812 = vunpack.c.l.b16 %v676
      %v1813 = vunpack.c.l.b16 %v677
      %v1814 = vunpack.c.l.b16 %v678
      %v1815 = vunpack.c.l.b16 %v679
      %v1816 = vunpack.c.l.b16 %v680
      %v1817 = vunpack.c.l.b16 %v681
      %v1818 = vunpack.c.l.b16 %v682
      %v1819 = vunpack.c.l.b16 %v683
      %v1820 = vunpack.c.l.b16 %v684
      %v1821 = vunpack.c.l.b16 %v685
      %v1822 = vunpack.c.l.b16 %v686
      %v1823 = vunpack.c.l.b16 %v687
      %v1824 = vunpack.c.l.b16 %v688
      %v1825 = vunpack.c.l.b16 %v689
      %v1826 = vunpack.c.l.b16 %v690
      %v1827 = vunpack.c.l.b16 %v691
      %v1828 = vunpack.c.l.b16 %v692
      %v1829 = vunpack.c.l.b16 %v693
      %v1830 = vunpack.c.l.b16 %v694
      %v1831 = vunpack.c.l.b16 %v695
      %v1832 = vunpack.c.l.b16 %v696
      %v1833 = vunpack.c.l.b16 %v697
      %v1834 = vunpack.c.l.b16 %v698
      %v1835 = vunpack.c.l.b16 %v699
      %v1836 = vunpack.c.l.b16 %v700
      %v1837 = vunpack.c.l.b16 %v701
      %v1838 = vunpack.c.l.b16 %v702
      %v1839 = vunpack.c.l.b16 %v703
      %v1840 = vunpack.c.l.b16 %v704
      %v1841 = vunpack.c.l.b16 %v705
      %v1842 = vunpack.c.l.b16 %v706
      %v1843 = vunpack.c.l.b16 %v707
      %v1844 = vunpack.c.l.b16 %v708
      %v1845 = vunpack.c.l.b16 %v709
      %v1846 = vunpack.c.l.b16 %v710
      %v1847 = vunpack.c.l.b16 %v711
      %v1848 = vunpack.c.l.b16 %v712
      %v1849 = vunpack.c.l.b16 %v713
      %v1850 = vunpack.c.l.b16 %v714
      %v1851 = vunpack.c.l.b16 %v715
      %v1852 = vunpack.c.l.b16 %v716
      %v1853 = vunpack.c.l.b16 %v717
      %v1854 = vunpack.c.l.b16 %v718
      %v1855 = vunpack.c.l.b16 %v719
      %v1856 = vunpack.c.l.b16 %v720
      %v1857 = vunpack.c.l.b16 %v721
      %v1858 = vunpack.c.l.b16 %v722
      %v1859 = vunpack.c.l.b16 %v723
      %v1860 = vunpack.c.l.b16 %v724
      %v1861 = vunpack.c.l.b16 %v725
      %v1862 = vunpack.c.l.b16 %v726
      %v1863 = vunpack.c.l.b16 %v727
      %v1864 = vunpack.c.l.b16 %v728
      %v1865 = vunpack.c.l.b16 %v729
      %v1866 = vunpack.c.l.b16 %v730
      %v1867 = vunpack.c.l.b16 %v731
      %v1868 = vunpack.c.l.b16 %v732
      %v1869 = vunpack.c.l.b16 %v733
      %v1870 = vunpack.c.l.b16 %v734
      %v1871 = vunpack.c.l.b16 %v735
      %v1872 = vunpack.c.l.b16 %v736
      %v1873 = vunpack.c.l.b16 %v737
      %v1874 = vunpack.c.l.b16 %v738
      %v1875 = vunpack.c.l.b16 %v739
      %v1876 = vunpack.c.l.b16 %v740
      %v1877 = vunpack.c.l.b16 %v741
      %v1878 = vunpack.c.l.b16 %v742
      %v1879 = vunpack.c.l.b16 %v743
      %v1880 = vunpack.c.l.b16 %v744
      %v1881 = vunpack.c.l.b16 %v745
      %v1882 = vunpack.c.l.b16 %v746
      %v1883 = vunpack.c.l.b16 %v747
      %v1884 = vunpack.c.l.b16 %v748
      %v1885 = vunpack.c.l.b16 %v749
      %v1886 = vunpack.c.l.b16 %v750
      %v1887 = vunpack.c.l.b16 %v751
      %v1888 = vunpack.c.l.b16 %v752
      %v1889 = vunpack.c.l.b16 %v753
      %v1890 = vunpack.c.l.b16 %v754
      %v1891 = vunpack.c.l.b16 %v755
      %v1892 = vunpack.c.l.b16 %v756
      %v1893 = vunpack.c.l.b16 %v757
      %v1894 = vunpack.c.l.b16 %v758
      %v1895 = vunpack.c.l.b16 %v759
      %v1896 = vunpack.c.l.b16 %v760
      %v1897 = vunpack.c.l.b16 %v761
      %v1898 = vunpack.c.l.b16 %v762
      %v1899 = vunpack.c.l.b16 %v763
      %v1900 = vunpack.c.l.b16 %v764
      %v1901 = vunpack.c.l.b16 %v765
      %v1902 = vunpack.c.l.b16 %v766
      %v1903 = vunpack.c.l.b16 %v767
      %v1904 = vunpack.c.l.b16 %v768
      %v1905 = vunpack.c.l.b16 %v769
      %v1906 = vunpack.c.l.b16 %v770
      %v1907 = vunpack.c.l.b16 %v771
      %v1908 = vunpack.c.l.b16 %v772
      %v1909 = vunpack.c.l.b16 %v773
      %v1910 = vunpack.c.l.b16 %v774
      %v1911 = vunpack.c.l.b16 %v775
      %v1912 = vunpack.c.l.b16 %v776
      %v1913 = vunpack.c.l.b16 %v777
      %v1914 = vunpack.c.l.b16 %v778
      %v1915 = vunpack.c.l.b16 %v779
      %v1916 = vunpack.c.l.b16 %v780
      %v1917 = vunpack.c.l.b16 %v781
      %v1918 = vunpack.c.l.b16 %v782
      %v1919 = vunpack.c.l.b16 %v783
      %v1920 = vunpack.c.l.b16 %v784
      %v1921 = vunpack.c.l.b16 %v785
      %v1922 = vunpack.c.l.b16 %v786
      %v1923 = vunpack.c.l.b16 %v787
      %v1924 = vunpack.c.l.b16 %v788
      %v1925 = vunpack.c.l.b16 %v789
      %v1926 = vunpack.c.l.b16 %v790
      %v1927 = vunpack.c.l.b16 %v791
      %v1928 = vunpack.c.l.b16 %v792
      %v1929 = vunpack.c.l.b16 %v793
      %v1930 = vunpack.c.l.b16 %v794
      %v1931 = vpack.c.b16 %v1420, %v1419
      %v1932 = vpack.c.b16 %v1422, %v1421
      %v1933 = vpack.c.b16 %v1424, %v1423
      %v1934 = vpack.c.b16 %v1426, %v1425
      %v1935 = vpack.c.b16 %v1428, %v1427
      %v1936 = vpack.c.b16 %v1430, %v1429
      %v1937 = vpack.c.b16 %v1432, %v1431
      %v1938 = vpack.c.b16 %v1434, %v1433
      %v1939 = vpack.c.b16 %v1436, %v1435
      %v1940 = vpack.c.b16 %v1438, %v1437
      %v1941 = vpack.c.b16 %v1440, %v1439
      %v1942 = vpack.c.b16 %v1442, %v1441
      %v1943 = vpack.c.b16 %v1444, %v1443
      %v1944 = vpack.c.b16 %v1446, %v1445
      %v1945 = vpack.c.b16 %v1448, %v1447
      %v1946 = vpack.c.b16 %v1450, %v1449
      %v1947 = vpack.c.b16 %v1452, %v1451
      %v1948 = vpack.c.b16 %v1454, %v1453
      %v1949 = vpack.c.b16 %v1456, %v1455
      %v1950 = vpack.c.b16 %v1458, %v1457
      %v1951 = vpack.c.b16 %v1460, %v1459
      %v1952 = vpack.c.b16 %v1462, %v1461
      %v1953 = vpack.c.b16 %v1464, %v1463
      %v1954 = vpack.c.b16 %v1466, %v1465
      %v1955 = vpack.c.b16 %v1468, %v1467
      %v1956 = vpack.c.b16 %v1470, %v1469
      %v1957 = vpack.c.b16 %v1472, %v1471
      %v1958 = vpack.c.b16 %v1474, %v1473
      %v1959 = vpack.c.b16 %v1476, %v1475
      %v1960 = vpack.c.b16 %v1478, %v1477
      %v1961 = vpack.c.b16 %v1480, %v1479
      %v1962 = vpack.c.b16 %v1482, %v1481
      %v1963 = vpack.c.b16 %v1484, %v1483
      %v1964 = vpack.c.b16 %v1486, %v1485
      %v1965 = vpack.c.b16 %v1488, %v1487
      %v1966 = vpack.c.b16 %v1490, %v1489
      %v1967 = vpack.c.b16 %v1492, %v1491
      %v1968 = vpack.c.b16 %v1494, %v1493
      %v1969 = vpack.c.b16 %v1496, %v1495
      %v1970 = vpack.c.b16 %v1498, %v1497
      %v1971 = vpack.c.b16 %v1500, %v1499
      %v1972 = vpack.c.b16 %v1502, %v1501
      %v1973 = vpack.c.b16 %v1504, %v1503
      %v1974 = vpack.c.b16 %v1506, %v1505
      %v1975 = vpack.c.b16 %v1508, %v1507
      %v1976 = vpack.c.b16 %v1510, %v1509
      %v1977 = vpack.c.b16 %v1512, %v1511
      %v1978 = vpack.c.b16 %v1514, %v1513
      %v1979 = vpack.c.b16 %v1516, %v1515
      %v1980 = vpack.c.b16 %v1518, %v1517
      %v1981 = vpack.c.b16 %v1520, %v1519
      %v1982 = vpack.c.b16 %v1522, %v1521
      %v1983 = vpack.c.b16 %v1524, %v1523
      %v1984 = vpack.c.b16 %v1526, %v1525
      %v1985 = vpack.c.b16 %v1528, %v1527
      %v1986 = vpack.c.b16 %v1530, %v1529
      %v1987 = vpack.c.b16 %v1532, %v1531
      %v1988 = vpack.c.b16 %v1534, %v1533
      %v1989 = vpack.c.b16 %v1536, %v1535
      %v1990 = vpack.c.b16 %v1538, %v1537
      %v1991 = vpack.c.b16 %v1540, %v1539
      %v1992 = vpack.c.b16 %v1542, %v1541
      %v1993 = vpack.c.b16 %v1544, %v1543
      %v1994 = vpack.c.b16 %v1546, %v1545
      %v1995 = vpack.c.b16 %v1548, %v1547
      %v1996 = vpack.c.b16 %v1550, %v1549
      %v1997 = vpack.c.b16 %v1552, %v1551
      %v1998 = vpack.c.b16 %v1554, %v1553
      %v1999 = vpack.c.b16 %v1556, %v1555
      %v2000 = vpack.c.b16 %v1558, %v1557
      %v2001 = vpack.c.b16 %v1560, %v1559
      %v2002 = vpack.c.b16 %v1562, %v1561
      %v2003 = vpack.c.b16 %v1564, %v1563
      %v2004 = vpack.c.b16 %v1566, %v1565
      %v2005 = vpack.c.b16 %v1568, %v1567
      %v2006 = vpack.c.b16 %v1570, %v1569
      %v2007 = vpack.c.b16 %v1572, %v1571
      %v2008 = vpack.c.b16 %v1574, %v1573
      %v2009 = vpack.c.b16 %v1576, %v1575
      %v2010 = vpack.c.b16 %v1578, %v1577
      %v2011 = vpack.c.b16 %v1580, %v1579
      %v2012 = vpack.c.b16 %v1582, %v1581
      %v2013 = vpack.c.b16 %v1584, %v1583
      %v2014 = vpack.c.b16 %v1586, %v1585
      %v2015 = vpack.c.b16 %v1588, %v1587
      %v2016 = vpack.c.b16 %v1590, %v1589
      %v2017 = vpack.c.b16 %v1592, %v1591
      %v2018 = vpack.c.b16 %v1594, %v1593
      %v2019 = vpack.c.b16 %v1596, %v1595
      %v2020 = vpack.c.b16 %v1598, %v1597
      %v2021 = vpack.c.b16 %v1600, %v1599
      %v2022 = vpack.c.b16 %v1602, %v1601
      %v2023 = vpack.c.b16 %v1604, %v1603
      %v2024 = vpack.c.b16 %v1606, %v1605
      %v2025 = vpack.c.b16 %v1608, %v1607
      %v2026 = vpack.c.b16 %v1610, %v1609
      %v2027 = vpack.c.b16 %v1612, %v1611
      %v2028 = vpack.c.b16 %v1614, %v1613
      %v2029 = vpack.c.b16 %v1616, %v1615
      %v2030 = vpack.c.b16 %v1618, %v1617
      %v2031 = vpack.c.b16 %v1620, %v1619
      %v2032 = vpack.c.b16 %v1622, %v1621
      %v2033 = vpack.c.b16 %v1624, %v1623
      %v2034 = vpack.c.b16 %v1626, %v1625
      %v2035 = vpack.c.b16 %v1628, %v1627
      %v2036 = vpack.c.b16 %v1630, %v1629
      %v2037 = vpack.c.b16 %v1632, %v1631
      %v2038 = vpack.c.b16 %v1634, %v1633
      %v2039 = vpack.c.b16 %v1636, %v1635
      %v2040 = vpack.c.b16 %v1638, %v1637
      %v2041 = vpack.c.b16 %v1640, %v1639
      %v2042 = vpack.c.b16 %v1642, %v1641
      %v2043 = vpack.c.b16 %v1644, %v1643
      %v2044 = vpack.c.b16 %v1646, %v1645
      %v2045 = vpack.c.b16 %v1648, %v1647
      %v2046 = vpack.c.b16 %v1650, %v1649
      %v2047 = vpack.c.b16 %v1652, %v1651
      %v2048 = vpack.c.b16 %v1654, %v1653
      %v2049 = vpack.c.b16 %v1656, %v1655
      %v2050 = vpack.c.b16 %v1658, %v1657
      %v2051 = vpack.c.b16 %v1660, %v1659
      %v2052 = vpack.c.b16 %v1662, %v1661
      %v2053 = vpack.c.b16 %v1664, %v1663
      %v2054 = vpack.c.b16 %v1666, %v1665
      %v2055 = vpack.c.b16 %v1668, %v1667
      %v2056 = vpack.c.b16 %v1670, %v1669
      %v2057 = vpack.c.b16 %v1672, %v1671
      %v2058 = vpack.c.b16 %v1674, %v1673
      %v2059 = vpack.c.b16 %v1676, %v1675
      %v2060 = vpack.c.b16 %v1678, %v1677
      %v2061 = vpack.c.b16 %v1680, %v1679
      %v2062 = vpack.c.b16 %v1682, %v1681
      %v2063 = vpack.c.b16 %v1684, %v1683
      %v2064 = vpack.c.b16 %v1686, %v1685
      %v2065 = vpack.c.b16 %v1688, %v1687
      %v2066 = vpack.c.b16 %v1690, %v1689
      %v2067 = vpack.c.b16 %v1692, %v1691
      %v2068 = vpack.c.b16 %v1694, %v1693
      %v2069 = vpack.c.b16 %v1696, %v1695
      %v2070 = vpack.c.b16 %v1698, %v1697
      %v2071 = vpack.c.b16 %v1700, %v1699
      %v2072 = vpack.c.b16 %v1702, %v1701
      %v2073 = vpack.c.b16 %v1704, %v1703
      %v2074 = vpack.c.b16 %v1706, %v1705
      %v2075 = vpack.c.b16 %v1708, %v1707
      %v2076 = vpack.c.b16 %v1710, %v1709
      %v2077 = vpack.c.b16 %v1712, %v1711
      %v2078 = vpack.c.b16 %v1714, %v1713
      %v2079 = vpack.c.b16 %v1716, %v1715
      %v2080 = vpack.c.b16 %v1718, %v1717
      %v2081 = vpack.c.b16 %v1720, %v1719
      %v2082 = vpack.c.b16 %v1722, %v1721
      %v2083 = vpack.c.b16 %v1724, %v1723
      %v2084 = vpack.c.b16 %v1726, %v1725
      %v2085 = vpack.c.b16 %v1728, %v1727
      %v2086 = vpack.c.b16 %v1730, %v1729
      %v2087 = vpack.c.b16 %v1732, %v1731
      %v2088 = vpack.c.b16 %v1734, %v1733
      %v2089 = vpack.c.b16 %v1736, %v1735
      %v2090 = vpack.c.b16 %v1738, %v1737
      %v2091 = vpack.c.b16 %v1740, %v1739
      %v2092 = vpack.c.b16 %v1742, %v1741
      %v2093 = vpack.c.b16 %v1744, %v1743
      %v2094 = vpack.c.b16 %v1746, %v1745
      %v2095 = vpack.c.b16 %v1748, %v1747
      %v2096 = vpack.c.b16 %v1750, %v1749
      %v2097 = vpack.c.b16 %v1752, %v1751
      %v2098 = vpack.c.b16 %v1754, %v1753
      %v2099 = vpack.c.b16 %v1756, %v1755
      %v2100 = vpack.c.b16 %v1758, %v1757
      %v2101 = vpack.c.b16 %v1760, %v1759
      %v2102 = vpack.c.b16 %v1762, %v1761
      %v2103 = vpack.c.b16 %v1764, %v1763
      %v2104 = vpack.c.b16 %v1766, %v1765
      %v2105 = vpack.c.b16 %v1768, %v1767
      %v2106 = vpack.c.b16 %v1770, %v1769
      %v2107 = vpack.c.b16 %v1772, %v1771
      %v2108 = vpack.c.b16 %v1774, %v1773
      %v2109 = vpack.c.b16 %v1776, %v1775
      %v2110 = vpack.c.b16 %v1778, %v1777
      %v2111 = vpack.c.b16 %v1780, %v1779
      %v2112 = vpack.c.b16 %v1782, %v1781
      %v2113 = vpack.c.b16 %v1784, %v1783
      %v2114 = vpack.c.b16 %v1786, %v1785
      %v2115 = vpack.c.b16 %v1788, %v1787
      %v2116 = vpack.c.b16 %v1790, %v1789
      %v2117 = vpack.c.b16 %v1792, %v1791
      %v2118 = vpack.c.b16 %v1794, %v1793
      %v2119 = vpack.c.b16 %v1796, %v1795
      %v2120 = vpack.c.b16 %v1798, %v1797
      %v2121 = vpack.c.b16 %v1800, %v1799
      %v2122 = vpack.c.b16 %v1802, %v1801
      %v2123 = vpack.c.b16 %v1804, %v1803
      %v2124 = vpack.c.b16 %v1806, %v1805
      %v2125 = vpack.c.b16 %v1808, %v1807
      %v2126 = vpack.c.b16 %v1810, %v1809
      %v2127 = vpack.c.b16 %v1812, %v1811
      %v2128 = vpack.c.b16 %v1814, %v1813
      %v2129 = vpack.c.b16 %v1816, %v1815
      %v2130 = vpack.c.b16 %v1818, %v1817
      %v2131 = vpack.c.b16 %v1820, %v1819
      %v2132 = vpack.c.b16 %v1822, %v1821
      %v2133 = vpack.c.b16 %v1824, %v1823
      %v2134 = vpack.c.b16 %v1826, %v1825
      %v2135 = vpack.c.b16 %v1828, %v1827
      %v2136 = vpack.c.b16 %v1830, %v1829
      %v2137 = vpack.c.b16 %v1832, %v1831
      %v2138 = vpack.c.b16 %v1834, %v1833
      %v2139 = vpack.c.b16 %v1836, %v1835
      %v2140 = vpack.c.b16 %v1838, %v1837
      %v2141 = vpack.c.b16 %v1840, %v1839
      %v2142 = vpack.c.b16 %v1842, %v1841
      %v2143 = vpack.c.b16 %v1844, %v1843
      %v2144 = vpack.c.b16 %v1846, %v1845
      %v2145 = vpack.c.b16 %v1848, %v1847
      %v2146 = vpack.c.b16 %v1850, %v1849
      %v2147 = vpack.c.b16 %v1852, %v1851
      %v2148 = vpack.c.b16 %v1854, %v1853
      %v2149 = vpack.c.b16 %v1856, %v1855
      %v2150 = vpack.c.b16 %v1858, %v1857
      %v2151 = vpack.c.b16 %v1860, %v1859
      %v2152 = vpack.c.b16 %v1862, %v1861
      %v2153 = vpack.c.b16 %v1864, %v1863
      %v2154 = vpack.c.b16 %v1866, %v1865
      %v2155 = vpack.c.b16 %v1868, %v1867
      %v2156 = vpack.c.b16 %v1870, %v1869
      %v2157 = vpack.c.b16 %v1872, %v1871
      %v2158 = vpack.c.b16 %v1874, %v1873
      %v2159 = vpack.c.b16 %v1876, %v1875
      %v2160 = vpack.c.b16 %v1878, %v1877
      %v2161 = vpack.c.b16 %v1880, %v1879
      %v2162 = vpack.c.b16 %v1882, %v1881
      %v2163 = vpack.c.b16 %v1884, %v1883
      %v2164 = vpack.c.b16 %v1886, %v1885
      %v2165 = vpack.c.b16 %v1888, %v1887
      %v2166 = vpack.c.b16 %v1890, %v1889
      %v2167 = vpack.c.b16 %v1892, %v1891
      %v2168 = vpack.c.b16 %v1894, %v1893
      %v2169 = vpack.c.b16 %v1896, %v1895
      %v2170 = vpack.c.b16 %v1898, %v1897
      %v2171 = vpack.c.b16 %v1900, %v1899
      %v2172 = vpack.c.b16 %v1902, %v1901
      %v2173 = vpack.c.b16 %v1904, %v1903
      %v2174 = vpack.c.b16 %v1906, %v1905
      %v2175 = vpack.c.b16 %v1908, %v1907
      %v2176 = vpack.c.b16 %v1910, %v1909
      %v2177 = vpack.c.b16 %v1912, %v1911
      %v2178 = vpack.c.b16 %v1914, %v1913
      %v2179 = vpack.c.b16 %v1916, %v1915
      %v2180 = vpack.c.b16 %v1918, %v1917
      %v2181 = vpack.c.b16 %v1920, %v1919
      %v2182 = vpack.c.b16 %v1922, %v1921
      %v2183 = vpack.c.b16 %v1924, %v1923
      %v2184 = vpack.c.b16 %v1926, %v1925
      %v2185 = vpack.c.b16 %v1928, %v1927
      %v2186 = vpack.c.b16 %v1930, %v1929
      %2443 = vmatprep.subr.bf16.mxu0 0
      %2444 = vmatpush1.bf16.msra.mxu0 %v1938
      %2445 = vmatprep.subr.bf16.mxu0 0
      %2446 = vmatpush1.bf16.msra.mxu0 %v1937
      %2447 = vmatprep.subr.bf16.mxu0 0
      %2448 = vmatpush1.bf16.msra.mxu0 %v1936
      %2449 = vmatprep.subr.bf16.mxu0 0
      %2450 = vmatpush1.bf16.msra.mxu0 %v1935
      %2451 = vmatprep.subr.bf16.mxu0 0
      %2452 = vmatpush1.bf16.msra.mxu0 %v1934
      %2453 = vmatprep.subr.bf16.mxu0 0
      %2454 = vmatpush1.bf16.msra.mxu0 %v1933
      %2455 = vmatprep.subr.bf16.mxu0 0
      %2456 = vmatpush1.bf16.msra.mxu0 %v1932
      %2457 = vmatprep.subr.bf16.mxu0 0
      %2458 = vmatpush1.bf16.msra.mxu0 %v1931
      %2459 = vmatprep.subr.bf16.mxu0 0
      %2460 = vmatpush2.bf16.msra.mxu0 %v1946
      %2461 = vmatprep.subr.bf16.mxu0 0
      %2462 = vmatpush2.bf16.msra.mxu0 %v1945
      %2463 = vmatprep.subr.bf16.mxu0 0
      %2464 = vmatpush2.bf16.msra.mxu0 %v1944
      %2465 = vmatprep.subr.bf16.mxu0 0
      %2466 = vmatpush2.bf16.msra.mxu0 %v1943
      %2467 = vmatprep.subr.bf16.mxu0 0
      %2468 = vmatpush2.bf16.msra.mxu0 %v1942
      %2469 = vmatprep.subr.bf16.mxu0 0
      %2470 = vmatpush2.bf16.msra.mxu0 %v1941
      %2471 = vmatprep.subr.bf16.mxu0 0
      %2472 = vmatpush2.bf16.msra.mxu0 %v1940
      %2473 = vmatprep.subr.bf16.mxu0 0
      %2474 = vmatpush2.bf16.msra.mxu0 %v1939
      %2475 = vmatprep.mubr.bf16.mxu0 %v844
      %2476 = vmatmul.mubr.bf16.gmra.mxu0 %v843
      %v2477 = vpop.f32.mrf.mxu0
      %v2478 = vadd.f32 0.0, %v2477
      %v2479 = vpop.f32.mrf.mxu0
      %v2480 = vpop.f32.mrf.mxu0
      %v2481 = vpop.f32.mrf.mxu0
      %2482 = vdwg.mxu0
      %2483 = vmatprep.subr.bf16.mxu0 0
      %2484 = vmatpush1.bf16.msra.mxu0 %v1954
      %2485 = vmatprep.subr.bf16.mxu0 0
      %2486 = vmatpush1.bf16.msra.mxu0 %v1953
      %2487 = vmatprep.subr.bf16.mxu0 0
      %2488 = vmatpush1.bf16.msra.mxu0 %v1952
      %2489 = vmatprep.subr.bf16.mxu0 0
      %2490 = vmatpush1.bf16.msra.mxu0 %v1951
      %2491 = vmatprep.subr.bf16.mxu0 0
      %2492 = vmatpush1.bf16.msra.mxu0 %v1950
      %2493 = vmatprep.subr.bf16.mxu0 0
      %2494 = vmatpush1.bf16.msra.mxu0 %v1949
      %2495 = vmatprep.subr.bf16.mxu0 0
      %2496 = vmatpush1.bf16.msra.mxu0 %v1948
      %2497 = vmatprep.subr.bf16.mxu0 0
      %2498 = vmatpush1.bf16.msra.mxu0 %v1947
      %2499 = vmatprep.subr.bf16.mxu0 0
      %2500 = vmatpush2.bf16.msra.mxu0 %v1962
      %2501 = vmatprep.subr.bf16.mxu0 0
      %2502 = vmatpush2.bf16.msra.mxu0 %v1961
      %2503 = vmatprep.subr.bf16.mxu0 0
      %2504 = vmatpush2.bf16.msra.mxu0 %v1960
      %2505 = vmatprep.subr.bf16.mxu0 0
      %2506 = vmatpush2.bf16.msra.mxu0 %v1959
      %2507 = vmatprep.subr.bf16.mxu0 0
      %2508 = vmatpush2.bf16.msra.mxu0 %v1958
      %2509 = vmatprep.subr.bf16.mxu0 0
      %2510 = vmatpush2.bf16.msra.mxu0 %v1957
      %2511 = vmatprep.subr.bf16.mxu0 0
      %2512 = vmatpush2.bf16.msra.mxu0 %v1956
      %2513 = vmatprep.subr.bf16.mxu0 0
      %2514 = vmatpush2.bf16.msra.mxu0 %v1955
      %2515 = vmatprep.mubr.bf16.mxu0 %v846
      %2516 = vmatmul.mubr.bf16.gmra.mxu0 %v845
      %v2517 = vpop.f32.mrf.mxu0
      %v2518 = vadd.f32 %v2478, %v2517
      %v2519 = vpop.f32.mrf.mxu0
      %v2520 = vpop.f32.mrf.mxu0
      %v2521 = vpop.f32.mrf.mxu0
      %2522 = vdwg.mxu0
      %2523 = vmatprep.subr.bf16.mxu0 0
      %2524 = vmatpush1.bf16.msra.mxu0 %v1970
      %2525 = vmatprep.subr.bf16.mxu0 0
      %2526 = vmatpush1.bf16.msra.mxu0 %v1969
      %2527 = vmatprep.subr.bf16.mxu0 0
      %2528 = vmatpush1.bf16.msra.mxu0 %v1968
      %2529 = vmatprep.subr.bf16.mxu0 0
      %2530 = vmatpush1.bf16.msra.mxu0 %v1967
      %2531 = vmatprep.subr.bf16.mxu0 0
      %2532 = vmatpush1.bf16.msra.mxu0 %v1966
      %2533 = vmatprep.subr.bf16.mxu0 0
      %2534 = vmatpush1.bf16.msra.mxu0 %v1965
      %2535 = vmatprep.subr.bf16.mxu0 0
      %2536 = vmatpush1.bf16.msra.mxu0 %v1964
      %2537 = vmatprep.subr.bf16.mxu0 0
      %2538 = vmatpush1.bf16.msra.mxu0 %v1963
      %2539 = vmatprep.subr.bf16.mxu0 0
      %2540 = vmatpush2.bf16.msra.mxu0 %v1978
      %2541 = vmatprep.subr.bf16.mxu0 0
      %2542 = vmatpush2.bf16.msra.mxu0 %v1977
      %2543 = vmatprep.subr.bf16.mxu0 0
      %2544 = vmatpush2.bf16.msra.mxu0 %v1976
      %2545 = vmatprep.subr.bf16.mxu0 0
      %2546 = vmatpush2.bf16.msra.mxu0 %v1975
      %2547 = vmatprep.subr.bf16.mxu0 0
      %2548 = vmatpush2.bf16.msra.mxu0 %v1974
      %2549 = vmatprep.subr.bf16.mxu0 0
      %2550 = vmatpush2.bf16.msra.mxu0 %v1973
      %2551 = vmatprep.subr.bf16.mxu0 0
      %2552 = vmatpush2.bf16.msra.mxu0 %v1972
      %2553 = vmatprep.subr.bf16.mxu0 0
      %2554 = vmatpush2.bf16.msra.mxu0 %v1971
      %2555 = vmatprep.mubr.bf16.mxu0 %v848
      %2556 = vmatmul.mubr.bf16.gmra.mxu0 %v847
      %v2557 = vpop.f32.mrf.mxu0
      %v2558 = vadd.f32 %v2518, %v2557
      %v2559 = vpop.f32.mrf.mxu0
      %v2560 = vpop.f32.mrf.mxu0
      %v2561 = vpop.f32.mrf.mxu0
      %2562 = vdwg.mxu0
      %2563 = vmatprep.subr.bf16.mxu0 0
      %2564 = vmatpush1.bf16.msra.mxu0 %v1986
      %2565 = vmatprep.subr.bf16.mxu0 0
      %2566 = vmatpush1.bf16.msra.mxu0 %v1985
      %2567 = vmatprep.subr.bf16.mxu0 0
      %2568 = vmatpush1.bf16.msra.mxu0 %v1984
      %2569 = vmatprep.subr.bf16.mxu0 0
      %2570 = vmatpush1.bf16.msra.mxu0 %v1983
      %2571 = vmatprep.subr.bf16.mxu0 0
      %2572 = vmatpush1.bf16.msra.mxu0 %v1982
      %2573 = vmatprep.subr.bf16.mxu0 0
      %2574 = vmatpush1.bf16.msra.mxu0 %v1981
      %2575 = vmatprep.subr.bf16.mxu0 0
      %2576 = vmatpush1.bf16.msra.mxu0 %v1980
      %2577 = vmatprep.subr.bf16.mxu0 0
      %2578 = vmatpush1.bf16.msra.mxu0 %v1979
      %2579 = vmatprep.subr.bf16.mxu0 0
      %2580 = vmatpush2.bf16.msra.mxu0 %v1994
      %2581 = vmatprep.subr.bf16.mxu0 0
      %2582 = vmatpush2.bf16.msra.mxu0 %v1993
      %2583 = vmatprep.subr.bf16.mxu0 0
      %2584 = vmatpush2.bf16.msra.mxu0 %v1992
      %2585 = vmatprep.subr.bf16.mxu0 0
      %2586 = vmatpush2.bf16.msra.mxu0 %v1991
      %2587 = vmatprep.subr.bf16.mxu0 0
      %2588 = vmatpush2.bf16.msra.mxu0 %v1990
      %2589 = vmatprep.subr.bf16.mxu0 0
      %2590 = vmatpush2.bf16.msra.mxu0 %v1989
      %2591 = vmatprep.subr.bf16.mxu0 0
      %2592 = vmatpush2.bf16.msra.mxu0 %v1988
      %2593 = vmatprep.subr.bf16.mxu0 0
      %2594 = vmatpush2.bf16.msra.mxu0 %v1987
      %2595 = vmatprep.mubr.bf16.mxu0 %v850
      %2596 = vmatmul.mubr.bf16.gmra.mxu0 %v849
      %v2597 = vpop.f32.mrf.mxu0
      %v2598 = vadd.f32 %v2558, %v2597
      %v2599 = vpop.f32.mrf.mxu0
      %v2600 = vpop.f32.mrf.mxu0
      %v2601 = vpop.f32.mrf.mxu0
      %2602 = vdwg.mxu0
      %2603 = vmatprep.subr.bf16.mxu0 0
      %2604 = vmatpush1.bf16.msra.mxu0 %v2002
      %2605 = vmatprep.subr.bf16.mxu0 0
      %2606 = vmatpush1.bf16.msra.mxu0 %v2001
      %2607 = vmatprep.subr.bf16.mxu0 0
      %2608 = vmatpush1.bf16.msra.mxu0 %v2000
      %2609 = vmatprep.subr.bf16.mxu0 0
      %2610 = vmatpush1.bf16.msra.mxu0 %v1999
      %2611 = vmatprep.subr.bf16.mxu0 0
      %2612 = vmatpush1.bf16.msra.mxu0 %v1998
      %2613 = vmatprep.subr.bf16.mxu0 0
      %2614 = vmatpush1.bf16.msra.mxu0 %v1997
      %2615 = vmatprep.subr.bf16.mxu0 0
      %2616 = vmatpush1.bf16.msra.mxu0 %v1996
      %2617 = vmatprep.subr.bf16.mxu0 0
      %2618 = vmatpush1.bf16.msra.mxu0 %v1995
      %2619 = vmatprep.subr.bf16.mxu0 0
      %2620 = vmatpush2.bf16.msra.mxu0 %v2010
      %2621 = vmatprep.subr.bf16.mxu0 0
      %2622 = vmatpush2.bf16.msra.mxu0 %v2009
      %2623 = vmatprep.subr.bf16.mxu0 0
      %2624 = vmatpush2.bf16.msra.mxu0 %v2008
      %2625 = vmatprep.subr.bf16.mxu0 0
      %2626 = vmatpush2.bf16.msra.mxu0 %v2007
      %2627 = vmatprep.subr.bf16.mxu0 0
      %2628 = vmatpush2.bf16.msra.mxu0 %v2006
      %2629 = vmatprep.subr.bf16.mxu0 0
      %2630 = vmatpush2.bf16.msra.mxu0 %v2005
      %2631 = vmatprep.subr.bf16.mxu0 0
      %2632 = vmatpush2.bf16.msra.mxu0 %v2004
      %2633 = vmatprep.subr.bf16.mxu0 0
      %2634 = vmatpush2.bf16.msra.mxu0 %v2003
      %2635 = vmatprep.mubr.bf16.mxu0 %v852
      %2636 = vmatmul.mubr.bf16.gmra.mxu0 %v851
      %v2637 = vpop.f32.mrf.mxu0
      %v2638 = vadd.f32 %v2598, %v2637
      %v2639 = vpop.f32.mrf.mxu0
      %v2640 = vpop.f32.mrf.mxu0
      %v2641 = vpop.f32.mrf.mxu0
      %2642 = vdwg.mxu0
      %2643 = vmatprep.subr.bf16.mxu0 0
      %2644 = vmatpush1.bf16.msra.mxu0 %v2018
      %2645 = vmatprep.subr.bf16.mxu0 0
      %2646 = vmatpush1.bf16.msra.mxu0 %v2017
      %2647 = vmatprep.subr.bf16.mxu0 0
      %2648 = vmatpush1.bf16.msra.mxu0 %v2016
      %2649 = vmatprep.subr.bf16.mxu0 0
      %2650 = vmatpush1.bf16.msra.mxu0 %v2015
      %2651 = vmatprep.subr.bf16.mxu0 0
      %2652 = vmatpush1.bf16.msra.mxu0 %v2014
      %2653 = vmatprep.subr.bf16.mxu0 0
      %2654 = vmatpush1.bf16.msra.mxu0 %v2013
      %2655 = vmatprep.subr.bf16.mxu0 0
      %2656 = vmatpush1.bf16.msra.mxu0 %v2012
      %2657 = vmatprep.subr.bf16.mxu0 0
      %2658 = vmatpush1.bf16.msra.mxu0 %v2011
      %2659 = vmatprep.subr.bf16.mxu0 0
      %2660 = vmatpush2.bf16.msra.mxu0 %v2026
      %2661 = vmatprep.subr.bf16.mxu0 0
      %2662 = vmatpush2.bf16.msra.mxu0 %v2025
      %2663 = vmatprep.subr.bf16.mxu0 0
      %2664 = vmatpush2.bf16.msra.mxu0 %v2024
      %2665 = vmatprep.subr.bf16.mxu0 0
      %2666 = vmatpush2.bf16.msra.mxu0 %v2023
      %2667 = vmatprep.subr.bf16.mxu0 0
      %2668 = vmatpush2.bf16.msra.mxu0 %v2022
      %2669 = vmatprep.subr.bf16.mxu0 0
      %2670 = vmatpush2.bf16.msra.mxu0 %v2021
      %2671 = vmatprep.subr.bf16.mxu0 0
      %2672 = vmatpush2.bf16.msra.mxu0 %v2020
      %2673 = vmatprep.subr.bf16.mxu0 0
      %2674 = vmatpush2.bf16.msra.mxu0 %v2019
      %2675 = vmatprep.mubr.bf16.mxu0 %v854
      %2676 = vmatmul.mubr.bf16.gmra.mxu0 %v853
      %v2677 = vpop.f32.mrf.mxu0
      %v2678 = vadd.f32 %v2638, %v2677
      %v2679 = vpop.f32.mrf.mxu0
      %v2680 = vpop.f32.mrf.mxu0
      %v2681 = vpop.f32.mrf.mxu0
      %2682 = vdwg.mxu0
      %2683 = vmatprep.subr.bf16.mxu0 0
      %2684 = vmatpush1.bf16.msra.mxu0 %v2034
      %2685 = vmatprep.subr.bf16.mxu0 0
      %2686 = vmatpush1.bf16.msra.mxu0 %v2033
      %2687 = vmatprep.subr.bf16.mxu0 0
      %2688 = vmatpush1.bf16.msra.mxu0 %v2032
      %2689 = vmatprep.subr.bf16.mxu0 0
      %2690 = vmatpush1.bf16.msra.mxu0 %v2031
      %2691 = vmatprep.subr.bf16.mxu0 0
      %2692 = vmatpush1.bf16.msra.mxu0 %v2030
      %2693 = vmatprep.subr.bf16.mxu0 0
      %2694 = vmatpush1.bf16.msra.mxu0 %v2029
      %2695 = vmatprep.subr.bf16.mxu0 0
      %2696 = vmatpush1.bf16.msra.mxu0 %v2028
      %2697 = vmatprep.subr.bf16.mxu0 0
      %2698 = vmatpush1.bf16.msra.mxu0 %v2027
      %2699 = vmatprep.subr.bf16.mxu0 0
      %2700 = vmatpush2.bf16.msra.mxu0 %v2042
      %2701 = vmatprep.subr.bf16.mxu0 0
      %2702 = vmatpush2.bf16.msra.mxu0 %v2041
      %2703 = vmatprep.subr.bf16.mxu0 0
      %2704 = vmatpush2.bf16.msra.mxu0 %v2040
      %2705 = vmatprep.subr.bf16.mxu0 0
      %2706 = vmatpush2.bf16.msra.mxu0 %v2039
      %2707 = vmatprep.subr.bf16.mxu0 0
      %2708 = vmatpush2.bf16.msra.mxu0 %v2038
      %2709 = vmatprep.subr.bf16.mxu0 0
      %2710 = vmatpush2.bf16.msra.mxu0 %v2037
      %2711 = vmatprep.subr.bf16.mxu0 0
      %2712 = vmatpush2.bf16.msra.mxu0 %v2036
      %2713 = vmatprep.subr.bf16.mxu0 0
      %2714 = vmatpush2.bf16.msra.mxu0 %v2035
      %2715 = vmatprep.mubr.bf16.mxu0 %v856
      %2716 = vmatmul.mubr.bf16.gmra.mxu0 %v855
      %v2717 = vpop.f32.mrf.mxu0
      %v2718 = vadd.f32 %v2678, %v2717
      %v2719 = vpop.f32.mrf.mxu0
      %v2720 = vpop.f32.mrf.mxu0
      %v2721 = vpop.f32.mrf.mxu0
      %2722 = vdwg.mxu0
      %2723 = vmatprep.subr.bf16.mxu0 0
      %2724 = vmatpush1.bf16.msra.mxu0 %v2050
      %2725 = vmatprep.subr.bf16.mxu0 0
      %2726 = vmatpush1.bf16.msra.mxu0 %v2049
      %2727 = vmatprep.subr.bf16.mxu0 0
      %2728 = vmatpush1.bf16.msra.mxu0 %v2048
      %2729 = vmatprep.subr.bf16.mxu0 0
      %2730 = vmatpush1.bf16.msra.mxu0 %v2047
      %2731 = vmatprep.subr.bf16.mxu0 0
      %2732 = vmatpush1.bf16.msra.mxu0 %v2046
      %2733 = vmatprep.subr.bf16.mxu0 0
      %2734 = vmatpush1.bf16.msra.mxu0 %v2045
      %2735 = vmatprep.subr.bf16.mxu0 0
      %2736 = vmatpush1.bf16.msra.mxu0 %v2044
      %2737 = vmatprep.subr.bf16.mxu0 0
      %2738 = vmatpush1.bf16.msra.mxu0 %v2043
      %2739 = vmatprep.subr.bf16.mxu0 0
      %2740 = vmatpush2.bf16.msra.mxu0 %v2058
      %2741 = vmatprep.subr.bf16.mxu0 0
      %2742 = vmatpush2.bf16.msra.mxu0 %v2057
      %2743 = vmatprep.subr.bf16.mxu0 0
      %2744 = vmatpush2.bf16.msra.mxu0 %v2056
      %2745 = vmatprep.subr.bf16.mxu0 0
      %2746 = vmatpush2.bf16.msra.mxu0 %v2055
      %2747 = vmatprep.subr.bf16.mxu0 0
      %2748 = vmatpush2.bf16.msra.mxu0 %v2054
      %2749 = vmatprep.subr.bf16.mxu0 0
      %2750 = vmatpush2.bf16.msra.mxu0 %v2053
      %2751 = vmatprep.subr.bf16.mxu0 0
      %2752 = vmatpush2.bf16.msra.mxu0 %v2052
      %2753 = vmatprep.subr.bf16.mxu0 0
      %2754 = vmatpush2.bf16.msra.mxu0 %v2051
      %2755 = vmatprep.mubr.bf16.mxu0 %v858
      %2756 = vmatmul.mubr.bf16.gmra.mxu0 %v857
      %v2757 = vpop.f32.mrf.mxu0
      %v2758 = vadd.f32 %v2718, %v2757
      %v2759 = vpop.f32.mrf.mxu0
      %v2760 = vpop.f32.mrf.mxu0
      %v2761 = vpop.f32.mrf.mxu0
      %2762 = vdwg.mxu0
      %2763 = vmatprep.subr.bf16.mxu0 0
      %2764 = vmatpush1.bf16.msra.mxu0 %v2066
      %2765 = vmatprep.subr.bf16.mxu0 0
      %2766 = vmatpush1.bf16.msra.mxu0 %v2065
      %2767 = vmatprep.subr.bf16.mxu0 0
      %2768 = vmatpush1.bf16.msra.mxu0 %v2064
      %2769 = vmatprep.subr.bf16.mxu0 0
      %2770 = vmatpush1.bf16.msra.mxu0 %v2063
      %2771 = vmatprep.subr.bf16.mxu0 0
      %2772 = vmatpush1.bf16.msra.mxu0 %v2062
      %2773 = vmatprep.subr.bf16.mxu0 0
      %2774 = vmatpush1.bf16.msra.mxu0 %v2061
      %2775 = vmatprep.subr.bf16.mxu0 0
      %2776 = vmatpush1.bf16.msra.mxu0 %v2060
      %2777 = vmatprep.subr.bf16.mxu0 0
      %2778 = vmatpush1.bf16.msra.mxu0 %v2059
      %2779 = vmatprep.subr.bf16.mxu0 0
      %2780 = vmatpush2.bf16.msra.mxu0 %v2074
      %2781 = vmatprep.subr.bf16.mxu0 0
      %2782 = vmatpush2.bf16.msra.mxu0 %v2073
      %2783 = vmatprep.subr.bf16.mxu0 0
      %2784 = vmatpush2.bf16.msra.mxu0 %v2072
      %2785 = vmatprep.subr.bf16.mxu0 0
      %2786 = vmatpush2.bf16.msra.mxu0 %v2071
      %2787 = vmatprep.subr.bf16.mxu0 0
      %2788 = vmatpush2.bf16.msra.mxu0 %v2070
      %2789 = vmatprep.subr.bf16.mxu0 0
      %2790 = vmatpush2.bf16.msra.mxu0 %v2069
      %2791 = vmatprep.subr.bf16.mxu0 0
      %2792 = vmatpush2.bf16.msra.mxu0 %v2068
      %2793 = vmatprep.subr.bf16.mxu0 0
      %2794 = vmatpush2.bf16.msra.mxu0 %v2067
      %2795 = vmatprep.mubr.bf16.mxu0 %v860
      %2796 = vmatmul.mubr.bf16.gmra.mxu0 %v859
      %v2797 = vpop.f32.mrf.mxu0
      %v2798 = vadd.f32 %v2758, %v2797
      %v2799 = vpop.f32.mrf.mxu0
      %v2800 = vpop.f32.mrf.mxu0
      %v2801 = vpop.f32.mrf.mxu0
      %2802 = vdwg.mxu0
      %2803 = vmatprep.subr.bf16.mxu0 0
      %2804 = vmatpush1.bf16.msra.mxu0 %v2082
      %2805 = vmatprep.subr.bf16.mxu0 0
      %2806 = vmatpush1.bf16.msra.mxu0 %v2081
      %2807 = vmatprep.subr.bf16.mxu0 0
      %2808 = vmatpush1.bf16.msra.mxu0 %v2080
      %2809 = vmatprep.subr.bf16.mxu0 0
      %2810 = vmatpush1.bf16.msra.mxu0 %v2079
      %2811 = vmatprep.subr.bf16.mxu0 0
      %2812 = vmatpush1.bf16.msra.mxu0 %v2078
      %2813 = vmatprep.subr.bf16.mxu0 0
      %2814 = vmatpush1.bf16.msra.mxu0 %v2077
      %2815 = vmatprep.subr.bf16.mxu0 0
      %2816 = vmatpush1.bf16.msra.mxu0 %v2076
      %2817 = vmatprep.subr.bf16.mxu0 0
      %2818 = vmatpush1.bf16.msra.mxu0 %v2075
      %2819 = vmatprep.subr.bf16.mxu0 0
      %2820 = vmatpush2.bf16.msra.mxu0 %v2090
      %2821 = vmatprep.subr.bf16.mxu0 0
      %2822 = vmatpush2.bf16.msra.mxu0 %v2089
      %2823 = vmatprep.subr.bf16.mxu0 0
      %2824 = vmatpush2.bf16.msra.mxu0 %v2088
      %2825 = vmatprep.subr.bf16.mxu0 0
      %2826 = vmatpush2.bf16.msra.mxu0 %v2087
      %2827 = vmatprep.subr.bf16.mxu0 0
      %2828 = vmatpush2.bf16.msra.mxu0 %v2086
      %2829 = vmatprep.subr.bf16.mxu0 0
      %2830 = vmatpush2.bf16.msra.mxu0 %v2085
      %2831 = vmatprep.subr.bf16.mxu0 0
      %2832 = vmatpush2.bf16.msra.mxu0 %v2084
      %2833 = vmatprep.subr.bf16.mxu0 0
      %2834 = vmatpush2.bf16.msra.mxu0 %v2083
      %2835 = vmatprep.mubr.bf16.mxu0 %v862
      %2836 = vmatmul.mubr.bf16.gmra.mxu0 %v861
      %v2837 = vpop.f32.mrf.mxu0
      %v2838 = vadd.f32 %v2798, %v2837
      %v2839 = vpop.f32.mrf.mxu0
      %v2840 = vpop.f32.mrf.mxu0
      %v2841 = vpop.f32.mrf.mxu0
      %2842 = vdwg.mxu0
      %2843 = vmatprep.subr.bf16.mxu0 0
      %2844 = vmatpush1.bf16.msra.mxu0 %v2098
      %2845 = vmatprep.subr.bf16.mxu0 0
      %2846 = vmatpush1.bf16.msra.mxu0 %v2097
      %2847 = vmatprep.subr.bf16.mxu0 0
      %2848 = vmatpush1.bf16.msra.mxu0 %v2096
      %2849 = vmatprep.subr.bf16.mxu0 0
      %2850 = vmatpush1.bf16.msra.mxu0 %v2095
      %2851 = vmatprep.subr.bf16.mxu0 0
      %2852 = vmatpush1.bf16.msra.mxu0 %v2094
      %2853 = vmatprep.subr.bf16.mxu0 0
      %2854 = vmatpush1.bf16.msra.mxu0 %v2093
      %2855 = vmatprep.subr.bf16.mxu0 0
      %2856 = vmatpush1.bf16.msra.mxu0 %v2092
      %2857 = vmatprep.subr.bf16.mxu0 0
      %2858 = vmatpush1.bf16.msra.mxu0 %v2091
      %2859 = vmatprep.subr.bf16.mxu0 0
      %2860 = vmatpush2.bf16.msra.mxu0 %v2106
      %2861 = vmatprep.subr.bf16.mxu0 0
      %2862 = vmatpush2.bf16.msra.mxu0 %v2105
      %2863 = vmatprep.subr.bf16.mxu0 0
      %2864 = vmatpush2.bf16.msra.mxu0 %v2104
      %2865 = vmatprep.subr.bf16.mxu0 0
      %2866 = vmatpush2.bf16.msra.mxu0 %v2103
      %2867 = vmatprep.subr.bf16.mxu0 0
      %2868 = vmatpush2.bf16.msra.mxu0 %v2102
      %2869 = vmatprep.subr.bf16.mxu0 0
      %2870 = vmatpush2.bf16.msra.mxu0 %v2101
      %2871 = vmatprep.subr.bf16.mxu0 0
      %2872 = vmatpush2.bf16.msra.mxu0 %v2100
      %2873 = vmatprep.subr.bf16.mxu0 0
      %2874 = vmatpush2.bf16.msra.mxu0 %v2099
      %2875 = vmatprep.mubr.bf16.mxu0 %v864
      %2876 = vmatmul.mubr.bf16.gmra.mxu0 %v863
      %v2877 = vpop.f32.mrf.mxu0
      %v2878 = vadd.f32 %v2838, %v2877
      %v2879 = vpop.f32.mrf.mxu0
      %v2880 = vpop.f32.mrf.mxu0
      %v2881 = vpop.f32.mrf.mxu0
      %2882 = vdwg.mxu0
      %2883 = vmatprep.subr.bf16.mxu0 0
      %2884 = vmatpush1.bf16.msra.mxu0 %v2114
      %2885 = vmatprep.subr.bf16.mxu0 0
      %2886 = vmatpush1.bf16.msra.mxu0 %v2113
      %2887 = vmatprep.subr.bf16.mxu0 0
      %2888 = vmatpush1.bf16.msra.mxu0 %v2112
      %2889 = vmatprep.subr.bf16.mxu0 0
      %2890 = vmatpush1.bf16.msra.mxu0 %v2111
      %2891 = vmatprep.subr.bf16.mxu0 0
      %2892 = vmatpush1.bf16.msra.mxu0 %v2110
      %2893 = vmatprep.subr.bf16.mxu0 0
      %2894 = vmatpush1.bf16.msra.mxu0 %v2109
      %2895 = vmatprep.subr.bf16.mxu0 0
      %2896 = vmatpush1.bf16.msra.mxu0 %v2108
      %2897 = vmatprep.subr.bf16.mxu0 0
      %2898 = vmatpush1.bf16.msra.mxu0 %v2107
      %2899 = vmatprep.subr.bf16.mxu0 0
      %2900 = vmatpush2.bf16.msra.mxu0 %v2122
      %2901 = vmatprep.subr.bf16.mxu0 0
      %2902 = vmatpush2.bf16.msra.mxu0 %v2121
      %2903 = vmatprep.subr.bf16.mxu0 0
      %2904 = vmatpush2.bf16.msra.mxu0 %v2120
      %2905 = vmatprep.subr.bf16.mxu0 0
      %2906 = vmatpush2.bf16.msra.mxu0 %v2119
      %2907 = vmatprep.subr.bf16.mxu0 0
      %2908 = vmatpush2.bf16.msra.mxu0 %v2118
      %2909 = vmatprep.subr.bf16.mxu0 0
      %2910 = vmatpush2.bf16.msra.mxu0 %v2117
      %2911 = vmatprep.subr.bf16.mxu0 0
      %2912 = vmatpush2.bf16.msra.mxu0 %v2116
      %2913 = vmatprep.subr.bf16.mxu0 0
      %2914 = vmatpush2.bf16.msra.mxu0 %v2115
      %2915 = vmatprep.mubr.bf16.mxu0 %v866
      %2916 = vmatmul.mubr.bf16.gmra.mxu0 %v865
      %v2917 = vpop.f32.mrf.mxu0
      %v2918 = vadd.f32 %v2878, %v2917
      %v2919 = vpop.f32.mrf.mxu0
      %v2920 = vpop.f32.mrf.mxu0
      %v2921 = vpop.f32.mrf.mxu0
      %2922 = vdwg.mxu0
      %2923 = vmatprep.subr.bf16.mxu0 0
      %2924 = vmatpush1.bf16.msra.mxu0 %v2130
      %2925 = vmatprep.subr.bf16.mxu0 0
      %2926 = vmatpush1.bf16.msra.mxu0 %v2129
      %2927 = vmatprep.subr.bf16.mxu0 0
      %2928 = vmatpush1.bf16.msra.mxu0 %v2128
      %2929 = vmatprep.subr.bf16.mxu0 0
      %2930 = vmatpush1.bf16.msra.mxu0 %v2127
      %2931 = vmatprep.subr.bf16.mxu0 0
      %2932 = vmatpush1.bf16.msra.mxu0 %v2126
      %2933 = vmatprep.subr.bf16.mxu0 0
      %2934 = vmatpush1.bf16.msra.mxu0 %v2125
      %2935 = vmatprep.subr.bf16.mxu0 0
      %2936 = vmatpush1.bf16.msra.mxu0 %v2124
      %2937 = vmatprep.subr.bf16.mxu0 0
      %2938 = vmatpush1.bf16.msra.mxu0 %v2123
      %2939 = vmatprep.subr.bf16.mxu0 0
      %2940 = vmatpush2.bf16.msra.mxu0 %v2138
      %2941 = vmatprep.subr.bf16.mxu0 0
      %2942 = vmatpush2.bf16.msra.mxu0 %v2137
      %2943 = vmatprep.subr.bf16.mxu0 0
      %2944 = vmatpush2.bf16.msra.mxu0 %v2136
      %2945 = vmatprep.subr.bf16.mxu0 0
      %2946 = vmatpush2.bf16.msra.mxu0 %v2135
      %2947 = vmatprep.subr.bf16.mxu0 0
      %2948 = vmatpush2.bf16.msra.mxu0 %v2134
      %2949 = vmatprep.subr.bf16.mxu0 0
      %2950 = vmatpush2.bf16.msra.mxu0 %v2133
      %2951 = vmatprep.subr.bf16.mxu0 0
      %2952 = vmatpush2.bf16.msra.mxu0 %v2132
      %2953 = vmatprep.subr.bf16.mxu0 0
      %2954 = vmatpush2.bf16.msra.mxu0 %v2131
      %2955 = vmatprep.mubr.bf16.mxu0 %v868
      %2956 = vmatmul.mubr.bf16.gmra.mxu0 %v867
      %v2957 = vpop.f32.mrf.mxu0
      %v2958 = vadd.f32 %v2918, %v2957
      %v2959 = vpop.f32.mrf.mxu0
      %v2960 = vpop.f32.mrf.mxu0
      %v2961 = vpop.f32.mrf.mxu0
      %2962 = vdwg.mxu0
      %2963 = vmatprep.subr.bf16.mxu0 0
      %2964 = vmatpush1.bf16.msra.mxu0 %v2146
      %2965 = vmatprep.subr.bf16.mxu0 0
      %2966 = vmatpush1.bf16.msra.mxu0 %v2145
      %2967 = vmatprep.subr.bf16.mxu0 0
      %2968 = vmatpush1.bf16.msra.mxu0 %v2144
      %2969 = vmatprep.subr.bf16.mxu0 0
      %2970 = vmatpush1.bf16.msra.mxu0 %v2143
      %2971 = vmatprep.subr.bf16.mxu0 0
      %2972 = vmatpush1.bf16.msra.mxu0 %v2142
      %2973 = vmatprep.subr.bf16.mxu0 0
      %2974 = vmatpush1.bf16.msra.mxu0 %v2141
      %2975 = vmatprep.subr.bf16.mxu0 0
      %2976 = vmatpush1.bf16.msra.mxu0 %v2140
      %2977 = vmatprep.subr.bf16.mxu0 0
      %2978 = vmatpush1.bf16.msra.mxu0 %v2139
      %2979 = vmatprep.subr.bf16.mxu0 0
      %2980 = vmatpush2.bf16.msra.mxu0 %v2154
      %2981 = vmatprep.subr.bf16.mxu0 0
      %2982 = vmatpush2.bf16.msra.mxu0 %v2153
      %2983 = vmatprep.subr.bf16.mxu0 0
      %2984 = vmatpush2.bf16.msra.mxu0 %v2152
      %2985 = vmatprep.subr.bf16.mxu0 0
      %2986 = vmatpush2.bf16.msra.mxu0 %v2151
      %2987 = vmatprep.subr.bf16.mxu0 0
      %2988 = vmatpush2.bf16.msra.mxu0 %v2150
      %2989 = vmatprep.subr.bf16.mxu0 0
      %2990 = vmatpush2.bf16.msra.mxu0 %v2149
      %2991 = vmatprep.subr.bf16.mxu0 0
      %2992 = vmatpush2.bf16.msra.mxu0 %v2148
      %2993 = vmatprep.subr.bf16.mxu0 0
      %2994 = vmatpush2.bf16.msra.mxu0 %v2147
      %2995 = vmatprep.mubr.bf16.mxu0 %v870
      %2996 = vmatmul.mubr.bf16.gmra.mxu0 %v869
      %v2997 = vpop.f32.mrf.mxu0
      %v2998 = vadd.f32 %v2958, %v2997
      %v2999 = vpop.f32.mrf.mxu0
      %v3000 = vpop.f32.mrf.mxu0
      %v3001 = vpop.f32.mrf.mxu0
      %3002 = vdwg.mxu0
      %3003 = vmatprep.subr.bf16.mxu0 0
      %3004 = vmatpush1.bf16.msra.mxu0 %v2162
      %3005 = vmatprep.subr.bf16.mxu0 0
      %3006 = vmatpush1.bf16.msra.mxu0 %v2161
      %3007 = vmatprep.subr.bf16.mxu0 0
      %3008 = vmatpush1.bf16.msra.mxu0 %v2160
      %3009 = vmatprep.subr.bf16.mxu0 0
      %3010 = vmatpush1.bf16.msra.mxu0 %v2159
      %3011 = vmatprep.subr.bf16.mxu0 0
      %3012 = vmatpush1.bf16.msra.mxu0 %v2158
      %3013 = vmatprep.subr.bf16.mxu0 0
      %3014 = vmatpush1.bf16.msra.mxu0 %v2157
      %3015 = vmatprep.subr.bf16.mxu0 0
      %3016 = vmatpush1.bf16.msra.mxu0 %v2156
      %3017 = vmatprep.subr.bf16.mxu0 0
      %3018 = vmatpush1.bf16.msra.mxu0 %v2155
      %3019 = vmatprep.subr.bf16.mxu0 0
      %3020 = vmatpush2.bf16.msra.mxu0 %v2170
      %3021 = vmatprep.subr.bf16.mxu0 0
      %3022 = vmatpush2.bf16.msra.mxu0 %v2169
      %3023 = vmatprep.subr.bf16.mxu0 0
      %3024 = vmatpush2.bf16.msra.mxu0 %v2168
      %3025 = vmatprep.subr.bf16.mxu0 0
      %3026 = vmatpush2.bf16.msra.mxu0 %v2167
      %3027 = vmatprep.subr.bf16.mxu0 0
      %3028 = vmatpush2.bf16.msra.mxu0 %v2166
      %3029 = vmatprep.subr.bf16.mxu0 0
      %3030 = vmatpush2.bf16.msra.mxu0 %v2165
      %3031 = vmatprep.subr.bf16.mxu0 0
      %3032 = vmatpush2.bf16.msra.mxu0 %v2164
      %3033 = vmatprep.subr.bf16.mxu0 0
      %3034 = vmatpush2.bf16.msra.mxu0 %v2163
      %3035 = vmatprep.mubr.bf16.mxu0 %v872
      %3036 = vmatmul.mubr.bf16.gmra.mxu0 %v871
      %v3037 = vpop.f32.mrf.mxu0
      %v3038 = vadd.f32 %v2998, %v3037
      %v3039 = vpop.f32.mrf.mxu0
      %v3040 = vpop.f32.mrf.mxu0
      %v3041 = vpop.f32.mrf.mxu0
      %3042 = vdwg.mxu0
      %3043 = vmatprep.subr.bf16.mxu0 0
      %3044 = vmatpush1.bf16.msra.mxu0 %v2178
      %3045 = vmatprep.subr.bf16.mxu0 0
      %3046 = vmatpush1.bf16.msra.mxu0 %v2177
      %3047 = vmatprep.subr.bf16.mxu0 0
      %3048 = vmatpush1.bf16.msra.mxu0 %v2176
      %3049 = vmatprep.subr.bf16.mxu0 0
      %3050 = vmatpush1.bf16.msra.mxu0 %v2175
      %3051 = vmatprep.subr.bf16.mxu0 0
      %3052 = vmatpush1.bf16.msra.mxu0 %v2174
      %3053 = vmatprep.subr.bf16.mxu0 0
      %3054 = vmatpush1.bf16.msra.mxu0 %v2173
      %3055 = vmatprep.subr.bf16.mxu0 0
      %3056 = vmatpush1.bf16.msra.mxu0 %v2172
      %3057 = vmatprep.subr.bf16.mxu0 0
      %3058 = vmatpush1.bf16.msra.mxu0 %v2171
      %3059 = vmatprep.subr.bf16.mxu0 0
      %3060 = vmatpush2.bf16.msra.mxu0 %v2186
      %3061 = vmatprep.subr.bf16.mxu0 0
      %3062 = vmatpush2.bf16.msra.mxu0 %v2185
      %3063 = vmatprep.subr.bf16.mxu0 0
      %3064 = vmatpush2.bf16.msra.mxu0 %v2184
      %3065 = vmatprep.subr.bf16.mxu0 0
      %3066 = vmatpush2.bf16.msra.mxu0 %v2183
      %3067 = vmatprep.subr.bf16.mxu0 0
      %3068 = vmatpush2.bf16.msra.mxu0 %v2182
      %3069 = vmatprep.subr.bf16.mxu0 0
      %3070 = vmatpush2.bf16.msra.mxu0 %v2181
      %3071 = vmatprep.subr.bf16.mxu0 0
      %3072 = vmatpush2.bf16.msra.mxu0 %v2180
      %3073 = vmatprep.subr.bf16.mxu0 0
      %3074 = vmatpush2.bf16.msra.mxu0 %v2179
      %3075 = vmatprep.mubr.bf16.mxu0 %v874
      %3076 = vmatmul.mubr.bf16.gmra.mxu0 %v873
      %v3077 = vpop.f32.mrf.mxu0
      %v3078 = vadd.f32 %v3038, %v3077
      %v3079 = vpop.f32.mrf.mxu0
      %v3080 = vpop.f32.mrf.mxu0
      %v3081 = vpop.f32.mrf.mxu0
      %3082 = vdwg.mxu0
      %v3083 = vadd.f32 %v266, %v3078
      %vm3084 = vcmask 261120
      %3085 = vst.msk [vmem:[#allocation2] sm:$0xff] %vm3084, %v3083
      %p3086 = scmp.eq.s32.totalorder %s21, 3
      // Predicated region
      $region37: #{descriptor_cifar_forward.7} parent=31 // pred_check
        %p3087 = pneg %p3086
      $region38: #{descriptor_cifar_forward.7} parent=31 // pred_check_branch
        %3089 = sbr.rel (%p3087) target = $region40
      $region39: #{descriptor_cifar_forward.7} parent=31 // pred_region
        %v3090 = vld [vmem:[#allocation2] sm:$0xff]
        %v3091 = vld [vmem:[%s251] sm:$0x1]
        %v3093 = vlaneseq
        %v3094 = vshrl.u32 %v3093, 7
        %v3095 = vsub.s32 0, %v3094
        %v3096 = vrot.slane %v3091, %v3095
        %v3098 = vadd.f32 %v3090, %v3096
        %3099 = vst.msk [vmem:[%s258] sm:$0xff] %vm3084, %v3098
      $region40: #{descriptor_cifar_forward.7} parent=31 // pred_fallthru
        _
      %p3100 = scmp.lt.s32.totalorder %s19, 0
      %s3101 = scalar_select %p3100, %s19, 0
      %p3102 = scmp.lt.s32.totalorder %s20, 0
      %s3103 = scalar_select %p3102, %s20, 0
      %s3104 = sadd.s32 %s3103, %s3101
      %s3105 = smul.addr %s3104, 8
      %s3106 = scalar_lea.vmem %s3, %s3105
      // Predicated region
      $region41: #{descriptor_cifar_forward.7} parent=31 // pred_check
        %p3107 = pneg %p135
      $region42: #{descriptor_cifar_forward.7} parent=31 // pred_check_branch
        %3109 = sbr.rel (%p3107) target = $region44
      $region43: #{descriptor_cifar_forward.7} parent=31 // pred_region
        _
      $region44: #{descriptor_cifar_forward.7} parent=31 // pred_fallthru
        _
      // Predicated region
      $region45: #{descriptor_cifar_forward.7} parent=31 // pred_check
        %p3110 = pneg %p135
      $region46: #{descriptor_cifar_forward.7} parent=31 // pred_check_branch
        %3112 = sbr.rel (%p3110) target = $region48
      $region47: #{descriptor_cifar_forward.7} parent=31 // pred_region
        %p3113 = scmp.lt.s32.totalorder %s19, 0
        %s3114 = scalar_select %p3113, %s19, 0
        %p3115 = scmp.lt.s32.totalorder %s20, 0
        %s3116 = scalar_select %p3115, %s20, 0
        %s3117 = sadd.s32 %s3116, %s3114
        %s3118 = smul.addr %s3117, 8
        %s3119 = scalar_lea.vmem %s3, %s3118
      $region48: #{descriptor_cifar_forward.7} parent=31 // pred_fallthru
        _
    $region32: #{descriptor_cifar_forward.7} parent=5 // pred_fallthru
      _
    %p3120 = scmp.le.s32.totalorder 2, %s9
    // Predicated region
    $region49: #{descriptor_cifar_forward.7} parent=5 // pred_check
      %p3121 = pneg %p3120
    $region50: #{descriptor_cifar_forward.7} parent=5 // pred_check_branch
      %3123 = sbr.rel (%p3121) target = $region52
    $region51: #{descriptor_cifar_forward.7} parent=5 // pred_region
      %s3124 = ssub.s32 %s9, 2
    $region52: #{descriptor_cifar_forward.7} parent=5 // pred_fallthru
      _
  $region6: #{descriptor_cifar_forward.7} parent=0 // loop_footer
    %s13 = sadd.s32 1, %s9
  $region7: #{descriptor_cifar_forward.7} parent=0 // loop_footer_branch
    %8 = sbr.rel target = $region3
  $region8: #{descriptor_cifar_forward.7} parent=0 // loop_exit
    _

</llo_original>
